<compile_context>
chip_gen: v7x
topology: tpu7x:2x2x1
jax: 0.10.0
libtpu: 0.0.40
codegen_flags: <defaults>
</compile_context>

<pallas_src>
import functools
import math

import jax
import jax.numpy as jnp
import numpy as np
from jax.experimental import pallas as pl
from jax.experimental.pallas import tpu as pltpu

_LANE = 128


def _radius_kernel(x_ref, u_ref, out_ref, un_ref, *,
                   targets_scaled, use_neg, scale, pi_scaled):
    """One grid step: all nr radiuses for one (P, Bn) column block.

    x_ref, u_ref : (P, Bn) VMEM tiles. P = nx*ny on sublanes, n-block on lanes.
                   u_ref holds atan2(im, re) * 1/(sigma*sqrt(2)) (pre-scaled).
    out_ref      : (nr, Bn) VMEM tile (lane-dense rows).
    un_ref       : (P, Bn) f32 VMEM scratch: "negated plan" angle, computed once
                   per block, re-read (cheap vld) by each negative radius.
    """
    # arg(-(centered_plan)) derived once per block from arg(centered_plan),
    # already in pre-scaled units (shift by pi/(sigma*sqrt(2))).
    # (Pixels with theta exactly 0 get +pi instead of atan2(-0,-re)'s -pi; the
    #  gaussian weight there is ~exp(-123) for sigma=0.1, i.e. negligible.)
    u0 = u_ref[...]
    un_ref[...] = jnp.where(u0 > 0.0, u0 - pi_scaled, u0 + pi_scaled)

    # Statically unrolled radius loop. Inputs are re-read from the VMEM-resident
    # refs inside every iteration instead of being held live as full-tile values
    # across the whole unrolled loop (3x(P,Bn) f32 >> 64 vregs would spill).
    for i, (tgt, neg) in enumerate(zip(targets_scaled, use_neg)):
        base = un_ref[...] if neg else u_ref[...]
        d = base - tgt                        # pre-scaled: no 1/(2*sigma^2) mul
        g = jnp.exp(-(d * d))                 # gaussian sans coefficient
        s = jnp.sum(g * x_ref[...], axis=0)   # sublane reduce -> (Bn,) lane-major
        out_ref[i, :] = jnp.sqrt(s * scale)   # scale = 2*coef folded here


def _round_up(v, m):
    return ((v + m - 1) // m) * m


def gaussian_radius_extractor(x, center_of_mass, nb_radiuses=24, sigma=0.1,
                              epsilon=1e-5, block_n=1024):
    """JAX/Pallas equivalent of GaussianRadiusExtractor.forward.

    x:              (nb, nf, nx, ny, nz) float
    center_of_mass: (nb, nf, nz) complex
    returns:        (nb, nf, nb_radiuses, nz) float32
    """
    del epsilon  # stored by the torch module but unused in forward
    nb, nf, nx, ny, nz = x.shape
    nr = nb_radiuses
    n = nb * nf * nz
    P = nx * ny

    k = 1.0 / (sigma * math.sqrt(2.0))                 # angle prescale factor
    coef = 1.0 / (sigma * math.sqrt(2.0 * math.pi))

    # ---- glue: flatten to (P, n) with the reduced spatial axis on sublanes ---
    x32 = x.astype(jnp.float32)
    xk = jnp.transpose(x32, (2, 3, 0, 1, 4)).reshape(P, n)

    # complex_plan[r, c] = c + 1j * r  (real = column index, imag = row index)
    plan_re = jnp.broadcast_to(jnp.arange(ny, dtype=jnp.float32)[None, :],
                               (nx, ny)).reshape(P, 1)
    plan_im = jnp.broadcast_to(jnp.arange(nx, dtype=jnp.float32)[:, None],
                               (nx, ny)).reshape(P, 1)
    com_re = jnp.real(center_of_mass).astype(jnp.float32).reshape(1, n)
    com_im = jnp.imag(center_of_mass).astype(jnp.float32).reshape(1, n)
    # Pre-scaled angle map: atan2(im, re) / (sigma*sqrt(2)).
    u = jnp.arctan2(plan_im - com_im, plan_re - com_re) * k        # (P, n)

    # ---- static per-radius constants (same Python float arithmetic as torch) -
    targets, use_neg = [], []
    for i in range(nr):
        angle = i * (2.0 * math.pi / nr) - math.pi
        if angle > 0.5 * math.pi:
            targets.append(angle - math.pi)
            use_neg.append(True)
        elif angle < -0.5 * math.pi:
            targets.append(angle + math.pi)
            use_neg.append(True)
        else:
            targets.append(angle)
            use_neg.append(False)
    targets_scaled = tuple(t * k for t in targets)
    use_neg = tuple(use_neg)

    # ---- block the n (lane) axis ----------------------------------------------
    n_lane = _round_up(n, _LANE)
    steps = max(1, -(-n_lane // block_n))          # enough steps so bn <~ block_n
    if n_lane >= 2 * _LANE:
        steps = max(steps, 2)                      # v7x megacore: >= 2 grid steps
    bn = _round_up(-(-n_lane // steps), _LANE)     # balanced, 128-lane aligned
    n_pad = steps * bn
    if n_pad != n:
        pad = n_pad - n
        xk = jnp.pad(xk, ((0, 0), (0, pad)))       # zero cols -> zero outputs
        u = jnp.pad(u, ((0, 0), (0, pad)))

    kernel = functools.partial(
        _radius_kernel, targets_scaled=targets_scaled, use_neg=use_neg,
        scale=2.0 * coef, pi_scaled=math.pi * k)

    out_flat = pl.pallas_call(
        kernel,
        out_shape=jax.ShapeDtypeStruct((nr, n_pad), jnp.float32),
        grid=(steps,),
        in_specs=[
            pl.BlockSpec((P, bn), lambda i: (0, i)),   # x block
            pl.BlockSpec((P, bn), lambda i: (0, i)),   # pre-scaled angle block
        ],
        out_specs=pl.BlockSpec((nr, bn), lambda i: (0, i)),   # lane-dense output
        scratch_shapes=[pltpu.VMEM((P, bn), jnp.float32)],    # negated-angle buf
        compiler_params=pltpu.CompilerParams(
            dimension_semantics=("parallel",)),
    )(xk, u)

    # (nr, n_pad) -> (n, nr) -> (nb, nf, nz, nr) -> (nb, nf, nr, nz)
    out = out_flat[:, :n].T.reshape(nb, nf, nz, nr)
    return jnp.transpose(out, (0, 1, 3, 2))


def reference_jax(x, center_of_mass, nb_radiuses=24, sigma=0.1):
    """Pure-JAX reference mirroring the torch forward (for verification)."""
    nb, nf, nx, ny, nz = x.shape
    nr = nb_radiuses
    col = jnp.arange(ny, dtype=jnp.float32)[None, :]
    row = jnp.arange(nx, dtype=jnp.float32)[:, None]
    coef = 1.0 / (sigma * math.sqrt(2.0 * math.pi))

    cre = jnp.real(center_of_mass).astype(jnp.float32)[:, :, None, None, :]
    cim = jnp.imag(center_of_mass).astype(jnp.float32)[:, :, None, None, :]
    d_re = col[None, None, :, :, None] - cre          # (nb, nf, nx, ny, nz)
    d_im = row[None, None, :, :, None] - cim

    out = jnp.zeros((nb, nf, nr, nz), jnp.float32)
    for i in range(nr):
        angle = i * (2.0 * math.pi / nr) - math.pi
        if angle > 0.5 * math.pi:
            arg, t = jnp.arctan2(-d_im, -d_re), angle - math.pi
        elif angle < -0.5 * math.pi:
            arg, t = jnp.arctan2(-d_im, -d_re), angle + math.pi
        else:
            arg, t = jnp.arctan2(d_im, d_re), angle
        g = coef * jnp.exp(-(arg - t) ** 2 / (2.0 * sigma ** 2))
        val = jnp.sqrt(jnp.sum(g * x.astype(jnp.float32), axis=(2, 3)) * 2.0)
        out = out.at[:, :, i, :].set(val)
    return out


if __name__ == "__main__":
    nb, nf, nx, ny, nz = 2, 1, 16, 16, 4
    nr, sigma = 24, 0.1

    key = jax.random.PRNGKey(0)
    kx, kre, kim = jax.random.split(key, 3)

    x = jax.random.uniform(kx, (nb, nf, nx, ny, nz), dtype=jnp.float32)
    com_re = jax.random.uniform(kre, (nb, nf, nz), minval=4.0, maxval=12.0,
                                dtype=jnp.float32)
    com_im = jax.random.uniform(kim, (nb, nf, nz), minval=4.0, maxval=12.0,
                                dtype=jnp.float32)
    center_of_mass = jax.lax.complex(com_re, com_im)   # (nb, nf, nz) complex64

    out = gaussian_radius_extractor(x, center_of_mass, nb_radiuses=nr,
                                    sigma=sigma)
    out = jax.block_until_ready(out)

    ref = jax.block_until_ready(
        reference_jax(x, center_of_mass, nb_radiuses=nr, sigma=sigma))

    np.testing.assert_allclose(np.asarray(out), np.asarray(ref),
                               rtol=1e-3, atol=1e-3)
    assert out.shape == (nb, nf, nr, nz)
    print("KERNEL_OK")
</pallas_src>

<mosaic_0001>
module attributes {stable_mosaic.version = 11 : i64} {
  func.func @_radius_kernel(%arg0: i32, %arg1: memref<256x128xf32, #tpu.memory_space<vmem>>, %arg2: memref<256x128xf32, #tpu.memory_space<vmem>>, %arg3: memref<24x128xf32, #tpu.memory_space<vmem>>, %arg4: memref<256x128xf32, #tpu.memory_space<vmem>>) attributes {dimension_semantics = [#tpu.dimension_semantics<parallel>], iteration_bounds = array<i64: 1>, scalar_prefetch = 0 : i64, scratch_operands = 1 : i64, tpu.core_type = #tpu.core_type<tc>, window_params = [{transform_indices = @transform_0, window_bounds = array<i64: 256, 128>}, {transform_indices = @transform_1, window_bounds = array<i64: 256, 128>}, {transform_indices = @transform_2, window_bounds = array<i64: 24, 128>}]} {
    %c0 = arith.constant 0 : index
    %c0_0 = arith.constant 0 : index
    %0 = vector.load %arg2[%c0, %c0_0] : memref<256x128xf32, #tpu.memory_space<vmem>>, vector<256x128xf32>
    %cst = arith.constant 0.000000e+00 : f32
    %1 = vector.broadcast %cst : f32 to vector<256x128xf32>
    %2 = arith.cmpf ogt, %0, %1 : vector<256x128xf32>
    %cst_1 = arith.constant 22.2144146 : f32
    %3 = vector.broadcast %cst_1 : f32 to vector<256x128xf32>
    %4 = arith.subf %0, %3 : vector<256x128xf32>
    %cst_2 = arith.constant 22.2144146 : f32
    %5 = vector.broadcast %cst_2 : f32 to vector<256x128xf32>
    %6 = arith.addf %0, %5 : vector<256x128xf32>
    %7 = arith.select %2, %4, %6 : vector<256x128xi1>, vector<256x128xf32>
    %c0_3 = arith.constant 0 : index
    %c0_4 = arith.constant 0 : index
    %8 = vector.load %arg4[%c0_3, %c0_4] : memref<256x128xf32, #tpu.memory_space<vmem>>, vector<256x128xf32>
    tpu.vector_store %arg4[%c0_3, %c0_4], %7 {strides = array<i32>} : memref<256x128xf32, #tpu.memory_space<vmem>>, vector<256x128xf32>,
    %c0_5 = arith.constant 0 : index
    %c0_6 = arith.constant 0 : index
    %9 = vector.load %arg4[%c0_5, %c0_6] : memref<256x128xf32, #tpu.memory_space<vmem>>, vector<256x128xf32>
    %cst_7 = arith.constant 0.000000e+00 : f32
    %10 = vector.broadcast %cst_7 : f32 to vector<256x128xf32>
    %11 = arith.subf %9, %10 : vector<256x128xf32>
    %12 = arith.mulf %11, %11 : vector<256x128xf32>
    %cst_8 = arith.constant 0.000000e+00 : f32
    %13 = vector.broadcast %cst_8 : f32 to vector<256x128xf32>
    %14 = arith.subf %13, %12 : vector<256x128xf32>
    %15 = math.exp %14 : vector<256x128xf32>
    %c0_9 = arith.constant 0 : index
    %c0_10 = arith.constant 0 : index
    %16 = vector.load %arg1[%c0_9, %c0_10] : memref<256x128xf32, #tpu.memory_space<vmem>>, vector<256x128xf32>
    %17 = arith.mulf %15, %16 : vector<256x128xf32>
    %cst_11 = arith.constant dense<0.000000e+00> : vector<128xf32>
    %18 = vector.multi_reduction <add>, %17, %cst_11 [0] : vector<256x128xf32> to vector<128xf32>
    %cst_12 = arith.constant 7.97884559 : f32
    %19 = vector.broadcast %cst_12 : f32 to vector<128xf32>
    %20 = arith.mulf %18, %19 : vector<128xf32>
    %21 = math.sqrt %20 : vector<128xf32>
    %c0_13 = arith.constant 0 : index
    %c0_14 = arith.constant 0 : index
    %22 = vector.load %arg3[%c0_13, %c0_14] : memref<24x128xf32, #tpu.memory_space<vmem>>, vector<1x128xf32>
    %23 = vector.shape_cast %22 : vector<1x128xf32> to vector<128xf32>
    %24 = vector.shape_cast %21 : vector<128xf32> to vector<1x128xf32>
    tpu.vector_store %arg3[%c0_13, %c0_14], %24 {strides = array<i32>} : memref<24x128xf32, #tpu.memory_space<vmem>>, vector<1x128xf32>,
    %c0_15 = arith.constant 0 : index
    %c0_16 = arith.constant 0 : index
    %25 = vector.load %arg4[%c0_15, %c0_16] : memref<256x128xf32, #tpu.memory_space<vmem>>, vector<256x128xf32>
    %cst_17 = arith.constant 1.85120118 : f32
    %26 = vector.broadcast %cst_17 : f32 to vector<256x128xf32>
    %27 = arith.subf %25, %26 : vector<256x128xf32>
    %28 = arith.mulf %27, %27 : vector<256x128xf32>
    %cst_18 = arith.constant 0.000000e+00 : f32
    %29 = vector.broadcast %cst_18 : f32 to vector<256x128xf32>
    %30 = arith.subf %29, %28 : vector<256x128xf32>
    %31 = math.exp %30 : vector<256x128xf32>
    %c0_19 = arith.constant 0 : index
    %c0_20 = arith.constant 0 : index
    %32 = vector.load %arg1[%c0_19, %c0_20] : memref<256x128xf32, #tpu.memory_space<vmem>>, vector<256x128xf32>
    %33 = arith.mulf %31, %32 : vector<256x128xf32>
    %cst_21 = arith.constant dense<0.000000e+00> : vector<128xf32>
    %34 = vector.multi_reduction <add>, %33, %cst_21 [0] : vector<256x128xf32> to vector<128xf32>
    %cst_22 = arith.constant 7.97884559 : f32
    %35 = vector.broadcast %cst_22 : f32 to vector<128xf32>
    %36 = arith.mulf %34, %35 : vector<128xf32>
    %37 = math.sqrt %36 : vector<128xf32>
    %c1 = arith.constant 1 : index
    %c0_23 = arith.constant 0 : index
    %38 = vector.load %arg3[%c1, %c0_23] : memref<24x128xf32, #tpu.memory_space<vmem>>, vector<1x128xf32>
    %39 = vector.shape_cast %38 : vector<1x128xf32> to vector<128xf32>
    %40 = vector.shape_cast %37 : vector<128xf32> to vector<1x128xf32>
    tpu.vector_store %arg3[%c1, %c0_23], %40 {strides = array<i32>} : memref<24x128xf32, #tpu.memory_space<vmem>>, vector<1x128xf32>,
    %c0_24 = arith.constant 0 : index
    %c0_25 = arith.constant 0 : index
    %41 = vector.load %arg4[%c0_24, %c0_25] : memref<256x128xf32, #tpu.memory_space<vmem>>, vector<256x128xf32>
    %cst_26 = arith.constant 3.70240235 : f32
    %42 = vector.broadcast %cst_26 : f32 to vector<256x128xf32>
    %43 = arith.subf %41, %42 : vector<256x128xf32>
    %44 = arith.mulf %43, %43 : vector<256x128xf32>
    %cst_27 = arith.constant 0.000000e+00 : f32
    %45 = vector.broadcast %cst_27 : f32 to vector<256x128xf32>
    %46 = arith.subf %45, %44 : vector<256x128xf32>
    %47 = math.exp %46 : vector<256x128xf32>
    %c0_28 = arith.constant 0 : index
    %c0_29 = arith.constant 0 : index
    %48 = vector.load %arg1[%c0_28, %c0_29] : memref<256x128xf32, #tpu.memory_space<vmem>>, vector<256x128xf32>
    %49 = arith.mulf %47, %48 : vector<256x128xf32>
    %cst_30 = arith.constant dense<0.000000e+00> : vector<128xf32>
    %50 = vector.multi_reduction <add>, %49, %cst_30 [0] : vector<256x128xf32> to vector<128xf32>
    %cst_31 = arith.constant 7.97884559 : f32
    %51 = vector.broadcast %cst_31 : f32 to vector<128xf32>
    %52 = arith.mulf %50, %51 : vector<128xf32>
    %53 = math.sqrt %52 : vector<128xf32>
    %c2 = arith.constant 2 : index
    %c0_32 = arith.constant 0 : index
    %54 = vector.load %arg3[%c2, %c0_32] : memref<24x128xf32, #tpu.memory_space<vmem>>, vector<1x128xf32>
    %55 = vector.shape_cast %54 : vector<1x128xf32> to vector<128xf32>
    %56 = vector.shape_cast %53 : vector<128xf32> to vector<1x128xf32>
    tpu.vector_store %arg3[%c2, %c0_32], %56 {strides = array<i32>} : memref<24x128xf32, #tpu.memory_space<vmem>>, vector<1x128xf32>,
    %c0_33 = arith.constant 0 : index
    %c0_34 = arith.constant 0 : index
    %57 = vector.load %arg4[%c0_33, %c0_34] : memref<256x128xf32, #tpu.memory_space<vmem>>, vector<256x128xf32>
    %cst_35 = arith.constant 5.55360365 : f32
    %58 = vector.broadcast %cst_35 : f32 to vector<256x128xf32>
    %59 = arith.subf %57, %58 : vector<256x128xf32>
    %60 = arith.mulf %59, %59 : vector<256x128xf32>
    %cst_36 = arith.constant 0.000000e+00 : f32
    %61 = vector.broadcast %cst_36 : f32 to vector<256x128xf32>
    %62 = arith.subf %61, %60 : vector<256x128xf32>
    %63 = math.exp %62 : vector<256x128xf32>
    %c0_37 = arith.constant 0 : index
    %c0_38 = arith.constant 0 : index
    %64 = vector.load %arg1[%c0_37, %c0_38] : memref<256x128xf32, #tpu.memory_space<vmem>>, vector<256x128xf32>
    %65 = arith.mulf %63, %64 : vector<256x128xf32>
    %cst_39 = arith.constant dense<0.000000e+00> : vector<128xf32>
    %66 = vector.multi_reduction <add>, %65, %cst_39 [0] : vector<256x128xf32> to vector<128xf32>
    %cst_40 = arith.constant 7.97884559 : f32
    %67 = vector.broadcast %cst_40 : f32 to vector<128xf32>
    %68 = arith.mulf %66, %67 : vector<128xf32>
    %69 = math.sqrt %68 : vector<128xf32>
    %c3 = arith.constant 3 : index
    %c0_41 = arith.constant 0 : index
    %70 = vector.load %arg3[%c3, %c0_41] : memref<24x128xf32, #tpu.memory_space<vmem>>, vector<1x128xf32>
    %71 = vector.shape_cast %70 : vector<1x128xf32> to vector<128xf32>
    %72 = vector.shape_cast %69 : vector<128xf32> to vector<1x128xf32>
    tpu.vector_store %arg3[%c3, %c0_41], %72 {strides = array<i32>} : memref<24x128xf32, #tpu.memory_space<vmem>>, vector<1x128xf32>,
    %c0_42 = arith.constant 0 : index
    %c0_43 = arith.constant 0 : index
    %73 = vector.load %arg4[%c0_42, %c0_43] : memref<256x128xf32, #tpu.memory_space<vmem>>, vector<256x128xf32>
    %cst_44 = arith.constant 7.40480471 : f32
    %74 = vector.broadcast %cst_44 : f32 to vector<256x128xf32>
    %75 = arith.subf %73, %74 : vector<256x128xf32>
    %76 = arith.mulf %75, %75 : vector<256x128xf32>
    %cst_45 = arith.constant 0.000000e+00 : f32
    %77 = vector.broadcast %cst_45 : f32 to vector<256x128xf32>
    %78 = arith.subf %77, %76 : vector<256x128xf32>
    %79 = math.exp %78 : vector<256x128xf32>
    %c0_46 = arith.constant 0 : index
    %c0_47 = arith.constant 0 : index
    %80 = vector.load %arg1[%c0_46, %c0_47] : memref<256x128xf32, #tpu.memory_space<vmem>>, vector<256x128xf32>
    %81 = arith.mulf %79, %80 : vector<256x128xf32>
    %cst_48 = arith.constant dense<0.000000e+00> : vector<128xf32>
    %82 = vector.multi_reduction <add>, %81, %cst_48 [0] : vector<256x128xf32> to vector<128xf32>
    %cst_49 = arith.constant 7.97884559 : f32
    %83 = vector.broadcast %cst_49 : f32 to vector<128xf32>
    %84 = arith.mulf %82, %83 : vector<128xf32>
    %85 = math.sqrt %84 : vector<128xf32>
    %c4 = arith.constant 4 : index
    %c0_50 = arith.constant 0 : index
    %86 = vector.load %arg3[%c4, %c0_50] : memref<24x128xf32, #tpu.memory_space<vmem>>, vector<1x128xf32>
    %87 = vector.shape_cast %86 : vector<1x128xf32> to vector<128xf32>
    %88 = vector.shape_cast %85 : vector<128xf32> to vector<1x128xf32>
    tpu.vector_store %arg3[%c4, %c0_50], %88 {strides = array<i32>} : memref<24x128xf32, #tpu.memory_space<vmem>>, vector<1x128xf32>,
    %c0_51 = arith.constant 0 : index
    %c0_52 = arith.constant 0 : index
    %89 = vector.load %arg4[%c0_51, %c0_52] : memref<256x128xf32, #tpu.memory_space<vmem>>, vector<256x128xf32>
    %cst_53 = arith.constant 9.25600624 : f32
    %90 = vector.broadcast %cst_53 : f32 to vector<256x128xf32>
    %91 = arith.subf %89, %90 : vector<256x128xf32>
    %92 = arith.mulf %91, %91 : vector<256x128xf32>
    %cst_54 = arith.constant 0.000000e+00 : f32
    %93 = vector.broadcast %cst_54 : f32 to vector<256x128xf32>
    %94 = arith.subf %93, %92 : vector<256x128xf32>
    %95 = math.exp %94 : vector<256x128xf32>
    %c0_55 = arith.constant 0 : index
    %c0_56 = arith.constant 0 : index
    %96 = vector.load %arg1[%c0_55, %c0_56] : memref<256x128xf32, #tpu.memory_space<vmem>>, vector<256x128xf32>
    %97 = arith.mulf %95, %96 : vector<256x128xf32>
    %cst_57 = arith.constant dense<0.000000e+00> : vector<128xf32>
    %98 = vector.multi_reduction <add>, %97, %cst_57 [0] : vector<256x128xf32> to vector<128xf32>
    %cst_58 = arith.constant 7.97884559 : f32
    %99 = vector.broadcast %cst_58 : f32 to vector<128xf32>
    %100 = arith.mulf %98, %99 : vector<128xf32>
    %101 = math.sqrt %100 : vector<128xf32>
    %c5 = arith.constant 5 : index
    %c0_59 = arith.constant 0 : index
    %102 = vector.load %arg3[%c5, %c0_59] : memref<24x128xf32, #tpu.memory_space<vmem>>, vector<1x128xf32>
    %103 = vector.shape_cast %102 : vector<1x128xf32> to vector<128xf32>
    %104 = vector.shape_cast %101 : vector<128xf32> to vector<1x128xf32>
    tpu.vector_store %arg3[%c5, %c0_59], %104 {strides = array<i32>} : memref<24x128xf32, #tpu.memory_space<vmem>>, vector<1x128xf32>,
    %c0_60 = arith.constant 0 : index
    %c0_61 = arith.constant 0 : index
    %105 = vector.load %arg2[%c0_60, %c0_61] : memref<256x128xf32, #tpu.memory_space<vmem>>, vector<256x128xf32>
    %cst_62 = arith.constant -11.1072073 : f32
    %106 = vector.broadcast %cst_62 : f32 to vector<256x128xf32>
    %107 = arith.subf %105, %106 : vector<256x128xf32>
    %108 = arith.mulf %107, %107 : vector<256x128xf32>
    %cst_63 = arith.constant 0.000000e+00 : f32
    %109 = vector.broadcast %cst_63 : f32 to vector<256x128xf32>
    %110 = arith.subf %109, %108 : vector<256x128xf32>
    %111 = math.exp %110 : vector<256x128xf32>
    %c0_64 = arith.constant 0 : index
    %c0_65 = arith.constant 0 : index
    %112 = vector.load %arg1[%c0_64, %c0_65] : memref<256x128xf32, #tpu.memory_space<vmem>>, vector<256x128xf32>
    %113 = arith.mulf %111, %112 : vector<256x128xf32>
    %cst_66 = arith.constant dense<0.000000e+00> : vector<128xf32>
    %114 = vector.multi_reduction <add>, %113, %cst_66 [0] : vector<256x128xf32> to vector<128xf32>
    %cst_67 = arith.constant 7.97884559 : f32
    %115 = vector.broadcast %cst_67 : f32 to vector<128xf32>
    %116 = arith.mulf %114, %115 : vector<128xf32>
    %117 = math.sqrt %116 : vector<128xf32>
    %c6 = arith.constant 6 : index
    %c0_68 = arith.constant 0 : index
    %118 = vector.load %arg3[%c6, %c0_68] : memref<24x128xf32, #tpu.memory_space<vmem>>, vector<1x128xf32>
    %119 = vector.shape_cast %118 : vector<1x128xf32> to vector<128xf32>
    %120 = vector.shape_cast %117 : vector<128xf32> to vector<1x128xf32>
    tpu.vector_store %arg3[%c6, %c0_68], %120 {strides = array<i32>} : memref<24x128xf32, #tpu.memory_space<vmem>>, vector<1x128xf32>,
    %c0_69 = arith.constant 0 : index
    %c0_70 = arith.constant 0 : index
    %121 = vector.load %arg2[%c0_69, %c0_70] : memref<256x128xf32, #tpu.memory_space<vmem>>, vector<256x128xf32>
    %cst_71 = arith.constant -9.25600624 : f32
    %122 = vector.broadcast %cst_71 : f32 to vector<256x128xf32>
    %123 = arith.subf %121, %122 : vector<256x128xf32>
    %124 = arith.mulf %123, %123 : vector<256x128xf32>
    %cst_72 = arith.constant 0.000000e+00 : f32
    %125 = vector.broadcast %cst_72 : f32 to vector<256x128xf32>
    %126 = arith.subf %125, %124 : vector<256x128xf32>
    %127 = math.exp %126 : vector<256x128xf32>
    %c0_73 = arith.constant 0 : index
    %c0_74 = arith.constant 0 : index
    %128 = vector.load %arg1[%c0_73, %c0_74] : memref<256x128xf32, #tpu.memory_space<vmem>>, vector<256x128xf32>
    %129 = arith.mulf %127, %128 : vector<256x128xf32>
    %cst_75 = arith.constant dense<0.000000e+00> : vector<128xf32>
    %130 = vector.multi_reduction <add>, %129, %cst_75 [0] : vector<256x128xf32> to vector<128xf32>
    %cst_76 = arith.constant 7.97884559 : f32
    %131 = vector.broadcast %cst_76 : f32 to vector<128xf32>
    %132 = arith.mulf %130, %131 : vector<128xf32>
    %133 = math.sqrt %132 : vector<128xf32>
    %c7 = arith.constant 7 : index
    %c0_77 = arith.constant 0 : index
    %134 = vector.load %arg3[%c7, %c0_77] : memref<24x128xf32, #tpu.memory_space<vmem>>, vector<1x128xf32>
    %135 = vector.shape_cast %134 : vector<1x128xf32> to vector<128xf32>
    %136 = vector.shape_cast %133 : vector<128xf32> to vector<1x128xf32>
    tpu.vector_store %arg3[%c7, %c0_77], %136 {strides = array<i32>} : memref<24x128xf32, #tpu.memory_space<vmem>>, vector<1x128xf32>,
    %c0_78 = arith.constant 0 : index
    %c0_79 = arith.constant 0 : index
    %137 = vector.load %arg2[%c0_78, %c0_79] : memref<256x128xf32, #tpu.memory_space<vmem>>, vector<256x128xf32>
    %cst_80 = arith.constant -7.40480471 : f32
    %138 = vector.broadcast %cst_80 : f32 to vector<256x128xf32>
    %139 = arith.subf %137, %138 : vector<256x128xf32>
    %140 = arith.mulf %139, %139 : vector<256x128xf32>
    %cst_81 = arith.constant 0.000000e+00 : f32
    %141 = vector.broadcast %cst_81 : f32 to vector<256x128xf32>
    %142 = arith.subf %141, %140 : vector<256x128xf32>
    %143 = math.exp %142 : vector<256x128xf32>
    %c0_82 = arith.constant 0 : index
    %c0_83 = arith.constant 0 : index
    %144 = vector.load %arg1[%c0_82, %c0_83] : memref<256x128xf32, #tpu.memory_space<vmem>>, vector<256x128xf32>
    %145 = arith.mulf %143, %144 : vector<256x128xf32>
    %cst_84 = arith.constant dense<0.000000e+00> : vector<128xf32>
    %146 = vector.multi_reduction <add>, %145, %cst_84 [0] : vector<256x128xf32> to vector<128xf32>
    %cst_85 = arith.constant 7.97884559 : f32
    %147 = vector.broadcast %cst_85 : f32 to vector<128xf32>
    %148 = arith.mulf %146, %147 : vector<128xf32>
    %149 = math.sqrt %148 : vector<128xf32>
    %c8 = arith.constant 8 : index
    %c0_86 = arith.constant 0 : index
    %150 = vector.load %arg3[%c8, %c0_86] : memref<24x128xf32, #tpu.memory_space<vmem>>, vector<1x128xf32>
    %151 = vector.shape_cast %150 : vector<1x128xf32> to vector<128xf32>
    %152 = vector.shape_cast %149 : vector<128xf32> to vector<1x128xf32>
    tpu.vector_store %arg3[%c8, %c0_86], %152 {strides = array<i32>} : memref<24x128xf32, #tpu.memory_space<vmem>>, vector<1x128xf32>,
    %c0_87 = arith.constant 0 : index
    %c0_88 = arith.constant 0 : index
    %153 = vector.load %arg2[%c0_87, %c0_88] : memref<256x128xf32, #tpu.memory_space<vmem>>, vector<256x128xf32>
    %cst_89 = arith.constant -5.55360365 : f32
    %154 = vector.broadcast %cst_89 : f32 to vector<256x128xf32>
    %155 = arith.subf %153, %154 : vector<256x128xf32>
    %156 = arith.mulf %155, %155 : vector<256x128xf32>
    %cst_90 = arith.constant 0.000000e+00 : f32
    %157 = vector.broadcast %cst_90 : f32 to vector<256x128xf32>
    %158 = arith.subf %157, %156 : vector<256x128xf32>
    %159 = math.exp %158 : vector<256x128xf32>
    %c0_91 = arith.constant 0 : index
    %c0_92 = arith.constant 0 : index
    %160 = vector.load %arg1[%c0_91, %c0_92] : memref<256x128xf32, #tpu.memory_space<vmem>>, vector<256x128xf32>
    %161 = arith.mulf %159, %160 : vector<256x128xf32>
    %cst_93 = arith.constant dense<0.000000e+00> : vector<128xf32>
    %162 = vector.multi_reduction <add>, %161, %cst_93 [0] : vector<256x128xf32> to vector<128xf32>
    %cst_94 = arith.constant 7.97884559 : f32
    %163 = vector.broadcast %cst_94 : f32 to vector<128xf32>
    %164 = arith.mulf %162, %163 : vector<128xf32>
    %165 = math.sqrt %164 : vector<128xf32>
    %c9 = arith.constant 9 : index
    %c0_95 = arith.constant 0 : index
    %166 = vector.load %arg3[%c9, %c0_95] : memref<24x128xf32, #tpu.memory_space<vmem>>, vector<1x128xf32>
    %167 = vector.shape_cast %166 : vector<1x128xf32> to vector<128xf32>
    %168 = vector.shape_cast %165 : vector<128xf32> to vector<1x128xf32>
    tpu.vector_store %arg3[%c9, %c0_95], %168 {strides = array<i32>} : memref<24x128xf32, #tpu.memory_space<vmem>>, vector<1x128xf32>,
    %c0_96 = arith.constant 0 : index
    %c0_97 = arith.constant 0 : index
    %169 = vector.load %arg2[%c0_96, %c0_97] : memref<256x128xf32, #tpu.memory_space<vmem>>, vector<256x128xf32>
    %cst_98 = arith.constant -3.70240235 : f32
    %170 = vector.broadcast %cst_98 : f32 to vector<256x128xf32>
    %171 = arith.subf %169, %170 : vector<256x128xf32>
    %172 = arith.mulf %171, %171 : vector<256x128xf32>
    %cst_99 = arith.constant 0.000000e+00 : f32
    %173 = vector.broadcast %cst_99 : f32 to vector<256x128xf32>
    %174 = arith.subf %173, %172 : vector<256x128xf32>
    %175 = math.exp %174 : vector<256x128xf32>
    %c0_100 = arith.constant 0 : index
    %c0_101 = arith.constant 0 : index
    %176 = vector.load %arg1[%c0_100, %c0_101] : memref<256x128xf32, #tpu.memory_space<vmem>>, vector<256x128xf32>
    %177 = arith.mulf %175, %176 : vector<256x128xf32>
    %cst_102 = arith.constant dense<0.000000e+00> : vector<128xf32>
    %178 = vector.multi_reduction <add>, %177, %cst_102 [0] : vector<256x128xf32> to vector<128xf32>
    %cst_103 = arith.constant 7.97884559 : f32
    %179 = vector.broadcast %cst_103 : f32 to vector<128xf32>
    %180 = arith.mulf %178, %179 : vector<128xf32>
    %181 = math.sqrt %180 : vector<128xf32>
    %c10 = arith.constant 10 : index
    %c0_104 = arith.constant 0 : index
    %182 = vector.load %arg3[%c10, %c0_104] : memref<24x128xf32, #tpu.memory_space<vmem>>, vector<1x128xf32>
    %183 = vector.shape_cast %182 : vector<1x128xf32> to vector<128xf32>
    %184 = vector.shape_cast %181 : vector<128xf32> to vector<1x128xf32>
    tpu.vector_store %arg3[%c10, %c0_104], %184 {strides = array<i32>} : memref<24x128xf32, #tpu.memory_space<vmem>>, vector<1x128xf32>,
    %c0_105 = arith.constant 0 : index
    %c0_106 = arith.constant 0 : index
    %185 = vector.load %arg2[%c0_105, %c0_106] : memref<256x128xf32, #tpu.memory_space<vmem>>, vector<256x128xf32>
    %cst_107 = arith.constant -1.85120118 : f32
    %186 = vector.broadcast %cst_107 : f32 to vector<256x128xf32>
    %187 = arith.subf %185, %186 : vector<256x128xf32>
    %188 = arith.mulf %187, %187 : vector<256x128xf32>
    %cst_108 = arith.constant 0.000000e+00 : f32
    %189 = vector.broadcast %cst_108 : f32 to vector<256x128xf32>
    %190 = arith.subf %189, %188 : vector<256x128xf32>
    %191 = math.exp %190 : vector<256x128xf32>
    %c0_109 = arith.constant 0 : index
    %c0_110 = arith.constant 0 : index
    %192 = vector.load %arg1[%c0_109, %c0_110] : memref<256x128xf32, #tpu.memory_space<vmem>>, vector<256x128xf32>
    %193 = arith.mulf %191, %192 : vector<256x128xf32>
    %cst_111 = arith.constant dense<0.000000e+00> : vector<128xf32>
    %194 = vector.multi_reduction <add>, %193, %cst_111 [0] : vector<256x128xf32> to vector<128xf32>
    %cst_112 = arith.constant 7.97884559 : f32
    %195 = vector.broadcast %cst_112 : f32 to vector<128xf32>
    %196 = arith.mulf %194, %195 : vector<128xf32>
    %197 = math.sqrt %196 : vector<128xf32>
    %c11 = arith.constant 11 : index
    %c0_113 = arith.constant 0 : index
    %198 = vector.load %arg3[%c11, %c0_113] : memref<24x128xf32, #tpu.memory_space<vmem>>, vector<1x128xf32>
    %199 = vector.shape_cast %198 : vector<1x128xf32> to vector<128xf32>
    %200 = vector.shape_cast %197 : vector<128xf32> to vector<1x128xf32>
    tpu.vector_store %arg3[%c11, %c0_113], %200 {strides = array<i32>} : memref<24x128xf32, #tpu.memory_space<vmem>>, vector<1x128xf32>,
    %c0_114 = arith.constant 0 : index
    %c0_115 = arith.constant 0 : index
    %201 = vector.load %arg2[%c0_114, %c0_115] : memref<256x128xf32, #tpu.memory_space<vmem>>, vector<256x128xf32>
    %cst_116 = arith.constant 0.000000e+00 : f32
    %202 = vector.broadcast %cst_116 : f32 to vector<256x128xf32>
    %203 = arith.subf %201, %202 : vector<256x128xf32>
    %204 = arith.mulf %203, %203 : vector<256x128xf32>
    %cst_117 = arith.constant 0.000000e+00 : f32
    %205 = vector.broadcast %cst_117 : f32 to vector<256x128xf32>
    %206 = arith.subf %205, %204 : vector<256x128xf32>
    %207 = math.exp %206 : vector<256x128xf32>
    %c0_118 = arith.constant 0 : index
    %c0_119 = arith.constant 0 : index
    %208 = vector.load %arg1[%c0_118, %c0_119] : memref<256x128xf32, #tpu.memory_space<vmem>>, vector<256x128xf32>
    %209 = arith.mulf %207, %208 : vector<256x128xf32>
    %cst_120 = arith.constant dense<0.000000e+00> : vector<128xf32>
    %210 = vector.multi_reduction <add>, %209, %cst_120 [0] : vector<256x128xf32> to vector<128xf32>
    %cst_121 = arith.constant 7.97884559 : f32
    %211 = vector.broadcast %cst_121 : f32 to vector<128xf32>
    %212 = arith.mulf %210, %211 : vector<128xf32>
    %213 = math.sqrt %212 : vector<128xf32>
    %c12 = arith.constant 12 : index
    %c0_122 = arith.constant 0 : index
    %214 = vector.load %arg3[%c12, %c0_122] : memref<24x128xf32, #tpu.memory_space<vmem>>, vector<1x128xf32>
    %215 = vector.shape_cast %214 : vector<1x128xf32> to vector<128xf32>
    %216 = vector.shape_cast %213 : vector<128xf32> to vector<1x128xf32>
    tpu.vector_store %arg3[%c12, %c0_122], %216 {strides = array<i32>} : memref<24x128xf32, #tpu.memory_space<vmem>>, vector<1x128xf32>,
    %c0_123 = arith.constant 0 : index
    %c0_124 = arith.constant 0 : index
    %217 = vector.load %arg2[%c0_123, %c0_124] : memref<256x128xf32, #tpu.memory_space<vmem>>, vector<256x128xf32>
    %cst_125 = arith.constant 1.85120118 : f32
    %218 = vector.broadcast %cst_125 : f32 to vector<256x128xf32>
    %219 = arith.subf %217, %218 : vector<256x128xf32>
    %220 = arith.mulf %219, %219 : vector<256x128xf32>
    %cst_126 = arith.constant 0.000000e+00 : f32
    %221 = vector.broadcast %cst_126 : f32 to vector<256x128xf32>
    %222 = arith.subf %221, %220 : vector<256x128xf32>
    %223 = math.exp %222 : vector<256x128xf32>
    %c0_127 = arith.constant 0 : index
    %c0_128 = arith.constant 0 : index
    %224 = vector.load %arg1[%c0_127, %c0_128] : memref<256x128xf32, #tpu.memory_space<vmem>>, vector<256x128xf32>
    %225 = arith.mulf %223, %224 : vector<256x128xf32>
    %cst_129 = arith.constant dense<0.000000e+00> : vector<128xf32>
    %226 = vector.multi_reduction <add>, %225, %cst_129 [0] : vector<256x128xf32> to vector<128xf32>
    %cst_130 = arith.constant 7.97884559 : f32
    %227 = vector.broadcast %cst_130 : f32 to vector<128xf32>
    %228 = arith.mulf %226, %227 : vector<128xf32>
    %229 = math.sqrt %228 : vector<128xf32>
    %c13 = arith.constant 13 : index
    %c0_131 = arith.constant 0 : index
    %230 = vector.load %arg3[%c13, %c0_131] : memref<24x128xf32, #tpu.memory_space<vmem>>, vector<1x128xf32>
    %231 = vector.shape_cast %230 : vector<1x128xf32> to vector<128xf32>
    %232 = vector.shape_cast %229 : vector<128xf32> to vector<1x128xf32>
    tpu.vector_store %arg3[%c13, %c0_131], %232 {strides = array<i32>} : memref<24x128xf32, #tpu.memory_space<vmem>>, vector<1x128xf32>,
    %c0_132 = arith.constant 0 : index
    %c0_133 = arith.constant 0 : index
    %233 = vector.load %arg2[%c0_132, %c0_133] : memref<256x128xf32, #tpu.memory_space<vmem>>, vector<256x128xf32>
    %cst_134 = arith.constant 3.70240235 : f32
    %234 = vector.broadcast %cst_134 : f32 to vector<256x128xf32>
    %235 = arith.subf %233, %234 : vector<256x128xf32>
    %236 = arith.mulf %235, %235 : vector<256x128xf32>
    %cst_135 = arith.constant 0.000000e+00 : f32
    %237 = vector.broadcast %cst_135 : f32 to vector<256x128xf32>
    %238 = arith.subf %237, %236 : vector<256x128xf32>
    %239 = math.exp %238 : vector<256x128xf32>
    %c0_136 = arith.constant 0 : index
    %c0_137 = arith.constant 0 : index
    %240 = vector.load %arg1[%c0_136, %c0_137] : memref<256x128xf32, #tpu.memory_space<vmem>>, vector<256x128xf32>
    %241 = arith.mulf %239, %240 : vector<256x128xf32>
    %cst_138 = arith.constant dense<0.000000e+00> : vector<128xf32>
    %242 = vector.multi_reduction <add>, %241, %cst_138 [0] : vector<256x128xf32> to vector<128xf32>
    %cst_139 = arith.constant 7.97884559 : f32
    %243 = vector.broadcast %cst_139 : f32 to vector<128xf32>
    %244 = arith.mulf %242, %243 : vector<128xf32>
    %245 = math.sqrt %244 : vector<128xf32>
    %c14 = arith.constant 14 : index
    %c0_140 = arith.constant 0 : index
    %246 = vector.load %arg3[%c14, %c0_140] : memref<24x128xf32, #tpu.memory_space<vmem>>, vector<1x128xf32>
    %247 = vector.shape_cast %246 : vector<1x128xf32> to vector<128xf32>
    %248 = vector.shape_cast %245 : vector<128xf32> to vector<1x128xf32>
    tpu.vector_store %arg3[%c14, %c0_140], %248 {strides = array<i32>} : memref<24x128xf32, #tpu.memory_space<vmem>>, vector<1x128xf32>,
    %c0_141 = arith.constant 0 : index
    %c0_142 = arith.constant 0 : index
    %249 = vector.load %arg2[%c0_141, %c0_142] : memref<256x128xf32, #tpu.memory_space<vmem>>, vector<256x128xf32>
    %cst_143 = arith.constant 5.55360365 : f32
    %250 = vector.broadcast %cst_143 : f32 to vector<256x128xf32>
    %251 = arith.subf %249, %250 : vector<256x128xf32>
    %252 = arith.mulf %251, %251 : vector<256x128xf32>
    %cst_144 = arith.constant 0.000000e+00 : f32
    %253 = vector.broadcast %cst_144 : f32 to vector<256x128xf32>
    %254 = arith.subf %253, %252 : vector<256x128xf32>
    %255 = math.exp %254 : vector<256x128xf32>
    %c0_145 = arith.constant 0 : index
    %c0_146 = arith.constant 0 : index
    %256 = vector.load %arg1[%c0_145, %c0_146] : memref<256x128xf32, #tpu.memory_space<vmem>>, vector<256x128xf32>
    %257 = arith.mulf %255, %256 : vector<256x128xf32>
    %cst_147 = arith.constant dense<0.000000e+00> : vector<128xf32>
    %258 = vector.multi_reduction <add>, %257, %cst_147 [0] : vector<256x128xf32> to vector<128xf32>
    %cst_148 = arith.constant 7.97884559 : f32
    %259 = vector.broadcast %cst_148 : f32 to vector<128xf32>
    %260 = arith.mulf %258, %259 : vector<128xf32>
    %261 = math.sqrt %260 : vector<128xf32>
    %c15 = arith.constant 15 : index
    %c0_149 = arith.constant 0 : index
    %262 = vector.load %arg3[%c15, %c0_149] : memref<24x128xf32, #tpu.memory_space<vmem>>, vector<1x128xf32>
    %263 = vector.shape_cast %262 : vector<1x128xf32> to vector<128xf32>
    %264 = vector.shape_cast %261 : vector<128xf32> to vector<1x128xf32>
    tpu.vector_store %arg3[%c15, %c0_149], %264 {strides = array<i32>} : memref<24x128xf32, #tpu.memory_space<vmem>>, vector<1x128xf32>,
    %c0_150 = arith.constant 0 : index
    %c0_151 = arith.constant 0 : index
    %265 = vector.load %arg2[%c0_150, %c0_151] : memref<256x128xf32, #tpu.memory_space<vmem>>, vector<256x128xf32>
    %cst_152 = arith.constant 7.40480471 : f32
    %266 = vector.broadcast %cst_152 : f32 to vector<256x128xf32>
    %267 = arith.subf %265, %266 : vector<256x128xf32>
    %268 = arith.mulf %267, %267 : vector<256x128xf32>
    %cst_153 = arith.constant 0.000000e+00 : f32
    %269 = vector.broadcast %cst_153 : f32 to vector<256x128xf32>
    %270 = arith.subf %269, %268 : vector<256x128xf32>
    %271 = math.exp %270 : vector<256x128xf32>
    %c0_154 = arith.constant 0 : index
    %c0_155 = arith.constant 0 : index
    %272 = vector.load %arg1[%c0_154, %c0_155] : memref<256x128xf32, #tpu.memory_space<vmem>>, vector<256x128xf32>
    %273 = arith.mulf %271, %272 : vector<256x128xf32>
    %cst_156 = arith.constant dense<0.000000e+00> : vector<128xf32>
    %274 = vector.multi_reduction <add>, %273, %cst_156 [0] : vector<256x128xf32> to vector<128xf32>
    %cst_157 = arith.constant 7.97884559 : f32
    %275 = vector.broadcast %cst_157 : f32 to vector<128xf32>
    %276 = arith.mulf %274, %275 : vector<128xf32>
    %277 = math.sqrt %276 : vector<128xf32>
    %c16 = arith.constant 16 : index
    %c0_158 = arith.constant 0 : index
    %278 = vector.load %arg3[%c16, %c0_158] : memref<24x128xf32, #tpu.memory_space<vmem>>, vector<1x128xf32>
    %279 = vector.shape_cast %278 : vector<1x128xf32> to vector<128xf32>
    %280 = vector.shape_cast %277 : vector<128xf32> to vector<1x128xf32>
    tpu.vector_store %arg3[%c16, %c0_158], %280 {strides = array<i32>} : memref<24x128xf32, #tpu.memory_space<vmem>>, vector<1x128xf32>,
    %c0_159 = arith.constant 0 : index
    %c0_160 = arith.constant 0 : index
    %281 = vector.load %arg2[%c0_159, %c0_160] : memref<256x128xf32, #tpu.memory_space<vmem>>, vector<256x128xf32>
    %cst_161 = arith.constant 9.25600624 : f32
    %282 = vector.broadcast %cst_161 : f32 to vector<256x128xf32>
    %283 = arith.subf %281, %282 : vector<256x128xf32>
    %284 = arith.mulf %283, %283 : vector<256x128xf32>
    %cst_162 = arith.constant 0.000000e+00 : f32
    %285 = vector.broadcast %cst_162 : f32 to vector<256x128xf32>
    %286 = arith.subf %285, %284 : vector<256x128xf32>
    %287 = math.exp %286 : vector<256x128xf32>
    %c0_163 = arith.constant 0 : index
    %c0_164 = arith.constant 0 : index
    %288 = vector.load %arg1[%c0_163, %c0_164] : memref<256x128xf32, #tpu.memory_space<vmem>>, vector<256x128xf32>
    %289 = arith.mulf %287, %288 : vector<256x128xf32>
    %cst_165 = arith.constant dense<0.000000e+00> : vector<128xf32>
    %290 = vector.multi_reduction <add>, %289, %cst_165 [0] : vector<256x128xf32> to vector<128xf32>
    %cst_166 = arith.constant 7.97884559 : f32
    %291 = vector.broadcast %cst_166 : f32 to vector<128xf32>
    %292 = arith.mulf %290, %291 : vector<128xf32>
    %293 = math.sqrt %292 : vector<128xf32>
    %c17 = arith.constant 17 : index
    %c0_167 = arith.constant 0 : index
    %294 = vector.load %arg3[%c17, %c0_167] : memref<24x128xf32, #tpu.memory_space<vmem>>, vector<1x128xf32>
    %295 = vector.shape_cast %294 : vector<1x128xf32> to vector<128xf32>
    %296 = vector.shape_cast %293 : vector<128xf32> to vector<1x128xf32>
    tpu.vector_store %arg3[%c17, %c0_167], %296 {strides = array<i32>} : memref<24x128xf32, #tpu.memory_space<vmem>>, vector<1x128xf32>,
    %c0_168 = arith.constant 0 : index
    %c0_169 = arith.constant 0 : index
    %297 = vector.load %arg2[%c0_168, %c0_169] : memref<256x128xf32, #tpu.memory_space<vmem>>, vector<256x128xf32>
    %cst_170 = arith.constant 11.1072073 : f32
    %298 = vector.broadcast %cst_170 : f32 to vector<256x128xf32>
    %299 = arith.subf %297, %298 : vector<256x128xf32>
    %300 = arith.mulf %299, %299 : vector<256x128xf32>
    %cst_171 = arith.constant 0.000000e+00 : f32
    %301 = vector.broadcast %cst_171 : f32 to vector<256x128xf32>
    %302 = arith.subf %301, %300 : vector<256x128xf32>
    %303 = math.exp %302 : vector<256x128xf32>
    %c0_172 = arith.constant 0 : index
    %c0_173 = arith.constant 0 : index
    %304 = vector.load %arg1[%c0_172, %c0_173] : memref<256x128xf32, #tpu.memory_space<vmem>>, vector<256x128xf32>
    %305 = arith.mulf %303, %304 : vector<256x128xf32>
    %cst_174 = arith.constant dense<0.000000e+00> : vector<128xf32>
    %306 = vector.multi_reduction <add>, %305, %cst_174 [0] : vector<256x128xf32> to vector<128xf32>
    %cst_175 = arith.constant 7.97884559 : f32
    %307 = vector.broadcast %cst_175 : f32 to vector<128xf32>
    %308 = arith.mulf %306, %307 : vector<128xf32>
    %309 = math.sqrt %308 : vector<128xf32>
    %c18 = arith.constant 18 : index
    %c0_176 = arith.constant 0 : index
    %310 = vector.load %arg3[%c18, %c0_176] : memref<24x128xf32, #tpu.memory_space<vmem>>, vector<1x128xf32>
    %311 = vector.shape_cast %310 : vector<1x128xf32> to vector<128xf32>
    %312 = vector.shape_cast %309 : vector<128xf32> to vector<1x128xf32>
    tpu.vector_store %arg3[%c18, %c0_176], %312 {strides = array<i32>} : memref<24x128xf32, #tpu.memory_space<vmem>>, vector<1x128xf32>,
    %c0_177 = arith.constant 0 : index
    %c0_178 = arith.constant 0 : index
    %313 = vector.load %arg4[%c0_177, %c0_178] : memref<256x128xf32, #tpu.memory_space<vmem>>, vector<256x128xf32>
    %cst_179 = arith.constant -9.25600624 : f32
    %314 = vector.broadcast %cst_179 : f32 to vector<256x128xf32>
    %315 = arith.subf %313, %314 : vector<256x128xf32>
    %316 = arith.mulf %315, %315 : vector<256x128xf32>
    %cst_180 = arith.constant 0.000000e+00 : f32
    %317 = vector.broadcast %cst_180 : f32 to vector<256x128xf32>
    %318 = arith.subf %317, %316 : vector<256x128xf32>
    %319 = math.exp %318 : vector<256x128xf32>
    %c0_181 = arith.constant 0 : index
    %c0_182 = arith.constant 0 : index
    %320 = vector.load %arg1[%c0_181, %c0_182] : memref<256x128xf32, #tpu.memory_space<vmem>>, vector<256x128xf32>
    %321 = arith.mulf %319, %320 : vector<256x128xf32>
    %cst_183 = arith.constant dense<0.000000e+00> : vector<128xf32>
    %322 = vector.multi_reduction <add>, %321, %cst_183 [0] : vector<256x128xf32> to vector<128xf32>
    %cst_184 = arith.constant 7.97884559 : f32
    %323 = vector.broadcast %cst_184 : f32 to vector<128xf32>
    %324 = arith.mulf %322, %323 : vector<128xf32>
    %325 = math.sqrt %324 : vector<128xf32>
    %c19 = arith.constant 19 : index
    %c0_185 = arith.constant 0 : index
    %326 = vector.load %arg3[%c19, %c0_185] : memref<24x128xf32, #tpu.memory_space<vmem>>, vector<1x128xf32>
    %327 = vector.shape_cast %326 : vector<1x128xf32> to vector<128xf32>
    %328 = vector.shape_cast %325 : vector<128xf32> to vector<1x128xf32>
    tpu.vector_store %arg3[%c19, %c0_185], %328 {strides = array<i32>} : memref<24x128xf32, #tpu.memory_space<vmem>>, vector<1x128xf32>,
    %c0_186 = arith.constant 0 : index
    %c0_187 = arith.constant 0 : index
    %329 = vector.load %arg4[%c0_186, %c0_187] : memref<256x128xf32, #tpu.memory_space<vmem>>, vector<256x128xf32>
    %cst_188 = arith.constant -7.40480471 : f32
    %330 = vector.broadcast %cst_188 : f32 to vector<256x128xf32>
    %331 = arith.subf %329, %330 : vector<256x128xf32>
    %332 = arith.mulf %331, %331 : vector<256x128xf32>
    %cst_189 = arith.constant 0.000000e+00 : f32
    %333 = vector.broadcast %cst_189 : f32 to vector<256x128xf32>
    %334 = arith.subf %333, %332 : vector<256x128xf32>
    %335 = math.exp %334 : vector<256x128xf32>
    %c0_190 = arith.constant 0 : index
    %c0_191 = arith.constant 0 : index
    %336 = vector.load %arg1[%c0_190, %c0_191] : memref<256x128xf32, #tpu.memory_space<vmem>>, vector<256x128xf32>
    %337 = arith.mulf %335, %336 : vector<256x128xf32>
    %cst_192 = arith.constant dense<0.000000e+00> : vector<128xf32>
    %338 = vector.multi_reduction <add>, %337, %cst_192 [0] : vector<256x128xf32> to vector<128xf32>
    %cst_193 = arith.constant 7.97884559 : f32
    %339 = vector.broadcast %cst_193 : f32 to vector<128xf32>
    %340 = arith.mulf %338, %339 : vector<128xf32>
    %341 = math.sqrt %340 : vector<128xf32>
    %c20 = arith.constant 20 : index
    %c0_194 = arith.constant 0 : index
    %342 = vector.load %arg3[%c20, %c0_194] : memref<24x128xf32, #tpu.memory_space<vmem>>, vector<1x128xf32>
    %343 = vector.shape_cast %342 : vector<1x128xf32> to vector<128xf32>
    %344 = vector.shape_cast %341 : vector<128xf32> to vector<1x128xf32>
    tpu.vector_store %arg3[%c20, %c0_194], %344 {strides = array<i32>} : memref<24x128xf32, #tpu.memory_space<vmem>>, vector<1x128xf32>,
    %c0_195 = arith.constant 0 : index
    %c0_196 = arith.constant 0 : index
    %345 = vector.load %arg4[%c0_195, %c0_196] : memref<256x128xf32, #tpu.memory_space<vmem>>, vector<256x128xf32>
    %cst_197 = arith.constant -5.55360365 : f32
    %346 = vector.broadcast %cst_197 : f32 to vector<256x128xf32>
    %347 = arith.subf %345, %346 : vector<256x128xf32>
    %348 = arith.mulf %347, %347 : vector<256x128xf32>
    %cst_198 = arith.constant 0.000000e+00 : f32
    %349 = vector.broadcast %cst_198 : f32 to vector<256x128xf32>
    %350 = arith.subf %349, %348 : vector<256x128xf32>
    %351 = math.exp %350 : vector<256x128xf32>
    %c0_199 = arith.constant 0 : index
    %c0_200 = arith.constant 0 : index
    %352 = vector.load %arg1[%c0_199, %c0_200] : memref<256x128xf32, #tpu.memory_space<vmem>>, vector<256x128xf32>
    %353 = arith.mulf %351, %352 : vector<256x128xf32>
    %cst_201 = arith.constant dense<0.000000e+00> : vector<128xf32>
    %354 = vector.multi_reduction <add>, %353, %cst_201 [0] : vector<256x128xf32> to vector<128xf32>
    %cst_202 = arith.constant 7.97884559 : f32
    %355 = vector.broadcast %cst_202 : f32 to vector<128xf32>
    %356 = arith.mulf %354, %355 : vector<128xf32>
    %357 = math.sqrt %356 : vector<128xf32>
    %c21 = arith.constant 21 : index
    %c0_203 = arith.constant 0 : index
    %358 = vector.load %arg3[%c21, %c0_203] : memref<24x128xf32, #tpu.memory_space<vmem>>, vector<1x128xf32>
    %359 = vector.shape_cast %358 : vector<1x128xf32> to vector<128xf32>
    %360 = vector.shape_cast %357 : vector<128xf32> to vector<1x128xf32>
    tpu.vector_store %arg3[%c21, %c0_203], %360 {strides = array<i32>} : memref<24x128xf32, #tpu.memory_space<vmem>>, vector<1x128xf32>,
    %c0_204 = arith.constant 0 : index
    %c0_205 = arith.constant 0 : index
    %361 = vector.load %arg4[%c0_204, %c0_205] : memref<256x128xf32, #tpu.memory_space<vmem>>, vector<256x128xf32>
    %cst_206 = arith.constant -3.70240235 : f32
    %362 = vector.broadcast %cst_206 : f32 to vector<256x128xf32>
    %363 = arith.subf %361, %362 : vector<256x128xf32>
    %364 = arith.mulf %363, %363 : vector<256x128xf32>
    %cst_207 = arith.constant 0.000000e+00 : f32
    %365 = vector.broadcast %cst_207 : f32 to vector<256x128xf32>
    %366 = arith.subf %365, %364 : vector<256x128xf32>
    %367 = math.exp %366 : vector<256x128xf32>
    %c0_208 = arith.constant 0 : index
    %c0_209 = arith.constant 0 : index
    %368 = vector.load %arg1[%c0_208, %c0_209] : memref<256x128xf32, #tpu.memory_space<vmem>>, vector<256x128xf32>
    %369 = arith.mulf %367, %368 : vector<256x128xf32>
    %cst_210 = arith.constant dense<0.000000e+00> : vector<128xf32>
    %370 = vector.multi_reduction <add>, %369, %cst_210 [0] : vector<256x128xf32> to vector<128xf32>
    %cst_211 = arith.constant 7.97884559 : f32
    %371 = vector.broadcast %cst_211 : f32 to vector<128xf32>
    %372 = arith.mulf %370, %371 : vector<128xf32>
    %373 = math.sqrt %372 : vector<128xf32>
    %c22 = arith.constant 22 : index
    %c0_212 = arith.constant 0 : index
    %374 = vector.load %arg3[%c22, %c0_212] : memref<24x128xf32, #tpu.memory_space<vmem>>, vector<1x128xf32>
    %375 = vector.shape_cast %374 : vector<1x128xf32> to vector<128xf32>
    %376 = vector.shape_cast %373 : vector<128xf32> to vector<1x128xf32>
    tpu.vector_store %arg3[%c22, %c0_212], %376 {strides = array<i32>} : memref<24x128xf32, #tpu.memory_space<vmem>>, vector<1x128xf32>,
    %c0_213 = arith.constant 0 : index
    %c0_214 = arith.constant 0 : index
    %377 = vector.load %arg4[%c0_213, %c0_214] : memref<256x128xf32, #tpu.memory_space<vmem>>, vector<256x128xf32>
    %cst_215 = arith.constant -1.85120118 : f32
    %378 = vector.broadcast %cst_215 : f32 to vector<256x128xf32>
    %379 = arith.subf %377, %378 : vector<256x128xf32>
    %380 = arith.mulf %379, %379 : vector<256x128xf32>
    %cst_216 = arith.constant 0.000000e+00 : f32
    %381 = vector.broadcast %cst_216 : f32 to vector<256x128xf32>
    %382 = arith.subf %381, %380 : vector<256x128xf32>
    %383 = math.exp %382 : vector<256x128xf32>
    %c0_217 = arith.constant 0 : index
    %c0_218 = arith.constant 0 : index
    %384 = vector.load %arg1[%c0_217, %c0_218] : memref<256x128xf32, #tpu.memory_space<vmem>>, vector<256x128xf32>
    %385 = arith.mulf %383, %384 : vector<256x128xf32>
    %cst_219 = arith.constant dense<0.000000e+00> : vector<128xf32>
    %386 = vector.multi_reduction <add>, %385, %cst_219 [0] : vector<256x128xf32> to vector<128xf32>
    %cst_220 = arith.constant 7.97884559 : f32
    %387 = vector.broadcast %cst_220 : f32 to vector<128xf32>
    %388 = arith.mulf %386, %387 : vector<128xf32>
    %389 = math.sqrt %388 : vector<128xf32>
    %c23 = arith.constant 23 : index
    %c0_221 = arith.constant 0 : index
    %390 = vector.load %arg3[%c23, %c0_221] : memref<24x128xf32, #tpu.memory_space<vmem>>, vector<1x128xf32>
    %391 = vector.shape_cast %390 : vector<1x128xf32> to vector<128xf32>
    %392 = vector.shape_cast %389 : vector<128xf32> to vector<1x128xf32>
    tpu.vector_store %arg3[%c23, %c0_221], %392 {strides = array<i32>} : memref<24x128xf32, #tpu.memory_space<vmem>>, vector<1x128xf32>,
    return
  }
  func.func @transform_0(%arg0: i32) -> (i32, i32) {
    %c0_i32 = arith.constant 0 : i32
    %c0_i32_0 = arith.constant 0 : i32
    return %c0_i32, %arg0 : i32, i32
  }
  func.func @transform_1(%arg0: i32) -> (i32, i32) {
    %c0_i32 = arith.constant 0 : i32
    %c0_i32_0 = arith.constant 0 : i32
    return %c0_i32, %arg0 : i32, i32
  }
  func.func @transform_2(%arg0: i32) -> (i32, i32) {
    %c0_i32 = arith.constant 0 : i32
    %c0_i32_0 = arith.constant 0 : i32
    return %c0_i32, %arg0 : i32, i32
  }
}

</mosaic_0001>

<llo_original>
// kernel: tpu_custom_call.1
$region0: #{tpu_custom_call.1}
  #allocation0 [shape = 'u32[]', space=smem, size = 0x4, offset = 0x4, fixed_abs, tag = 'smem constant byte address 0x4 - core index']
  #allocation1 [shape = 'u32[144,128]{1,0:T(1,128)}', space=vmem, size = 0x12000, scoped, tag = 'internal scratch']
  #allocation2 [shape = 'f32[256,128]{1,0:T(8,128)}', space=vmem, size = 0x20000, scoped, tag = 'scratch operand']
  %s0 = inlined_call_operand.hbm [shape: f32[256,128], index: 0, kind: input, shape index: {}]
  %s1 = inlined_call_operand.hbm [shape: f32[256,128], index: 1, kind: input, shape index: {}]
  %s2 = inlined_call_operand.hbm [shape: f32[24,128], index: 2, kind: output, shape index: {}]
  %s3 = sld [smem:[#allocation0]]
  $region26: #{tpu_custom_call.1} parent=0
    _
  %s5 = ssub.s32 1, %s3
  %s6 = scalar_select 0, %s5, %s3
  $region1: #{tpu_custom_call.1} parent=0
    #allocation3 [shape = 'u8[131072]{0}', space=vmem, size = 0x20000, scoped, tag = 'input window, operand 0, single buffered']
    #allocation4 [shape = 's32[1]{0}', space=sflag, size = 0x4, scoped, tag = 'scoped memory for tpu_custom_call.1']
    #allocation5 [shape = 's32[1]{0}', space=sflag, size = 0x4, scoped, tag = 'scoped memory for tpu_custom_call.1']
    #allocation6 [shape = 'u8[131072]{0}', space=vmem, size = 0x20000, scoped, tag = 'input window, operand 1, single buffered']
    #allocation7 [shape = 's32[1]{0}', space=sflag, size = 0x4, scoped, tag = 'scoped memory for tpu_custom_call.1']
    #allocation8 [shape = 'u8[12288]{0}', space=vmem, size = 0x3000, scoped, tag = 'output window, operand 0, single buffered']
    %7 = vsyncpa [#allocation4], 0
    %8 = vsyncpa [#allocation7], 0
    %9 = vsyncpa [#allocation5], 0
    // Predicated region
    $region2: #{tpu_custom_call.1} parent=1 // pred_check
      _
    $region3: #{tpu_custom_call.1} parent=1 // pred_check_branch
      %11 = sbr.rel (0) target = $region5
    $region4: #{tpu_custom_call.1} parent=1 // pred_region
      %s13 = ssub.s32 4096, 4096
      %14 = vsyncadd [#allocation4], %s13
      %s15 = sshll.u32 [#allocation3], 4
      %s16 = int_to_ptr.vmem [resolvable:$true] %s15
      %21 = dma.hbm_to_vmem [thread:$0]  %s0, 4096, %s16, [#allocation4], 128, 128, 8
    $region5: #{tpu_custom_call.1} parent=1 // pred_fallthru
      _
    // Predicated region
    $region6: #{tpu_custom_call.1} parent=1 // pred_check
      _
    $region7: #{tpu_custom_call.1} parent=1 // pred_check_branch
      %23 = sbr.rel (0) target = $region9
    $region8: #{tpu_custom_call.1} parent=1 // pred_region
      %s25 = ssub.s32 4096, 4096
      %26 = vsyncadd [#allocation7], %s25
      %s27 = sshll.u32 [#allocation6], 4
      %s28 = int_to_ptr.vmem [resolvable:$true] %s27
      %33 = dma.hbm_to_vmem [thread:$0]  %s1, 4096, %s28, [#allocation7], 128, 128, 8
    $region9: #{tpu_custom_call.1} parent=1 // pred_fallthru
      _
    // Predicated region
    $region10: #{tpu_custom_call.1} parent=1 // pred_check
      _
    $region11: #{tpu_custom_call.1} parent=1 // pred_check_branch
      %35 = sbr.rel (0) target = $region13
    $region12: #{tpu_custom_call.1} parent=1 // pred_region
      %36 = dma.done [#allocation4], 4096
    $region13: #{tpu_custom_call.1} parent=1 // pred_fallthru
      _
    // Predicated region
    $region14: #{tpu_custom_call.1} parent=1 // pred_check
      _
    $region15: #{tpu_custom_call.1} parent=1 // pred_check_branch
      %38 = sbr.rel (0) target = $region17
    $region16: #{tpu_custom_call.1} parent=1 // pred_region
      %39 = dma.done [#allocation7], 4096
    $region17: #{tpu_custom_call.1} parent=1 // pred_fallthru
      _
    %v40 = vld [vmem:[#allocation6] sm:$0xff]
    %v41 = vld [vmem:[#allocation6 + $0x8] sm:$0xff]
    %v42 = vld [vmem:[#allocation6 + $0x10] sm:$0xff]
    %v43 = vld [vmem:[#allocation6 + $0x18] sm:$0xff]
    %v44 = vld [vmem:[#allocation6 + $0x20] sm:$0xff]
    %v45 = vld [vmem:[#allocation6 + $0x28] sm:$0xff]
    %v46 = vld [vmem:[#allocation6 + $0x30] sm:$0xff]
    %v47 = vld [vmem:[#allocation6 + $0x38] sm:$0xff]
    %v48 = vld [vmem:[#allocation6 + $0x40] sm:$0xff]
    %v49 = vld [vmem:[#allocation6 + $0x48] sm:$0xff]
    %v50 = vld [vmem:[#allocation6 + $0x50] sm:$0xff]
    %v51 = vld [vmem:[#allocation6 + $0x58] sm:$0xff]
    %v52 = vld [vmem:[#allocation6 + $0x60] sm:$0xff]
    %v53 = vld [vmem:[#allocation6 + $0x68] sm:$0xff]
    %v54 = vld [vmem:[#allocation6 + $0x70] sm:$0xff]
    %v55 = vld [vmem:[#allocation6 + $0x78] sm:$0xff]
    %v56 = vld [vmem:[#allocation6 + $0x80] sm:$0xff]
    %v57 = vld [vmem:[#allocation6 + $0x88] sm:$0xff]
    %v58 = vld [vmem:[#allocation6 + $0x90] sm:$0xff]
    %v59 = vld [vmem:[#allocation6 + $0x98] sm:$0xff]
    %v60 = vld [vmem:[#allocation6 + $0xa0] sm:$0xff]
    %v61 = vld [vmem:[#allocation6 + $0xa8] sm:$0xff]
    %v62 = vld [vmem:[#allocation6 + $0xb0] sm:$0xff]
    %v63 = vld [vmem:[#allocation6 + $0xb8] sm:$0xff]
    %v64 = vld [vmem:[#allocation6 + $0xc0] sm:$0xff]
    %v65 = vld [vmem:[#allocation6 + $0xc8] sm:$0xff]
    %v66 = vld [vmem:[#allocation6 + $0xd0] sm:$0xff]
    %v67 = vld [vmem:[#allocation6 + $0xd8] sm:$0xff]
    %v68 = vld [vmem:[#allocation6 + $0xe0] sm:$0xff]
    %v69 = vld [vmem:[#allocation6 + $0xe8] sm:$0xff]
    %v70 = vld [vmem:[#allocation6 + $0xf0] sm:$0xff]
    %v71 = vld [vmem:[#allocation6 + $0xf8] sm:$0xff]
    %vm72 = vcmp.gt.f32.partialorder %v40, 0.0
    %vm73 = vcmp.gt.f32.partialorder %v41, 0.0
    %vm74 = vcmp.gt.f32.partialorder %v42, 0.0
    %vm75 = vcmp.gt.f32.partialorder %v43, 0.0
    %vm76 = vcmp.gt.f32.partialorder %v44, 0.0
    %vm77 = vcmp.gt.f32.partialorder %v45, 0.0
    %vm78 = vcmp.gt.f32.partialorder %v46, 0.0
    %vm79 = vcmp.gt.f32.partialorder %v47, 0.0
    %vm80 = vcmp.gt.f32.partialorder %v48, 0.0
    %vm81 = vcmp.gt.f32.partialorder %v49, 0.0
    %vm82 = vcmp.gt.f32.partialorder %v50, 0.0
    %vm83 = vcmp.gt.f32.partialorder %v51, 0.0
    %vm84 = vcmp.gt.f32.partialorder %v52, 0.0
    %vm85 = vcmp.gt.f32.partialorder %v53, 0.0
    %vm86 = vcmp.gt.f32.partialorder %v54, 0.0
    %vm87 = vcmp.gt.f32.partialorder %v55, 0.0
    %vm88 = vcmp.gt.f32.partialorder %v56, 0.0
    %vm89 = vcmp.gt.f32.partialorder %v57, 0.0
    %vm90 = vcmp.gt.f32.partialorder %v58, 0.0
    %vm91 = vcmp.gt.f32.partialorder %v59, 0.0
    %vm92 = vcmp.gt.f32.partialorder %v60, 0.0
    %vm93 = vcmp.gt.f32.partialorder %v61, 0.0
    %vm94 = vcmp.gt.f32.partialorder %v62, 0.0
    %vm95 = vcmp.gt.f32.partialorder %v63, 0.0
    %vm96 = vcmp.gt.f32.partialorder %v64, 0.0
    %vm97 = vcmp.gt.f32.partialorder %v65, 0.0
    %vm98 = vcmp.gt.f32.partialorder %v66, 0.0
    %vm99 = vcmp.gt.f32.partialorder %v67, 0.0
    %vm100 = vcmp.gt.f32.partialorder %v68, 0.0
    %vm101 = vcmp.gt.f32.partialorder %v69, 0.0
    %vm102 = vcmp.gt.f32.partialorder %v70, 0.0
    %vm103 = vcmp.gt.f32.partialorder %v71, 0.0
    %v104 = vsub.f32 %v40, 22.214415
    %v105 = vsub.f32 %v41, 22.214415
    %v106 = vsub.f32 %v42, 22.214415
    %v107 = vsub.f32 %v43, 22.214415
    %v108 = vsub.f32 %v44, 22.214415
    %v109 = vsub.f32 %v45, 22.214415
    %v110 = vsub.f32 %v46, 22.214415
    %v111 = vsub.f32 %v47, 22.214415
    %v112 = vsub.f32 %v48, 22.214415
    %v113 = vsub.f32 %v49, 22.214415
    %v114 = vsub.f32 %v50, 22.214415
    %v115 = vsub.f32 %v51, 22.214415
    %v116 = vsub.f32 %v52, 22.214415
    %v117 = vsub.f32 %v53, 22.214415
    %v118 = vsub.f32 %v54, 22.214415
    %v119 = vsub.f32 %v55, 22.214415
    %v120 = vsub.f32 %v56, 22.214415
    %v121 = vsub.f32 %v57, 22.214415
    %v122 = vsub.f32 %v58, 22.214415
    %v123 = vsub.f32 %v59, 22.214415
    %v124 = vsub.f32 %v60, 22.214415
    %v125 = vsub.f32 %v61, 22.214415
    %v126 = vsub.f32 %v62, 22.214415
    %v127 = vsub.f32 %v63, 22.214415
    %v128 = vsub.f32 %v64, 22.214415
    %v129 = vsub.f32 %v65, 22.214415
    %v130 = vsub.f32 %v66, 22.214415
    %v131 = vsub.f32 %v67, 22.214415
    %v132 = vsub.f32 %v68, 22.214415
    %v133 = vsub.f32 %v69, 22.214415
    %v134 = vsub.f32 %v70, 22.214415
    %v135 = vsub.f32 %v71, 22.214415
    %v136 = vadd.f32 %v40, 22.214415
    %v137 = vadd.f32 %v41, 22.214415
    %v138 = vadd.f32 %v42, 22.214415
    %v139 = vadd.f32 %v43, 22.214415
    %v140 = vadd.f32 %v44, 22.214415
    %v141 = vadd.f32 %v45, 22.214415
    %v142 = vadd.f32 %v46, 22.214415
    %v143 = vadd.f32 %v47, 22.214415
    %v144 = vadd.f32 %v48, 22.214415
    %v145 = vadd.f32 %v49, 22.214415
    %v146 = vadd.f32 %v50, 22.214415
    %v147 = vadd.f32 %v51, 22.214415
    %v148 = vadd.f32 %v52, 22.214415
    %v149 = vadd.f32 %v53, 22.214415
    %v150 = vadd.f32 %v54, 22.214415
    %v151 = vadd.f32 %v55, 22.214415
    %v152 = vadd.f32 %v56, 22.214415
    %v153 = vadd.f32 %v57, 22.214415
    %v154 = vadd.f32 %v58, 22.214415
    %v155 = vadd.f32 %v59, 22.214415
    %v156 = vadd.f32 %v60, 22.214415
    %v157 = vadd.f32 %v61, 22.214415
    %v158 = vadd.f32 %v62, 22.214415
    %v159 = vadd.f32 %v63, 22.214415
    %v160 = vadd.f32 %v64, 22.214415
    %v161 = vadd.f32 %v65, 22.214415
    %v162 = vadd.f32 %v66, 22.214415
    %v163 = vadd.f32 %v67, 22.214415
    %v164 = vadd.f32 %v68, 22.214415
    %v165 = vadd.f32 %v69, 22.214415
    %v166 = vadd.f32 %v70, 22.214415
    %v167 = vadd.f32 %v71, 22.214415
    %v168 = vsel %vm72, %v104, %v136
    %v169 = vsel %vm73, %v105, %v137
    %v170 = vsel %vm74, %v106, %v138
    %v171 = vsel %vm75, %v107, %v139
    %v172 = vsel %vm76, %v108, %v140
    %v173 = vsel %vm77, %v109, %v141
    %v174 = vsel %vm78, %v110, %v142
    %v175 = vsel %vm79, %v111, %v143
    %v176 = vsel %vm80, %v112, %v144
    %v177 = vsel %vm81, %v113, %v145
    %v178 = vsel %vm82, %v114, %v146
    %v179 = vsel %vm83, %v115, %v147
    %v180 = vsel %vm84, %v116, %v148
    %v181 = vsel %vm85, %v117, %v149
    %v182 = vsel %vm86, %v118, %v150
    %v183 = vsel %vm87, %v119, %v151
    %v184 = vsel %vm88, %v120, %v152
    %v185 = vsel %vm89, %v121, %v153
    %v186 = vsel %vm90, %v122, %v154
    %v187 = vsel %vm91, %v123, %v155
    %v188 = vsel %vm92, %v124, %v156
    %v189 = vsel %vm93, %v125, %v157
    %v190 = vsel %vm94, %v126, %v158
    %v191 = vsel %vm95, %v127, %v159
    %v192 = vsel %vm96, %v128, %v160
    %v193 = vsel %vm97, %v129, %v161
    %v194 = vsel %vm98, %v130, %v162
    %v195 = vsel %vm99, %v131, %v163
    %v196 = vsel %vm100, %v132, %v164
    %v197 = vsel %vm101, %v133, %v165
    %v198 = vsel %vm102, %v134, %v166
    %v199 = vsel %vm103, %v135, %v167
    %200 = vst [vmem:[#allocation2] sm:$0xff] %v168
    %201 = vst [vmem:[#allocation2 + $0x8] sm:$0xff] %v169
    %202 = vst [vmem:[#allocation2 + $0x10] sm:$0xff] %v170
    %203 = vst [vmem:[#allocation2 + $0x18] sm:$0xff] %v171
    %204 = vst [vmem:[#allocation2 + $0x20] sm:$0xff] %v172
    %205 = vst [vmem:[#allocation2 + $0x28] sm:$0xff] %v173
    %206 = vst [vmem:[#allocation2 + $0x30] sm:$0xff] %v174
    %207 = vst [vmem:[#allocation2 + $0x38] sm:$0xff] %v175
    %208 = vst [vmem:[#allocation2 + $0x40] sm:$0xff] %v176
    %209 = vst [vmem:[#allocation2 + $0x48] sm:$0xff] %v177
    %210 = vst [vmem:[#allocation2 + $0x50] sm:$0xff] %v178
    %211 = vst [vmem:[#allocation2 + $0x58] sm:$0xff] %v179
    %212 = vst [vmem:[#allocation2 + $0x60] sm:$0xff] %v180
    %213 = vst [vmem:[#allocation2 + $0x68] sm:$0xff] %v181
    %214 = vst [vmem:[#allocation2 + $0x70] sm:$0xff] %v182
    %215 = vst [vmem:[#allocation2 + $0x78] sm:$0xff] %v183
    %216 = vst [vmem:[#allocation2 + $0x80] sm:$0xff] %v184
    %217 = vst [vmem:[#allocation2 + $0x88] sm:$0xff] %v185
    %218 = vst [vmem:[#allocation2 + $0x90] sm:$0xff] %v186
    %219 = vst [vmem:[#allocation2 + $0x98] sm:$0xff] %v187
    %220 = vst [vmem:[#allocation2 + $0xa0] sm:$0xff] %v188
    %221 = vst [vmem:[#allocation2 + $0xa8] sm:$0xff] %v189
    %222 = vst [vmem:[#allocation2 + $0xb0] sm:$0xff] %v190
    %223 = vst [vmem:[#allocation2 + $0xb8] sm:$0xff] %v191
    %224 = vst [vmem:[#allocation2 + $0xc0] sm:$0xff] %v192
    %225 = vst [vmem:[#allocation2 + $0xc8] sm:$0xff] %v193
    %226 = vst [vmem:[#allocation2 + $0xd0] sm:$0xff] %v194
    %227 = vst [vmem:[#allocation2 + $0xd8] sm:$0xff] %v195
    %228 = vst [vmem:[#allocation2 + $0xe0] sm:$0xff] %v196
    %229 = vst [vmem:[#allocation2 + $0xe8] sm:$0xff] %v197
    %230 = vst [vmem:[#allocation2 + $0xf0] sm:$0xff] %v198
    %231 = vst [vmem:[#allocation2 + $0xf8] sm:$0xff] %v199
    %v232 = vld [vmem:[#allocation2] sm:$0xff]
    %v233 = vld [vmem:[#allocation2 + $0x8] sm:$0xff]
    %v234 = vld [vmem:[#allocation2 + $0x10] sm:$0xff]
    %v235 = vld [vmem:[#allocation2 + $0x18] sm:$0xff]
    %v236 = vld [vmem:[#allocation2 + $0x20] sm:$0xff]
    %v237 = vld [vmem:[#allocation2 + $0x28] sm:$0xff]
    %v238 = vld [vmem:[#allocation2 + $0x30] sm:$0xff]
    %v239 = vld [vmem:[#allocation2 + $0x38] sm:$0xff]
    %v240 = vld [vmem:[#allocation2 + $0x40] sm:$0xff]
    %v241 = vld [vmem:[#allocation2 + $0x48] sm:$0xff]
    %v242 = vld [vmem:[#allocation2 + $0x50] sm:$0xff]
    %v243 = vld [vmem:[#allocation2 + $0x58] sm:$0xff]
    %v244 = vld [vmem:[#allocation2 + $0x60] sm:$0xff]
    %v245 = vld [vmem:[#allocation2 + $0x68] sm:$0xff]
    %v246 = vld [vmem:[#allocation2 + $0x70] sm:$0xff]
    %v247 = vld [vmem:[#allocation2 + $0x78] sm:$0xff]
    %v248 = vld [vmem:[#allocation2 + $0x80] sm:$0xff]
    %v249 = vld [vmem:[#allocation2 + $0x88] sm:$0xff]
    %v250 = vld [vmem:[#allocation2 + $0x90] sm:$0xff]
    %v251 = vld [vmem:[#allocation2 + $0x98] sm:$0xff]
    %v252 = vld [vmem:[#allocation2 + $0xa0] sm:$0xff]
    %v253 = vld [vmem:[#allocation2 + $0xa8] sm:$0xff]
    %v254 = vld [vmem:[#allocation2 + $0xb0] sm:$0xff]
    %v255 = vld [vmem:[#allocation2 + $0xb8] sm:$0xff]
    %v256 = vld [vmem:[#allocation2 + $0xc0] sm:$0xff]
    %v257 = vld [vmem:[#allocation2 + $0xc8] sm:$0xff]
    %v258 = vld [vmem:[#allocation2 + $0xd0] sm:$0xff]
    %v259 = vld [vmem:[#allocation2 + $0xd8] sm:$0xff]
    %v260 = vld [vmem:[#allocation2 + $0xe0] sm:$0xff]
    %v261 = vld [vmem:[#allocation2 + $0xe8] sm:$0xff]
    %v262 = vld [vmem:[#allocation2 + $0xf0] sm:$0xff]
    %v263 = vld [vmem:[#allocation2 + $0xf8] sm:$0xff]
    %v264 = vmul.f32 %v232, %v232
    %v265 = vmul.f32 %v233, %v233
    %v266 = vmul.f32 %v234, %v234
    %v267 = vmul.f32 %v235, %v235
    %v268 = vmul.f32 %v236, %v236
    %v269 = vmul.f32 %v237, %v237
    %v270 = vmul.f32 %v238, %v238
    %v271 = vmul.f32 %v239, %v239
    %v272 = vmul.f32 %v240, %v240
    %v273 = vmul.f32 %v241, %v241
    %v274 = vmul.f32 %v242, %v242
    %v275 = vmul.f32 %v243, %v243
    %v276 = vmul.f32 %v244, %v244
    %v277 = vmul.f32 %v245, %v245
    %v278 = vmul.f32 %v246, %v246
    %v279 = vmul.f32 %v247, %v247
    %v280 = vmul.f32 %v248, %v248
    %v281 = vmul.f32 %v249, %v249
    %v282 = vmul.f32 %v250, %v250
    %v283 = vmul.f32 %v251, %v251
    %v284 = vmul.f32 %v252, %v252
    %v285 = vmul.f32 %v253, %v253
    %v286 = vmul.f32 %v254, %v254
    %v287 = vmul.f32 %v255, %v255
    %v288 = vmul.f32 %v256, %v256
    %v289 = vmul.f32 %v257, %v257
    %v290 = vmul.f32 %v258, %v258
    %v291 = vmul.f32 %v259, %v259
    %v292 = vmul.f32 %v260, %v260
    %v293 = vmul.f32 %v261, %v261
    %v294 = vmul.f32 %v262, %v262
    %v295 = vmul.f32 %v263, %v263
    %v296 = vsub.f32 0.0, %v264
    %v297 = vsub.f32 0.0, %v265
    %v298 = vsub.f32 0.0, %v266
    %v299 = vsub.f32 0.0, %v267
    %v300 = vsub.f32 0.0, %v268
    %v301 = vsub.f32 0.0, %v269
    %v302 = vsub.f32 0.0, %v270
    %v303 = vsub.f32 0.0, %v271
    %v304 = vsub.f32 0.0, %v272
    %v305 = vsub.f32 0.0, %v273
    %v306 = vsub.f32 0.0, %v274
    %v307 = vsub.f32 0.0, %v275
    %v308 = vsub.f32 0.0, %v276
    %v309 = vsub.f32 0.0, %v277
    %v310 = vsub.f32 0.0, %v278
    %v311 = vsub.f32 0.0, %v279
    %v312 = vsub.f32 0.0, %v280
    %v313 = vsub.f32 0.0, %v281
    %v314 = vsub.f32 0.0, %v282
    %v315 = vsub.f32 0.0, %v283
    %v316 = vsub.f32 0.0, %v284
    %v317 = vsub.f32 0.0, %v285
    %v318 = vsub.f32 0.0, %v286
    %v319 = vsub.f32 0.0, %v287
    %v320 = vsub.f32 0.0, %v288
    %v321 = vsub.f32 0.0, %v289
    %v322 = vsub.f32 0.0, %v290
    %v323 = vsub.f32 0.0, %v291
    %v324 = vsub.f32 0.0, %v292
    %v325 = vsub.f32 0.0, %v293
    %v326 = vsub.f32 0.0, %v294
    %v327 = vsub.f32 0.0, %v295
    %v328 = vmul.f32 %v296, 1.442695
    %v329 = vpow.pop %v328
    %v330 = vmul.f32 %v297, 1.442695
    %v331 = vpow.pop %v330
    %v332 = vmul.f32 %v298, 1.442695
    %v333 = vpow.pop %v332
    %v334 = vmul.f32 %v299, 1.442695
    %v335 = vpow.pop %v334
    %v336 = vmul.f32 %v300, 1.442695
    %v337 = vpow.pop %v336
    %v338 = vmul.f32 %v301, 1.442695
    %v339 = vpow.pop %v338
    %v340 = vmul.f32 %v302, 1.442695
    %v341 = vpow.pop %v340
    %v342 = vmul.f32 %v303, 1.442695
    %v343 = vpow.pop %v342
    %v344 = vmul.f32 %v304, 1.442695
    %v345 = vpow.pop %v344
    %v346 = vmul.f32 %v305, 1.442695
    %v347 = vpow.pop %v346
    %v348 = vmul.f32 %v306, 1.442695
    %v349 = vpow.pop %v348
    %v350 = vmul.f32 %v307, 1.442695
    %v351 = vpow.pop %v350
    %v352 = vmul.f32 %v308, 1.442695
    %v353 = vpow.pop %v352
    %v354 = vmul.f32 %v309, 1.442695
    %v355 = vpow.pop %v354
    %v356 = vmul.f32 %v310, 1.442695
    %v357 = vpow.pop %v356
    %v358 = vmul.f32 %v311, 1.442695
    %v359 = vpow.pop %v358
    %v360 = vmul.f32 %v312, 1.442695
    %v361 = vpow.pop %v360
    %v362 = vmul.f32 %v313, 1.442695
    %v363 = vpow.pop %v362
    %v364 = vmul.f32 %v314, 1.442695
    %v365 = vpow.pop %v364
    %v366 = vmul.f32 %v315, 1.442695
    %v367 = vpow.pop %v366
    %v368 = vmul.f32 %v316, 1.442695
    %v369 = vpow.pop %v368
    %v370 = vmul.f32 %v317, 1.442695
    %v371 = vpow.pop %v370
    %v372 = vmul.f32 %v318, 1.442695
    %v373 = vpow.pop %v372
    %v374 = vmul.f32 %v319, 1.442695
    %v375 = vpow.pop %v374
    %v376 = vmul.f32 %v320, 1.442695
    %v377 = vpow.pop %v376
    %v378 = vmul.f32 %v321, 1.442695
    %v379 = vpow.pop %v378
    %v380 = vmul.f32 %v322, 1.442695
    %v381 = vpow.pop %v380
    %v382 = vmul.f32 %v323, 1.442695
    %v383 = vpow.pop %v382
    %v384 = vmul.f32 %v324, 1.442695
    %v385 = vpow.pop %v384
    %v386 = vmul.f32 %v325, 1.442695
    %v387 = vpow.pop %v386
    %v388 = vmul.f32 %v326, 1.442695
    %v389 = vpow.pop %v388
    %v390 = vmul.f32 %v327, 1.442695
    %v391 = vpow.pop %v390
    %v392 = vld [vmem:[#allocation3] sm:$0xff]
    %v393 = vld [vmem:[#allocation3 + $0x8] sm:$0xff]
    %v394 = vld [vmem:[#allocation3 + $0x10] sm:$0xff]
    %v395 = vld [vmem:[#allocation3 + $0x18] sm:$0xff]
    %v396 = vld [vmem:[#allocation3 + $0x20] sm:$0xff]
    %v397 = vld [vmem:[#allocation3 + $0x28] sm:$0xff]
    %v398 = vld [vmem:[#allocation3 + $0x30] sm:$0xff]
    %v399 = vld [vmem:[#allocation3 + $0x38] sm:$0xff]
    %v400 = vld [vmem:[#allocation3 + $0x40] sm:$0xff]
    %v401 = vld [vmem:[#allocation3 + $0x48] sm:$0xff]
    %v402 = vld [vmem:[#allocation3 + $0x50] sm:$0xff]
    %v403 = vld [vmem:[#allocation3 + $0x58] sm:$0xff]
    %v404 = vld [vmem:[#allocation3 + $0x60] sm:$0xff]
    %v405 = vld [vmem:[#allocation3 + $0x68] sm:$0xff]
    %v406 = vld [vmem:[#allocation3 + $0x70] sm:$0xff]
    %v407 = vld [vmem:[#allocation3 + $0x78] sm:$0xff]
    %v408 = vld [vmem:[#allocation3 + $0x80] sm:$0xff]
    %v409 = vld [vmem:[#allocation3 + $0x88] sm:$0xff]
    %v410 = vld [vmem:[#allocation3 + $0x90] sm:$0xff]
    %v411 = vld [vmem:[#allocation3 + $0x98] sm:$0xff]
    %v412 = vld [vmem:[#allocation3 + $0xa0] sm:$0xff]
    %v413 = vld [vmem:[#allocation3 + $0xa8] sm:$0xff]
    %v414 = vld [vmem:[#allocation3 + $0xb0] sm:$0xff]
    %v415 = vld [vmem:[#allocation3 + $0xb8] sm:$0xff]
    %v416 = vld [vmem:[#allocation3 + $0xc0] sm:$0xff]
    %v417 = vld [vmem:[#allocation3 + $0xc8] sm:$0xff]
    %v418 = vld [vmem:[#allocation3 + $0xd0] sm:$0xff]
    %v419 = vld [vmem:[#allocation3 + $0xd8] sm:$0xff]
    %v420 = vld [vmem:[#allocation3 + $0xe0] sm:$0xff]
    %v421 = vld [vmem:[#allocation3 + $0xe8] sm:$0xff]
    %v422 = vld [vmem:[#allocation3 + $0xf0] sm:$0xff]
    %v423 = vld [vmem:[#allocation3 + $0xf8] sm:$0xff]
    %v424 = vmul.f32 %v329, %v392
    %v425 = vmul.f32 %v331, %v393
    %v426 = vmul.f32 %v333, %v394
    %v427 = vmul.f32 %v335, %v395
    %v428 = vmul.f32 %v337, %v396
    %v429 = vmul.f32 %v339, %v397
    %v430 = vmul.f32 %v341, %v398
    %v431 = vmul.f32 %v343, %v399
    %v432 = vmul.f32 %v345, %v400
    %v433 = vmul.f32 %v347, %v401
    %v434 = vmul.f32 %v349, %v402
    %v435 = vmul.f32 %v351, %v403
    %v436 = vmul.f32 %v353, %v404
    %v437 = vmul.f32 %v355, %v405
    %v438 = vmul.f32 %v357, %v406
    %v439 = vmul.f32 %v359, %v407
    %v440 = vmul.f32 %v361, %v408
    %v441 = vmul.f32 %v363, %v409
    %v442 = vmul.f32 %v365, %v410
    %v443 = vmul.f32 %v367, %v411
    %v444 = vmul.f32 %v369, %v412
    %v445 = vmul.f32 %v371, %v413
    %v446 = vmul.f32 %v373, %v414
    %v447 = vmul.f32 %v375, %v415
    %v448 = vmul.f32 %v377, %v416
    %v449 = vmul.f32 %v379, %v417
    %v450 = vmul.f32 %v381, %v418
    %v451 = vmul.f32 %v383, %v419
    %v452 = vmul.f32 %v385, %v420
    %v453 = vmul.f32 %v387, %v421
    %v454 = vmul.f32 %v389, %v422
    %v455 = vmul.f32 %v391, %v423
    %v456 = vadd.f32 %v424, %v425
    %v457 = vadd.f32 %v456, %v426
    %v458 = vadd.f32 %v457, %v427
    %v459 = vadd.f32 %v458, %v428
    %v460 = vadd.f32 %v459, %v429
    %v461 = vadd.f32 %v460, %v430
    %v462 = vadd.f32 %v461, %v431
    %v463 = vadd.f32 %v462, %v432
    %v464 = vadd.f32 %v463, %v433
    %v465 = vadd.f32 %v464, %v434
    %v466 = vadd.f32 %v465, %v435
    %v467 = vadd.f32 %v466, %v436
    %v468 = vadd.f32 %v467, %v437
    %v469 = vadd.f32 %v468, %v438
    %v470 = vadd.f32 %v469, %v439
    %v471 = vadd.f32 %v470, %v440
    %v472 = vadd.f32 %v471, %v441
    %v473 = vadd.f32 %v472, %v442
    %v474 = vadd.f32 %v473, %v443
    %v475 = vadd.f32 %v474, %v444
    %v476 = vadd.f32 %v475, %v445
    %v477 = vadd.f32 %v476, %v446
    %v478 = vadd.f32 %v477, %v447
    %v479 = vadd.f32 %v478, %v448
    %v480 = vadd.f32 %v479, %v449
    %v481 = vadd.f32 %v480, %v450
    %v482 = vadd.f32 %v481, %v451
    %v483 = vadd.f32 %v482, %v452
    %v484 = vadd.f32 %v483, %v453
    %v485 = vadd.f32 %v484, %v454
    %v486 = vadd.f32 %v485, %v455
    %v487 = vrot.slane %v486, 4
    %v488 = vadd.f32 %v486, %v487
    %v489 = vrot.slane %v488, 2
    %v490 = vadd.f32 %v488, %v489
    %v491 = vrot.slane %v490, 1
    %v492 = vadd.f32 %v490, %v491
    %v493 = vmul.f32 %v492, 7.9788456
    %v494 = vrsqrt.pop %v493
    %v495 = vmul.f32 %v493, %v494
    %vm496 = vcmp.eq.f32.partialorder %v493, inf
    %v497 = vsel %vm496, %v493, %v495
    %vm498 = vcmp.eq.f32.partialorder %v493, 0.0
    %v499 = vand.u32 %v493, 2147483648
    %v500 = vsel %vm498, %v499, %v497
    %501 = vst [vmem:[#allocation8] sm:$0x1] %v500
    %v502 = vld [vmem:[#allocation2] sm:$0xff]
    %v503 = vld [vmem:[#allocation2 + $0x8] sm:$0xff]
    %v504 = vld [vmem:[#allocation2 + $0x10] sm:$0xff]
    %v505 = vld [vmem:[#allocation2 + $0x18] sm:$0xff]
    %v506 = vld [vmem:[#allocation2 + $0x20] sm:$0xff]
    %v507 = vld [vmem:[#allocation2 + $0x28] sm:$0xff]
    %v508 = vld [vmem:[#allocation2 + $0x30] sm:$0xff]
    %v509 = vld [vmem:[#allocation2 + $0x38] sm:$0xff]
    %v510 = vld [vmem:[#allocation2 + $0x40] sm:$0xff]
    %v511 = vld [vmem:[#allocation2 + $0x48] sm:$0xff]
    %v512 = vld [vmem:[#allocation2 + $0x50] sm:$0xff]
    %v513 = vld [vmem:[#allocation2 + $0x58] sm:$0xff]
    %v514 = vld [vmem:[#allocation2 + $0x60] sm:$0xff]
    %v515 = vld [vmem:[#allocation2 + $0x68] sm:$0xff]
    %v516 = vld [vmem:[#allocation2 + $0x70] sm:$0xff]
    %v517 = vld [vmem:[#allocation2 + $0x78] sm:$0xff]
    %v518 = vld [vmem:[#allocation2 + $0x80] sm:$0xff]
    %v519 = vld [vmem:[#allocation2 + $0x88] sm:$0xff]
    %v520 = vld [vmem:[#allocation2 + $0x90] sm:$0xff]
    %v521 = vld [vmem:[#allocation2 + $0x98] sm:$0xff]
    %v522 = vld [vmem:[#allocation2 + $0xa0] sm:$0xff]
    %v523 = vld [vmem:[#allocation2 + $0xa8] sm:$0xff]
    %v524 = vld [vmem:[#allocation2 + $0xb0] sm:$0xff]
    %v525 = vld [vmem:[#allocation2 + $0xb8] sm:$0xff]
    %v526 = vld [vmem:[#allocation2 + $0xc0] sm:$0xff]
    %v527 = vld [vmem:[#allocation2 + $0xc8] sm:$0xff]
    %v528 = vld [vmem:[#allocation2 + $0xd0] sm:$0xff]
    %v529 = vld [vmem:[#allocation2 + $0xd8] sm:$0xff]
    %v530 = vld [vmem:[#allocation2 + $0xe0] sm:$0xff]
    %v531 = vld [vmem:[#allocation2 + $0xe8] sm:$0xff]
    %v532 = vld [vmem:[#allocation2 + $0xf0] sm:$0xff]
    %v533 = vld [vmem:[#allocation2 + $0xf8] sm:$0xff]
    %v534 = vsub.f32 %v502, 1.8512012
    %v535 = vsub.f32 %v503, 1.8512012
    %v536 = vsub.f32 %v504, 1.8512012
    %v537 = vsub.f32 %v505, 1.8512012
    %v538 = vsub.f32 %v506, 1.8512012
    %v539 = vsub.f32 %v507, 1.8512012
    %v540 = vsub.f32 %v508, 1.8512012
    %v541 = vsub.f32 %v509, 1.8512012
    %v542 = vsub.f32 %v510, 1.8512012
    %v543 = vsub.f32 %v511, 1.8512012
    %v544 = vsub.f32 %v512, 1.8512012
    %v545 = vsub.f32 %v513, 1.8512012
    %v546 = vsub.f32 %v514, 1.8512012
    %v547 = vsub.f32 %v515, 1.8512012
    %v548 = vsub.f32 %v516, 1.8512012
    %v549 = vsub.f32 %v517, 1.8512012
    %v550 = vsub.f32 %v518, 1.8512012
    %v551 = vsub.f32 %v519, 1.8512012
    %v552 = vsub.f32 %v520, 1.8512012
    %v553 = vsub.f32 %v521, 1.8512012
    %v554 = vsub.f32 %v522, 1.8512012
    %v555 = vsub.f32 %v523, 1.8512012
    %v556 = vsub.f32 %v524, 1.8512012
    %v557 = vsub.f32 %v525, 1.8512012
    %v558 = vsub.f32 %v526, 1.8512012
    %v559 = vsub.f32 %v527, 1.8512012
    %v560 = vsub.f32 %v528, 1.8512012
    %v561 = vsub.f32 %v529, 1.8512012
    %v562 = vsub.f32 %v530, 1.8512012
    %v563 = vsub.f32 %v531, 1.8512012
    %v564 = vsub.f32 %v532, 1.8512012
    %v565 = vsub.f32 %v533, 1.8512012
    %v566 = vmul.f32 %v534, %v534
    %v567 = vmul.f32 %v535, %v535
    %v568 = vmul.f32 %v536, %v536
    %v569 = vmul.f32 %v537, %v537
    %v570 = vmul.f32 %v538, %v538
    %v571 = vmul.f32 %v539, %v539
    %v572 = vmul.f32 %v540, %v540
    %v573 = vmul.f32 %v541, %v541
    %v574 = vmul.f32 %v542, %v542
    %v575 = vmul.f32 %v543, %v543
    %v576 = vmul.f32 %v544, %v544
    %v577 = vmul.f32 %v545, %v545
    %v578 = vmul.f32 %v546, %v546
    %v579 = vmul.f32 %v547, %v547
    %v580 = vmul.f32 %v548, %v548
    %v581 = vmul.f32 %v549, %v549
    %v582 = vmul.f32 %v550, %v550
    %v583 = vmul.f32 %v551, %v551
    %v584 = vmul.f32 %v552, %v552
    %v585 = vmul.f32 %v553, %v553
    %v586 = vmul.f32 %v554, %v554
    %v587 = vmul.f32 %v555, %v555
    %v588 = vmul.f32 %v556, %v556
    %v589 = vmul.f32 %v557, %v557
    %v590 = vmul.f32 %v558, %v558
    %v591 = vmul.f32 %v559, %v559
    %v592 = vmul.f32 %v560, %v560
    %v593 = vmul.f32 %v561, %v561
    %v594 = vmul.f32 %v562, %v562
    %v595 = vmul.f32 %v563, %v563
    %v596 = vmul.f32 %v564, %v564
    %v597 = vmul.f32 %v565, %v565
    %v598 = vsub.f32 0.0, %v566
    %v599 = vsub.f32 0.0, %v567
    %v600 = vsub.f32 0.0, %v568
    %v601 = vsub.f32 0.0, %v569
    %v602 = vsub.f32 0.0, %v570
    %v603 = vsub.f32 0.0, %v571
    %v604 = vsub.f32 0.0, %v572
    %v605 = vsub.f32 0.0, %v573
    %v606 = vsub.f32 0.0, %v574
    %v607 = vsub.f32 0.0, %v575
    %v608 = vsub.f32 0.0, %v576
    %v609 = vsub.f32 0.0, %v577
    %v610 = vsub.f32 0.0, %v578
    %v611 = vsub.f32 0.0, %v579
    %v612 = vsub.f32 0.0, %v580
    %v613 = vsub.f32 0.0, %v581
    %v614 = vsub.f32 0.0, %v582
    %v615 = vsub.f32 0.0, %v583
    %v616 = vsub.f32 0.0, %v584
    %v617 = vsub.f32 0.0, %v585
    %v618 = vsub.f32 0.0, %v586
    %v619 = vsub.f32 0.0, %v587
    %v620 = vsub.f32 0.0, %v588
    %v621 = vsub.f32 0.0, %v589
    %v622 = vsub.f32 0.0, %v590
    %v623 = vsub.f32 0.0, %v591
    %v624 = vsub.f32 0.0, %v592
    %v625 = vsub.f32 0.0, %v593
    %v626 = vsub.f32 0.0, %v594
    %v627 = vsub.f32 0.0, %v595
    %v628 = vsub.f32 0.0, %v596
    %v629 = vsub.f32 0.0, %v597
    %v630 = vmul.f32 %v598, 1.442695
    %v631 = vpow.pop %v630
    %v632 = vmul.f32 %v599, 1.442695
    %v633 = vpow.pop %v632
    %v634 = vmul.f32 %v600, 1.442695
    %v635 = vpow.pop %v634
    %v636 = vmul.f32 %v601, 1.442695
    %v637 = vpow.pop %v636
    %v638 = vmul.f32 %v602, 1.442695
    %v639 = vpow.pop %v638
    %v640 = vmul.f32 %v603, 1.442695
    %v641 = vpow.pop %v640
    %v642 = vmul.f32 %v604, 1.442695
    %v643 = vpow.pop %v642
    %v644 = vmul.f32 %v605, 1.442695
    %v645 = vpow.pop %v644
    %v646 = vmul.f32 %v606, 1.442695
    %v647 = vpow.pop %v646
    %v648 = vmul.f32 %v607, 1.442695
    %v649 = vpow.pop %v648
    %v650 = vmul.f32 %v608, 1.442695
    %v651 = vpow.pop %v650
    %v652 = vmul.f32 %v609, 1.442695
    %v653 = vpow.pop %v652
    %v654 = vmul.f32 %v610, 1.442695
    %v655 = vpow.pop %v654
    %v656 = vmul.f32 %v611, 1.442695
    %v657 = vpow.pop %v656
    %v658 = vmul.f32 %v612, 1.442695
    %v659 = vpow.pop %v658
    %v660 = vmul.f32 %v613, 1.442695
    %v661 = vpow.pop %v660
    %v662 = vmul.f32 %v614, 1.442695
    %v663 = vpow.pop %v662
    %v664 = vmul.f32 %v615, 1.442695
    %v665 = vpow.pop %v664
    %v666 = vmul.f32 %v616, 1.442695
    %v667 = vpow.pop %v666
    %v668 = vmul.f32 %v617, 1.442695
    %v669 = vpow.pop %v668
    %v670 = vmul.f32 %v618, 1.442695
    %v671 = vpow.pop %v670
    %v672 = vmul.f32 %v619, 1.442695
    %v673 = vpow.pop %v672
    %v674 = vmul.f32 %v620, 1.442695
    %v675 = vpow.pop %v674
    %v676 = vmul.f32 %v621, 1.442695
    %v677 = vpow.pop %v676
    %v678 = vmul.f32 %v622, 1.442695
    %v679 = vpow.pop %v678
    %v680 = vmul.f32 %v623, 1.442695
    %v681 = vpow.pop %v680
    %v682 = vmul.f32 %v624, 1.442695
    %v683 = vpow.pop %v682
    %v684 = vmul.f32 %v625, 1.442695
    %v685 = vpow.pop %v684
    %v686 = vmul.f32 %v626, 1.442695
    %v687 = vpow.pop %v686
    %v688 = vmul.f32 %v627, 1.442695
    %v689 = vpow.pop %v688
    %v690 = vmul.f32 %v628, 1.442695
    %v691 = vpow.pop %v690
    %v692 = vmul.f32 %v629, 1.442695
    %v693 = vpow.pop %v692
    %v694 = vld [vmem:[#allocation3] sm:$0xff]
    %v695 = vld [vmem:[#allocation3 + $0x8] sm:$0xff]
    %v696 = vld [vmem:[#allocation3 + $0x10] sm:$0xff]
    %v697 = vld [vmem:[#allocation3 + $0x18] sm:$0xff]
    %v698 = vld [vmem:[#allocation3 + $0x20] sm:$0xff]
    %v699 = vld [vmem:[#allocation3 + $0x28] sm:$0xff]
    %v700 = vld [vmem:[#allocation3 + $0x30] sm:$0xff]
    %v701 = vld [vmem:[#allocation3 + $0x38] sm:$0xff]
    %v702 = vld [vmem:[#allocation3 + $0x40] sm:$0xff]
    %v703 = vld [vmem:[#allocation3 + $0x48] sm:$0xff]
    %v704 = vld [vmem:[#allocation3 + $0x50] sm:$0xff]
    %v705 = vld [vmem:[#allocation3 + $0x58] sm:$0xff]
    %v706 = vld [vmem:[#allocation3 + $0x60] sm:$0xff]
    %v707 = vld [vmem:[#allocation3 + $0x68] sm:$0xff]
    %v708 = vld [vmem:[#allocation3 + $0x70] sm:$0xff]
    %v709 = vld [vmem:[#allocation3 + $0x78] sm:$0xff]
    %v710 = vld [vmem:[#allocation3 + $0x80] sm:$0xff]
    %v711 = vld [vmem:[#allocation3 + $0x88] sm:$0xff]
    %v712 = vld [vmem:[#allocation3 + $0x90] sm:$0xff]
    %v713 = vld [vmem:[#allocation3 + $0x98] sm:$0xff]
    %v714 = vld [vmem:[#allocation3 + $0xa0] sm:$0xff]
    %v715 = vld [vmem:[#allocation3 + $0xa8] sm:$0xff]
    %v716 = vld [vmem:[#allocation3 + $0xb0] sm:$0xff]
    %v717 = vld [vmem:[#allocation3 + $0xb8] sm:$0xff]
    %v718 = vld [vmem:[#allocation3 + $0xc0] sm:$0xff]
    %v719 = vld [vmem:[#allocation3 + $0xc8] sm:$0xff]
    %v720 = vld [vmem:[#allocation3 + $0xd0] sm:$0xff]
    %v721 = vld [vmem:[#allocation3 + $0xd8] sm:$0xff]
    %v722 = vld [vmem:[#allocation3 + $0xe0] sm:$0xff]
    %v723 = vld [vmem:[#allocation3 + $0xe8] sm:$0xff]
    %v724 = vld [vmem:[#allocation3 + $0xf0] sm:$0xff]
    %v725 = vld [vmem:[#allocation3 + $0xf8] sm:$0xff]
    %v726 = vmul.f32 %v631, %v694
    %v727 = vmul.f32 %v633, %v695
    %v728 = vmul.f32 %v635, %v696
    %v729 = vmul.f32 %v637, %v697
    %v730 = vmul.f32 %v639, %v698
    %v731 = vmul.f32 %v641, %v699
    %v732 = vmul.f32 %v643, %v700
    %v733 = vmul.f32 %v645, %v701
    %v734 = vmul.f32 %v647, %v702
    %v735 = vmul.f32 %v649, %v703
    %v736 = vmul.f32 %v651, %v704
    %v737 = vmul.f32 %v653, %v705
    %v738 = vmul.f32 %v655, %v706
    %v739 = vmul.f32 %v657, %v707
    %v740 = vmul.f32 %v659, %v708
    %v741 = vmul.f32 %v661, %v709
    %v742 = vmul.f32 %v663, %v710
    %v743 = vmul.f32 %v665, %v711
    %v744 = vmul.f32 %v667, %v712
    %v745 = vmul.f32 %v669, %v713
    %v746 = vmul.f32 %v671, %v714
    %v747 = vmul.f32 %v673, %v715
    %v748 = vmul.f32 %v675, %v716
    %v749 = vmul.f32 %v677, %v717
    %v750 = vmul.f32 %v679, %v718
    %v751 = vmul.f32 %v681, %v719
    %v752 = vmul.f32 %v683, %v720
    %v753 = vmul.f32 %v685, %v721
    %v754 = vmul.f32 %v687, %v722
    %v755 = vmul.f32 %v689, %v723
    %v756 = vmul.f32 %v691, %v724
    %v757 = vmul.f32 %v693, %v725
    %v758 = vadd.f32 %v726, %v727
    %v759 = vadd.f32 %v758, %v728
    %v760 = vadd.f32 %v759, %v729
    %v761 = vadd.f32 %v760, %v730
    %v762 = vadd.f32 %v761, %v731
    %v763 = vadd.f32 %v762, %v732
    %v764 = vadd.f32 %v763, %v733
    %v765 = vadd.f32 %v764, %v734
    %v766 = vadd.f32 %v765, %v735
    %v767 = vadd.f32 %v766, %v736
    %v768 = vadd.f32 %v767, %v737
    %v769 = vadd.f32 %v768, %v738
    %v770 = vadd.f32 %v769, %v739
    %v771 = vadd.f32 %v770, %v740
    %v772 = vadd.f32 %v771, %v741
    %v773 = vadd.f32 %v772, %v742
    %v774 = vadd.f32 %v773, %v743
    %v775 = vadd.f32 %v774, %v744
    %v776 = vadd.f32 %v775, %v745
    %v777 = vadd.f32 %v776, %v746
    %v778 = vadd.f32 %v777, %v747
    %v779 = vadd.f32 %v778, %v748
    %v780 = vadd.f32 %v779, %v749
    %v781 = vadd.f32 %v780, %v750
    %v782 = vadd.f32 %v781, %v751
    %v783 = vadd.f32 %v782, %v752
    %v784 = vadd.f32 %v783, %v753
    %v785 = vadd.f32 %v784, %v754
    %v786 = vadd.f32 %v785, %v755
    %v787 = vadd.f32 %v786, %v756
    %v788 = vadd.f32 %v787, %v757
    %v789 = vrot.slane %v788, 4
    %v790 = vadd.f32 %v788, %v789
    %v791 = vrot.slane %v790, 2
    %v792 = vadd.f32 %v790, %v791
    %v793 = vrot.slane %v792, 1
    %v794 = vadd.f32 %v792, %v793
    %v795 = vmul.f32 %v794, 7.9788456
    %v796 = vrsqrt.pop %v795
    %v797 = vmul.f32 %v795, %v796
    %vm798 = vcmp.eq.f32.partialorder %v795, inf
    %v799 = vsel %vm798, %v795, %v797
    %vm800 = vcmp.eq.f32.partialorder %v795, 0.0
    %v801 = vand.u32 %v795, 2147483648
    %v802 = vsel %vm800, %v801, %v799
    %803 = vst [vmem:[#allocation8 + $0x1] sm:$0x1] %v802
    %v804 = vld [vmem:[#allocation2] sm:$0xff]
    %v805 = vld [vmem:[#allocation2 + $0x8] sm:$0xff]
    %v806 = vld [vmem:[#allocation2 + $0x10] sm:$0xff]
    %v807 = vld [vmem:[#allocation2 + $0x18] sm:$0xff]
    %v808 = vld [vmem:[#allocation2 + $0x20] sm:$0xff]
    %v809 = vld [vmem:[#allocation2 + $0x28] sm:$0xff]
    %v810 = vld [vmem:[#allocation2 + $0x30] sm:$0xff]
    %v811 = vld [vmem:[#allocation2 + $0x38] sm:$0xff]
    %v812 = vld [vmem:[#allocation2 + $0x40] sm:$0xff]
    %v813 = vld [vmem:[#allocation2 + $0x48] sm:$0xff]
    %v814 = vld [vmem:[#allocation2 + $0x50] sm:$0xff]
    %v815 = vld [vmem:[#allocation2 + $0x58] sm:$0xff]
    %v816 = vld [vmem:[#allocation2 + $0x60] sm:$0xff]
    %v817 = vld [vmem:[#allocation2 + $0x68] sm:$0xff]
    %v818 = vld [vmem:[#allocation2 + $0x70] sm:$0xff]
    %v819 = vld [vmem:[#allocation2 + $0x78] sm:$0xff]
    %v820 = vld [vmem:[#allocation2 + $0x80] sm:$0xff]
    %v821 = vld [vmem:[#allocation2 + $0x88] sm:$0xff]
    %v822 = vld [vmem:[#allocation2 + $0x90] sm:$0xff]
    %v823 = vld [vmem:[#allocation2 + $0x98] sm:$0xff]
    %v824 = vld [vmem:[#allocation2 + $0xa0] sm:$0xff]
    %v825 = vld [vmem:[#allocation2 + $0xa8] sm:$0xff]
    %v826 = vld [vmem:[#allocation2 + $0xb0] sm:$0xff]
    %v827 = vld [vmem:[#allocation2 + $0xb8] sm:$0xff]
    %v828 = vld [vmem:[#allocation2 + $0xc0] sm:$0xff]
    %v829 = vld [vmem:[#allocation2 + $0xc8] sm:$0xff]
    %v830 = vld [vmem:[#allocation2 + $0xd0] sm:$0xff]
    %v831 = vld [vmem:[#allocation2 + $0xd8] sm:$0xff]
    %v832 = vld [vmem:[#allocation2 + $0xe0] sm:$0xff]
    %v833 = vld [vmem:[#allocation2 + $0xe8] sm:$0xff]
    %v834 = vld [vmem:[#allocation2 + $0xf0] sm:$0xff]
    %v835 = vld [vmem:[#allocation2 + $0xf8] sm:$0xff]
    %v836 = vsub.f32 %v804, 3.7024024
    %v837 = vsub.f32 %v805, 3.7024024
    %v838 = vsub.f32 %v806, 3.7024024
    %v839 = vsub.f32 %v807, 3.7024024
    %v840 = vsub.f32 %v808, 3.7024024
    %v841 = vsub.f32 %v809, 3.7024024
    %v842 = vsub.f32 %v810, 3.7024024
    %v843 = vsub.f32 %v811, 3.7024024
    %v844 = vsub.f32 %v812, 3.7024024
    %v845 = vsub.f32 %v813, 3.7024024
    %v846 = vsub.f32 %v814, 3.7024024
    %v847 = vsub.f32 %v815, 3.7024024
    %v848 = vsub.f32 %v816, 3.7024024
    %v849 = vsub.f32 %v817, 3.7024024
    %v850 = vsub.f32 %v818, 3.7024024
    %v851 = vsub.f32 %v819, 3.7024024
    %v852 = vsub.f32 %v820, 3.7024024
    %v853 = vsub.f32 %v821, 3.7024024
    %v854 = vsub.f32 %v822, 3.7024024
    %v855 = vsub.f32 %v823, 3.7024024
    %v856 = vsub.f32 %v824, 3.7024024
    %v857 = vsub.f32 %v825, 3.7024024
    %v858 = vsub.f32 %v826, 3.7024024
    %v859 = vsub.f32 %v827, 3.7024024
    %v860 = vsub.f32 %v828, 3.7024024
    %v861 = vsub.f32 %v829, 3.7024024
    %v862 = vsub.f32 %v830, 3.7024024
    %v863 = vsub.f32 %v831, 3.7024024
    %v864 = vsub.f32 %v832, 3.7024024
    %v865 = vsub.f32 %v833, 3.7024024
    %v866 = vsub.f32 %v834, 3.7024024
    %v867 = vsub.f32 %v835, 3.7024024
    %v868 = vmul.f32 %v836, %v836
    %v869 = vmul.f32 %v837, %v837
    %v870 = vmul.f32 %v838, %v838
    %v871 = vmul.f32 %v839, %v839
    %v872 = vmul.f32 %v840, %v840
    %v873 = vmul.f32 %v841, %v841
    %v874 = vmul.f32 %v842, %v842
    %v875 = vmul.f32 %v843, %v843
    %v876 = vmul.f32 %v844, %v844
    %v877 = vmul.f32 %v845, %v845
    %v878 = vmul.f32 %v846, %v846
    %v879 = vmul.f32 %v847, %v847
    %v880 = vmul.f32 %v848, %v848
    %v881 = vmul.f32 %v849, %v849
    %v882 = vmul.f32 %v850, %v850
    %v883 = vmul.f32 %v851, %v851
    %v884 = vmul.f32 %v852, %v852
    %v885 = vmul.f32 %v853, %v853
    %v886 = vmul.f32 %v854, %v854
    %v887 = vmul.f32 %v855, %v855
    %v888 = vmul.f32 %v856, %v856
    %v889 = vmul.f32 %v857, %v857
    %v890 = vmul.f32 %v858, %v858
    %v891 = vmul.f32 %v859, %v859
    %v892 = vmul.f32 %v860, %v860
    %v893 = vmul.f32 %v861, %v861
    %v894 = vmul.f32 %v862, %v862
    %v895 = vmul.f32 %v863, %v863
    %v896 = vmul.f32 %v864, %v864
    %v897 = vmul.f32 %v865, %v865
    %v898 = vmul.f32 %v866, %v866
    %v899 = vmul.f32 %v867, %v867
    %v900 = vsub.f32 0.0, %v868
    %v901 = vsub.f32 0.0, %v869
    %v902 = vsub.f32 0.0, %v870
    %v903 = vsub.f32 0.0, %v871
    %v904 = vsub.f32 0.0, %v872
    %v905 = vsub.f32 0.0, %v873
    %v906 = vsub.f32 0.0, %v874
    %v907 = vsub.f32 0.0, %v875
    %v908 = vsub.f32 0.0, %v876
    %v909 = vsub.f32 0.0, %v877
    %v910 = vsub.f32 0.0, %v878
    %v911 = vsub.f32 0.0, %v879
    %v912 = vsub.f32 0.0, %v880
    %v913 = vsub.f32 0.0, %v881
    %v914 = vsub.f32 0.0, %v882
    %v915 = vsub.f32 0.0, %v883
    %v916 = vsub.f32 0.0, %v884
    %v917 = vsub.f32 0.0, %v885
    %v918 = vsub.f32 0.0, %v886
    %v919 = vsub.f32 0.0, %v887
    %v920 = vsub.f32 0.0, %v888
    %v921 = vsub.f32 0.0, %v889
    %v922 = vsub.f32 0.0, %v890
    %v923 = vsub.f32 0.0, %v891
    %v924 = vsub.f32 0.0, %v892
    %v925 = vsub.f32 0.0, %v893
    %v926 = vsub.f32 0.0, %v894
    %v927 = vsub.f32 0.0, %v895
    %v928 = vsub.f32 0.0, %v896
    %v929 = vsub.f32 0.0, %v897
    %v930 = vsub.f32 0.0, %v898
    %v931 = vsub.f32 0.0, %v899
    %v932 = vmul.f32 %v900, 1.442695
    %v933 = vpow.pop %v932
    %v934 = vmul.f32 %v901, 1.442695
    %v935 = vpow.pop %v934
    %v936 = vmul.f32 %v902, 1.442695
    %v937 = vpow.pop %v936
    %v938 = vmul.f32 %v903, 1.442695
    %v939 = vpow.pop %v938
    %v940 = vmul.f32 %v904, 1.442695
    %v941 = vpow.pop %v940
    %v942 = vmul.f32 %v905, 1.442695
    %v943 = vpow.pop %v942
    %v944 = vmul.f32 %v906, 1.442695
    %v945 = vpow.pop %v944
    %v946 = vmul.f32 %v907, 1.442695
    %v947 = vpow.pop %v946
    %v948 = vmul.f32 %v908, 1.442695
    %v949 = vpow.pop %v948
    %v950 = vmul.f32 %v909, 1.442695
    %v951 = vpow.pop %v950
    %v952 = vmul.f32 %v910, 1.442695
    %v953 = vpow.pop %v952
    %v954 = vmul.f32 %v911, 1.442695
    %v955 = vpow.pop %v954
    %v956 = vmul.f32 %v912, 1.442695
    %v957 = vpow.pop %v956
    %v958 = vmul.f32 %v913, 1.442695
    %v959 = vpow.pop %v958
    %v960 = vmul.f32 %v914, 1.442695
    %v961 = vpow.pop %v960
    %v962 = vmul.f32 %v915, 1.442695
    %v963 = vpow.pop %v962
    %v964 = vmul.f32 %v916, 1.442695
    %v965 = vpow.pop %v964
    %v966 = vmul.f32 %v917, 1.442695
    %v967 = vpow.pop %v966
    %v968 = vmul.f32 %v918, 1.442695
    %v969 = vpow.pop %v968
    %v970 = vmul.f32 %v919, 1.442695
    %v971 = vpow.pop %v970
    %v972 = vmul.f32 %v920, 1.442695
    %v973 = vpow.pop %v972
    %v974 = vmul.f32 %v921, 1.442695
    %v975 = vpow.pop %v974
    %v976 = vmul.f32 %v922, 1.442695
    %v977 = vpow.pop %v976
    %v978 = vmul.f32 %v923, 1.442695
    %v979 = vpow.pop %v978
    %v980 = vmul.f32 %v924, 1.442695
    %v981 = vpow.pop %v980
    %v982 = vmul.f32 %v925, 1.442695
    %v983 = vpow.pop %v982
    %v984 = vmul.f32 %v926, 1.442695
    %v985 = vpow.pop %v984
    %v986 = vmul.f32 %v927, 1.442695
    %v987 = vpow.pop %v986
    %v988 = vmul.f32 %v928, 1.442695
    %v989 = vpow.pop %v988
    %v990 = vmul.f32 %v929, 1.442695
    %v991 = vpow.pop %v990
    %v992 = vmul.f32 %v930, 1.442695
    %v993 = vpow.pop %v992
    %v994 = vmul.f32 %v931, 1.442695
    %v995 = vpow.pop %v994
    %v996 = vld [vmem:[#allocation3] sm:$0xff]
    %v997 = vld [vmem:[#allocation3 + $0x8] sm:$0xff]
    %v998 = vld [vmem:[#allocation3 + $0x10] sm:$0xff]
    %v999 = vld [vmem:[#allocation3 + $0x18] sm:$0xff]
    %v1000 = vld [vmem:[#allocation3 + $0x20] sm:$0xff]
    %v1001 = vld [vmem:[#allocation3 + $0x28] sm:$0xff]
    %v1002 = vld [vmem:[#allocation3 + $0x30] sm:$0xff]
    %v1003 = vld [vmem:[#allocation3 + $0x38] sm:$0xff]
    %v1004 = vld [vmem:[#allocation3 + $0x40] sm:$0xff]
    %v1005 = vld [vmem:[#allocation3 + $0x48] sm:$0xff]
    %v1006 = vld [vmem:[#allocation3 + $0x50] sm:$0xff]
    %v1007 = vld [vmem:[#allocation3 + $0x58] sm:$0xff]
    %v1008 = vld [vmem:[#allocation3 + $0x60] sm:$0xff]
    %v1009 = vld [vmem:[#allocation3 + $0x68] sm:$0xff]
    %v1010 = vld [vmem:[#allocation3 + $0x70] sm:$0xff]
    %v1011 = vld [vmem:[#allocation3 + $0x78] sm:$0xff]
    %v1012 = vld [vmem:[#allocation3 + $0x80] sm:$0xff]
    %v1013 = vld [vmem:[#allocation3 + $0x88] sm:$0xff]
    %v1014 = vld [vmem:[#allocation3 + $0x90] sm:$0xff]
    %v1015 = vld [vmem:[#allocation3 + $0x98] sm:$0xff]
    %v1016 = vld [vmem:[#allocation3 + $0xa0] sm:$0xff]
    %v1017 = vld [vmem:[#allocation3 + $0xa8] sm:$0xff]
    %v1018 = vld [vmem:[#allocation3 + $0xb0] sm:$0xff]
    %v1019 = vld [vmem:[#allocation3 + $0xb8] sm:$0xff]
    %v1020 = vld [vmem:[#allocation3 + $0xc0] sm:$0xff]
    %v1021 = vld [vmem:[#allocation3 + $0xc8] sm:$0xff]
    %v1022 = vld [vmem:[#allocation3 + $0xd0] sm:$0xff]
    %v1023 = vld [vmem:[#allocation3 + $0xd8] sm:$0xff]
    %v1024 = vld [vmem:[#allocation3 + $0xe0] sm:$0xff]
    %v1025 = vld [vmem:[#allocation3 + $0xe8] sm:$0xff]
    %v1026 = vld [vmem:[#allocation3 + $0xf0] sm:$0xff]
    %v1027 = vld [vmem:[#allocation3 + $0xf8] sm:$0xff]
    %v1028 = vmul.f32 %v933, %v996
    %v1029 = vmul.f32 %v935, %v997
    %v1030 = vmul.f32 %v937, %v998
    %v1031 = vmul.f32 %v939, %v999
    %v1032 = vmul.f32 %v941, %v1000
    %v1033 = vmul.f32 %v943, %v1001
    %v1034 = vmul.f32 %v945, %v1002
    %v1035 = vmul.f32 %v947, %v1003
    %v1036 = vmul.f32 %v949, %v1004
    %v1037 = vmul.f32 %v951, %v1005
    %v1038 = vmul.f32 %v953, %v1006
    %v1039 = vmul.f32 %v955, %v1007
    %v1040 = vmul.f32 %v957, %v1008
    %v1041 = vmul.f32 %v959, %v1009
    %v1042 = vmul.f32 %v961, %v1010
    %v1043 = vmul.f32 %v963, %v1011
    %v1044 = vmul.f32 %v965, %v1012
    %v1045 = vmul.f32 %v967, %v1013
    %v1046 = vmul.f32 %v969, %v1014
    %v1047 = vmul.f32 %v971, %v1015
    %v1048 = vmul.f32 %v973, %v1016
    %v1049 = vmul.f32 %v975, %v1017
    %v1050 = vmul.f32 %v977, %v1018
    %v1051 = vmul.f32 %v979, %v1019
    %v1052 = vmul.f32 %v981, %v1020
    %v1053 = vmul.f32 %v983, %v1021
    %v1054 = vmul.f32 %v985, %v1022
    %v1055 = vmul.f32 %v987, %v1023
    %v1056 = vmul.f32 %v989, %v1024
    %v1057 = vmul.f32 %v991, %v1025
    %v1058 = vmul.f32 %v993, %v1026
    %v1059 = vmul.f32 %v995, %v1027
    %v1060 = vadd.f32 %v1028, %v1029
    %v1061 = vadd.f32 %v1060, %v1030
    %v1062 = vadd.f32 %v1061, %v1031
    %v1063 = vadd.f32 %v1062, %v1032
    %v1064 = vadd.f32 %v1063, %v1033
    %v1065 = vadd.f32 %v1064, %v1034
    %v1066 = vadd.f32 %v1065, %v1035
    %v1067 = vadd.f32 %v1066, %v1036
    %v1068 = vadd.f32 %v1067, %v1037
    %v1069 = vadd.f32 %v1068, %v1038
    %v1070 = vadd.f32 %v1069, %v1039
    %v1071 = vadd.f32 %v1070, %v1040
    %v1072 = vadd.f32 %v1071, %v1041
    %v1073 = vadd.f32 %v1072, %v1042
    %v1074 = vadd.f32 %v1073, %v1043
    %v1075 = vadd.f32 %v1074, %v1044
    %v1076 = vadd.f32 %v1075, %v1045
    %v1077 = vadd.f32 %v1076, %v1046
    %v1078 = vadd.f32 %v1077, %v1047
    %v1079 = vadd.f32 %v1078, %v1048
    %v1080 = vadd.f32 %v1079, %v1049
    %v1081 = vadd.f32 %v1080, %v1050
    %v1082 = vadd.f32 %v1081, %v1051
    %v1083 = vadd.f32 %v1082, %v1052
    %v1084 = vadd.f32 %v1083, %v1053
    %v1085 = vadd.f32 %v1084, %v1054
    %v1086 = vadd.f32 %v1085, %v1055
    %v1087 = vadd.f32 %v1086, %v1056
    %v1088 = vadd.f32 %v1087, %v1057
    %v1089 = vadd.f32 %v1088, %v1058
    %v1090 = vadd.f32 %v1089, %v1059
    %v1091 = vrot.slane %v1090, 4
    %v1092 = vadd.f32 %v1090, %v1091
    %v1093 = vrot.slane %v1092, 2
    %v1094 = vadd.f32 %v1092, %v1093
    %v1095 = vrot.slane %v1094, 1
    %v1096 = vadd.f32 %v1094, %v1095
    %v1097 = vmul.f32 %v1096, 7.9788456
    %v1098 = vrsqrt.pop %v1097
    %v1099 = vmul.f32 %v1097, %v1098
    %vm1100 = vcmp.eq.f32.partialorder %v1097, inf
    %v1101 = vsel %vm1100, %v1097, %v1099
    %vm1102 = vcmp.eq.f32.partialorder %v1097, 0.0
    %v1103 = vand.u32 %v1097, 2147483648
    %v1104 = vsel %vm1102, %v1103, %v1101
    %1105 = vst [vmem:[#allocation8 + $0x2] sm:$0x1] %v1104
    %v1106 = vld [vmem:[#allocation2] sm:$0xff]
    %v1107 = vld [vmem:[#allocation2 + $0x8] sm:$0xff]
    %v1108 = vld [vmem:[#allocation2 + $0x10] sm:$0xff]
    %v1109 = vld [vmem:[#allocation2 + $0x18] sm:$0xff]
    %v1110 = vld [vmem:[#allocation2 + $0x20] sm:$0xff]
    %v1111 = vld [vmem:[#allocation2 + $0x28] sm:$0xff]
    %v1112 = vld [vmem:[#allocation2 + $0x30] sm:$0xff]
    %v1113 = vld [vmem:[#allocation2 + $0x38] sm:$0xff]
    %v1114 = vld [vmem:[#allocation2 + $0x40] sm:$0xff]
    %v1115 = vld [vmem:[#allocation2 + $0x48] sm:$0xff]
    %v1116 = vld [vmem:[#allocation2 + $0x50] sm:$0xff]
    %v1117 = vld [vmem:[#allocation2 + $0x58] sm:$0xff]
    %v1118 = vld [vmem:[#allocation2 + $0x60] sm:$0xff]
    %v1119 = vld [vmem:[#allocation2 + $0x68] sm:$0xff]
    %v1120 = vld [vmem:[#allocation2 + $0x70] sm:$0xff]
    %v1121 = vld [vmem:[#allocation2 + $0x78] sm:$0xff]
    %v1122 = vld [vmem:[#allocation2 + $0x80] sm:$0xff]
    %v1123 = vld [vmem:[#allocation2 + $0x88] sm:$0xff]
    %v1124 = vld [vmem:[#allocation2 + $0x90] sm:$0xff]
    %v1125 = vld [vmem:[#allocation2 + $0x98] sm:$0xff]
    %v1126 = vld [vmem:[#allocation2 + $0xa0] sm:$0xff]
    %v1127 = vld [vmem:[#allocation2 + $0xa8] sm:$0xff]
    %v1128 = vld [vmem:[#allocation2 + $0xb0] sm:$0xff]
    %v1129 = vld [vmem:[#allocation2 + $0xb8] sm:$0xff]
    %v1130 = vld [vmem:[#allocation2 + $0xc0] sm:$0xff]
    %v1131 = vld [vmem:[#allocation2 + $0xc8] sm:$0xff]
    %v1132 = vld [vmem:[#allocation2 + $0xd0] sm:$0xff]
    %v1133 = vld [vmem:[#allocation2 + $0xd8] sm:$0xff]
    %v1134 = vld [vmem:[#allocation2 + $0xe0] sm:$0xff]
    %v1135 = vld [vmem:[#allocation2 + $0xe8] sm:$0xff]
    %v1136 = vld [vmem:[#allocation2 + $0xf0] sm:$0xff]
    %v1137 = vld [vmem:[#allocation2 + $0xf8] sm:$0xff]
    %v1138 = vsub.f32 %v1106, 5.5536036
    %v1139 = vsub.f32 %v1107, 5.5536036
    %v1140 = vsub.f32 %v1108, 5.5536036
    %v1141 = vsub.f32 %v1109, 5.5536036
    %v1142 = vsub.f32 %v1110, 5.5536036
    %v1143 = vsub.f32 %v1111, 5.5536036
    %v1144 = vsub.f32 %v1112, 5.5536036
    %v1145 = vsub.f32 %v1113, 5.5536036
    %v1146 = vsub.f32 %v1114, 5.5536036
    %v1147 = vsub.f32 %v1115, 5.5536036
    %v1148 = vsub.f32 %v1116, 5.5536036
    %v1149 = vsub.f32 %v1117, 5.5536036
    %v1150 = vsub.f32 %v1118, 5.5536036
    %v1151 = vsub.f32 %v1119, 5.5536036
    %v1152 = vsub.f32 %v1120, 5.5536036
    %v1153 = vsub.f32 %v1121, 5.5536036
    %v1154 = vsub.f32 %v1122, 5.5536036
    %v1155 = vsub.f32 %v1123, 5.5536036
    %v1156 = vsub.f32 %v1124, 5.5536036
    %v1157 = vsub.f32 %v1125, 5.5536036
    %v1158 = vsub.f32 %v1126, 5.5536036
    %v1159 = vsub.f32 %v1127, 5.5536036
    %v1160 = vsub.f32 %v1128, 5.5536036
    %v1161 = vsub.f32 %v1129, 5.5536036
    %v1162 = vsub.f32 %v1130, 5.5536036
    %v1163 = vsub.f32 %v1131, 5.5536036
    %v1164 = vsub.f32 %v1132, 5.5536036
    %v1165 = vsub.f32 %v1133, 5.5536036
    %v1166 = vsub.f32 %v1134, 5.5536036
    %v1167 = vsub.f32 %v1135, 5.5536036
    %v1168 = vsub.f32 %v1136, 5.5536036
    %v1169 = vsub.f32 %v1137, 5.5536036
    %v1170 = vmul.f32 %v1138, %v1138
    %v1171 = vmul.f32 %v1139, %v1139
    %v1172 = vmul.f32 %v1140, %v1140
    %v1173 = vmul.f32 %v1141, %v1141
    %v1174 = vmul.f32 %v1142, %v1142
    %v1175 = vmul.f32 %v1143, %v1143
    %v1176 = vmul.f32 %v1144, %v1144
    %v1177 = vmul.f32 %v1145, %v1145
    %v1178 = vmul.f32 %v1146, %v1146
    %v1179 = vmul.f32 %v1147, %v1147
    %v1180 = vmul.f32 %v1148, %v1148
    %v1181 = vmul.f32 %v1149, %v1149
    %v1182 = vmul.f32 %v1150, %v1150
    %v1183 = vmul.f32 %v1151, %v1151
    %v1184 = vmul.f32 %v1152, %v1152
    %v1185 = vmul.f32 %v1153, %v1153
    %v1186 = vmul.f32 %v1154, %v1154
    %v1187 = vmul.f32 %v1155, %v1155
    %v1188 = vmul.f32 %v1156, %v1156
    %v1189 = vmul.f32 %v1157, %v1157
    %v1190 = vmul.f32 %v1158, %v1158
    %v1191 = vmul.f32 %v1159, %v1159
    %v1192 = vmul.f32 %v1160, %v1160
    %v1193 = vmul.f32 %v1161, %v1161
    %v1194 = vmul.f32 %v1162, %v1162
    %v1195 = vmul.f32 %v1163, %v1163
    %v1196 = vmul.f32 %v1164, %v1164
    %v1197 = vmul.f32 %v1165, %v1165
    %v1198 = vmul.f32 %v1166, %v1166
    %v1199 = vmul.f32 %v1167, %v1167
    %v1200 = vmul.f32 %v1168, %v1168
    %v1201 = vmul.f32 %v1169, %v1169
    %v1202 = vsub.f32 0.0, %v1170
    %v1203 = vsub.f32 0.0, %v1171
    %v1204 = vsub.f32 0.0, %v1172
    %v1205 = vsub.f32 0.0, %v1173
    %v1206 = vsub.f32 0.0, %v1174
    %v1207 = vsub.f32 0.0, %v1175
    %v1208 = vsub.f32 0.0, %v1176
    %v1209 = vsub.f32 0.0, %v1177
    %v1210 = vsub.f32 0.0, %v1178
    %v1211 = vsub.f32 0.0, %v1179
    %v1212 = vsub.f32 0.0, %v1180
    %v1213 = vsub.f32 0.0, %v1181
    %v1214 = vsub.f32 0.0, %v1182
    %v1215 = vsub.f32 0.0, %v1183
    %v1216 = vsub.f32 0.0, %v1184
    %v1217 = vsub.f32 0.0, %v1185
    %v1218 = vsub.f32 0.0, %v1186
    %v1219 = vsub.f32 0.0, %v1187
    %v1220 = vsub.f32 0.0, %v1188
    %v1221 = vsub.f32 0.0, %v1189
    %v1222 = vsub.f32 0.0, %v1190
    %v1223 = vsub.f32 0.0, %v1191
    %v1224 = vsub.f32 0.0, %v1192
    %v1225 = vsub.f32 0.0, %v1193
    %v1226 = vsub.f32 0.0, %v1194
    %v1227 = vsub.f32 0.0, %v1195
    %v1228 = vsub.f32 0.0, %v1196
    %v1229 = vsub.f32 0.0, %v1197
    %v1230 = vsub.f32 0.0, %v1198
    %v1231 = vsub.f32 0.0, %v1199
    %v1232 = vsub.f32 0.0, %v1200
    %v1233 = vsub.f32 0.0, %v1201
    %v1234 = vmul.f32 %v1202, 1.442695
    %v1235 = vpow.pop %v1234
    %v1236 = vmul.f32 %v1203, 1.442695
    %v1237 = vpow.pop %v1236
    %v1238 = vmul.f32 %v1204, 1.442695
    %v1239 = vpow.pop %v1238
    %v1240 = vmul.f32 %v1205, 1.442695
    %v1241 = vpow.pop %v1240
    %v1242 = vmul.f32 %v1206, 1.442695
    %v1243 = vpow.pop %v1242
    %v1244 = vmul.f32 %v1207, 1.442695
    %v1245 = vpow.pop %v1244
    %v1246 = vmul.f32 %v1208, 1.442695
    %v1247 = vpow.pop %v1246
    %v1248 = vmul.f32 %v1209, 1.442695
    %v1249 = vpow.pop %v1248
    %v1250 = vmul.f32 %v1210, 1.442695
    %v1251 = vpow.pop %v1250
    %v1252 = vmul.f32 %v1211, 1.442695
    %v1253 = vpow.pop %v1252
    %v1254 = vmul.f32 %v1212, 1.442695
    %v1255 = vpow.pop %v1254
    %v1256 = vmul.f32 %v1213, 1.442695
    %v1257 = vpow.pop %v1256
    %v1258 = vmul.f32 %v1214, 1.442695
    %v1259 = vpow.pop %v1258
    %v1260 = vmul.f32 %v1215, 1.442695
    %v1261 = vpow.pop %v1260
    %v1262 = vmul.f32 %v1216, 1.442695
    %v1263 = vpow.pop %v1262
    %v1264 = vmul.f32 %v1217, 1.442695
    %v1265 = vpow.pop %v1264
    %v1266 = vmul.f32 %v1218, 1.442695
    %v1267 = vpow.pop %v1266
    %v1268 = vmul.f32 %v1219, 1.442695
    %v1269 = vpow.pop %v1268
    %v1270 = vmul.f32 %v1220, 1.442695
    %v1271 = vpow.pop %v1270
    %v1272 = vmul.f32 %v1221, 1.442695
    %v1273 = vpow.pop %v1272
    %v1274 = vmul.f32 %v1222, 1.442695
    %v1275 = vpow.pop %v1274
    %v1276 = vmul.f32 %v1223, 1.442695
    %v1277 = vpow.pop %v1276
    %v1278 = vmul.f32 %v1224, 1.442695
    %v1279 = vpow.pop %v1278
    %v1280 = vmul.f32 %v1225, 1.442695
    %v1281 = vpow.pop %v1280
    %v1282 = vmul.f32 %v1226, 1.442695
    %v1283 = vpow.pop %v1282
    %v1284 = vmul.f32 %v1227, 1.442695
    %v1285 = vpow.pop %v1284
    %v1286 = vmul.f32 %v1228, 1.442695
    %v1287 = vpow.pop %v1286
    %v1288 = vmul.f32 %v1229, 1.442695
    %v1289 = vpow.pop %v1288
    %v1290 = vmul.f32 %v1230, 1.442695
    %v1291 = vpow.pop %v1290
    %v1292 = vmul.f32 %v1231, 1.442695
    %v1293 = vpow.pop %v1292
    %v1294 = vmul.f32 %v1232, 1.442695
    %v1295 = vpow.pop %v1294
    %v1296 = vmul.f32 %v1233, 1.442695
    %v1297 = vpow.pop %v1296
    %v1298 = vld [vmem:[#allocation3] sm:$0xff]
    %v1299 = vld [vmem:[#allocation3 + $0x8] sm:$0xff]
    %v1300 = vld [vmem:[#allocation3 + $0x10] sm:$0xff]
    %v1301 = vld [vmem:[#allocation3 + $0x18] sm:$0xff]
    %v1302 = vld [vmem:[#allocation3 + $0x20] sm:$0xff]
    %v1303 = vld [vmem:[#allocation3 + $0x28] sm:$0xff]
    %v1304 = vld [vmem:[#allocation3 + $0x30] sm:$0xff]
    %v1305 = vld [vmem:[#allocation3 + $0x38] sm:$0xff]
    %v1306 = vld [vmem:[#allocation3 + $0x40] sm:$0xff]
    %v1307 = vld [vmem:[#allocation3 + $0x48] sm:$0xff]
    %v1308 = vld [vmem:[#allocation3 + $0x50] sm:$0xff]
    %v1309 = vld [vmem:[#allocation3 + $0x58] sm:$0xff]
    %v1310 = vld [vmem:[#allocation3 + $0x60] sm:$0xff]
    %v1311 = vld [vmem:[#allocation3 + $0x68] sm:$0xff]
    %v1312 = vld [vmem:[#allocation3 + $0x70] sm:$0xff]
    %v1313 = vld [vmem:[#allocation3 + $0x78] sm:$0xff]
    %v1314 = vld [vmem:[#allocation3 + $0x80] sm:$0xff]
    %v1315 = vld [vmem:[#allocation3 + $0x88] sm:$0xff]
    %v1316 = vld [vmem:[#allocation3 + $0x90] sm:$0xff]
    %v1317 = vld [vmem:[#allocation3 + $0x98] sm:$0xff]
    %v1318 = vld [vmem:[#allocation3 + $0xa0] sm:$0xff]
    %v1319 = vld [vmem:[#allocation3 + $0xa8] sm:$0xff]
    %v1320 = vld [vmem:[#allocation3 + $0xb0] sm:$0xff]
    %v1321 = vld [vmem:[#allocation3 + $0xb8] sm:$0xff]
    %v1322 = vld [vmem:[#allocation3 + $0xc0] sm:$0xff]
    %v1323 = vld [vmem:[#allocation3 + $0xc8] sm:$0xff]
    %v1324 = vld [vmem:[#allocation3 + $0xd0] sm:$0xff]
    %v1325 = vld [vmem:[#allocation3 + $0xd8] sm:$0xff]
    %v1326 = vld [vmem:[#allocation3 + $0xe0] sm:$0xff]
    %v1327 = vld [vmem:[#allocation3 + $0xe8] sm:$0xff]
    %v1328 = vld [vmem:[#allocation3 + $0xf0] sm:$0xff]
    %v1329 = vld [vmem:[#allocation3 + $0xf8] sm:$0xff]
    %v1330 = vmul.f32 %v1235, %v1298
    %v1331 = vmul.f32 %v1237, %v1299
    %v1332 = vmul.f32 %v1239, %v1300
    %v1333 = vmul.f32 %v1241, %v1301
    %v1334 = vmul.f32 %v1243, %v1302
    %v1335 = vmul.f32 %v1245, %v1303
    %v1336 = vmul.f32 %v1247, %v1304
    %v1337 = vmul.f32 %v1249, %v1305
    %v1338 = vmul.f32 %v1251, %v1306
    %v1339 = vmul.f32 %v1253, %v1307
    %v1340 = vmul.f32 %v1255, %v1308
    %v1341 = vmul.f32 %v1257, %v1309
    %v1342 = vmul.f32 %v1259, %v1310
    %v1343 = vmul.f32 %v1261, %v1311
    %v1344 = vmul.f32 %v1263, %v1312
    %v1345 = vmul.f32 %v1265, %v1313
    %v1346 = vmul.f32 %v1267, %v1314
    %v1347 = vmul.f32 %v1269, %v1315
    %v1348 = vmul.f32 %v1271, %v1316
    %v1349 = vmul.f32 %v1273, %v1317
    %v1350 = vmul.f32 %v1275, %v1318
    %v1351 = vmul.f32 %v1277, %v1319
    %v1352 = vmul.f32 %v1279, %v1320
    %v1353 = vmul.f32 %v1281, %v1321
    %v1354 = vmul.f32 %v1283, %v1322
    %v1355 = vmul.f32 %v1285, %v1323
    %v1356 = vmul.f32 %v1287, %v1324
    %v1357 = vmul.f32 %v1289, %v1325
    %v1358 = vmul.f32 %v1291, %v1326
    %v1359 = vmul.f32 %v1293, %v1327
    %v1360 = vmul.f32 %v1295, %v1328
    %v1361 = vmul.f32 %v1297, %v1329
    %v1362 = vadd.f32 %v1330, %v1331
    %v1363 = vadd.f32 %v1362, %v1332
    %v1364 = vadd.f32 %v1363, %v1333
    %v1365 = vadd.f32 %v1364, %v1334
    %v1366 = vadd.f32 %v1365, %v1335
    %v1367 = vadd.f32 %v1366, %v1336
    %v1368 = vadd.f32 %v1367, %v1337
    %v1369 = vadd.f32 %v1368, %v1338
    %v1370 = vadd.f32 %v1369, %v1339
    %v1371 = vadd.f32 %v1370, %v1340
    %v1372 = vadd.f32 %v1371, %v1341
    %v1373 = vadd.f32 %v1372, %v1342
    %v1374 = vadd.f32 %v1373, %v1343
    %v1375 = vadd.f32 %v1374, %v1344
    %v1376 = vadd.f32 %v1375, %v1345
    %v1377 = vadd.f32 %v1376, %v1346
    %v1378 = vadd.f32 %v1377, %v1347
    %v1379 = vadd.f32 %v1378, %v1348
    %v1380 = vadd.f32 %v1379, %v1349
    %v1381 = vadd.f32 %v1380, %v1350
    %v1382 = vadd.f32 %v1381, %v1351
    %v1383 = vadd.f32 %v1382, %v1352
    %v1384 = vadd.f32 %v1383, %v1353
    %v1385 = vadd.f32 %v1384, %v1354
    %v1386 = vadd.f32 %v1385, %v1355
    %v1387 = vadd.f32 %v1386, %v1356
    %v1388 = vadd.f32 %v1387, %v1357
    %v1389 = vadd.f32 %v1388, %v1358
    %v1390 = vadd.f32 %v1389, %v1359
    %v1391 = vadd.f32 %v1390, %v1360
    %v1392 = vadd.f32 %v1391, %v1361
    %v1393 = vrot.slane %v1392, 4
    %v1394 = vadd.f32 %v1392, %v1393
    %v1395 = vrot.slane %v1394, 2
    %v1396 = vadd.f32 %v1394, %v1395
    %v1397 = vrot.slane %v1396, 1
    %v1398 = vadd.f32 %v1396, %v1397
    %v1399 = vmul.f32 %v1398, 7.9788456
    %v1400 = vrsqrt.pop %v1399
    %v1401 = vmul.f32 %v1399, %v1400
    %vm1402 = vcmp.eq.f32.partialorder %v1399, inf
    %v1403 = vsel %vm1402, %v1399, %v1401
    %vm1404 = vcmp.eq.f32.partialorder %v1399, 0.0
    %v1405 = vand.u32 %v1399, 2147483648
    %v1406 = vsel %vm1404, %v1405, %v1403
    %1407 = vst [vmem:[#allocation8 + $0x3] sm:$0x1] %v1406
    %v1408 = vld [vmem:[#allocation2] sm:$0xff]
    %v1409 = vld [vmem:[#allocation2 + $0x8] sm:$0xff]
    %v1410 = vld [vmem:[#allocation2 + $0x10] sm:$0xff]
    %v1411 = vld [vmem:[#allocation2 + $0x18] sm:$0xff]
    %v1412 = vld [vmem:[#allocation2 + $0x20] sm:$0xff]
    %v1413 = vld [vmem:[#allocation2 + $0x28] sm:$0xff]
    %v1414 = vld [vmem:[#allocation2 + $0x30] sm:$0xff]
    %v1415 = vld [vmem:[#allocation2 + $0x38] sm:$0xff]
    %v1416 = vld [vmem:[#allocation2 + $0x40] sm:$0xff]
    %v1417 = vld [vmem:[#allocation2 + $0x48] sm:$0xff]
    %v1418 = vld [vmem:[#allocation2 + $0x50] sm:$0xff]
    %v1419 = vld [vmem:[#allocation2 + $0x58] sm:$0xff]
    %v1420 = vld [vmem:[#allocation2 + $0x60] sm:$0xff]
    %v1421 = vld [vmem:[#allocation2 + $0x68] sm:$0xff]
    %v1422 = vld [vmem:[#allocation2 + $0x70] sm:$0xff]
    %v1423 = vld [vmem:[#allocation2 + $0x78] sm:$0xff]
    %v1424 = vld [vmem:[#allocation2 + $0x80] sm:$0xff]
    %v1425 = vld [vmem:[#allocation2 + $0x88] sm:$0xff]
    %v1426 = vld [vmem:[#allocation2 + $0x90] sm:$0xff]
    %v1427 = vld [vmem:[#allocation2 + $0x98] sm:$0xff]
    %v1428 = vld [vmem:[#allocation2 + $0xa0] sm:$0xff]
    %v1429 = vld [vmem:[#allocation2 + $0xa8] sm:$0xff]
    %v1430 = vld [vmem:[#allocation2 + $0xb0] sm:$0xff]
    %v1431 = vld [vmem:[#allocation2 + $0xb8] sm:$0xff]
    %v1432 = vld [vmem:[#allocation2 + $0xc0] sm:$0xff]
    %v1433 = vld [vmem:[#allocation2 + $0xc8] sm:$0xff]
    %v1434 = vld [vmem:[#allocation2 + $0xd0] sm:$0xff]
    %v1435 = vld [vmem:[#allocation2 + $0xd8] sm:$0xff]
    %v1436 = vld [vmem:[#allocation2 + $0xe0] sm:$0xff]
    %v1437 = vld [vmem:[#allocation2 + $0xe8] sm:$0xff]
    %v1438 = vld [vmem:[#allocation2 + $0xf0] sm:$0xff]
    %v1439 = vld [vmem:[#allocation2 + $0xf8] sm:$0xff]
    %v1440 = vsub.f32 %v1408, 7.4048047
    %v1441 = vsub.f32 %v1409, 7.4048047
    %v1442 = vsub.f32 %v1410, 7.4048047
    %v1443 = vsub.f32 %v1411, 7.4048047
    %v1444 = vsub.f32 %v1412, 7.4048047
    %v1445 = vsub.f32 %v1413, 7.4048047
    %v1446 = vsub.f32 %v1414, 7.4048047
    %v1447 = vsub.f32 %v1415, 7.4048047
    %v1448 = vsub.f32 %v1416, 7.4048047
    %v1449 = vsub.f32 %v1417, 7.4048047
    %v1450 = vsub.f32 %v1418, 7.4048047
    %v1451 = vsub.f32 %v1419, 7.4048047
    %v1452 = vsub.f32 %v1420, 7.4048047
    %v1453 = vsub.f32 %v1421, 7.4048047
    %v1454 = vsub.f32 %v1422, 7.4048047
    %v1455 = vsub.f32 %v1423, 7.4048047
    %v1456 = vsub.f32 %v1424, 7.4048047
    %v1457 = vsub.f32 %v1425, 7.4048047
    %v1458 = vsub.f32 %v1426, 7.4048047
    %v1459 = vsub.f32 %v1427, 7.4048047
    %v1460 = vsub.f32 %v1428, 7.4048047
    %v1461 = vsub.f32 %v1429, 7.4048047
    %v1462 = vsub.f32 %v1430, 7.4048047
    %v1463 = vsub.f32 %v1431, 7.4048047
    %v1464 = vsub.f32 %v1432, 7.4048047
    %v1465 = vsub.f32 %v1433, 7.4048047
    %v1466 = vsub.f32 %v1434, 7.4048047
    %v1467 = vsub.f32 %v1435, 7.4048047
    %v1468 = vsub.f32 %v1436, 7.4048047
    %v1469 = vsub.f32 %v1437, 7.4048047
    %v1470 = vsub.f32 %v1438, 7.4048047
    %v1471 = vsub.f32 %v1439, 7.4048047
    %v1472 = vmul.f32 %v1440, %v1440
    %v1473 = vmul.f32 %v1441, %v1441
    %v1474 = vmul.f32 %v1442, %v1442
    %v1475 = vmul.f32 %v1443, %v1443
    %v1476 = vmul.f32 %v1444, %v1444
    %v1477 = vmul.f32 %v1445, %v1445
    %v1478 = vmul.f32 %v1446, %v1446
    %v1479 = vmul.f32 %v1447, %v1447
    %v1480 = vmul.f32 %v1448, %v1448
    %v1481 = vmul.f32 %v1449, %v1449
    %v1482 = vmul.f32 %v1450, %v1450
    %v1483 = vmul.f32 %v1451, %v1451
    %v1484 = vmul.f32 %v1452, %v1452
    %v1485 = vmul.f32 %v1453, %v1453
    %v1486 = vmul.f32 %v1454, %v1454
    %v1487 = vmul.f32 %v1455, %v1455
    %v1488 = vmul.f32 %v1456, %v1456
    %v1489 = vmul.f32 %v1457, %v1457
    %v1490 = vmul.f32 %v1458, %v1458
    %v1491 = vmul.f32 %v1459, %v1459
    %v1492 = vmul.f32 %v1460, %v1460
    %v1493 = vmul.f32 %v1461, %v1461
    %v1494 = vmul.f32 %v1462, %v1462
    %v1495 = vmul.f32 %v1463, %v1463
    %v1496 = vmul.f32 %v1464, %v1464
    %v1497 = vmul.f32 %v1465, %v1465
    %v1498 = vmul.f32 %v1466, %v1466
    %v1499 = vmul.f32 %v1467, %v1467
    %v1500 = vmul.f32 %v1468, %v1468
    %v1501 = vmul.f32 %v1469, %v1469
    %v1502 = vmul.f32 %v1470, %v1470
    %v1503 = vmul.f32 %v1471, %v1471
    %v1504 = vsub.f32 0.0, %v1472
    %v1505 = vsub.f32 0.0, %v1473
    %v1506 = vsub.f32 0.0, %v1474
    %v1507 = vsub.f32 0.0, %v1475
    %v1508 = vsub.f32 0.0, %v1476
    %v1509 = vsub.f32 0.0, %v1477
    %v1510 = vsub.f32 0.0, %v1478
    %v1511 = vsub.f32 0.0, %v1479
    %v1512 = vsub.f32 0.0, %v1480
    %v1513 = vsub.f32 0.0, %v1481
    %v1514 = vsub.f32 0.0, %v1482
    %v1515 = vsub.f32 0.0, %v1483
    %v1516 = vsub.f32 0.0, %v1484
    %v1517 = vsub.f32 0.0, %v1485
    %v1518 = vsub.f32 0.0, %v1486
    %v1519 = vsub.f32 0.0, %v1487
    %v1520 = vsub.f32 0.0, %v1488
    %v1521 = vsub.f32 0.0, %v1489
    %v1522 = vsub.f32 0.0, %v1490
    %v1523 = vsub.f32 0.0, %v1491
    %v1524 = vsub.f32 0.0, %v1492
    %v1525 = vsub.f32 0.0, %v1493
    %v1526 = vsub.f32 0.0, %v1494
    %v1527 = vsub.f32 0.0, %v1495
    %v1528 = vsub.f32 0.0, %v1496
    %v1529 = vsub.f32 0.0, %v1497
    %v1530 = vsub.f32 0.0, %v1498
    %v1531 = vsub.f32 0.0, %v1499
    %v1532 = vsub.f32 0.0, %v1500
    %v1533 = vsub.f32 0.0, %v1501
    %v1534 = vsub.f32 0.0, %v1502
    %v1535 = vsub.f32 0.0, %v1503
    %v1536 = vmul.f32 %v1504, 1.442695
    %v1537 = vpow.pop %v1536
    %v1538 = vmul.f32 %v1505, 1.442695
    %v1539 = vpow.pop %v1538
    %v1540 = vmul.f32 %v1506, 1.442695
    %v1541 = vpow.pop %v1540
    %v1542 = vmul.f32 %v1507, 1.442695
    %v1543 = vpow.pop %v1542
    %v1544 = vmul.f32 %v1508, 1.442695
    %v1545 = vpow.pop %v1544
    %v1546 = vmul.f32 %v1509, 1.442695
    %v1547 = vpow.pop %v1546
    %v1548 = vmul.f32 %v1510, 1.442695
    %v1549 = vpow.pop %v1548
    %v1550 = vmul.f32 %v1511, 1.442695
    %v1551 = vpow.pop %v1550
    %v1552 = vmul.f32 %v1512, 1.442695
    %v1553 = vpow.pop %v1552
    %v1554 = vmul.f32 %v1513, 1.442695
    %v1555 = vpow.pop %v1554
    %v1556 = vmul.f32 %v1514, 1.442695
    %v1557 = vpow.pop %v1556
    %v1558 = vmul.f32 %v1515, 1.442695
    %v1559 = vpow.pop %v1558
    %v1560 = vmul.f32 %v1516, 1.442695
    %v1561 = vpow.pop %v1560
    %v1562 = vmul.f32 %v1517, 1.442695
    %v1563 = vpow.pop %v1562
    %v1564 = vmul.f32 %v1518, 1.442695
    %v1565 = vpow.pop %v1564
    %v1566 = vmul.f32 %v1519, 1.442695
    %v1567 = vpow.pop %v1566
    %v1568 = vmul.f32 %v1520, 1.442695
    %v1569 = vpow.pop %v1568
    %v1570 = vmul.f32 %v1521, 1.442695
    %v1571 = vpow.pop %v1570
    %v1572 = vmul.f32 %v1522, 1.442695
    %v1573 = vpow.pop %v1572
    %v1574 = vmul.f32 %v1523, 1.442695
    %v1575 = vpow.pop %v1574
    %v1576 = vmul.f32 %v1524, 1.442695
    %v1577 = vpow.pop %v1576
    %v1578 = vmul.f32 %v1525, 1.442695
    %v1579 = vpow.pop %v1578
    %v1580 = vmul.f32 %v1526, 1.442695
    %v1581 = vpow.pop %v1580
    %v1582 = vmul.f32 %v1527, 1.442695
    %v1583 = vpow.pop %v1582
    %v1584 = vmul.f32 %v1528, 1.442695
    %v1585 = vpow.pop %v1584
    %v1586 = vmul.f32 %v1529, 1.442695
    %v1587 = vpow.pop %v1586
    %v1588 = vmul.f32 %v1530, 1.442695
    %v1589 = vpow.pop %v1588
    %v1590 = vmul.f32 %v1531, 1.442695
    %v1591 = vpow.pop %v1590
    %v1592 = vmul.f32 %v1532, 1.442695
    %v1593 = vpow.pop %v1592
    %v1594 = vmul.f32 %v1533, 1.442695
    %v1595 = vpow.pop %v1594
    %v1596 = vmul.f32 %v1534, 1.442695
    %v1597 = vpow.pop %v1596
    %v1598 = vmul.f32 %v1535, 1.442695
    %v1599 = vpow.pop %v1598
    %v1600 = vld [vmem:[#allocation3] sm:$0xff]
    %v1601 = vld [vmem:[#allocation3 + $0x8] sm:$0xff]
    %v1602 = vld [vmem:[#allocation3 + $0x10] sm:$0xff]
    %v1603 = vld [vmem:[#allocation3 + $0x18] sm:$0xff]
    %v1604 = vld [vmem:[#allocation3 + $0x20] sm:$0xff]
    %v1605 = vld [vmem:[#allocation3 + $0x28] sm:$0xff]
    %v1606 = vld [vmem:[#allocation3 + $0x30] sm:$0xff]
    %v1607 = vld [vmem:[#allocation3 + $0x38] sm:$0xff]
    %v1608 = vld [vmem:[#allocation3 + $0x40] sm:$0xff]
    %v1609 = vld [vmem:[#allocation3 + $0x48] sm:$0xff]
    %v1610 = vld [vmem:[#allocation3 + $0x50] sm:$0xff]
    %v1611 = vld [vmem:[#allocation3 + $0x58] sm:$0xff]
    %v1612 = vld [vmem:[#allocation3 + $0x60] sm:$0xff]
    %v1613 = vld [vmem:[#allocation3 + $0x68] sm:$0xff]
    %v1614 = vld [vmem:[#allocation3 + $0x70] sm:$0xff]
    %v1615 = vld [vmem:[#allocation3 + $0x78] sm:$0xff]
    %v1616 = vld [vmem:[#allocation3 + $0x80] sm:$0xff]
    %v1617 = vld [vmem:[#allocation3 + $0x88] sm:$0xff]
    %v1618 = vld [vmem:[#allocation3 + $0x90] sm:$0xff]
    %v1619 = vld [vmem:[#allocation3 + $0x98] sm:$0xff]
    %v1620 = vld [vmem:[#allocation3 + $0xa0] sm:$0xff]
    %v1621 = vld [vmem:[#allocation3 + $0xa8] sm:$0xff]
    %v1622 = vld [vmem:[#allocation3 + $0xb0] sm:$0xff]
    %v1623 = vld [vmem:[#allocation3 + $0xb8] sm:$0xff]
    %v1624 = vld [vmem:[#allocation3 + $0xc0] sm:$0xff]
    %v1625 = vld [vmem:[#allocation3 + $0xc8] sm:$0xff]
    %v1626 = vld [vmem:[#allocation3 + $0xd0] sm:$0xff]
    %v1627 = vld [vmem:[#allocation3 + $0xd8] sm:$0xff]
    %v1628 = vld [vmem:[#allocation3 + $0xe0] sm:$0xff]
    %v1629 = vld [vmem:[#allocation3 + $0xe8] sm:$0xff]
    %v1630 = vld [vmem:[#allocation3 + $0xf0] sm:$0xff]
    %v1631 = vld [vmem:[#allocation3 + $0xf8] sm:$0xff]
    %v1632 = vmul.f32 %v1537, %v1600
    %v1633 = vmul.f32 %v1539, %v1601
    %v1634 = vmul.f32 %v1541, %v1602
    %v1635 = vmul.f32 %v1543, %v1603
    %v1636 = vmul.f32 %v1545, %v1604
    %v1637 = vmul.f32 %v1547, %v1605
    %v1638 = vmul.f32 %v1549, %v1606
    %v1639 = vmul.f32 %v1551, %v1607
    %v1640 = vmul.f32 %v1553, %v1608
    %v1641 = vmul.f32 %v1555, %v1609
    %v1642 = vmul.f32 %v1557, %v1610
    %v1643 = vmul.f32 %v1559, %v1611
    %v1644 = vmul.f32 %v1561, %v1612
    %v1645 = vmul.f32 %v1563, %v1613
    %v1646 = vmul.f32 %v1565, %v1614
    %v1647 = vmul.f32 %v1567, %v1615
    %v1648 = vmul.f32 %v1569, %v1616
    %v1649 = vmul.f32 %v1571, %v1617
    %v1650 = vmul.f32 %v1573, %v1618
    %v1651 = vmul.f32 %v1575, %v1619
    %v1652 = vmul.f32 %v1577, %v1620
    %v1653 = vmul.f32 %v1579, %v1621
    %v1654 = vmul.f32 %v1581, %v1622
    %v1655 = vmul.f32 %v1583, %v1623
    %v1656 = vmul.f32 %v1585, %v1624
    %v1657 = vmul.f32 %v1587, %v1625
    %v1658 = vmul.f32 %v1589, %v1626
    %v1659 = vmul.f32 %v1591, %v1627
    %v1660 = vmul.f32 %v1593, %v1628
    %v1661 = vmul.f32 %v1595, %v1629
    %v1662 = vmul.f32 %v1597, %v1630
    %v1663 = vmul.f32 %v1599, %v1631
    %v1664 = vadd.f32 %v1632, %v1633
    %v1665 = vadd.f32 %v1664, %v1634
    %v1666 = vadd.f32 %v1665, %v1635
    %v1667 = vadd.f32 %v1666, %v1636
    %v1668 = vadd.f32 %v1667, %v1637
    %v1669 = vadd.f32 %v1668, %v1638
    %v1670 = vadd.f32 %v1669, %v1639
    %v1671 = vadd.f32 %v1670, %v1640
    %v1672 = vadd.f32 %v1671, %v1641
    %v1673 = vadd.f32 %v1672, %v1642
    %v1674 = vadd.f32 %v1673, %v1643
    %v1675 = vadd.f32 %v1674, %v1644
    %v1676 = vadd.f32 %v1675, %v1645
    %v1677 = vadd.f32 %v1676, %v1646
    %v1678 = vadd.f32 %v1677, %v1647
    %v1679 = vadd.f32 %v1678, %v1648
    %v1680 = vadd.f32 %v1679, %v1649
    %v1681 = vadd.f32 %v1680, %v1650
    %v1682 = vadd.f32 %v1681, %v1651
    %v1683 = vadd.f32 %v1682, %v1652
    %v1684 = vadd.f32 %v1683, %v1653
    %v1685 = vadd.f32 %v1684, %v1654
    %v1686 = vadd.f32 %v1685, %v1655
    %v1687 = vadd.f32 %v1686, %v1656
    %v1688 = vadd.f32 %v1687, %v1657
    %v1689 = vadd.f32 %v1688, %v1658
    %v1690 = vadd.f32 %v1689, %v1659
    %v1691 = vadd.f32 %v1690, %v1660
    %v1692 = vadd.f32 %v1691, %v1661
    %v1693 = vadd.f32 %v1692, %v1662
    %v1694 = vadd.f32 %v1693, %v1663
    %v1695 = vrot.slane %v1694, 4
    %v1696 = vadd.f32 %v1694, %v1695
    %v1697 = vrot.slane %v1696, 2
    %v1698 = vadd.f32 %v1696, %v1697
    %v1699 = vrot.slane %v1698, 1
    %v1700 = vadd.f32 %v1698, %v1699
    %v1701 = vmul.f32 %v1700, 7.9788456
    %v1702 = vrsqrt.pop %v1701
    %v1703 = vmul.f32 %v1701, %v1702
    %vm1704 = vcmp.eq.f32.partialorder %v1701, inf
    %v1705 = vsel %vm1704, %v1701, %v1703
    %vm1706 = vcmp.eq.f32.partialorder %v1701, 0.0
    %v1707 = vand.u32 %v1701, 2147483648
    %v1708 = vsel %vm1706, %v1707, %v1705
    %1709 = vst [vmem:[#allocation8 + $0x4] sm:$0x1] %v1708
    %v1710 = vld [vmem:[#allocation2] sm:$0xff]
    %v1711 = vld [vmem:[#allocation2 + $0x8] sm:$0xff]
    %v1712 = vld [vmem:[#allocation2 + $0x10] sm:$0xff]
    %v1713 = vld [vmem:[#allocation2 + $0x18] sm:$0xff]
    %v1714 = vld [vmem:[#allocation2 + $0x20] sm:$0xff]
    %v1715 = vld [vmem:[#allocation2 + $0x28] sm:$0xff]
    %v1716 = vld [vmem:[#allocation2 + $0x30] sm:$0xff]
    %v1717 = vld [vmem:[#allocation2 + $0x38] sm:$0xff]
    %v1718 = vld [vmem:[#allocation2 + $0x40] sm:$0xff]
    %v1719 = vld [vmem:[#allocation2 + $0x48] sm:$0xff]
    %v1720 = vld [vmem:[#allocation2 + $0x50] sm:$0xff]
    %v1721 = vld [vmem:[#allocation2 + $0x58] sm:$0xff]
    %v1722 = vld [vmem:[#allocation2 + $0x60] sm:$0xff]
    %v1723 = vld [vmem:[#allocation2 + $0x68] sm:$0xff]
    %v1724 = vld [vmem:[#allocation2 + $0x70] sm:$0xff]
    %v1725 = vld [vmem:[#allocation2 + $0x78] sm:$0xff]
    %v1726 = vld [vmem:[#allocation2 + $0x80] sm:$0xff]
    %v1727 = vld [vmem:[#allocation2 + $0x88] sm:$0xff]
    %v1728 = vld [vmem:[#allocation2 + $0x90] sm:$0xff]
    %v1729 = vld [vmem:[#allocation2 + $0x98] sm:$0xff]
    %v1730 = vld [vmem:[#allocation2 + $0xa0] sm:$0xff]
    %v1731 = vld [vmem:[#allocation2 + $0xa8] sm:$0xff]
    %v1732 = vld [vmem:[#allocation2 + $0xb0] sm:$0xff]
    %v1733 = vld [vmem:[#allocation2 + $0xb8] sm:$0xff]
    %v1734 = vld [vmem:[#allocation2 + $0xc0] sm:$0xff]
    %v1735 = vld [vmem:[#allocation2 + $0xc8] sm:$0xff]
    %v1736 = vld [vmem:[#allocation2 + $0xd0] sm:$0xff]
    %v1737 = vld [vmem:[#allocation2 + $0xd8] sm:$0xff]
    %v1738 = vld [vmem:[#allocation2 + $0xe0] sm:$0xff]
    %v1739 = vld [vmem:[#allocation2 + $0xe8] sm:$0xff]
    %v1740 = vld [vmem:[#allocation2 + $0xf0] sm:$0xff]
    %v1741 = vld [vmem:[#allocation2 + $0xf8] sm:$0xff]
    %v1742 = vsub.f32 %v1710, 9.256006
    %v1743 = vsub.f32 %v1711, 9.256006
    %v1744 = vsub.f32 %v1712, 9.256006
    %v1745 = vsub.f32 %v1713, 9.256006
    %v1746 = vsub.f32 %v1714, 9.256006
    %v1747 = vsub.f32 %v1715, 9.256006
    %v1748 = vsub.f32 %v1716, 9.256006
    %v1749 = vsub.f32 %v1717, 9.256006
    %v1750 = vsub.f32 %v1718, 9.256006
    %v1751 = vsub.f32 %v1719, 9.256006
    %v1752 = vsub.f32 %v1720, 9.256006
    %v1753 = vsub.f32 %v1721, 9.256006
    %v1754 = vsub.f32 %v1722, 9.256006
    %v1755 = vsub.f32 %v1723, 9.256006
    %v1756 = vsub.f32 %v1724, 9.256006
    %v1757 = vsub.f32 %v1725, 9.256006
    %v1758 = vsub.f32 %v1726, 9.256006
    %v1759 = vsub.f32 %v1727, 9.256006
    %v1760 = vsub.f32 %v1728, 9.256006
    %v1761 = vsub.f32 %v1729, 9.256006
    %v1762 = vsub.f32 %v1730, 9.256006
    %v1763 = vsub.f32 %v1731, 9.256006
    %v1764 = vsub.f32 %v1732, 9.256006
    %v1765 = vsub.f32 %v1733, 9.256006
    %v1766 = vsub.f32 %v1734, 9.256006
    %v1767 = vsub.f32 %v1735, 9.256006
    %v1768 = vsub.f32 %v1736, 9.256006
    %v1769 = vsub.f32 %v1737, 9.256006
    %v1770 = vsub.f32 %v1738, 9.256006
    %v1771 = vsub.f32 %v1739, 9.256006
    %v1772 = vsub.f32 %v1740, 9.256006
    %v1773 = vsub.f32 %v1741, 9.256006
    %v1774 = vmul.f32 %v1742, %v1742
    %v1775 = vmul.f32 %v1743, %v1743
    %v1776 = vmul.f32 %v1744, %v1744
    %v1777 = vmul.f32 %v1745, %v1745
    %v1778 = vmul.f32 %v1746, %v1746
    %v1779 = vmul.f32 %v1747, %v1747
    %v1780 = vmul.f32 %v1748, %v1748
    %v1781 = vmul.f32 %v1749, %v1749
    %v1782 = vmul.f32 %v1750, %v1750
    %v1783 = vmul.f32 %v1751, %v1751
    %v1784 = vmul.f32 %v1752, %v1752
    %v1785 = vmul.f32 %v1753, %v1753
    %v1786 = vmul.f32 %v1754, %v1754
    %v1787 = vmul.f32 %v1755, %v1755
    %v1788 = vmul.f32 %v1756, %v1756
    %v1789 = vmul.f32 %v1757, %v1757
    %v1790 = vmul.f32 %v1758, %v1758
    %v1791 = vmul.f32 %v1759, %v1759
    %v1792 = vmul.f32 %v1760, %v1760
    %v1793 = vmul.f32 %v1761, %v1761
    %v1794 = vmul.f32 %v1762, %v1762
    %v1795 = vmul.f32 %v1763, %v1763
    %v1796 = vmul.f32 %v1764, %v1764
    %v1797 = vmul.f32 %v1765, %v1765
    %v1798 = vmul.f32 %v1766, %v1766
    %v1799 = vmul.f32 %v1767, %v1767
    %v1800 = vmul.f32 %v1768, %v1768
    %v1801 = vmul.f32 %v1769, %v1769
    %v1802 = vmul.f32 %v1770, %v1770
    %v1803 = vmul.f32 %v1771, %v1771
    %v1804 = vmul.f32 %v1772, %v1772
    %v1805 = vmul.f32 %v1773, %v1773
    %v1806 = vsub.f32 0.0, %v1774
    %v1807 = vsub.f32 0.0, %v1775
    %v1808 = vsub.f32 0.0, %v1776
    %v1809 = vsub.f32 0.0, %v1777
    %v1810 = vsub.f32 0.0, %v1778
    %v1811 = vsub.f32 0.0, %v1779
    %v1812 = vsub.f32 0.0, %v1780
    %v1813 = vsub.f32 0.0, %v1781
    %v1814 = vsub.f32 0.0, %v1782
    %v1815 = vsub.f32 0.0, %v1783
    %v1816 = vsub.f32 0.0, %v1784
    %v1817 = vsub.f32 0.0, %v1785
    %v1818 = vsub.f32 0.0, %v1786
    %v1819 = vsub.f32 0.0, %v1787
    %v1820 = vsub.f32 0.0, %v1788
    %v1821 = vsub.f32 0.0, %v1789
    %v1822 = vsub.f32 0.0, %v1790
    %v1823 = vsub.f32 0.0, %v1791
    %v1824 = vsub.f32 0.0, %v1792
    %v1825 = vsub.f32 0.0, %v1793
    %v1826 = vsub.f32 0.0, %v1794
    %v1827 = vsub.f32 0.0, %v1795
    %v1828 = vsub.f32 0.0, %v1796
    %v1829 = vsub.f32 0.0, %v1797
    %v1830 = vsub.f32 0.0, %v1798
    %v1831 = vsub.f32 0.0, %v1799
    %v1832 = vsub.f32 0.0, %v1800
    %v1833 = vsub.f32 0.0, %v1801
    %v1834 = vsub.f32 0.0, %v1802
    %v1835 = vsub.f32 0.0, %v1803
    %v1836 = vsub.f32 0.0, %v1804
    %v1837 = vsub.f32 0.0, %v1805
    %v1838 = vmul.f32 %v1806, 1.442695
    %v1839 = vpow.pop %v1838
    %v1840 = vmul.f32 %v1807, 1.442695
    %v1841 = vpow.pop %v1840
    %v1842 = vmul.f32 %v1808, 1.442695
    %v1843 = vpow.pop %v1842
    %v1844 = vmul.f32 %v1809, 1.442695
    %v1845 = vpow.pop %v1844
    %v1846 = vmul.f32 %v1810, 1.442695
    %v1847 = vpow.pop %v1846
    %v1848 = vmul.f32 %v1811, 1.442695
    %v1849 = vpow.pop %v1848
    %v1850 = vmul.f32 %v1812, 1.442695
    %v1851 = vpow.pop %v1850
    %v1852 = vmul.f32 %v1813, 1.442695
    %v1853 = vpow.pop %v1852
    %v1854 = vmul.f32 %v1814, 1.442695
    %v1855 = vpow.pop %v1854
    %v1856 = vmul.f32 %v1815, 1.442695
    %v1857 = vpow.pop %v1856
    %v1858 = vmul.f32 %v1816, 1.442695
    %v1859 = vpow.pop %v1858
    %v1860 = vmul.f32 %v1817, 1.442695
    %v1861 = vpow.pop %v1860
    %v1862 = vmul.f32 %v1818, 1.442695
    %v1863 = vpow.pop %v1862
    %v1864 = vmul.f32 %v1819, 1.442695
    %v1865 = vpow.pop %v1864
    %v1866 = vmul.f32 %v1820, 1.442695
    %v1867 = vpow.pop %v1866
    %v1868 = vmul.f32 %v1821, 1.442695
    %v1869 = vpow.pop %v1868
    %v1870 = vmul.f32 %v1822, 1.442695
    %v1871 = vpow.pop %v1870
    %v1872 = vmul.f32 %v1823, 1.442695
    %v1873 = vpow.pop %v1872
    %v1874 = vmul.f32 %v1824, 1.442695
    %v1875 = vpow.pop %v1874
    %v1876 = vmul.f32 %v1825, 1.442695
    %v1877 = vpow.pop %v1876
    %v1878 = vmul.f32 %v1826, 1.442695
    %v1879 = vpow.pop %v1878
    %v1880 = vmul.f32 %v1827, 1.442695
    %v1881 = vpow.pop %v1880
    %v1882 = vmul.f32 %v1828, 1.442695
    %v1883 = vpow.pop %v1882
    %v1884 = vmul.f32 %v1829, 1.442695
    %v1885 = vpow.pop %v1884
    %v1886 = vmul.f32 %v1830, 1.442695
    %v1887 = vpow.pop %v1886
    %v1888 = vmul.f32 %v1831, 1.442695
    %v1889 = vpow.pop %v1888
    %v1890 = vmul.f32 %v1832, 1.442695
    %v1891 = vpow.pop %v1890
    %v1892 = vmul.f32 %v1833, 1.442695
    %v1893 = vpow.pop %v1892
    %v1894 = vmul.f32 %v1834, 1.442695
    %v1895 = vpow.pop %v1894
    %v1896 = vmul.f32 %v1835, 1.442695
    %v1897 = vpow.pop %v1896
    %v1898 = vmul.f32 %v1836, 1.442695
    %v1899 = vpow.pop %v1898
    %v1900 = vmul.f32 %v1837, 1.442695
    %v1901 = vpow.pop %v1900
    %v1902 = vld [vmem:[#allocation3] sm:$0xff]
    %v1903 = vld [vmem:[#allocation3 + $0x8] sm:$0xff]
    %v1904 = vld [vmem:[#allocation3 + $0x10] sm:$0xff]
    %v1905 = vld [vmem:[#allocation3 + $0x18] sm:$0xff]
    %v1906 = vld [vmem:[#allocation3 + $0x20] sm:$0xff]
    %v1907 = vld [vmem:[#allocation3 + $0x28] sm:$0xff]
    %v1908 = vld [vmem:[#allocation3 + $0x30] sm:$0xff]
    %v1909 = vld [vmem:[#allocation3 + $0x38] sm:$0xff]
    %v1910 = vld [vmem:[#allocation3 + $0x40] sm:$0xff]
    %v1911 = vld [vmem:[#allocation3 + $0x48] sm:$0xff]
    %v1912 = vld [vmem:[#allocation3 + $0x50] sm:$0xff]
    %v1913 = vld [vmem:[#allocation3 + $0x58] sm:$0xff]
    %v1914 = vld [vmem:[#allocation3 + $0x60] sm:$0xff]
    %v1915 = vld [vmem:[#allocation3 + $0x68] sm:$0xff]
    %v1916 = vld [vmem:[#allocation3 + $0x70] sm:$0xff]
    %v1917 = vld [vmem:[#allocation3 + $0x78] sm:$0xff]
    %v1918 = vld [vmem:[#allocation3 + $0x80] sm:$0xff]
    %v1919 = vld [vmem:[#allocation3 + $0x88] sm:$0xff]
    %v1920 = vld [vmem:[#allocation3 + $0x90] sm:$0xff]
    %v1921 = vld [vmem:[#allocation3 + $0x98] sm:$0xff]
    %v1922 = vld [vmem:[#allocation3 + $0xa0] sm:$0xff]
    %v1923 = vld [vmem:[#allocation3 + $0xa8] sm:$0xff]
    %v1924 = vld [vmem:[#allocation3 + $0xb0] sm:$0xff]
    %v1925 = vld [vmem:[#allocation3 + $0xb8] sm:$0xff]
    %v1926 = vld [vmem:[#allocation3 + $0xc0] sm:$0xff]
    %v1927 = vld [vmem:[#allocation3 + $0xc8] sm:$0xff]
    %v1928 = vld [vmem:[#allocation3 + $0xd0] sm:$0xff]
    %v1929 = vld [vmem:[#allocation3 + $0xd8] sm:$0xff]
    %v1930 = vld [vmem:[#allocation3 + $0xe0] sm:$0xff]
    %v1931 = vld [vmem:[#allocation3 + $0xe8] sm:$0xff]
    %v1932 = vld [vmem:[#allocation3 + $0xf0] sm:$0xff]
    %v1933 = vld [vmem:[#allocation3 + $0xf8] sm:$0xff]
    %v1934 = vmul.f32 %v1839, %v1902
    %v1935 = vmul.f32 %v1841, %v1903
    %v1936 = vmul.f32 %v1843, %v1904
    %v1937 = vmul.f32 %v1845, %v1905
    %v1938 = vmul.f32 %v1847, %v1906
    %v1939 = vmul.f32 %v1849, %v1907
    %v1940 = vmul.f32 %v1851, %v1908
    %v1941 = vmul.f32 %v1853, %v1909
    %v1942 = vmul.f32 %v1855, %v1910
    %v1943 = vmul.f32 %v1857, %v1911
    %v1944 = vmul.f32 %v1859, %v1912
    %v1945 = vmul.f32 %v1861, %v1913
    %v1946 = vmul.f32 %v1863, %v1914
    %v1947 = vmul.f32 %v1865, %v1915
    %v1948 = vmul.f32 %v1867, %v1916
    %v1949 = vmul.f32 %v1869, %v1917
    %v1950 = vmul.f32 %v1871, %v1918
    %v1951 = vmul.f32 %v1873, %v1919
    %v1952 = vmul.f32 %v1875, %v1920
    %v1953 = vmul.f32 %v1877, %v1921
    %v1954 = vmul.f32 %v1879, %v1922
    %v1955 = vmul.f32 %v1881, %v1923
    %v1956 = vmul.f32 %v1883, %v1924
    %v1957 = vmul.f32 %v1885, %v1925
    %v1958 = vmul.f32 %v1887, %v1926
    %v1959 = vmul.f32 %v1889, %v1927
    %v1960 = vmul.f32 %v1891, %v1928
    %v1961 = vmul.f32 %v1893, %v1929
    %v1962 = vmul.f32 %v1895, %v1930
    %v1963 = vmul.f32 %v1897, %v1931
    %v1964 = vmul.f32 %v1899, %v1932
    %v1965 = vmul.f32 %v1901, %v1933
    %v1966 = vadd.f32 %v1934, %v1935
    %v1967 = vadd.f32 %v1966, %v1936
    %v1968 = vadd.f32 %v1967, %v1937
    %v1969 = vadd.f32 %v1968, %v1938
    %v1970 = vadd.f32 %v1969, %v1939
    %v1971 = vadd.f32 %v1970, %v1940
    %v1972 = vadd.f32 %v1971, %v1941
    %v1973 = vadd.f32 %v1972, %v1942
    %v1974 = vadd.f32 %v1973, %v1943
    %v1975 = vadd.f32 %v1974, %v1944
    %v1976 = vadd.f32 %v1975, %v1945
    %v1977 = vadd.f32 %v1976, %v1946
    %v1978 = vadd.f32 %v1977, %v1947
    %v1979 = vadd.f32 %v1978, %v1948
    %v1980 = vadd.f32 %v1979, %v1949
    %v1981 = vadd.f32 %v1980, %v1950
    %v1982 = vadd.f32 %v1981, %v1951
    %v1983 = vadd.f32 %v1982, %v1952
    %v1984 = vadd.f32 %v1983, %v1953
    %v1985 = vadd.f32 %v1984, %v1954
    %v1986 = vadd.f32 %v1985, %v1955
    %v1987 = vadd.f32 %v1986, %v1956
    %v1988 = vadd.f32 %v1987, %v1957
    %v1989 = vadd.f32 %v1988, %v1958
    %v1990 = vadd.f32 %v1989, %v1959
    %v1991 = vadd.f32 %v1990, %v1960
    %v1992 = vadd.f32 %v1991, %v1961
    %v1993 = vadd.f32 %v1992, %v1962
    %v1994 = vadd.f32 %v1993, %v1963
    %v1995 = vadd.f32 %v1994, %v1964
    %v1996 = vadd.f32 %v1995, %v1965
    %v1997 = vrot.slane %v1996, 4
    %v1998 = vadd.f32 %v1996, %v1997
    %v1999 = vrot.slane %v1998, 2
    %v2000 = vadd.f32 %v1998, %v1999
    %v2001 = vrot.slane %v2000, 1
    %v2002 = vadd.f32 %v2000, %v2001
    %v2003 = vmul.f32 %v2002, 7.9788456
    %v2004 = vrsqrt.pop %v2003
    %v2005 = vmul.f32 %v2003, %v2004
    %vm2006 = vcmp.eq.f32.partialorder %v2003, inf
    %v2007 = vsel %vm2006, %v2003, %v2005
    %vm2008 = vcmp.eq.f32.partialorder %v2003, 0.0
    %v2009 = vand.u32 %v2003, 2147483648
    %v2010 = vsel %vm2008, %v2009, %v2007
    %2011 = vst [vmem:[#allocation8 + $0x5] sm:$0x1] %v2010
    %v2012 = vld [vmem:[#allocation6] sm:$0xff]
    %v2013 = vld [vmem:[#allocation6 + $0x8] sm:$0xff]
    %v2014 = vld [vmem:[#allocation6 + $0x10] sm:$0xff]
    %v2015 = vld [vmem:[#allocation6 + $0x18] sm:$0xff]
    %v2016 = vld [vmem:[#allocation6 + $0x20] sm:$0xff]
    %v2017 = vld [vmem:[#allocation6 + $0x28] sm:$0xff]
    %v2018 = vld [vmem:[#allocation6 + $0x30] sm:$0xff]
    %v2019 = vld [vmem:[#allocation6 + $0x38] sm:$0xff]
    %v2020 = vld [vmem:[#allocation6 + $0x40] sm:$0xff]
    %v2021 = vld [vmem:[#allocation6 + $0x48] sm:$0xff]
    %v2022 = vld [vmem:[#allocation6 + $0x50] sm:$0xff]
    %v2023 = vld [vmem:[#allocation6 + $0x58] sm:$0xff]
    %v2024 = vld [vmem:[#allocation6 + $0x60] sm:$0xff]
    %v2025 = vld [vmem:[#allocation6 + $0x68] sm:$0xff]
    %v2026 = vld [vmem:[#allocation6 + $0x70] sm:$0xff]
    %v2027 = vld [vmem:[#allocation6 + $0x78] sm:$0xff]
    %v2028 = vld [vmem:[#allocation6 + $0x80] sm:$0xff]
    %v2029 = vld [vmem:[#allocation6 + $0x88] sm:$0xff]
    %v2030 = vld [vmem:[#allocation6 + $0x90] sm:$0xff]
    %v2031 = vld [vmem:[#allocation6 + $0x98] sm:$0xff]
    %v2032 = vld [vmem:[#allocation6 + $0xa0] sm:$0xff]
    %v2033 = vld [vmem:[#allocation6 + $0xa8] sm:$0xff]
    %v2034 = vld [vmem:[#allocation6 + $0xb0] sm:$0xff]
    %v2035 = vld [vmem:[#allocation6 + $0xb8] sm:$0xff]
    %v2036 = vld [vmem:[#allocation6 + $0xc0] sm:$0xff]
    %v2037 = vld [vmem:[#allocation6 + $0xc8] sm:$0xff]
    %v2038 = vld [vmem:[#allocation6 + $0xd0] sm:$0xff]
    %v2039 = vld [vmem:[#allocation6 + $0xd8] sm:$0xff]
    %v2040 = vld [vmem:[#allocation6 + $0xe0] sm:$0xff]
    %v2041 = vld [vmem:[#allocation6 + $0xe8] sm:$0xff]
    %v2042 = vld [vmem:[#allocation6 + $0xf0] sm:$0xff]
    %v2043 = vld [vmem:[#allocation6 + $0xf8] sm:$0xff]
    %v2044 = vsub.f32 %v2012, -11.107207
    %v2045 = vsub.f32 %v2013, -11.107207
    %v2046 = vsub.f32 %v2014, -11.107207
    %v2047 = vsub.f32 %v2015, -11.107207
    %v2048 = vsub.f32 %v2016, -11.107207
    %v2049 = vsub.f32 %v2017, -11.107207
    %v2050 = vsub.f32 %v2018, -11.107207
    %v2051 = vsub.f32 %v2019, -11.107207
    %v2052 = vsub.f32 %v2020, -11.107207
    %v2053 = vsub.f32 %v2021, -11.107207
    %v2054 = vsub.f32 %v2022, -11.107207
    %v2055 = vsub.f32 %v2023, -11.107207
    %v2056 = vsub.f32 %v2024, -11.107207
    %v2057 = vsub.f32 %v2025, -11.107207
    %v2058 = vsub.f32 %v2026, -11.107207
    %v2059 = vsub.f32 %v2027, -11.107207
    %v2060 = vsub.f32 %v2028, -11.107207
    %v2061 = vsub.f32 %v2029, -11.107207
    %v2062 = vsub.f32 %v2030, -11.107207
    %v2063 = vsub.f32 %v2031, -11.107207
    %v2064 = vsub.f32 %v2032, -11.107207
    %v2065 = vsub.f32 %v2033, -11.107207
    %v2066 = vsub.f32 %v2034, -11.107207
    %v2067 = vsub.f32 %v2035, -11.107207
    %v2068 = vsub.f32 %v2036, -11.107207
    %v2069 = vsub.f32 %v2037, -11.107207
    %v2070 = vsub.f32 %v2038, -11.107207
    %v2071 = vsub.f32 %v2039, -11.107207
    %v2072 = vsub.f32 %v2040, -11.107207
    %v2073 = vsub.f32 %v2041, -11.107207
    %v2074 = vsub.f32 %v2042, -11.107207
    %v2075 = vsub.f32 %v2043, -11.107207
    %v2076 = vmul.f32 %v2044, %v2044
    %v2077 = vmul.f32 %v2045, %v2045
    %v2078 = vmul.f32 %v2046, %v2046
    %v2079 = vmul.f32 %v2047, %v2047
    %v2080 = vmul.f32 %v2048, %v2048
    %v2081 = vmul.f32 %v2049, %v2049
    %v2082 = vmul.f32 %v2050, %v2050
    %v2083 = vmul.f32 %v2051, %v2051
    %v2084 = vmul.f32 %v2052, %v2052
    %v2085 = vmul.f32 %v2053, %v2053
    %v2086 = vmul.f32 %v2054, %v2054
    %v2087 = vmul.f32 %v2055, %v2055
    %v2088 = vmul.f32 %v2056, %v2056
    %v2089 = vmul.f32 %v2057, %v2057
    %v2090 = vmul.f32 %v2058, %v2058
    %v2091 = vmul.f32 %v2059, %v2059
    %v2092 = vmul.f32 %v2060, %v2060
    %v2093 = vmul.f32 %v2061, %v2061
    %v2094 = vmul.f32 %v2062, %v2062
    %v2095 = vmul.f32 %v2063, %v2063
    %v2096 = vmul.f32 %v2064, %v2064
    %v2097 = vmul.f32 %v2065, %v2065
    %v2098 = vmul.f32 %v2066, %v2066
    %v2099 = vmul.f32 %v2067, %v2067
    %v2100 = vmul.f32 %v2068, %v2068
    %v2101 = vmul.f32 %v2069, %v2069
    %v2102 = vmul.f32 %v2070, %v2070
    %v2103 = vmul.f32 %v2071, %v2071
    %v2104 = vmul.f32 %v2072, %v2072
    %v2105 = vmul.f32 %v2073, %v2073
    %v2106 = vmul.f32 %v2074, %v2074
    %v2107 = vmul.f32 %v2075, %v2075
    %v2108 = vsub.f32 0.0, %v2076
    %v2109 = vsub.f32 0.0, %v2077
    %v2110 = vsub.f32 0.0, %v2078
    %v2111 = vsub.f32 0.0, %v2079
    %v2112 = vsub.f32 0.0, %v2080
    %v2113 = vsub.f32 0.0, %v2081
    %v2114 = vsub.f32 0.0, %v2082
    %v2115 = vsub.f32 0.0, %v2083
    %v2116 = vsub.f32 0.0, %v2084
    %v2117 = vsub.f32 0.0, %v2085
    %v2118 = vsub.f32 0.0, %v2086
    %v2119 = vsub.f32 0.0, %v2087
    %v2120 = vsub.f32 0.0, %v2088
    %v2121 = vsub.f32 0.0, %v2089
    %v2122 = vsub.f32 0.0, %v2090
    %v2123 = vsub.f32 0.0, %v2091
    %v2124 = vsub.f32 0.0, %v2092
    %v2125 = vsub.f32 0.0, %v2093
    %v2126 = vsub.f32 0.0, %v2094
    %v2127 = vsub.f32 0.0, %v2095
    %v2128 = vsub.f32 0.0, %v2096
    %v2129 = vsub.f32 0.0, %v2097
    %v2130 = vsub.f32 0.0, %v2098
    %v2131 = vsub.f32 0.0, %v2099
    %v2132 = vsub.f32 0.0, %v2100
    %v2133 = vsub.f32 0.0, %v2101
    %v2134 = vsub.f32 0.0, %v2102
    %v2135 = vsub.f32 0.0, %v2103
    %v2136 = vsub.f32 0.0, %v2104
    %v2137 = vsub.f32 0.0, %v2105
    %v2138 = vsub.f32 0.0, %v2106
    %v2139 = vsub.f32 0.0, %v2107
    %v2140 = vmul.f32 %v2108, 1.442695
    %v2141 = vpow.pop %v2140
    %v2142 = vmul.f32 %v2109, 1.442695
    %v2143 = vpow.pop %v2142
    %v2144 = vmul.f32 %v2110, 1.442695
    %v2145 = vpow.pop %v2144
    %v2146 = vmul.f32 %v2111, 1.442695
    %v2147 = vpow.pop %v2146
    %v2148 = vmul.f32 %v2112, 1.442695
    %v2149 = vpow.pop %v2148
    %v2150 = vmul.f32 %v2113, 1.442695
    %v2151 = vpow.pop %v2150
    %v2152 = vmul.f32 %v2114, 1.442695
    %v2153 = vpow.pop %v2152
    %v2154 = vmul.f32 %v2115, 1.442695
    %v2155 = vpow.pop %v2154
    %v2156 = vmul.f32 %v2116, 1.442695
    %v2157 = vpow.pop %v2156
    %v2158 = vmul.f32 %v2117, 1.442695
    %v2159 = vpow.pop %v2158
    %v2160 = vmul.f32 %v2118, 1.442695
    %v2161 = vpow.pop %v2160
    %v2162 = vmul.f32 %v2119, 1.442695
    %v2163 = vpow.pop %v2162
    %v2164 = vmul.f32 %v2120, 1.442695
    %v2165 = vpow.pop %v2164
    %v2166 = vmul.f32 %v2121, 1.442695
    %v2167 = vpow.pop %v2166
    %v2168 = vmul.f32 %v2122, 1.442695
    %v2169 = vpow.pop %v2168
    %v2170 = vmul.f32 %v2123, 1.442695
    %v2171 = vpow.pop %v2170
    %v2172 = vmul.f32 %v2124, 1.442695
    %v2173 = vpow.pop %v2172
    %v2174 = vmul.f32 %v2125, 1.442695
    %v2175 = vpow.pop %v2174
    %v2176 = vmul.f32 %v2126, 1.442695
    %v2177 = vpow.pop %v2176
    %v2178 = vmul.f32 %v2127, 1.442695
    %v2179 = vpow.pop %v2178
    %v2180 = vmul.f32 %v2128, 1.442695
    %v2181 = vpow.pop %v2180
    %v2182 = vmul.f32 %v2129, 1.442695
    %v2183 = vpow.pop %v2182
    %v2184 = vmul.f32 %v2130, 1.442695
    %v2185 = vpow.pop %v2184
    %v2186 = vmul.f32 %v2131, 1.442695
    %v2187 = vpow.pop %v2186
    %v2188 = vmul.f32 %v2132, 1.442695
    %v2189 = vpow.pop %v2188
    %v2190 = vmul.f32 %v2133, 1.442695
    %v2191 = vpow.pop %v2190
    %v2192 = vmul.f32 %v2134, 1.442695
    %v2193 = vpow.pop %v2192
    %v2194 = vmul.f32 %v2135, 1.442695
    %v2195 = vpow.pop %v2194
    %v2196 = vmul.f32 %v2136, 1.442695
    %v2197 = vpow.pop %v2196
    %v2198 = vmul.f32 %v2137, 1.442695
    %v2199 = vpow.pop %v2198
    %v2200 = vmul.f32 %v2138, 1.442695
    %v2201 = vpow.pop %v2200
    %v2202 = vmul.f32 %v2139, 1.442695
    %v2203 = vpow.pop %v2202
    %v2204 = vld [vmem:[#allocation3] sm:$0xff]
    %v2205 = vld [vmem:[#allocation3 + $0x8] sm:$0xff]
    %v2206 = vld [vmem:[#allocation3 + $0x10] sm:$0xff]
    %v2207 = vld [vmem:[#allocation3 + $0x18] sm:$0xff]
    %v2208 = vld [vmem:[#allocation3 + $0x20] sm:$0xff]
    %v2209 = vld [vmem:[#allocation3 + $0x28] sm:$0xff]
    %v2210 = vld [vmem:[#allocation3 + $0x30] sm:$0xff]
    %v2211 = vld [vmem:[#allocation3 + $0x38] sm:$0xff]
    %v2212 = vld [vmem:[#allocation3 + $0x40] sm:$0xff]
    %v2213 = vld [vmem:[#allocation3 + $0x48] sm:$0xff]
    %v2214 = vld [vmem:[#allocation3 + $0x50] sm:$0xff]
    %v2215 = vld [vmem:[#allocation3 + $0x58] sm:$0xff]
    %v2216 = vld [vmem:[#allocation3 + $0x60] sm:$0xff]
    %v2217 = vld [vmem:[#allocation3 + $0x68] sm:$0xff]
    %v2218 = vld [vmem:[#allocation3 + $0x70] sm:$0xff]
    %v2219 = vld [vmem:[#allocation3 + $0x78] sm:$0xff]
    %v2220 = vld [vmem:[#allocation3 + $0x80] sm:$0xff]
    %v2221 = vld [vmem:[#allocation3 + $0x88] sm:$0xff]
    %v2222 = vld [vmem:[#allocation3 + $0x90] sm:$0xff]
    %v2223 = vld [vmem:[#allocation3 + $0x98] sm:$0xff]
    %v2224 = vld [vmem:[#allocation3 + $0xa0] sm:$0xff]
    %v2225 = vld [vmem:[#allocation3 + $0xa8] sm:$0xff]
    %v2226 = vld [vmem:[#allocation3 + $0xb0] sm:$0xff]
    %v2227 = vld [vmem:[#allocation3 + $0xb8] sm:$0xff]
    %v2228 = vld [vmem:[#allocation3 + $0xc0] sm:$0xff]
    %v2229 = vld [vmem:[#allocation3 + $0xc8] sm:$0xff]
    %v2230 = vld [vmem:[#allocation3 + $0xd0] sm:$0xff]
    %v2231 = vld [vmem:[#allocation3 + $0xd8] sm:$0xff]
    %v2232 = vld [vmem:[#allocation3 + $0xe0] sm:$0xff]
    %v2233 = vld [vmem:[#allocation3 + $0xe8] sm:$0xff]
    %v2234 = vld [vmem:[#allocation3 + $0xf0] sm:$0xff]
    %v2235 = vld [vmem:[#allocation3 + $0xf8] sm:$0xff]
    %v2236 = vmul.f32 %v2141, %v2204
    %v2237 = vmul.f32 %v2143, %v2205
    %v2238 = vmul.f32 %v2145, %v2206
    %v2239 = vmul.f32 %v2147, %v2207
    %v2240 = vmul.f32 %v2149, %v2208
    %v2241 = vmul.f32 %v2151, %v2209
    %v2242 = vmul.f32 %v2153, %v2210
    %v2243 = vmul.f32 %v2155, %v2211
    %v2244 = vmul.f32 %v2157, %v2212
    %v2245 = vmul.f32 %v2159, %v2213
    %v2246 = vmul.f32 %v2161, %v2214
    %v2247 = vmul.f32 %v2163, %v2215
    %v2248 = vmul.f32 %v2165, %v2216
    %v2249 = vmul.f32 %v2167, %v2217
    %v2250 = vmul.f32 %v2169, %v2218
    %v2251 = vmul.f32 %v2171, %v2219
    %v2252 = vmul.f32 %v2173, %v2220
    %v2253 = vmul.f32 %v2175, %v2221
    %v2254 = vmul.f32 %v2177, %v2222
    %v2255 = vmul.f32 %v2179, %v2223
    %v2256 = vmul.f32 %v2181, %v2224
    %v2257 = vmul.f32 %v2183, %v2225
    %v2258 = vmul.f32 %v2185, %v2226
    %v2259 = vmul.f32 %v2187, %v2227
    %v2260 = vmul.f32 %v2189, %v2228
    %v2261 = vmul.f32 %v2191, %v2229
    %v2262 = vmul.f32 %v2193, %v2230
    %v2263 = vmul.f32 %v2195, %v2231
    %v2264 = vmul.f32 %v2197, %v2232
    %v2265 = vmul.f32 %v2199, %v2233
    %v2266 = vmul.f32 %v2201, %v2234
    %v2267 = vmul.f32 %v2203, %v2235
    %v2268 = vadd.f32 %v2236, %v2237
    %v2269 = vadd.f32 %v2268, %v2238
    %v2270 = vadd.f32 %v2269, %v2239
    %v2271 = vadd.f32 %v2270, %v2240
    %v2272 = vadd.f32 %v2271, %v2241
    %v2273 = vadd.f32 %v2272, %v2242
    %v2274 = vadd.f32 %v2273, %v2243
    %v2275 = vadd.f32 %v2274, %v2244
    %v2276 = vadd.f32 %v2275, %v2245
    %v2277 = vadd.f32 %v2276, %v2246
    %v2278 = vadd.f32 %v2277, %v2247
    %v2279 = vadd.f32 %v2278, %v2248
    %v2280 = vadd.f32 %v2279, %v2249
    %v2281 = vadd.f32 %v2280, %v2250
    %v2282 = vadd.f32 %v2281, %v2251
    %v2283 = vadd.f32 %v2282, %v2252
    %v2284 = vadd.f32 %v2283, %v2253
    %v2285 = vadd.f32 %v2284, %v2254
    %v2286 = vadd.f32 %v2285, %v2255
    %v2287 = vadd.f32 %v2286, %v2256
    %v2288 = vadd.f32 %v2287, %v2257
    %v2289 = vadd.f32 %v2288, %v2258
    %v2290 = vadd.f32 %v2289, %v2259
    %v2291 = vadd.f32 %v2290, %v2260
    %v2292 = vadd.f32 %v2291, %v2261
    %v2293 = vadd.f32 %v2292, %v2262
    %v2294 = vadd.f32 %v2293, %v2263
    %v2295 = vadd.f32 %v2294, %v2264
    %v2296 = vadd.f32 %v2295, %v2265
    %v2297 = vadd.f32 %v2296, %v2266
    %v2298 = vadd.f32 %v2297, %v2267
    %v2299 = vrot.slane %v2298, 4
    %v2300 = vadd.f32 %v2298, %v2299
    %v2301 = vrot.slane %v2300, 2
    %v2302 = vadd.f32 %v2300, %v2301
    %v2303 = vrot.slane %v2302, 1
    %v2304 = vadd.f32 %v2302, %v2303
    %v2305 = vmul.f32 %v2304, 7.9788456
    %v2306 = vrsqrt.pop %v2305
    %v2307 = vmul.f32 %v2305, %v2306
    %vm2308 = vcmp.eq.f32.partialorder %v2305, inf
    %v2309 = vsel %vm2308, %v2305, %v2307
    %vm2310 = vcmp.eq.f32.partialorder %v2305, 0.0
    %v2311 = vand.u32 %v2305, 2147483648
    %v2312 = vsel %vm2310, %v2311, %v2309
    %2313 = vst [vmem:[#allocation8 + $0x6] sm:$0x1] %v2312
    %v2314 = vld [vmem:[#allocation6] sm:$0xff]
    %v2315 = vld [vmem:[#allocation6 + $0x8] sm:$0xff]
    %v2316 = vld [vmem:[#allocation6 + $0x10] sm:$0xff]
    %v2317 = vld [vmem:[#allocation6 + $0x18] sm:$0xff]
    %v2318 = vld [vmem:[#allocation6 + $0x20] sm:$0xff]
    %v2319 = vld [vmem:[#allocation6 + $0x28] sm:$0xff]
    %v2320 = vld [vmem:[#allocation6 + $0x30] sm:$0xff]
    %v2321 = vld [vmem:[#allocation6 + $0x38] sm:$0xff]
    %v2322 = vld [vmem:[#allocation6 + $0x40] sm:$0xff]
    %v2323 = vld [vmem:[#allocation6 + $0x48] sm:$0xff]
    %v2324 = vld [vmem:[#allocation6 + $0x50] sm:$0xff]
    %v2325 = vld [vmem:[#allocation6 + $0x58] sm:$0xff]
    %v2326 = vld [vmem:[#allocation6 + $0x60] sm:$0xff]
    %v2327 = vld [vmem:[#allocation6 + $0x68] sm:$0xff]
    %v2328 = vld [vmem:[#allocation6 + $0x70] sm:$0xff]
    %v2329 = vld [vmem:[#allocation6 + $0x78] sm:$0xff]
    %v2330 = vld [vmem:[#allocation6 + $0x80] sm:$0xff]
    %v2331 = vld [vmem:[#allocation6 + $0x88] sm:$0xff]
    %v2332 = vld [vmem:[#allocation6 + $0x90] sm:$0xff]
    %v2333 = vld [vmem:[#allocation6 + $0x98] sm:$0xff]
    %v2334 = vld [vmem:[#allocation6 + $0xa0] sm:$0xff]
    %v2335 = vld [vmem:[#allocation6 + $0xa8] sm:$0xff]
    %v2336 = vld [vmem:[#allocation6 + $0xb0] sm:$0xff]
    %v2337 = vld [vmem:[#allocation6 + $0xb8] sm:$0xff]
    %v2338 = vld [vmem:[#allocation6 + $0xc0] sm:$0xff]
    %v2339 = vld [vmem:[#allocation6 + $0xc8] sm:$0xff]
    %v2340 = vld [vmem:[#allocation6 + $0xd0] sm:$0xff]
    %v2341 = vld [vmem:[#allocation6 + $0xd8] sm:$0xff]
    %v2342 = vld [vmem:[#allocation6 + $0xe0] sm:$0xff]
    %v2343 = vld [vmem:[#allocation6 + $0xe8] sm:$0xff]
    %v2344 = vld [vmem:[#allocation6 + $0xf0] sm:$0xff]
    %v2345 = vld [vmem:[#allocation6 + $0xf8] sm:$0xff]
    %v2346 = vsub.f32 %v2314, -9.256006
    %v2347 = vsub.f32 %v2315, -9.256006
    %v2348 = vsub.f32 %v2316, -9.256006
    %v2349 = vsub.f32 %v2317, -9.256006
    %v2350 = vsub.f32 %v2318, -9.256006
    %v2351 = vsub.f32 %v2319, -9.256006
    %v2352 = vsub.f32 %v2320, -9.256006
    %v2353 = vsub.f32 %v2321, -9.256006
    %v2354 = vsub.f32 %v2322, -9.256006
    %v2355 = vsub.f32 %v2323, -9.256006
    %v2356 = vsub.f32 %v2324, -9.256006
    %v2357 = vsub.f32 %v2325, -9.256006
    %v2358 = vsub.f32 %v2326, -9.256006
    %v2359 = vsub.f32 %v2327, -9.256006
    %v2360 = vsub.f32 %v2328, -9.256006
    %v2361 = vsub.f32 %v2329, -9.256006
    %v2362 = vsub.f32 %v2330, -9.256006
    %v2363 = vsub.f32 %v2331, -9.256006
    %v2364 = vsub.f32 %v2332, -9.256006
    %v2365 = vsub.f32 %v2333, -9.256006
    %v2366 = vsub.f32 %v2334, -9.256006
    %v2367 = vsub.f32 %v2335, -9.256006
    %v2368 = vsub.f32 %v2336, -9.256006
    %v2369 = vsub.f32 %v2337, -9.256006
    %v2370 = vsub.f32 %v2338, -9.256006
    %v2371 = vsub.f32 %v2339, -9.256006
    %v2372 = vsub.f32 %v2340, -9.256006
    %v2373 = vsub.f32 %v2341, -9.256006
    %v2374 = vsub.f32 %v2342, -9.256006
    %v2375 = vsub.f32 %v2343, -9.256006
    %v2376 = vsub.f32 %v2344, -9.256006
    %v2377 = vsub.f32 %v2345, -9.256006
    %v2378 = vmul.f32 %v2346, %v2346
    %v2379 = vmul.f32 %v2347, %v2347
    %v2380 = vmul.f32 %v2348, %v2348
    %v2381 = vmul.f32 %v2349, %v2349
    %v2382 = vmul.f32 %v2350, %v2350
    %v2383 = vmul.f32 %v2351, %v2351
    %v2384 = vmul.f32 %v2352, %v2352
    %v2385 = vmul.f32 %v2353, %v2353
    %v2386 = vmul.f32 %v2354, %v2354
    %v2387 = vmul.f32 %v2355, %v2355
    %v2388 = vmul.f32 %v2356, %v2356
    %v2389 = vmul.f32 %v2357, %v2357
    %v2390 = vmul.f32 %v2358, %v2358
    %v2391 = vmul.f32 %v2359, %v2359
    %v2392 = vmul.f32 %v2360, %v2360
    %v2393 = vmul.f32 %v2361, %v2361
    %v2394 = vmul.f32 %v2362, %v2362
    %v2395 = vmul.f32 %v2363, %v2363
    %v2396 = vmul.f32 %v2364, %v2364
    %v2397 = vmul.f32 %v2365, %v2365
    %v2398 = vmul.f32 %v2366, %v2366
    %v2399 = vmul.f32 %v2367, %v2367
    %v2400 = vmul.f32 %v2368, %v2368
    %v2401 = vmul.f32 %v2369, %v2369
    %v2402 = vmul.f32 %v2370, %v2370
    %v2403 = vmul.f32 %v2371, %v2371
    %v2404 = vmul.f32 %v2372, %v2372
    %v2405 = vmul.f32 %v2373, %v2373
    %v2406 = vmul.f32 %v2374, %v2374
    %v2407 = vmul.f32 %v2375, %v2375
    %v2408 = vmul.f32 %v2376, %v2376
    %v2409 = vmul.f32 %v2377, %v2377
    %v2410 = vsub.f32 0.0, %v2378
    %v2411 = vsub.f32 0.0, %v2379
    %v2412 = vsub.f32 0.0, %v2380
    %v2413 = vsub.f32 0.0, %v2381
    %v2414 = vsub.f32 0.0, %v2382
    %v2415 = vsub.f32 0.0, %v2383
    %v2416 = vsub.f32 0.0, %v2384
    %v2417 = vsub.f32 0.0, %v2385
    %v2418 = vsub.f32 0.0, %v2386
    %v2419 = vsub.f32 0.0, %v2387
    %v2420 = vsub.f32 0.0, %v2388
    %v2421 = vsub.f32 0.0, %v2389
    %v2422 = vsub.f32 0.0, %v2390
    %v2423 = vsub.f32 0.0, %v2391
    %v2424 = vsub.f32 0.0, %v2392
    %v2425 = vsub.f32 0.0, %v2393
    %v2426 = vsub.f32 0.0, %v2394
    %v2427 = vsub.f32 0.0, %v2395
    %v2428 = vsub.f32 0.0, %v2396
    %v2429 = vsub.f32 0.0, %v2397
    %v2430 = vsub.f32 0.0, %v2398
    %v2431 = vsub.f32 0.0, %v2399
    %v2432 = vsub.f32 0.0, %v2400
    %v2433 = vsub.f32 0.0, %v2401
    %v2434 = vsub.f32 0.0, %v2402
    %v2435 = vsub.f32 0.0, %v2403
    %v2436 = vsub.f32 0.0, %v2404
    %v2437 = vsub.f32 0.0, %v2405
    %v2438 = vsub.f32 0.0, %v2406
    %v2439 = vsub.f32 0.0, %v2407
    %v2440 = vsub.f32 0.0, %v2408
    %v2441 = vsub.f32 0.0, %v2409
    %v2442 = vmul.f32 %v2410, 1.442695
    %v2443 = vpow.pop %v2442
    %v2444 = vmul.f32 %v2411, 1.442695
    %v2445 = vpow.pop %v2444
    %v2446 = vmul.f32 %v2412, 1.442695
    %v2447 = vpow.pop %v2446
    %v2448 = vmul.f32 %v2413, 1.442695
    %v2449 = vpow.pop %v2448
    %v2450 = vmul.f32 %v2414, 1.442695
    %v2451 = vpow.pop %v2450
    %v2452 = vmul.f32 %v2415, 1.442695
    %v2453 = vpow.pop %v2452
    %v2454 = vmul.f32 %v2416, 1.442695
    %v2455 = vpow.pop %v2454
    %v2456 = vmul.f32 %v2417, 1.442695
    %v2457 = vpow.pop %v2456
    %v2458 = vmul.f32 %v2418, 1.442695
    %v2459 = vpow.pop %v2458
    %v2460 = vmul.f32 %v2419, 1.442695
    %v2461 = vpow.pop %v2460
    %v2462 = vmul.f32 %v2420, 1.442695
    %v2463 = vpow.pop %v2462
    %v2464 = vmul.f32 %v2421, 1.442695
    %v2465 = vpow.pop %v2464
    %v2466 = vmul.f32 %v2422, 1.442695
    %v2467 = vpow.pop %v2466
    %v2468 = vmul.f32 %v2423, 1.442695
    %v2469 = vpow.pop %v2468
    %v2470 = vmul.f32 %v2424, 1.442695
    %v2471 = vpow.pop %v2470
    %v2472 = vmul.f32 %v2425, 1.442695
    %v2473 = vpow.pop %v2472
    %v2474 = vmul.f32 %v2426, 1.442695
    %v2475 = vpow.pop %v2474
    %v2476 = vmul.f32 %v2427, 1.442695
    %v2477 = vpow.pop %v2476
    %v2478 = vmul.f32 %v2428, 1.442695
    %v2479 = vpow.pop %v2478
    %v2480 = vmul.f32 %v2429, 1.442695
    %v2481 = vpow.pop %v2480
    %v2482 = vmul.f32 %v2430, 1.442695
    %v2483 = vpow.pop %v2482
    %v2484 = vmul.f32 %v2431, 1.442695
    %v2485 = vpow.pop %v2484
    %v2486 = vmul.f32 %v2432, 1.442695
    %v2487 = vpow.pop %v2486
    %v2488 = vmul.f32 %v2433, 1.442695
    %v2489 = vpow.pop %v2488
    %v2490 = vmul.f32 %v2434, 1.442695
    %v2491 = vpow.pop %v2490
    %v2492 = vmul.f32 %v2435, 1.442695
    %v2493 = vpow.pop %v2492
    %v2494 = vmul.f32 %v2436, 1.442695
    %v2495 = vpow.pop %v2494
    %v2496 = vmul.f32 %v2437, 1.442695
    %v2497 = vpow.pop %v2496
    %v2498 = vmul.f32 %v2438, 1.442695
    %v2499 = vpow.pop %v2498
    %v2500 = vmul.f32 %v2439, 1.442695
    %v2501 = vpow.pop %v2500
    %v2502 = vmul.f32 %v2440, 1.442695
    %v2503 = vpow.pop %v2502
    %v2504 = vmul.f32 %v2441, 1.442695
    %v2505 = vpow.pop %v2504
    %v2506 = vld [vmem:[#allocation3] sm:$0xff]
    %v2507 = vld [vmem:[#allocation3 + $0x8] sm:$0xff]
    %v2508 = vld [vmem:[#allocation3 + $0x10] sm:$0xff]
    %v2509 = vld [vmem:[#allocation3 + $0x18] sm:$0xff]
    %v2510 = vld [vmem:[#allocation3 + $0x20] sm:$0xff]
    %v2511 = vld [vmem:[#allocation3 + $0x28] sm:$0xff]
    %v2512 = vld [vmem:[#allocation3 + $0x30] sm:$0xff]
    %v2513 = vld [vmem:[#allocation3 + $0x38] sm:$0xff]
    %v2514 = vld [vmem:[#allocation3 + $0x40] sm:$0xff]
    %v2515 = vld [vmem:[#allocation3 + $0x48] sm:$0xff]
    %v2516 = vld [vmem:[#allocation3 + $0x50] sm:$0xff]
    %v2517 = vld [vmem:[#allocation3 + $0x58] sm:$0xff]
    %v2518 = vld [vmem:[#allocation3 + $0x60] sm:$0xff]
    %v2519 = vld [vmem:[#allocation3 + $0x68] sm:$0xff]
    %v2520 = vld [vmem:[#allocation3 + $0x70] sm:$0xff]
    %v2521 = vld [vmem:[#allocation3 + $0x78] sm:$0xff]
    %v2522 = vld [vmem:[#allocation3 + $0x80] sm:$0xff]
    %v2523 = vld [vmem:[#allocation3 + $0x88] sm:$0xff]
    %v2524 = vld [vmem:[#allocation3 + $0x90] sm:$0xff]
    %v2525 = vld [vmem:[#allocation3 + $0x98] sm:$0xff]
    %v2526 = vld [vmem:[#allocation3 + $0xa0] sm:$0xff]
    %v2527 = vld [vmem:[#allocation3 + $0xa8] sm:$0xff]
    %v2528 = vld [vmem:[#allocation3 + $0xb0] sm:$0xff]
    %v2529 = vld [vmem:[#allocation3 + $0xb8] sm:$0xff]
    %v2530 = vld [vmem:[#allocation3 + $0xc0] sm:$0xff]
    %v2531 = vld [vmem:[#allocation3 + $0xc8] sm:$0xff]
    %v2532 = vld [vmem:[#allocation3 + $0xd0] sm:$0xff]
    %v2533 = vld [vmem:[#allocation3 + $0xd8] sm:$0xff]
    %v2534 = vld [vmem:[#allocation3 + $0xe0] sm:$0xff]
    %v2535 = vld [vmem:[#allocation3 + $0xe8] sm:$0xff]
    %v2536 = vld [vmem:[#allocation3 + $0xf0] sm:$0xff]
    %v2537 = vld [vmem:[#allocation3 + $0xf8] sm:$0xff]
    %v2538 = vmul.f32 %v2443, %v2506
    %v2539 = vmul.f32 %v2445, %v2507
    %v2540 = vmul.f32 %v2447, %v2508
    %v2541 = vmul.f32 %v2449, %v2509
    %v2542 = vmul.f32 %v2451, %v2510
    %v2543 = vmul.f32 %v2453, %v2511
    %v2544 = vmul.f32 %v2455, %v2512
    %v2545 = vmul.f32 %v2457, %v2513
    %v2546 = vmul.f32 %v2459, %v2514
    %v2547 = vmul.f32 %v2461, %v2515
    %v2548 = vmul.f32 %v2463, %v2516
    %v2549 = vmul.f32 %v2465, %v2517
    %v2550 = vmul.f32 %v2467, %v2518
    %v2551 = vmul.f32 %v2469, %v2519
    %v2552 = vmul.f32 %v2471, %v2520
    %v2553 = vmul.f32 %v2473, %v2521
    %v2554 = vmul.f32 %v2475, %v2522
    %v2555 = vmul.f32 %v2477, %v2523
    %v2556 = vmul.f32 %v2479, %v2524
    %v2557 = vmul.f32 %v2481, %v2525
    %v2558 = vmul.f32 %v2483, %v2526
    %v2559 = vmul.f32 %v2485, %v2527
    %v2560 = vmul.f32 %v2487, %v2528
    %v2561 = vmul.f32 %v2489, %v2529
    %v2562 = vmul.f32 %v2491, %v2530
    %v2563 = vmul.f32 %v2493, %v2531
    %v2564 = vmul.f32 %v2495, %v2532
    %v2565 = vmul.f32 %v2497, %v2533
    %v2566 = vmul.f32 %v2499, %v2534
    %v2567 = vmul.f32 %v2501, %v2535
    %v2568 = vmul.f32 %v2503, %v2536
    %v2569 = vmul.f32 %v2505, %v2537
    %v2570 = vadd.f32 %v2538, %v2539
    %v2571 = vadd.f32 %v2570, %v2540
    %v2572 = vadd.f32 %v2571, %v2541
    %v2573 = vadd.f32 %v2572, %v2542
    %v2574 = vadd.f32 %v2573, %v2543
    %v2575 = vadd.f32 %v2574, %v2544
    %v2576 = vadd.f32 %v2575, %v2545
    %v2577 = vadd.f32 %v2576, %v2546
    %v2578 = vadd.f32 %v2577, %v2547
    %v2579 = vadd.f32 %v2578, %v2548
    %v2580 = vadd.f32 %v2579, %v2549
    %v2581 = vadd.f32 %v2580, %v2550
    %v2582 = vadd.f32 %v2581, %v2551
    %v2583 = vadd.f32 %v2582, %v2552
    %v2584 = vadd.f32 %v2583, %v2553
    %v2585 = vadd.f32 %v2584, %v2554
    %v2586 = vadd.f32 %v2585, %v2555
    %v2587 = vadd.f32 %v2586, %v2556
    %v2588 = vadd.f32 %v2587, %v2557
    %v2589 = vadd.f32 %v2588, %v2558
    %v2590 = vadd.f32 %v2589, %v2559
    %v2591 = vadd.f32 %v2590, %v2560
    %v2592 = vadd.f32 %v2591, %v2561
    %v2593 = vadd.f32 %v2592, %v2562
    %v2594 = vadd.f32 %v2593, %v2563
    %v2595 = vadd.f32 %v2594, %v2564
    %v2596 = vadd.f32 %v2595, %v2565
    %v2597 = vadd.f32 %v2596, %v2566
    %v2598 = vadd.f32 %v2597, %v2567
    %v2599 = vadd.f32 %v2598, %v2568
    %v2600 = vadd.f32 %v2599, %v2569
    %v2601 = vrot.slane %v2600, 4
    %v2602 = vadd.f32 %v2600, %v2601
    %v2603 = vrot.slane %v2602, 2
    %v2604 = vadd.f32 %v2602, %v2603
    %v2605 = vrot.slane %v2604, 1
    %v2606 = vadd.f32 %v2604, %v2605
    %v2607 = vmul.f32 %v2606, 7.9788456
    %v2608 = vrsqrt.pop %v2607
    %v2609 = vmul.f32 %v2607, %v2608
    %vm2610 = vcmp.eq.f32.partialorder %v2607, inf
    %v2611 = vsel %vm2610, %v2607, %v2609
    %vm2612 = vcmp.eq.f32.partialorder %v2607, 0.0
    %v2613 = vand.u32 %v2607, 2147483648
    %v2614 = vsel %vm2612, %v2613, %v2611
    %2615 = vst [vmem:[#allocation8 + $0x7] sm:$0x1] %v2614
    %v2616 = vld [vmem:[#allocation6] sm:$0xff]
    %v2617 = vld [vmem:[#allocation6 + $0x8] sm:$0xff]
    %v2618 = vld [vmem:[#allocation6 + $0x10] sm:$0xff]
    %v2619 = vld [vmem:[#allocation6 + $0x18] sm:$0xff]
    %v2620 = vld [vmem:[#allocation6 + $0x20] sm:$0xff]
    %v2621 = vld [vmem:[#allocation6 + $0x28] sm:$0xff]
    %v2622 = vld [vmem:[#allocation6 + $0x30] sm:$0xff]
    %v2623 = vld [vmem:[#allocation6 + $0x38] sm:$0xff]
    %v2624 = vld [vmem:[#allocation6 + $0x40] sm:$0xff]
    %v2625 = vld [vmem:[#allocation6 + $0x48] sm:$0xff]
    %v2626 = vld [vmem:[#allocation6 + $0x50] sm:$0xff]
    %v2627 = vld [vmem:[#allocation6 + $0x58] sm:$0xff]
    %v2628 = vld [vmem:[#allocation6 + $0x60] sm:$0xff]
    %v2629 = vld [vmem:[#allocation6 + $0x68] sm:$0xff]
    %v2630 = vld [vmem:[#allocation6 + $0x70] sm:$0xff]
    %v2631 = vld [vmem:[#allocation6 + $0x78] sm:$0xff]
    %v2632 = vld [vmem:[#allocation6 + $0x80] sm:$0xff]
    %v2633 = vld [vmem:[#allocation6 + $0x88] sm:$0xff]
    %v2634 = vld [vmem:[#allocation6 + $0x90] sm:$0xff]
    %v2635 = vld [vmem:[#allocation6 + $0x98] sm:$0xff]
    %v2636 = vld [vmem:[#allocation6 + $0xa0] sm:$0xff]
    %v2637 = vld [vmem:[#allocation6 + $0xa8] sm:$0xff]
    %v2638 = vld [vmem:[#allocation6 + $0xb0] sm:$0xff]
    %v2639 = vld [vmem:[#allocation6 + $0xb8] sm:$0xff]
    %v2640 = vld [vmem:[#allocation6 + $0xc0] sm:$0xff]
    %v2641 = vld [vmem:[#allocation6 + $0xc8] sm:$0xff]
    %v2642 = vld [vmem:[#allocation6 + $0xd0] sm:$0xff]
    %v2643 = vld [vmem:[#allocation6 + $0xd8] sm:$0xff]
    %v2644 = vld [vmem:[#allocation6 + $0xe0] sm:$0xff]
    %v2645 = vld [vmem:[#allocation6 + $0xe8] sm:$0xff]
    %v2646 = vld [vmem:[#allocation6 + $0xf0] sm:$0xff]
    %v2647 = vld [vmem:[#allocation6 + $0xf8] sm:$0xff]
    %v2648 = vsub.f32 %v2616, -7.4048047
    %v2649 = vsub.f32 %v2617, -7.4048047
    %v2650 = vsub.f32 %v2618, -7.4048047
    %v2651 = vsub.f32 %v2619, -7.4048047
    %v2652 = vsub.f32 %v2620, -7.4048047
    %v2653 = vsub.f32 %v2621, -7.4048047
    %v2654 = vsub.f32 %v2622, -7.4048047
    %v2655 = vsub.f32 %v2623, -7.4048047
    %v2656 = vsub.f32 %v2624, -7.4048047
    %v2657 = vsub.f32 %v2625, -7.4048047
    %v2658 = vsub.f32 %v2626, -7.4048047
    %v2659 = vsub.f32 %v2627, -7.4048047
    %v2660 = vsub.f32 %v2628, -7.4048047
    %v2661 = vsub.f32 %v2629, -7.4048047
    %v2662 = vsub.f32 %v2630, -7.4048047
    %v2663 = vsub.f32 %v2631, -7.4048047
    %v2664 = vsub.f32 %v2632, -7.4048047
    %v2665 = vsub.f32 %v2633, -7.4048047
    %v2666 = vsub.f32 %v2634, -7.4048047
    %v2667 = vsub.f32 %v2635, -7.4048047
    %v2668 = vsub.f32 %v2636, -7.4048047
    %v2669 = vsub.f32 %v2637, -7.4048047
    %v2670 = vsub.f32 %v2638, -7.4048047
    %v2671 = vsub.f32 %v2639, -7.4048047
    %v2672 = vsub.f32 %v2640, -7.4048047
    %v2673 = vsub.f32 %v2641, -7.4048047
    %v2674 = vsub.f32 %v2642, -7.4048047
    %v2675 = vsub.f32 %v2643, -7.4048047
    %v2676 = vsub.f32 %v2644, -7.4048047
    %v2677 = vsub.f32 %v2645, -7.4048047
    %v2678 = vsub.f32 %v2646, -7.4048047
    %v2679 = vsub.f32 %v2647, -7.4048047
    %v2680 = vmul.f32 %v2648, %v2648
    %v2681 = vmul.f32 %v2649, %v2649
    %v2682 = vmul.f32 %v2650, %v2650
    %v2683 = vmul.f32 %v2651, %v2651
    %v2684 = vmul.f32 %v2652, %v2652
    %v2685 = vmul.f32 %v2653, %v2653
    %v2686 = vmul.f32 %v2654, %v2654
    %v2687 = vmul.f32 %v2655, %v2655
    %v2688 = vmul.f32 %v2656, %v2656
    %v2689 = vmul.f32 %v2657, %v2657
    %v2690 = vmul.f32 %v2658, %v2658
    %v2691 = vmul.f32 %v2659, %v2659
    %v2692 = vmul.f32 %v2660, %v2660
    %v2693 = vmul.f32 %v2661, %v2661
    %v2694 = vmul.f32 %v2662, %v2662
    %v2695 = vmul.f32 %v2663, %v2663
    %v2696 = vmul.f32 %v2664, %v2664
    %v2697 = vmul.f32 %v2665, %v2665
    %v2698 = vmul.f32 %v2666, %v2666
    %v2699 = vmul.f32 %v2667, %v2667
    %v2700 = vmul.f32 %v2668, %v2668
    %v2701 = vmul.f32 %v2669, %v2669
    %v2702 = vmul.f32 %v2670, %v2670
    %v2703 = vmul.f32 %v2671, %v2671
    %v2704 = vmul.f32 %v2672, %v2672
    %v2705 = vmul.f32 %v2673, %v2673
    %v2706 = vmul.f32 %v2674, %v2674
    %v2707 = vmul.f32 %v2675, %v2675
    %v2708 = vmul.f32 %v2676, %v2676
    %v2709 = vmul.f32 %v2677, %v2677
    %v2710 = vmul.f32 %v2678, %v2678
    %v2711 = vmul.f32 %v2679, %v2679
    %v2712 = vsub.f32 0.0, %v2680
    %v2713 = vsub.f32 0.0, %v2681
    %v2714 = vsub.f32 0.0, %v2682
    %v2715 = vsub.f32 0.0, %v2683
    %v2716 = vsub.f32 0.0, %v2684
    %v2717 = vsub.f32 0.0, %v2685
    %v2718 = vsub.f32 0.0, %v2686
    %v2719 = vsub.f32 0.0, %v2687
    %v2720 = vsub.f32 0.0, %v2688
    %v2721 = vsub.f32 0.0, %v2689
    %v2722 = vsub.f32 0.0, %v2690
    %v2723 = vsub.f32 0.0, %v2691
    %v2724 = vsub.f32 0.0, %v2692
    %v2725 = vsub.f32 0.0, %v2693
    %v2726 = vsub.f32 0.0, %v2694
    %v2727 = vsub.f32 0.0, %v2695
    %v2728 = vsub.f32 0.0, %v2696
    %v2729 = vsub.f32 0.0, %v2697
    %v2730 = vsub.f32 0.0, %v2698
    %v2731 = vsub.f32 0.0, %v2699
    %v2732 = vsub.f32 0.0, %v2700
    %v2733 = vsub.f32 0.0, %v2701
    %v2734 = vsub.f32 0.0, %v2702
    %v2735 = vsub.f32 0.0, %v2703
    %v2736 = vsub.f32 0.0, %v2704
    %v2737 = vsub.f32 0.0, %v2705
    %v2738 = vsub.f32 0.0, %v2706
    %v2739 = vsub.f32 0.0, %v2707
    %v2740 = vsub.f32 0.0, %v2708
    %v2741 = vsub.f32 0.0, %v2709
    %v2742 = vsub.f32 0.0, %v2710
    %v2743 = vsub.f32 0.0, %v2711
    %v2744 = vmul.f32 %v2712, 1.442695
    %v2745 = vpow.pop %v2744
    %v2746 = vmul.f32 %v2713, 1.442695
    %v2747 = vpow.pop %v2746
    %v2748 = vmul.f32 %v2714, 1.442695
    %v2749 = vpow.pop %v2748
    %v2750 = vmul.f32 %v2715, 1.442695
    %v2751 = vpow.pop %v2750
    %v2752 = vmul.f32 %v2716, 1.442695
    %v2753 = vpow.pop %v2752
    %v2754 = vmul.f32 %v2717, 1.442695
    %v2755 = vpow.pop %v2754
    %v2756 = vmul.f32 %v2718, 1.442695
    %v2757 = vpow.pop %v2756
    %v2758 = vmul.f32 %v2719, 1.442695
    %v2759 = vpow.pop %v2758
    %v2760 = vmul.f32 %v2720, 1.442695
    %v2761 = vpow.pop %v2760
    %v2762 = vmul.f32 %v2721, 1.442695
    %v2763 = vpow.pop %v2762
    %v2764 = vmul.f32 %v2722, 1.442695
    %v2765 = vpow.pop %v2764
    %v2766 = vmul.f32 %v2723, 1.442695
    %v2767 = vpow.pop %v2766
    %v2768 = vmul.f32 %v2724, 1.442695
    %v2769 = vpow.pop %v2768
    %v2770 = vmul.f32 %v2725, 1.442695
    %v2771 = vpow.pop %v2770
    %v2772 = vmul.f32 %v2726, 1.442695
    %v2773 = vpow.pop %v2772
    %v2774 = vmul.f32 %v2727, 1.442695
    %v2775 = vpow.pop %v2774
    %v2776 = vmul.f32 %v2728, 1.442695
    %v2777 = vpow.pop %v2776
    %v2778 = vmul.f32 %v2729, 1.442695
    %v2779 = vpow.pop %v2778
    %v2780 = vmul.f32 %v2730, 1.442695
    %v2781 = vpow.pop %v2780
    %v2782 = vmul.f32 %v2731, 1.442695
    %v2783 = vpow.pop %v2782
    %v2784 = vmul.f32 %v2732, 1.442695
    %v2785 = vpow.pop %v2784
    %v2786 = vmul.f32 %v2733, 1.442695
    %v2787 = vpow.pop %v2786
    %v2788 = vmul.f32 %v2734, 1.442695
    %v2789 = vpow.pop %v2788
    %v2790 = vmul.f32 %v2735, 1.442695
    %v2791 = vpow.pop %v2790
    %v2792 = vmul.f32 %v2736, 1.442695
    %v2793 = vpow.pop %v2792
    %v2794 = vmul.f32 %v2737, 1.442695
    %v2795 = vpow.pop %v2794
    %v2796 = vmul.f32 %v2738, 1.442695
    %v2797 = vpow.pop %v2796
    %v2798 = vmul.f32 %v2739, 1.442695
    %v2799 = vpow.pop %v2798
    %v2800 = vmul.f32 %v2740, 1.442695
    %v2801 = vpow.pop %v2800
    %v2802 = vmul.f32 %v2741, 1.442695
    %v2803 = vpow.pop %v2802
    %v2804 = vmul.f32 %v2742, 1.442695
    %v2805 = vpow.pop %v2804
    %v2806 = vmul.f32 %v2743, 1.442695
    %v2807 = vpow.pop %v2806
    %v2808 = vld [vmem:[#allocation3] sm:$0xff]
    %v2809 = vld [vmem:[#allocation3 + $0x8] sm:$0xff]
    %v2810 = vld [vmem:[#allocation3 + $0x10] sm:$0xff]
    %v2811 = vld [vmem:[#allocation3 + $0x18] sm:$0xff]
    %v2812 = vld [vmem:[#allocation3 + $0x20] sm:$0xff]
    %v2813 = vld [vmem:[#allocation3 + $0x28] sm:$0xff]
    %v2814 = vld [vmem:[#allocation3 + $0x30] sm:$0xff]
    %v2815 = vld [vmem:[#allocation3 + $0x38] sm:$0xff]
    %v2816 = vld [vmem:[#allocation3 + $0x40] sm:$0xff]
    %v2817 = vld [vmem:[#allocation3 + $0x48] sm:$0xff]
    %v2818 = vld [vmem:[#allocation3 + $0x50] sm:$0xff]
    %v2819 = vld [vmem:[#allocation3 + $0x58] sm:$0xff]
    %v2820 = vld [vmem:[#allocation3 + $0x60] sm:$0xff]
    %v2821 = vld [vmem:[#allocation3 + $0x68] sm:$0xff]
    %v2822 = vld [vmem:[#allocation3 + $0x70] sm:$0xff]
    %v2823 = vld [vmem:[#allocation3 + $0x78] sm:$0xff]
    %v2824 = vld [vmem:[#allocation3 + $0x80] sm:$0xff]
    %v2825 = vld [vmem:[#allocation3 + $0x88] sm:$0xff]
    %v2826 = vld [vmem:[#allocation3 + $0x90] sm:$0xff]
    %v2827 = vld [vmem:[#allocation3 + $0x98] sm:$0xff]
    %v2828 = vld [vmem:[#allocation3 + $0xa0] sm:$0xff]
    %v2829 = vld [vmem:[#allocation3 + $0xa8] sm:$0xff]
    %v2830 = vld [vmem:[#allocation3 + $0xb0] sm:$0xff]
    %v2831 = vld [vmem:[#allocation3 + $0xb8] sm:$0xff]
    %v2832 = vld [vmem:[#allocation3 + $0xc0] sm:$0xff]
    %v2833 = vld [vmem:[#allocation3 + $0xc8] sm:$0xff]
    %v2834 = vld [vmem:[#allocation3 + $0xd0] sm:$0xff]
    %v2835 = vld [vmem:[#allocation3 + $0xd8] sm:$0xff]
    %v2836 = vld [vmem:[#allocation3 + $0xe0] sm:$0xff]
    %v2837 = vld [vmem:[#allocation3 + $0xe8] sm:$0xff]
    %v2838 = vld [vmem:[#allocation3 + $0xf0] sm:$0xff]
    %v2839 = vld [vmem:[#allocation3 + $0xf8] sm:$0xff]
    %v2840 = vmul.f32 %v2745, %v2808
    %v2841 = vmul.f32 %v2747, %v2809
    %v2842 = vmul.f32 %v2749, %v2810
    %v2843 = vmul.f32 %v2751, %v2811
    %v2844 = vmul.f32 %v2753, %v2812
    %v2845 = vmul.f32 %v2755, %v2813
    %v2846 = vmul.f32 %v2757, %v2814
    %v2847 = vmul.f32 %v2759, %v2815
    %v2848 = vmul.f32 %v2761, %v2816
    %v2849 = vmul.f32 %v2763, %v2817
    %v2850 = vmul.f32 %v2765, %v2818
    %v2851 = vmul.f32 %v2767, %v2819
    %v2852 = vmul.f32 %v2769, %v2820
    %v2853 = vmul.f32 %v2771, %v2821
    %v2854 = vmul.f32 %v2773, %v2822
    %v2855 = vmul.f32 %v2775, %v2823
    %v2856 = vmul.f32 %v2777, %v2824
    %v2857 = vmul.f32 %v2779, %v2825
    %v2858 = vmul.f32 %v2781, %v2826
    %v2859 = vmul.f32 %v2783, %v2827
    %v2860 = vmul.f32 %v2785, %v2828
    %v2861 = vmul.f32 %v2787, %v2829
    %v2862 = vmul.f32 %v2789, %v2830
    %v2863 = vmul.f32 %v2791, %v2831
    %v2864 = vmul.f32 %v2793, %v2832
    %v2865 = vmul.f32 %v2795, %v2833
    %v2866 = vmul.f32 %v2797, %v2834
    %v2867 = vmul.f32 %v2799, %v2835
    %v2868 = vmul.f32 %v2801, %v2836
    %v2869 = vmul.f32 %v2803, %v2837
    %v2870 = vmul.f32 %v2805, %v2838
    %v2871 = vmul.f32 %v2807, %v2839
    %v2872 = vadd.f32 %v2840, %v2841
    %v2873 = vadd.f32 %v2872, %v2842
    %v2874 = vadd.f32 %v2873, %v2843
    %v2875 = vadd.f32 %v2874, %v2844
    %v2876 = vadd.f32 %v2875, %v2845
    %v2877 = vadd.f32 %v2876, %v2846
    %v2878 = vadd.f32 %v2877, %v2847
    %v2879 = vadd.f32 %v2878, %v2848
    %v2880 = vadd.f32 %v2879, %v2849
    %v2881 = vadd.f32 %v2880, %v2850
    %v2882 = vadd.f32 %v2881, %v2851
    %v2883 = vadd.f32 %v2882, %v2852
    %v2884 = vadd.f32 %v2883, %v2853
    %v2885 = vadd.f32 %v2884, %v2854
    %v2886 = vadd.f32 %v2885, %v2855
    %v2887 = vadd.f32 %v2886, %v2856
    %v2888 = vadd.f32 %v2887, %v2857
    %v2889 = vadd.f32 %v2888, %v2858
    %v2890 = vadd.f32 %v2889, %v2859
    %v2891 = vadd.f32 %v2890, %v2860
    %v2892 = vadd.f32 %v2891, %v2861
    %v2893 = vadd.f32 %v2892, %v2862
    %v2894 = vadd.f32 %v2893, %v2863
    %v2895 = vadd.f32 %v2894, %v2864
    %v2896 = vadd.f32 %v2895, %v2865
    %v2897 = vadd.f32 %v2896, %v2866
    %v2898 = vadd.f32 %v2897, %v2867
    %v2899 = vadd.f32 %v2898, %v2868
    %v2900 = vadd.f32 %v2899, %v2869
    %v2901 = vadd.f32 %v2900, %v2870
    %v2902 = vadd.f32 %v2901, %v2871
    %v2903 = vrot.slane %v2902, 4
    %v2904 = vadd.f32 %v2902, %v2903
    %v2905 = vrot.slane %v2904, 2
    %v2906 = vadd.f32 %v2904, %v2905
    %v2907 = vrot.slane %v2906, 1
    %v2908 = vadd.f32 %v2906, %v2907
    %v2909 = vmul.f32 %v2908, 7.9788456
    %v2910 = vrsqrt.pop %v2909
    %v2911 = vmul.f32 %v2909, %v2910
    %vm2912 = vcmp.eq.f32.partialorder %v2909, inf
    %v2913 = vsel %vm2912, %v2909, %v2911
    %vm2914 = vcmp.eq.f32.partialorder %v2909, 0.0
    %v2915 = vand.u32 %v2909, 2147483648
    %v2916 = vsel %vm2914, %v2915, %v2913
    %2917 = vst [vmem:[#allocation8 + $0x8] sm:$0x1] %v2916
    %v2918 = vld [vmem:[#allocation6] sm:$0xff]
    %v2919 = vld [vmem:[#allocation6 + $0x8] sm:$0xff]
    %v2920 = vld [vmem:[#allocation6 + $0x10] sm:$0xff]
    %v2921 = vld [vmem:[#allocation6 + $0x18] sm:$0xff]
    %v2922 = vld [vmem:[#allocation6 + $0x20] sm:$0xff]
    %v2923 = vld [vmem:[#allocation6 + $0x28] sm:$0xff]
    %v2924 = vld [vmem:[#allocation6 + $0x30] sm:$0xff]
    %v2925 = vld [vmem:[#allocation6 + $0x38] sm:$0xff]
    %v2926 = vld [vmem:[#allocation6 + $0x40] sm:$0xff]
    %v2927 = vld [vmem:[#allocation6 + $0x48] sm:$0xff]
    %v2928 = vld [vmem:[#allocation6 + $0x50] sm:$0xff]
    %v2929 = vld [vmem:[#allocation6 + $0x58] sm:$0xff]
    %v2930 = vld [vmem:[#allocation6 + $0x60] sm:$0xff]
    %v2931 = vld [vmem:[#allocation6 + $0x68] sm:$0xff]
    %v2932 = vld [vmem:[#allocation6 + $0x70] sm:$0xff]
    %v2933 = vld [vmem:[#allocation6 + $0x78] sm:$0xff]
    %v2934 = vld [vmem:[#allocation6 + $0x80] sm:$0xff]
    %v2935 = vld [vmem:[#allocation6 + $0x88] sm:$0xff]
    %v2936 = vld [vmem:[#allocation6 + $0x90] sm:$0xff]
    %v2937 = vld [vmem:[#allocation6 + $0x98] sm:$0xff]
    %v2938 = vld [vmem:[#allocation6 + $0xa0] sm:$0xff]
    %v2939 = vld [vmem:[#allocation6 + $0xa8] sm:$0xff]
    %v2940 = vld [vmem:[#allocation6 + $0xb0] sm:$0xff]
    %v2941 = vld [vmem:[#allocation6 + $0xb8] sm:$0xff]
    %v2942 = vld [vmem:[#allocation6 + $0xc0] sm:$0xff]
    %v2943 = vld [vmem:[#allocation6 + $0xc8] sm:$0xff]
    %v2944 = vld [vmem:[#allocation6 + $0xd0] sm:$0xff]
    %v2945 = vld [vmem:[#allocation6 + $0xd8] sm:$0xff]
    %v2946 = vld [vmem:[#allocation6 + $0xe0] sm:$0xff]
    %v2947 = vld [vmem:[#allocation6 + $0xe8] sm:$0xff]
    %v2948 = vld [vmem:[#allocation6 + $0xf0] sm:$0xff]
    %v2949 = vld [vmem:[#allocation6 + $0xf8] sm:$0xff]
    %v2950 = vsub.f32 %v2918, -5.5536036
    %v2951 = vsub.f32 %v2919, -5.5536036
    %v2952 = vsub.f32 %v2920, -5.5536036
    %v2953 = vsub.f32 %v2921, -5.5536036
    %v2954 = vsub.f32 %v2922, -5.5536036
    %v2955 = vsub.f32 %v2923, -5.5536036
    %v2956 = vsub.f32 %v2924, -5.5536036
    %v2957 = vsub.f32 %v2925, -5.5536036
    %v2958 = vsub.f32 %v2926, -5.5536036
    %v2959 = vsub.f32 %v2927, -5.5536036
    %v2960 = vsub.f32 %v2928, -5.5536036
    %v2961 = vsub.f32 %v2929, -5.5536036
    %v2962 = vsub.f32 %v2930, -5.5536036
    %v2963 = vsub.f32 %v2931, -5.5536036
    %v2964 = vsub.f32 %v2932, -5.5536036
    %v2965 = vsub.f32 %v2933, -5.5536036
    %v2966 = vsub.f32 %v2934, -5.5536036
    %v2967 = vsub.f32 %v2935, -5.5536036
    %v2968 = vsub.f32 %v2936, -5.5536036
    %v2969 = vsub.f32 %v2937, -5.5536036
    %v2970 = vsub.f32 %v2938, -5.5536036
    %v2971 = vsub.f32 %v2939, -5.5536036
    %v2972 = vsub.f32 %v2940, -5.5536036
    %v2973 = vsub.f32 %v2941, -5.5536036
    %v2974 = vsub.f32 %v2942, -5.5536036
    %v2975 = vsub.f32 %v2943, -5.5536036
    %v2976 = vsub.f32 %v2944, -5.5536036
    %v2977 = vsub.f32 %v2945, -5.5536036
    %v2978 = vsub.f32 %v2946, -5.5536036
    %v2979 = vsub.f32 %v2947, -5.5536036
    %v2980 = vsub.f32 %v2948, -5.5536036
    %v2981 = vsub.f32 %v2949, -5.5536036
    %v2982 = vmul.f32 %v2950, %v2950
    %v2983 = vmul.f32 %v2951, %v2951
    %v2984 = vmul.f32 %v2952, %v2952
    %v2985 = vmul.f32 %v2953, %v2953
    %v2986 = vmul.f32 %v2954, %v2954
    %v2987 = vmul.f32 %v2955, %v2955
    %v2988 = vmul.f32 %v2956, %v2956
    %v2989 = vmul.f32 %v2957, %v2957
    %v2990 = vmul.f32 %v2958, %v2958
    %v2991 = vmul.f32 %v2959, %v2959
    %v2992 = vmul.f32 %v2960, %v2960
    %v2993 = vmul.f32 %v2961, %v2961
    %v2994 = vmul.f32 %v2962, %v2962
    %v2995 = vmul.f32 %v2963, %v2963
    %v2996 = vmul.f32 %v2964, %v2964
    %v2997 = vmul.f32 %v2965, %v2965
    %v2998 = vmul.f32 %v2966, %v2966
    %v2999 = vmul.f32 %v2967, %v2967
    %v3000 = vmul.f32 %v2968, %v2968
    %v3001 = vmul.f32 %v2969, %v2969
    %v3002 = vmul.f32 %v2970, %v2970
    %v3003 = vmul.f32 %v2971, %v2971
    %v3004 = vmul.f32 %v2972, %v2972
    %v3005 = vmul.f32 %v2973, %v2973
    %v3006 = vmul.f32 %v2974, %v2974
    %v3007 = vmul.f32 %v2975, %v2975
    %v3008 = vmul.f32 %v2976, %v2976
    %v3009 = vmul.f32 %v2977, %v2977
    %v3010 = vmul.f32 %v2978, %v2978
    %v3011 = vmul.f32 %v2979, %v2979
    %v3012 = vmul.f32 %v2980, %v2980
    %v3013 = vmul.f32 %v2981, %v2981
    %v3014 = vsub.f32 0.0, %v2982
    %v3015 = vsub.f32 0.0, %v2983
    %v3016 = vsub.f32 0.0, %v2984
    %v3017 = vsub.f32 0.0, %v2985
    %v3018 = vsub.f32 0.0, %v2986
    %v3019 = vsub.f32 0.0, %v2987
    %v3020 = vsub.f32 0.0, %v2988
    %v3021 = vsub.f32 0.0, %v2989
    %v3022 = vsub.f32 0.0, %v2990
    %v3023 = vsub.f32 0.0, %v2991
    %v3024 = vsub.f32 0.0, %v2992
    %v3025 = vsub.f32 0.0, %v2993
    %v3026 = vsub.f32 0.0, %v2994
    %v3027 = vsub.f32 0.0, %v2995
    %v3028 = vsub.f32 0.0, %v2996
    %v3029 = vsub.f32 0.0, %v2997
    %v3030 = vsub.f32 0.0, %v2998
    %v3031 = vsub.f32 0.0, %v2999
    %v3032 = vsub.f32 0.0, %v3000
    %v3033 = vsub.f32 0.0, %v3001
    %v3034 = vsub.f32 0.0, %v3002
    %v3035 = vsub.f32 0.0, %v3003
    %v3036 = vsub.f32 0.0, %v3004
    %v3037 = vsub.f32 0.0, %v3005
    %v3038 = vsub.f32 0.0, %v3006
    %v3039 = vsub.f32 0.0, %v3007
    %v3040 = vsub.f32 0.0, %v3008
    %v3041 = vsub.f32 0.0, %v3009
    %v3042 = vsub.f32 0.0, %v3010
    %v3043 = vsub.f32 0.0, %v3011
    %v3044 = vsub.f32 0.0, %v3012
    %v3045 = vsub.f32 0.0, %v3013
    %v3046 = vmul.f32 %v3014, 1.442695
    %v3047 = vpow.pop %v3046
    %v3048 = vmul.f32 %v3015, 1.442695
    %v3049 = vpow.pop %v3048
    %v3050 = vmul.f32 %v3016, 1.442695
    %v3051 = vpow.pop %v3050
    %v3052 = vmul.f32 %v3017, 1.442695
    %v3053 = vpow.pop %v3052
    %v3054 = vmul.f32 %v3018, 1.442695
    %v3055 = vpow.pop %v3054
    %v3056 = vmul.f32 %v3019, 1.442695
    %v3057 = vpow.pop %v3056
    %v3058 = vmul.f32 %v3020, 1.442695
    %v3059 = vpow.pop %v3058
    %v3060 = vmul.f32 %v3021, 1.442695
    %v3061 = vpow.pop %v3060
    %v3062 = vmul.f32 %v3022, 1.442695
    %v3063 = vpow.pop %v3062
    %v3064 = vmul.f32 %v3023, 1.442695
    %v3065 = vpow.pop %v3064
    %v3066 = vmul.f32 %v3024, 1.442695
    %v3067 = vpow.pop %v3066
    %v3068 = vmul.f32 %v3025, 1.442695
    %v3069 = vpow.pop %v3068
    %v3070 = vmul.f32 %v3026, 1.442695
    %v3071 = vpow.pop %v3070
    %v3072 = vmul.f32 %v3027, 1.442695
    %v3073 = vpow.pop %v3072
    %v3074 = vmul.f32 %v3028, 1.442695
    %v3075 = vpow.pop %v3074
    %v3076 = vmul.f32 %v3029, 1.442695
    %v3077 = vpow.pop %v3076
    %v3078 = vmul.f32 %v3030, 1.442695
    %v3079 = vpow.pop %v3078
    %v3080 = vmul.f32 %v3031, 1.442695
    %v3081 = vpow.pop %v3080
    %v3082 = vmul.f32 %v3032, 1.442695
    %v3083 = vpow.pop %v3082
    %v3084 = vmul.f32 %v3033, 1.442695
    %v3085 = vpow.pop %v3084
    %v3086 = vmul.f32 %v3034, 1.442695
    %v3087 = vpow.pop %v3086
    %v3088 = vmul.f32 %v3035, 1.442695
    %v3089 = vpow.pop %v3088
    %v3090 = vmul.f32 %v3036, 1.442695
    %v3091 = vpow.pop %v3090
    %v3092 = vmul.f32 %v3037, 1.442695
    %v3093 = vpow.pop %v3092
    %v3094 = vmul.f32 %v3038, 1.442695
    %v3095 = vpow.pop %v3094
    %v3096 = vmul.f32 %v3039, 1.442695
    %v3097 = vpow.pop %v3096
    %v3098 = vmul.f32 %v3040, 1.442695
    %v3099 = vpow.pop %v3098
    %v3100 = vmul.f32 %v3041, 1.442695
    %v3101 = vpow.pop %v3100
    %v3102 = vmul.f32 %v3042, 1.442695
    %v3103 = vpow.pop %v3102
    %v3104 = vmul.f32 %v3043, 1.442695
    %v3105 = vpow.pop %v3104
    %v3106 = vmul.f32 %v3044, 1.442695
    %v3107 = vpow.pop %v3106
    %v3108 = vmul.f32 %v3045, 1.442695
    %v3109 = vpow.pop %v3108
    %v3110 = vld [vmem:[#allocation3] sm:$0xff]
    %v3111 = vld [vmem:[#allocation3 + $0x8] sm:$0xff]
    %v3112 = vld [vmem:[#allocation3 + $0x10] sm:$0xff]
    %v3113 = vld [vmem:[#allocation3 + $0x18] sm:$0xff]
    %v3114 = vld [vmem:[#allocation3 + $0x20] sm:$0xff]
    %v3115 = vld [vmem:[#allocation3 + $0x28] sm:$0xff]
    %v3116 = vld [vmem:[#allocation3 + $0x30] sm:$0xff]
    %v3117 = vld [vmem:[#allocation3 + $0x38] sm:$0xff]
    %v3118 = vld [vmem:[#allocation3 + $0x40] sm:$0xff]
    %v3119 = vld [vmem:[#allocation3 + $0x48] sm:$0xff]
    %v3120 = vld [vmem:[#allocation3 + $0x50] sm:$0xff]
    %v3121 = vld [vmem:[#allocation3 + $0x58] sm:$0xff]
    %v3122 = vld [vmem:[#allocation3 + $0x60] sm:$0xff]
    %v3123 = vld [vmem:[#allocation3 + $0x68] sm:$0xff]
    %v3124 = vld [vmem:[#allocation3 + $0x70] sm:$0xff]
    %v3125 = vld [vmem:[#allocation3 + $0x78] sm:$0xff]
    %v3126 = vld [vmem:[#allocation3 + $0x80] sm:$0xff]
    %v3127 = vld [vmem:[#allocation3 + $0x88] sm:$0xff]
    %v3128 = vld [vmem:[#allocation3 + $0x90] sm:$0xff]
    %v3129 = vld [vmem:[#allocation3 + $0x98] sm:$0xff]
    %v3130 = vld [vmem:[#allocation3 + $0xa0] sm:$0xff]
    %v3131 = vld [vmem:[#allocation3 + $0xa8] sm:$0xff]
    %v3132 = vld [vmem:[#allocation3 + $0xb0] sm:$0xff]
    %v3133 = vld [vmem:[#allocation3 + $0xb8] sm:$0xff]
    %v3134 = vld [vmem:[#allocation3 + $0xc0] sm:$0xff]
    %v3135 = vld [vmem:[#allocation3 + $0xc8] sm:$0xff]
    %v3136 = vld [vmem:[#allocation3 + $0xd0] sm:$0xff]
    %v3137 = vld [vmem:[#allocation3 + $0xd8] sm:$0xff]
    %v3138 = vld [vmem:[#allocation3 + $0xe0] sm:$0xff]
    %v3139 = vld [vmem:[#allocation3 + $0xe8] sm:$0xff]
    %v3140 = vld [vmem:[#allocation3 + $0xf0] sm:$0xff]
    %v3141 = vld [vmem:[#allocation3 + $0xf8] sm:$0xff]
    %v3142 = vmul.f32 %v3047, %v3110
    %v3143 = vmul.f32 %v3049, %v3111
    %v3144 = vmul.f32 %v3051, %v3112
    %v3145 = vmul.f32 %v3053, %v3113
    %v3146 = vmul.f32 %v3055, %v3114
    %v3147 = vmul.f32 %v3057, %v3115
    %v3148 = vmul.f32 %v3059, %v3116
    %v3149 = vmul.f32 %v3061, %v3117
    %v3150 = vmul.f32 %v3063, %v3118
    %v3151 = vmul.f32 %v3065, %v3119
    %v3152 = vmul.f32 %v3067, %v3120
    %v3153 = vmul.f32 %v3069, %v3121
    %v3154 = vmul.f32 %v3071, %v3122
    %v3155 = vmul.f32 %v3073, %v3123
    %v3156 = vmul.f32 %v3075, %v3124
    %v3157 = vmul.f32 %v3077, %v3125
    %v3158 = vmul.f32 %v3079, %v3126
    %v3159 = vmul.f32 %v3081, %v3127
    %v3160 = vmul.f32 %v3083, %v3128
    %v3161 = vmul.f32 %v3085, %v3129
    %v3162 = vmul.f32 %v3087, %v3130
    %v3163 = vmul.f32 %v3089, %v3131
    %v3164 = vmul.f32 %v3091, %v3132
    %v3165 = vmul.f32 %v3093, %v3133
    %v3166 = vmul.f32 %v3095, %v3134
    %v3167 = vmul.f32 %v3097, %v3135
    %v3168 = vmul.f32 %v3099, %v3136
    %v3169 = vmul.f32 %v3101, %v3137
    %v3170 = vmul.f32 %v3103, %v3138
    %v3171 = vmul.f32 %v3105, %v3139
    %v3172 = vmul.f32 %v3107, %v3140
    %v3173 = vmul.f32 %v3109, %v3141
    %v3174 = vadd.f32 %v3142, %v3143
    %v3175 = vadd.f32 %v3174, %v3144
    %v3176 = vadd.f32 %v3175, %v3145
    %v3177 = vadd.f32 %v3176, %v3146
    %v3178 = vadd.f32 %v3177, %v3147
    %v3179 = vadd.f32 %v3178, %v3148
    %v3180 = vadd.f32 %v3179, %v3149
    %v3181 = vadd.f32 %v3180, %v3150
    %v3182 = vadd.f32 %v3181, %v3151
    %v3183 = vadd.f32 %v3182, %v3152
    %v3184 = vadd.f32 %v3183, %v3153
    %v3185 = vadd.f32 %v3184, %v3154
    %v3186 = vadd.f32 %v3185, %v3155
    %v3187 = vadd.f32 %v3186, %v3156
    %v3188 = vadd.f32 %v3187, %v3157
    %v3189 = vadd.f32 %v3188, %v3158
    %v3190 = vadd.f32 %v3189, %v3159
    %v3191 = vadd.f32 %v3190, %v3160
    %v3192 = vadd.f32 %v3191, %v3161
    %v3193 = vadd.f32 %v3192, %v3162
    %v3194 = vadd.f32 %v3193, %v3163
    %v3195 = vadd.f32 %v3194, %v3164
    %v3196 = vadd.f32 %v3195, %v3165
    %v3197 = vadd.f32 %v3196, %v3166
    %v3198 = vadd.f32 %v3197, %v3167
    %v3199 = vadd.f32 %v3198, %v3168
    %v3200 = vadd.f32 %v3199, %v3169
    %v3201 = vadd.f32 %v3200, %v3170
    %v3202 = vadd.f32 %v3201, %v3171
    %v3203 = vadd.f32 %v3202, %v3172
    %v3204 = vadd.f32 %v3203, %v3173
    %v3205 = vrot.slane %v3204, 4
    %v3206 = vadd.f32 %v3204, %v3205
    %v3207 = vrot.slane %v3206, 2
    %v3208 = vadd.f32 %v3206, %v3207
    %v3209 = vrot.slane %v3208, 1
    %v3210 = vadd.f32 %v3208, %v3209
    %v3211 = vmul.f32 %v3210, 7.9788456
    %v3212 = vrsqrt.pop %v3211
    %v3213 = vmul.f32 %v3211, %v3212
    %vm3214 = vcmp.eq.f32.partialorder %v3211, inf
    %v3215 = vsel %vm3214, %v3211, %v3213
    %vm3216 = vcmp.eq.f32.partialorder %v3211, 0.0
    %v3217 = vand.u32 %v3211, 2147483648
    %v3218 = vsel %vm3216, %v3217, %v3215
    %3219 = vst [vmem:[#allocation8 + $0x9] sm:$0x1] %v3218
    %v3220 = vld [vmem:[#allocation6] sm:$0xff]
    %v3221 = vld [vmem:[#allocation6 + $0x8] sm:$0xff]
    %v3222 = vld [vmem:[#allocation6 + $0x10] sm:$0xff]
    %v3223 = vld [vmem:[#allocation6 + $0x18] sm:$0xff]
    %v3224 = vld [vmem:[#allocation6 + $0x20] sm:$0xff]
    %v3225 = vld [vmem:[#allocation6 + $0x28] sm:$0xff]
    %v3226 = vld [vmem:[#allocation6 + $0x30] sm:$0xff]
    %v3227 = vld [vmem:[#allocation6 + $0x38] sm:$0xff]
    %v3228 = vld [vmem:[#allocation6 + $0x40] sm:$0xff]
    %v3229 = vld [vmem:[#allocation6 + $0x48] sm:$0xff]
    %v3230 = vld [vmem:[#allocation6 + $0x50] sm:$0xff]
    %v3231 = vld [vmem:[#allocation6 + $0x58] sm:$0xff]
    %v3232 = vld [vmem:[#allocation6 + $0x60] sm:$0xff]
    %v3233 = vld [vmem:[#allocation6 + $0x68] sm:$0xff]
    %v3234 = vld [vmem:[#allocation6 + $0x70] sm:$0xff]
    %v3235 = vld [vmem:[#allocation6 + $0x78] sm:$0xff]
    %v3236 = vld [vmem:[#allocation6 + $0x80] sm:$0xff]
    %v3237 = vld [vmem:[#allocation6 + $0x88] sm:$0xff]
    %v3238 = vld [vmem:[#allocation6 + $0x90] sm:$0xff]
    %v3239 = vld [vmem:[#allocation6 + $0x98] sm:$0xff]
    %v3240 = vld [vmem:[#allocation6 + $0xa0] sm:$0xff]
    %v3241 = vld [vmem:[#allocation6 + $0xa8] sm:$0xff]
    %v3242 = vld [vmem:[#allocation6 + $0xb0] sm:$0xff]
    %v3243 = vld [vmem:[#allocation6 + $0xb8] sm:$0xff]
    %v3244 = vld [vmem:[#allocation6 + $0xc0] sm:$0xff]
    %v3245 = vld [vmem:[#allocation6 + $0xc8] sm:$0xff]
    %v3246 = vld [vmem:[#allocation6 + $0xd0] sm:$0xff]
    %v3247 = vld [vmem:[#allocation6 + $0xd8] sm:$0xff]
    %v3248 = vld [vmem:[#allocation6 + $0xe0] sm:$0xff]
    %v3249 = vld [vmem:[#allocation6 + $0xe8] sm:$0xff]
    %v3250 = vld [vmem:[#allocation6 + $0xf0] sm:$0xff]
    %v3251 = vld [vmem:[#allocation6 + $0xf8] sm:$0xff]
    %v3252 = vsub.f32 %v3220, -3.7024024
    %v3253 = vsub.f32 %v3221, -3.7024024
    %v3254 = vsub.f32 %v3222, -3.7024024
    %v3255 = vsub.f32 %v3223, -3.7024024
    %v3256 = vsub.f32 %v3224, -3.7024024
    %v3257 = vsub.f32 %v3225, -3.7024024
    %v3258 = vsub.f32 %v3226, -3.7024024
    %v3259 = vsub.f32 %v3227, -3.7024024
    %v3260 = vsub.f32 %v3228, -3.7024024
    %v3261 = vsub.f32 %v3229, -3.7024024
    %v3262 = vsub.f32 %v3230, -3.7024024
    %v3263 = vsub.f32 %v3231, -3.7024024
    %v3264 = vsub.f32 %v3232, -3.7024024
    %v3265 = vsub.f32 %v3233, -3.7024024
    %v3266 = vsub.f32 %v3234, -3.7024024
    %v3267 = vsub.f32 %v3235, -3.7024024
    %v3268 = vsub.f32 %v3236, -3.7024024
    %v3269 = vsub.f32 %v3237, -3.7024024
    %v3270 = vsub.f32 %v3238, -3.7024024
    %v3271 = vsub.f32 %v3239, -3.7024024
    %v3272 = vsub.f32 %v3240, -3.7024024
    %v3273 = vsub.f32 %v3241, -3.7024024
    %v3274 = vsub.f32 %v3242, -3.7024024
    %v3275 = vsub.f32 %v3243, -3.7024024
    %v3276 = vsub.f32 %v3244, -3.7024024
    %v3277 = vsub.f32 %v3245, -3.7024024
    %v3278 = vsub.f32 %v3246, -3.7024024
    %v3279 = vsub.f32 %v3247, -3.7024024
    %v3280 = vsub.f32 %v3248, -3.7024024
    %v3281 = vsub.f32 %v3249, -3.7024024
    %v3282 = vsub.f32 %v3250, -3.7024024
    %v3283 = vsub.f32 %v3251, -3.7024024
    %v3284 = vmul.f32 %v3252, %v3252
    %v3285 = vmul.f32 %v3253, %v3253
    %v3286 = vmul.f32 %v3254, %v3254
    %v3287 = vmul.f32 %v3255, %v3255
    %v3288 = vmul.f32 %v3256, %v3256
    %v3289 = vmul.f32 %v3257, %v3257
    %v3290 = vmul.f32 %v3258, %v3258
    %v3291 = vmul.f32 %v3259, %v3259
    %v3292 = vmul.f32 %v3260, %v3260
    %v3293 = vmul.f32 %v3261, %v3261
    %v3294 = vmul.f32 %v3262, %v3262
    %v3295 = vmul.f32 %v3263, %v3263
    %v3296 = vmul.f32 %v3264, %v3264
    %v3297 = vmul.f32 %v3265, %v3265
    %v3298 = vmul.f32 %v3266, %v3266
    %v3299 = vmul.f32 %v3267, %v3267
    %v3300 = vmul.f32 %v3268, %v3268
    %v3301 = vmul.f32 %v3269, %v3269
    %v3302 = vmul.f32 %v3270, %v3270
    %v3303 = vmul.f32 %v3271, %v3271
    %v3304 = vmul.f32 %v3272, %v3272
    %v3305 = vmul.f32 %v3273, %v3273
    %v3306 = vmul.f32 %v3274, %v3274
    %v3307 = vmul.f32 %v3275, %v3275
    %v3308 = vmul.f32 %v3276, %v3276
    %v3309 = vmul.f32 %v3277, %v3277
    %v3310 = vmul.f32 %v3278, %v3278
    %v3311 = vmul.f32 %v3279, %v3279
    %v3312 = vmul.f32 %v3280, %v3280
    %v3313 = vmul.f32 %v3281, %v3281
    %v3314 = vmul.f32 %v3282, %v3282
    %v3315 = vmul.f32 %v3283, %v3283
    %v3316 = vsub.f32 0.0, %v3284
    %v3317 = vsub.f32 0.0, %v3285
    %v3318 = vsub.f32 0.0, %v3286
    %v3319 = vsub.f32 0.0, %v3287
    %v3320 = vsub.f32 0.0, %v3288
    %v3321 = vsub.f32 0.0, %v3289
    %v3322 = vsub.f32 0.0, %v3290
    %v3323 = vsub.f32 0.0, %v3291
    %v3324 = vsub.f32 0.0, %v3292
    %v3325 = vsub.f32 0.0, %v3293
    %v3326 = vsub.f32 0.0, %v3294
    %v3327 = vsub.f32 0.0, %v3295
    %v3328 = vsub.f32 0.0, %v3296
    %v3329 = vsub.f32 0.0, %v3297
    %v3330 = vsub.f32 0.0, %v3298
    %v3331 = vsub.f32 0.0, %v3299
    %v3332 = vsub.f32 0.0, %v3300
    %v3333 = vsub.f32 0.0, %v3301
    %v3334 = vsub.f32 0.0, %v3302
    %v3335 = vsub.f32 0.0, %v3303
    %v3336 = vsub.f32 0.0, %v3304
    %v3337 = vsub.f32 0.0, %v3305
    %v3338 = vsub.f32 0.0, %v3306
    %v3339 = vsub.f32 0.0, %v3307
    %v3340 = vsub.f32 0.0, %v3308
    %v3341 = vsub.f32 0.0, %v3309
    %v3342 = vsub.f32 0.0, %v3310
    %v3343 = vsub.f32 0.0, %v3311
    %v3344 = vsub.f32 0.0, %v3312
    %v3345 = vsub.f32 0.0, %v3313
    %v3346 = vsub.f32 0.0, %v3314
    %v3347 = vsub.f32 0.0, %v3315
    %v3348 = vmul.f32 %v3316, 1.442695
    %v3349 = vpow.pop %v3348
    %v3350 = vmul.f32 %v3317, 1.442695
    %v3351 = vpow.pop %v3350
    %v3352 = vmul.f32 %v3318, 1.442695
    %v3353 = vpow.pop %v3352
    %v3354 = vmul.f32 %v3319, 1.442695
    %v3355 = vpow.pop %v3354
    %v3356 = vmul.f32 %v3320, 1.442695
    %v3357 = vpow.pop %v3356
    %v3358 = vmul.f32 %v3321, 1.442695
    %v3359 = vpow.pop %v3358
    %v3360 = vmul.f32 %v3322, 1.442695
    %v3361 = vpow.pop %v3360
    %v3362 = vmul.f32 %v3323, 1.442695
    %v3363 = vpow.pop %v3362
    %v3364 = vmul.f32 %v3324, 1.442695
    %v3365 = vpow.pop %v3364
    %v3366 = vmul.f32 %v3325, 1.442695
    %v3367 = vpow.pop %v3366
    %v3368 = vmul.f32 %v3326, 1.442695
    %v3369 = vpow.pop %v3368
    %v3370 = vmul.f32 %v3327, 1.442695
    %v3371 = vpow.pop %v3370
    %v3372 = vmul.f32 %v3328, 1.442695
    %v3373 = vpow.pop %v3372
    %v3374 = vmul.f32 %v3329, 1.442695
    %v3375 = vpow.pop %v3374
    %v3376 = vmul.f32 %v3330, 1.442695
    %v3377 = vpow.pop %v3376
    %v3378 = vmul.f32 %v3331, 1.442695
    %v3379 = vpow.pop %v3378
    %v3380 = vmul.f32 %v3332, 1.442695
    %v3381 = vpow.pop %v3380
    %v3382 = vmul.f32 %v3333, 1.442695
    %v3383 = vpow.pop %v3382
    %v3384 = vmul.f32 %v3334, 1.442695
    %v3385 = vpow.pop %v3384
    %v3386 = vmul.f32 %v3335, 1.442695
    %v3387 = vpow.pop %v3386
    %v3388 = vmul.f32 %v3336, 1.442695
    %v3389 = vpow.pop %v3388
    %v3390 = vmul.f32 %v3337, 1.442695
    %v3391 = vpow.pop %v3390
    %v3392 = vmul.f32 %v3338, 1.442695
    %v3393 = vpow.pop %v3392
    %v3394 = vmul.f32 %v3339, 1.442695
    %v3395 = vpow.pop %v3394
    %v3396 = vmul.f32 %v3340, 1.442695
    %v3397 = vpow.pop %v3396
    %v3398 = vmul.f32 %v3341, 1.442695
    %v3399 = vpow.pop %v3398
    %v3400 = vmul.f32 %v3342, 1.442695
    %v3401 = vpow.pop %v3400
    %v3402 = vmul.f32 %v3343, 1.442695
    %v3403 = vpow.pop %v3402
    %v3404 = vmul.f32 %v3344, 1.442695
    %v3405 = vpow.pop %v3404
    %v3406 = vmul.f32 %v3345, 1.442695
    %v3407 = vpow.pop %v3406
    %v3408 = vmul.f32 %v3346, 1.442695
    %v3409 = vpow.pop %v3408
    %v3410 = vmul.f32 %v3347, 1.442695
    %v3411 = vpow.pop %v3410
    %v3412 = vld [vmem:[#allocation3] sm:$0xff]
    %v3413 = vld [vmem:[#allocation3 + $0x8] sm:$0xff]
    %v3414 = vld [vmem:[#allocation3 + $0x10] sm:$0xff]
    %v3415 = vld [vmem:[#allocation3 + $0x18] sm:$0xff]
    %v3416 = vld [vmem:[#allocation3 + $0x20] sm:$0xff]
    %v3417 = vld [vmem:[#allocation3 + $0x28] sm:$0xff]
    %v3418 = vld [vmem:[#allocation3 + $0x30] sm:$0xff]
    %v3419 = vld [vmem:[#allocation3 + $0x38] sm:$0xff]
    %v3420 = vld [vmem:[#allocation3 + $0x40] sm:$0xff]
    %v3421 = vld [vmem:[#allocation3 + $0x48] sm:$0xff]
    %v3422 = vld [vmem:[#allocation3 + $0x50] sm:$0xff]
    %v3423 = vld [vmem:[#allocation3 + $0x58] sm:$0xff]
    %v3424 = vld [vmem:[#allocation3 + $0x60] sm:$0xff]
    %v3425 = vld [vmem:[#allocation3 + $0x68] sm:$0xff]
    %v3426 = vld [vmem:[#allocation3 + $0x70] sm:$0xff]
    %v3427 = vld [vmem:[#allocation3 + $0x78] sm:$0xff]
    %v3428 = vld [vmem:[#allocation3 + $0x80] sm:$0xff]
    %v3429 = vld [vmem:[#allocation3 + $0x88] sm:$0xff]
    %v3430 = vld [vmem:[#allocation3 + $0x90] sm:$0xff]
    %v3431 = vld [vmem:[#allocation3 + $0x98] sm:$0xff]
    %v3432 = vld [vmem:[#allocation3 + $0xa0] sm:$0xff]
    %v3433 = vld [vmem:[#allocation3 + $0xa8] sm:$0xff]
    %v3434 = vld [vmem:[#allocation3 + $0xb0] sm:$0xff]
    %v3435 = vld [vmem:[#allocation3 + $0xb8] sm:$0xff]
    %v3436 = vld [vmem:[#allocation3 + $0xc0] sm:$0xff]
    %v3437 = vld [vmem:[#allocation3 + $0xc8] sm:$0xff]
    %v3438 = vld [vmem:[#allocation3 + $0xd0] sm:$0xff]
    %v3439 = vld [vmem:[#allocation3 + $0xd8] sm:$0xff]
    %v3440 = vld [vmem:[#allocation3 + $0xe0] sm:$0xff]
    %v3441 = vld [vmem:[#allocation3 + $0xe8] sm:$0xff]
    %v3442 = vld [vmem:[#allocation3 + $0xf0] sm:$0xff]
    %v3443 = vld [vmem:[#allocation3 + $0xf8] sm:$0xff]
    %v3444 = vmul.f32 %v3349, %v3412
    %v3445 = vmul.f32 %v3351, %v3413
    %v3446 = vmul.f32 %v3353, %v3414
    %v3447 = vmul.f32 %v3355, %v3415
    %v3448 = vmul.f32 %v3357, %v3416
    %v3449 = vmul.f32 %v3359, %v3417
    %v3450 = vmul.f32 %v3361, %v3418
    %v3451 = vmul.f32 %v3363, %v3419
    %v3452 = vmul.f32 %v3365, %v3420
    %v3453 = vmul.f32 %v3367, %v3421
    %v3454 = vmul.f32 %v3369, %v3422
    %v3455 = vmul.f32 %v3371, %v3423
    %v3456 = vmul.f32 %v3373, %v3424
    %v3457 = vmul.f32 %v3375, %v3425
    %v3458 = vmul.f32 %v3377, %v3426
    %v3459 = vmul.f32 %v3379, %v3427
    %v3460 = vmul.f32 %v3381, %v3428
    %v3461 = vmul.f32 %v3383, %v3429
    %v3462 = vmul.f32 %v3385, %v3430
    %v3463 = vmul.f32 %v3387, %v3431
    %v3464 = vmul.f32 %v3389, %v3432
    %v3465 = vmul.f32 %v3391, %v3433
    %v3466 = vmul.f32 %v3393, %v3434
    %v3467 = vmul.f32 %v3395, %v3435
    %v3468 = vmul.f32 %v3397, %v3436
    %v3469 = vmul.f32 %v3399, %v3437
    %v3470 = vmul.f32 %v3401, %v3438
    %v3471 = vmul.f32 %v3403, %v3439
    %v3472 = vmul.f32 %v3405, %v3440
    %v3473 = vmul.f32 %v3407, %v3441
    %v3474 = vmul.f32 %v3409, %v3442
    %v3475 = vmul.f32 %v3411, %v3443
    %v3476 = vadd.f32 %v3444, %v3445
    %v3477 = vadd.f32 %v3476, %v3446
    %v3478 = vadd.f32 %v3477, %v3447
    %v3479 = vadd.f32 %v3478, %v3448
    %v3480 = vadd.f32 %v3479, %v3449
    %v3481 = vadd.f32 %v3480, %v3450
    %v3482 = vadd.f32 %v3481, %v3451
    %v3483 = vadd.f32 %v3482, %v3452
    %v3484 = vadd.f32 %v3483, %v3453
    %v3485 = vadd.f32 %v3484, %v3454
    %v3486 = vadd.f32 %v3485, %v3455
    %v3487 = vadd.f32 %v3486, %v3456
    %v3488 = vadd.f32 %v3487, %v3457
    %v3489 = vadd.f32 %v3488, %v3458
    %v3490 = vadd.f32 %v3489, %v3459
    %v3491 = vadd.f32 %v3490, %v3460
    %v3492 = vadd.f32 %v3491, %v3461
    %v3493 = vadd.f32 %v3492, %v3462
    %v3494 = vadd.f32 %v3493, %v3463
    %v3495 = vadd.f32 %v3494, %v3464
    %v3496 = vadd.f32 %v3495, %v3465
    %v3497 = vadd.f32 %v3496, %v3466
    %v3498 = vadd.f32 %v3497, %v3467
    %v3499 = vadd.f32 %v3498, %v3468
    %v3500 = vadd.f32 %v3499, %v3469
    %v3501 = vadd.f32 %v3500, %v3470
    %v3502 = vadd.f32 %v3501, %v3471
    %v3503 = vadd.f32 %v3502, %v3472
    %v3504 = vadd.f32 %v3503, %v3473
    %v3505 = vadd.f32 %v3504, %v3474
    %v3506 = vadd.f32 %v3505, %v3475
    %v3507 = vrot.slane %v3506, 4
    %v3508 = vadd.f32 %v3506, %v3507
    %v3509 = vrot.slane %v3508, 2
    %v3510 = vadd.f32 %v3508, %v3509
    %v3511 = vrot.slane %v3510, 1
    %v3512 = vadd.f32 %v3510, %v3511
    %v3513 = vmul.f32 %v3512, 7.9788456
    %v3514 = vrsqrt.pop %v3513
    %v3515 = vmul.f32 %v3513, %v3514
    %vm3516 = vcmp.eq.f32.partialorder %v3513, inf
    %v3517 = vsel %vm3516, %v3513, %v3515
    %vm3518 = vcmp.eq.f32.partialorder %v3513, 0.0
    %v3519 = vand.u32 %v3513, 2147483648
    %v3520 = vsel %vm3518, %v3519, %v3517
    %3521 = vst [vmem:[#allocation8 + $0xa] sm:$0x1] %v3520
    %v3522 = vld [vmem:[#allocation6] sm:$0xff]
    %v3523 = vld [vmem:[#allocation6 + $0x8] sm:$0xff]
    %v3524 = vld [vmem:[#allocation6 + $0x10] sm:$0xff]
    %v3525 = vld [vmem:[#allocation6 + $0x18] sm:$0xff]
    %v3526 = vld [vmem:[#allocation6 + $0x20] sm:$0xff]
    %v3527 = vld [vmem:[#allocation6 + $0x28] sm:$0xff]
    %v3528 = vld [vmem:[#allocation6 + $0x30] sm:$0xff]
    %v3529 = vld [vmem:[#allocation6 + $0x38] sm:$0xff]
    %v3530 = vld [vmem:[#allocation6 + $0x40] sm:$0xff]
    %v3531 = vld [vmem:[#allocation6 + $0x48] sm:$0xff]
    %v3532 = vld [vmem:[#allocation6 + $0x50] sm:$0xff]
    %v3533 = vld [vmem:[#allocation6 + $0x58] sm:$0xff]
    %v3534 = vld [vmem:[#allocation6 + $0x60] sm:$0xff]
    %v3535 = vld [vmem:[#allocation6 + $0x68] sm:$0xff]
    %v3536 = vld [vmem:[#allocation6 + $0x70] sm:$0xff]
    %v3537 = vld [vmem:[#allocation6 + $0x78] sm:$0xff]
    %v3538 = vld [vmem:[#allocation6 + $0x80] sm:$0xff]
    %v3539 = vld [vmem:[#allocation6 + $0x88] sm:$0xff]
    %v3540 = vld [vmem:[#allocation6 + $0x90] sm:$0xff]
    %v3541 = vld [vmem:[#allocation6 + $0x98] sm:$0xff]
    %v3542 = vld [vmem:[#allocation6 + $0xa0] sm:$0xff]
    %v3543 = vld [vmem:[#allocation6 + $0xa8] sm:$0xff]
    %v3544 = vld [vmem:[#allocation6 + $0xb0] sm:$0xff]
    %v3545 = vld [vmem:[#allocation6 + $0xb8] sm:$0xff]
    %v3546 = vld [vmem:[#allocation6 + $0xc0] sm:$0xff]
    %v3547 = vld [vmem:[#allocation6 + $0xc8] sm:$0xff]
    %v3548 = vld [vmem:[#allocation6 + $0xd0] sm:$0xff]
    %v3549 = vld [vmem:[#allocation6 + $0xd8] sm:$0xff]
    %v3550 = vld [vmem:[#allocation6 + $0xe0] sm:$0xff]
    %v3551 = vld [vmem:[#allocation6 + $0xe8] sm:$0xff]
    %v3552 = vld [vmem:[#allocation6 + $0xf0] sm:$0xff]
    %v3553 = vld [vmem:[#allocation6 + $0xf8] sm:$0xff]
    %v3554 = vsub.f32 %v3522, -1.8512012
    %v3555 = vsub.f32 %v3523, -1.8512012
    %v3556 = vsub.f32 %v3524, -1.8512012
    %v3557 = vsub.f32 %v3525, -1.8512012
    %v3558 = vsub.f32 %v3526, -1.8512012
    %v3559 = vsub.f32 %v3527, -1.8512012
    %v3560 = vsub.f32 %v3528, -1.8512012
    %v3561 = vsub.f32 %v3529, -1.8512012
    %v3562 = vsub.f32 %v3530, -1.8512012
    %v3563 = vsub.f32 %v3531, -1.8512012
    %v3564 = vsub.f32 %v3532, -1.8512012
    %v3565 = vsub.f32 %v3533, -1.8512012
    %v3566 = vsub.f32 %v3534, -1.8512012
    %v3567 = vsub.f32 %v3535, -1.8512012
    %v3568 = vsub.f32 %v3536, -1.8512012
    %v3569 = vsub.f32 %v3537, -1.8512012
    %v3570 = vsub.f32 %v3538, -1.8512012
    %v3571 = vsub.f32 %v3539, -1.8512012
    %v3572 = vsub.f32 %v3540, -1.8512012
    %v3573 = vsub.f32 %v3541, -1.8512012
    %v3574 = vsub.f32 %v3542, -1.8512012
    %v3575 = vsub.f32 %v3543, -1.8512012
    %v3576 = vsub.f32 %v3544, -1.8512012
    %v3577 = vsub.f32 %v3545, -1.8512012
    %v3578 = vsub.f32 %v3546, -1.8512012
    %v3579 = vsub.f32 %v3547, -1.8512012
    %v3580 = vsub.f32 %v3548, -1.8512012
    %v3581 = vsub.f32 %v3549, -1.8512012
    %v3582 = vsub.f32 %v3550, -1.8512012
    %v3583 = vsub.f32 %v3551, -1.8512012
    %v3584 = vsub.f32 %v3552, -1.8512012
    %v3585 = vsub.f32 %v3553, -1.8512012
    %v3586 = vmul.f32 %v3554, %v3554
    %v3587 = vmul.f32 %v3555, %v3555
    %v3588 = vmul.f32 %v3556, %v3556
    %v3589 = vmul.f32 %v3557, %v3557
    %v3590 = vmul.f32 %v3558, %v3558
    %v3591 = vmul.f32 %v3559, %v3559
    %v3592 = vmul.f32 %v3560, %v3560
    %v3593 = vmul.f32 %v3561, %v3561
    %v3594 = vmul.f32 %v3562, %v3562
    %v3595 = vmul.f32 %v3563, %v3563
    %v3596 = vmul.f32 %v3564, %v3564
    %v3597 = vmul.f32 %v3565, %v3565
    %v3598 = vmul.f32 %v3566, %v3566
    %v3599 = vmul.f32 %v3567, %v3567
    %v3600 = vmul.f32 %v3568, %v3568
    %v3601 = vmul.f32 %v3569, %v3569
    %v3602 = vmul.f32 %v3570, %v3570
    %v3603 = vmul.f32 %v3571, %v3571
    %v3604 = vmul.f32 %v3572, %v3572
    %v3605 = vmul.f32 %v3573, %v3573
    %v3606 = vmul.f32 %v3574, %v3574
    %v3607 = vmul.f32 %v3575, %v3575
    %v3608 = vmul.f32 %v3576, %v3576
    %v3609 = vmul.f32 %v3577, %v3577
    %v3610 = vmul.f32 %v3578, %v3578
    %v3611 = vmul.f32 %v3579, %v3579
    %v3612 = vmul.f32 %v3580, %v3580
    %v3613 = vmul.f32 %v3581, %v3581
    %v3614 = vmul.f32 %v3582, %v3582
    %v3615 = vmul.f32 %v3583, %v3583
    %v3616 = vmul.f32 %v3584, %v3584
    %v3617 = vmul.f32 %v3585, %v3585
    %v3618 = vsub.f32 0.0, %v3586
    %v3619 = vsub.f32 0.0, %v3587
    %v3620 = vsub.f32 0.0, %v3588
    %v3621 = vsub.f32 0.0, %v3589
    %v3622 = vsub.f32 0.0, %v3590
    %v3623 = vsub.f32 0.0, %v3591
    %v3624 = vsub.f32 0.0, %v3592
    %v3625 = vsub.f32 0.0, %v3593
    %v3626 = vsub.f32 0.0, %v3594
    %v3627 = vsub.f32 0.0, %v3595
    %v3628 = vsub.f32 0.0, %v3596
    %v3629 = vsub.f32 0.0, %v3597
    %v3630 = vsub.f32 0.0, %v3598
    %v3631 = vsub.f32 0.0, %v3599
    %v3632 = vsub.f32 0.0, %v3600
    %v3633 = vsub.f32 0.0, %v3601
    %v3634 = vsub.f32 0.0, %v3602
    %v3635 = vsub.f32 0.0, %v3603
    %v3636 = vsub.f32 0.0, %v3604
    %v3637 = vsub.f32 0.0, %v3605
    %v3638 = vsub.f32 0.0, %v3606
    %v3639 = vsub.f32 0.0, %v3607
    %v3640 = vsub.f32 0.0, %v3608
    %v3641 = vsub.f32 0.0, %v3609
    %v3642 = vsub.f32 0.0, %v3610
    %v3643 = vsub.f32 0.0, %v3611
    %v3644 = vsub.f32 0.0, %v3612
    %v3645 = vsub.f32 0.0, %v3613
    %v3646 = vsub.f32 0.0, %v3614
    %v3647 = vsub.f32 0.0, %v3615
    %v3648 = vsub.f32 0.0, %v3616
    %v3649 = vsub.f32 0.0, %v3617
    %v3650 = vmul.f32 %v3618, 1.442695
    %v3651 = vpow.pop %v3650
    %v3652 = vmul.f32 %v3619, 1.442695
    %v3653 = vpow.pop %v3652
    %v3654 = vmul.f32 %v3620, 1.442695
    %v3655 = vpow.pop %v3654
    %v3656 = vmul.f32 %v3621, 1.442695
    %v3657 = vpow.pop %v3656
    %v3658 = vmul.f32 %v3622, 1.442695
    %v3659 = vpow.pop %v3658
    %v3660 = vmul.f32 %v3623, 1.442695
    %v3661 = vpow.pop %v3660
    %v3662 = vmul.f32 %v3624, 1.442695
    %v3663 = vpow.pop %v3662
    %v3664 = vmul.f32 %v3625, 1.442695
    %v3665 = vpow.pop %v3664
    %v3666 = vmul.f32 %v3626, 1.442695
    %v3667 = vpow.pop %v3666
    %v3668 = vmul.f32 %v3627, 1.442695
    %v3669 = vpow.pop %v3668
    %v3670 = vmul.f32 %v3628, 1.442695
    %v3671 = vpow.pop %v3670
    %v3672 = vmul.f32 %v3629, 1.442695
    %v3673 = vpow.pop %v3672
    %v3674 = vmul.f32 %v3630, 1.442695
    %v3675 = vpow.pop %v3674
    %v3676 = vmul.f32 %v3631, 1.442695
    %v3677 = vpow.pop %v3676
    %v3678 = vmul.f32 %v3632, 1.442695
    %v3679 = vpow.pop %v3678
    %v3680 = vmul.f32 %v3633, 1.442695
    %v3681 = vpow.pop %v3680
    %v3682 = vmul.f32 %v3634, 1.442695
    %v3683 = vpow.pop %v3682
    %v3684 = vmul.f32 %v3635, 1.442695
    %v3685 = vpow.pop %v3684
    %v3686 = vmul.f32 %v3636, 1.442695
    %v3687 = vpow.pop %v3686
    %v3688 = vmul.f32 %v3637, 1.442695
    %v3689 = vpow.pop %v3688
    %v3690 = vmul.f32 %v3638, 1.442695
    %v3691 = vpow.pop %v3690
    %v3692 = vmul.f32 %v3639, 1.442695
    %v3693 = vpow.pop %v3692
    %v3694 = vmul.f32 %v3640, 1.442695
    %v3695 = vpow.pop %v3694
    %v3696 = vmul.f32 %v3641, 1.442695
    %v3697 = vpow.pop %v3696
    %v3698 = vmul.f32 %v3642, 1.442695
    %v3699 = vpow.pop %v3698
    %v3700 = vmul.f32 %v3643, 1.442695
    %v3701 = vpow.pop %v3700
    %v3702 = vmul.f32 %v3644, 1.442695
    %v3703 = vpow.pop %v3702
    %v3704 = vmul.f32 %v3645, 1.442695
    %v3705 = vpow.pop %v3704
    %v3706 = vmul.f32 %v3646, 1.442695
    %v3707 = vpow.pop %v3706
    %v3708 = vmul.f32 %v3647, 1.442695
    %v3709 = vpow.pop %v3708
    %v3710 = vmul.f32 %v3648, 1.442695
    %v3711 = vpow.pop %v3710
    %v3712 = vmul.f32 %v3649, 1.442695
    %v3713 = vpow.pop %v3712
    %v3714 = vld [vmem:[#allocation3] sm:$0xff]
    %v3715 = vld [vmem:[#allocation3 + $0x8] sm:$0xff]
    %v3716 = vld [vmem:[#allocation3 + $0x10] sm:$0xff]
    %v3717 = vld [vmem:[#allocation3 + $0x18] sm:$0xff]
    %v3718 = vld [vmem:[#allocation3 + $0x20] sm:$0xff]
    %v3719 = vld [vmem:[#allocation3 + $0x28] sm:$0xff]
    %v3720 = vld [vmem:[#allocation3 + $0x30] sm:$0xff]
    %v3721 = vld [vmem:[#allocation3 + $0x38] sm:$0xff]
    %v3722 = vld [vmem:[#allocation3 + $0x40] sm:$0xff]
    %v3723 = vld [vmem:[#allocation3 + $0x48] sm:$0xff]
    %v3724 = vld [vmem:[#allocation3 + $0x50] sm:$0xff]
    %v3725 = vld [vmem:[#allocation3 + $0x58] sm:$0xff]
    %v3726 = vld [vmem:[#allocation3 + $0x60] sm:$0xff]
    %v3727 = vld [vmem:[#allocation3 + $0x68] sm:$0xff]
    %v3728 = vld [vmem:[#allocation3 + $0x70] sm:$0xff]
    %v3729 = vld [vmem:[#allocation3 + $0x78] sm:$0xff]
    %v3730 = vld [vmem:[#allocation3 + $0x80] sm:$0xff]
    %v3731 = vld [vmem:[#allocation3 + $0x88] sm:$0xff]
    %v3732 = vld [vmem:[#allocation3 + $0x90] sm:$0xff]
    %v3733 = vld [vmem:[#allocation3 + $0x98] sm:$0xff]
    %v3734 = vld [vmem:[#allocation3 + $0xa0] sm:$0xff]
    %v3735 = vld [vmem:[#allocation3 + $0xa8] sm:$0xff]
    %v3736 = vld [vmem:[#allocation3 + $0xb0] sm:$0xff]
    %v3737 = vld [vmem:[#allocation3 + $0xb8] sm:$0xff]
    %v3738 = vld [vmem:[#allocation3 + $0xc0] sm:$0xff]
    %v3739 = vld [vmem:[#allocation3 + $0xc8] sm:$0xff]
    %v3740 = vld [vmem:[#allocation3 + $0xd0] sm:$0xff]
    %v3741 = vld [vmem:[#allocation3 + $0xd8] sm:$0xff]
    %v3742 = vld [vmem:[#allocation3 + $0xe0] sm:$0xff]
    %v3743 = vld [vmem:[#allocation3 + $0xe8] sm:$0xff]
    %v3744 = vld [vmem:[#allocation3 + $0xf0] sm:$0xff]
    %v3745 = vld [vmem:[#allocation3 + $0xf8] sm:$0xff]
    %v3746 = vmul.f32 %v3651, %v3714
    %v3747 = vmul.f32 %v3653, %v3715
    %v3748 = vmul.f32 %v3655, %v3716
    %v3749 = vmul.f32 %v3657, %v3717
    %v3750 = vmul.f32 %v3659, %v3718
    %v3751 = vmul.f32 %v3661, %v3719
    %v3752 = vmul.f32 %v3663, %v3720
    %v3753 = vmul.f32 %v3665, %v3721
    %v3754 = vmul.f32 %v3667, %v3722
    %v3755 = vmul.f32 %v3669, %v3723
    %v3756 = vmul.f32 %v3671, %v3724
    %v3757 = vmul.f32 %v3673, %v3725
    %v3758 = vmul.f32 %v3675, %v3726
    %v3759 = vmul.f32 %v3677, %v3727
    %v3760 = vmul.f32 %v3679, %v3728
    %v3761 = vmul.f32 %v3681, %v3729
    %v3762 = vmul.f32 %v3683, %v3730
    %v3763 = vmul.f32 %v3685, %v3731
    %v3764 = vmul.f32 %v3687, %v3732
    %v3765 = vmul.f32 %v3689, %v3733
    %v3766 = vmul.f32 %v3691, %v3734
    %v3767 = vmul.f32 %v3693, %v3735
    %v3768 = vmul.f32 %v3695, %v3736
    %v3769 = vmul.f32 %v3697, %v3737
    %v3770 = vmul.f32 %v3699, %v3738
    %v3771 = vmul.f32 %v3701, %v3739
    %v3772 = vmul.f32 %v3703, %v3740
    %v3773 = vmul.f32 %v3705, %v3741
    %v3774 = vmul.f32 %v3707, %v3742
    %v3775 = vmul.f32 %v3709, %v3743
    %v3776 = vmul.f32 %v3711, %v3744
    %v3777 = vmul.f32 %v3713, %v3745
    %v3778 = vadd.f32 %v3746, %v3747
    %v3779 = vadd.f32 %v3778, %v3748
    %v3780 = vadd.f32 %v3779, %v3749
    %v3781 = vadd.f32 %v3780, %v3750
    %v3782 = vadd.f32 %v3781, %v3751
    %v3783 = vadd.f32 %v3782, %v3752
    %v3784 = vadd.f32 %v3783, %v3753
    %v3785 = vadd.f32 %v3784, %v3754
    %v3786 = vadd.f32 %v3785, %v3755
    %v3787 = vadd.f32 %v3786, %v3756
    %v3788 = vadd.f32 %v3787, %v3757
    %v3789 = vadd.f32 %v3788, %v3758
    %v3790 = vadd.f32 %v3789, %v3759
    %v3791 = vadd.f32 %v3790, %v3760
    %v3792 = vadd.f32 %v3791, %v3761
    %v3793 = vadd.f32 %v3792, %v3762
    %v3794 = vadd.f32 %v3793, %v3763
    %v3795 = vadd.f32 %v3794, %v3764
    %v3796 = vadd.f32 %v3795, %v3765
    %v3797 = vadd.f32 %v3796, %v3766
    %v3798 = vadd.f32 %v3797, %v3767
    %v3799 = vadd.f32 %v3798, %v3768
    %v3800 = vadd.f32 %v3799, %v3769
    %v3801 = vadd.f32 %v3800, %v3770
    %v3802 = vadd.f32 %v3801, %v3771
    %v3803 = vadd.f32 %v3802, %v3772
    %v3804 = vadd.f32 %v3803, %v3773
    %v3805 = vadd.f32 %v3804, %v3774
    %v3806 = vadd.f32 %v3805, %v3775
    %v3807 = vadd.f32 %v3806, %v3776
    %v3808 = vadd.f32 %v3807, %v3777
    %v3809 = vrot.slane %v3808, 4
    %v3810 = vadd.f32 %v3808, %v3809
    %v3811 = vrot.slane %v3810, 2
    %v3812 = vadd.f32 %v3810, %v3811
    %v3813 = vrot.slane %v3812, 1
    %v3814 = vadd.f32 %v3812, %v3813
    %v3815 = vmul.f32 %v3814, 7.9788456
    %v3816 = vrsqrt.pop %v3815
    %v3817 = vmul.f32 %v3815, %v3816
    %vm3818 = vcmp.eq.f32.partialorder %v3815, inf
    %v3819 = vsel %vm3818, %v3815, %v3817
    %vm3820 = vcmp.eq.f32.partialorder %v3815, 0.0
    %v3821 = vand.u32 %v3815, 2147483648
    %v3822 = vsel %vm3820, %v3821, %v3819
    %3823 = vst [vmem:[#allocation8 + $0xb] sm:$0x1] %v3822
    %v3824 = vld [vmem:[#allocation6] sm:$0xff]
    %v3825 = vld [vmem:[#allocation6 + $0x8] sm:$0xff]
    %v3826 = vld [vmem:[#allocation6 + $0x10] sm:$0xff]
    %v3827 = vld [vmem:[#allocation6 + $0x18] sm:$0xff]
    %v3828 = vld [vmem:[#allocation6 + $0x20] sm:$0xff]
    %v3829 = vld [vmem:[#allocation6 + $0x28] sm:$0xff]
    %v3830 = vld [vmem:[#allocation6 + $0x30] sm:$0xff]
    %v3831 = vld [vmem:[#allocation6 + $0x38] sm:$0xff]
    %v3832 = vld [vmem:[#allocation6 + $0x40] sm:$0xff]
    %v3833 = vld [vmem:[#allocation6 + $0x48] sm:$0xff]
    %v3834 = vld [vmem:[#allocation6 + $0x50] sm:$0xff]
    %v3835 = vld [vmem:[#allocation6 + $0x58] sm:$0xff]
    %v3836 = vld [vmem:[#allocation6 + $0x60] sm:$0xff]
    %v3837 = vld [vmem:[#allocation6 + $0x68] sm:$0xff]
    %v3838 = vld [vmem:[#allocation6 + $0x70] sm:$0xff]
    %v3839 = vld [vmem:[#allocation6 + $0x78] sm:$0xff]
    %v3840 = vld [vmem:[#allocation6 + $0x80] sm:$0xff]
    %v3841 = vld [vmem:[#allocation6 + $0x88] sm:$0xff]
    %v3842 = vld [vmem:[#allocation6 + $0x90] sm:$0xff]
    %v3843 = vld [vmem:[#allocation6 + $0x98] sm:$0xff]
    %v3844 = vld [vmem:[#allocation6 + $0xa0] sm:$0xff]
    %v3845 = vld [vmem:[#allocation6 + $0xa8] sm:$0xff]
    %v3846 = vld [vmem:[#allocation6 + $0xb0] sm:$0xff]
    %v3847 = vld [vmem:[#allocation6 + $0xb8] sm:$0xff]
    %v3848 = vld [vmem:[#allocation6 + $0xc0] sm:$0xff]
    %v3849 = vld [vmem:[#allocation6 + $0xc8] sm:$0xff]
    %v3850 = vld [vmem:[#allocation6 + $0xd0] sm:$0xff]
    %v3851 = vld [vmem:[#allocation6 + $0xd8] sm:$0xff]
    %v3852 = vld [vmem:[#allocation6 + $0xe0] sm:$0xff]
    %v3853 = vld [vmem:[#allocation6 + $0xe8] sm:$0xff]
    %v3854 = vld [vmem:[#allocation6 + $0xf0] sm:$0xff]
    %v3855 = vld [vmem:[#allocation6 + $0xf8] sm:$0xff]
    %v3856 = vmul.f32 %v3824, %v3824
    %v3857 = vmul.f32 %v3825, %v3825
    %v3858 = vmul.f32 %v3826, %v3826
    %v3859 = vmul.f32 %v3827, %v3827
    %v3860 = vmul.f32 %v3828, %v3828
    %v3861 = vmul.f32 %v3829, %v3829
    %v3862 = vmul.f32 %v3830, %v3830
    %v3863 = vmul.f32 %v3831, %v3831
    %v3864 = vmul.f32 %v3832, %v3832
    %v3865 = vmul.f32 %v3833, %v3833
    %v3866 = vmul.f32 %v3834, %v3834
    %v3867 = vmul.f32 %v3835, %v3835
    %v3868 = vmul.f32 %v3836, %v3836
    %v3869 = vmul.f32 %v3837, %v3837
    %v3870 = vmul.f32 %v3838, %v3838
    %v3871 = vmul.f32 %v3839, %v3839
    %v3872 = vmul.f32 %v3840, %v3840
    %v3873 = vmul.f32 %v3841, %v3841
    %v3874 = vmul.f32 %v3842, %v3842
    %v3875 = vmul.f32 %v3843, %v3843
    %v3876 = vmul.f32 %v3844, %v3844
    %v3877 = vmul.f32 %v3845, %v3845
    %v3878 = vmul.f32 %v3846, %v3846
    %v3879 = vmul.f32 %v3847, %v3847
    %v3880 = vmul.f32 %v3848, %v3848
    %v3881 = vmul.f32 %v3849, %v3849
    %v3882 = vmul.f32 %v3850, %v3850
    %v3883 = vmul.f32 %v3851, %v3851
    %v3884 = vmul.f32 %v3852, %v3852
    %v3885 = vmul.f32 %v3853, %v3853
    %v3886 = vmul.f32 %v3854, %v3854
    %v3887 = vmul.f32 %v3855, %v3855
    %v3888 = vsub.f32 0.0, %v3856
    %v3889 = vsub.f32 0.0, %v3857
    %v3890 = vsub.f32 0.0, %v3858
    %v3891 = vsub.f32 0.0, %v3859
    %v3892 = vsub.f32 0.0, %v3860
    %v3893 = vsub.f32 0.0, %v3861
    %v3894 = vsub.f32 0.0, %v3862
    %v3895 = vsub.f32 0.0, %v3863
    %v3896 = vsub.f32 0.0, %v3864
    %v3897 = vsub.f32 0.0, %v3865
    %v3898 = vsub.f32 0.0, %v3866
    %v3899 = vsub.f32 0.0, %v3867
    %v3900 = vsub.f32 0.0, %v3868
    %v3901 = vsub.f32 0.0, %v3869
    %v3902 = vsub.f32 0.0, %v3870
    %v3903 = vsub.f32 0.0, %v3871
    %v3904 = vsub.f32 0.0, %v3872
    %v3905 = vsub.f32 0.0, %v3873
    %v3906 = vsub.f32 0.0, %v3874
    %v3907 = vsub.f32 0.0, %v3875
    %v3908 = vsub.f32 0.0, %v3876
    %v3909 = vsub.f32 0.0, %v3877
    %v3910 = vsub.f32 0.0, %v3878
    %v3911 = vsub.f32 0.0, %v3879
    %v3912 = vsub.f32 0.0, %v3880
    %v3913 = vsub.f32 0.0, %v3881
    %v3914 = vsub.f32 0.0, %v3882
    %v3915 = vsub.f32 0.0, %v3883
    %v3916 = vsub.f32 0.0, %v3884
    %v3917 = vsub.f32 0.0, %v3885
    %v3918 = vsub.f32 0.0, %v3886
    %v3919 = vsub.f32 0.0, %v3887
    %v3920 = vmul.f32 %v3888, 1.442695
    %v3921 = vpow.pop %v3920
    %v3922 = vmul.f32 %v3889, 1.442695
    %v3923 = vpow.pop %v3922
    %v3924 = vmul.f32 %v3890, 1.442695
    %v3925 = vpow.pop %v3924
    %v3926 = vmul.f32 %v3891, 1.442695
    %v3927 = vpow.pop %v3926
    %v3928 = vmul.f32 %v3892, 1.442695
    %v3929 = vpow.pop %v3928
    %v3930 = vmul.f32 %v3893, 1.442695
    %v3931 = vpow.pop %v3930
    %v3932 = vmul.f32 %v3894, 1.442695
    %v3933 = vpow.pop %v3932
    %v3934 = vmul.f32 %v3895, 1.442695
    %v3935 = vpow.pop %v3934
    %v3936 = vmul.f32 %v3896, 1.442695
    %v3937 = vpow.pop %v3936
    %v3938 = vmul.f32 %v3897, 1.442695
    %v3939 = vpow.pop %v3938
    %v3940 = vmul.f32 %v3898, 1.442695
    %v3941 = vpow.pop %v3940
    %v3942 = vmul.f32 %v3899, 1.442695
    %v3943 = vpow.pop %v3942
    %v3944 = vmul.f32 %v3900, 1.442695
    %v3945 = vpow.pop %v3944
    %v3946 = vmul.f32 %v3901, 1.442695
    %v3947 = vpow.pop %v3946
    %v3948 = vmul.f32 %v3902, 1.442695
    %v3949 = vpow.pop %v3948
    %v3950 = vmul.f32 %v3903, 1.442695
    %v3951 = vpow.pop %v3950
    %v3952 = vmul.f32 %v3904, 1.442695
    %v3953 = vpow.pop %v3952
    %v3954 = vmul.f32 %v3905, 1.442695
    %v3955 = vpow.pop %v3954
    %v3956 = vmul.f32 %v3906, 1.442695
    %v3957 = vpow.pop %v3956
    %v3958 = vmul.f32 %v3907, 1.442695
    %v3959 = vpow.pop %v3958
    %v3960 = vmul.f32 %v3908, 1.442695
    %v3961 = vpow.pop %v3960
    %v3962 = vmul.f32 %v3909, 1.442695
    %v3963 = vpow.pop %v3962
    %v3964 = vmul.f32 %v3910, 1.442695
    %v3965 = vpow.pop %v3964
    %v3966 = vmul.f32 %v3911, 1.442695
    %v3967 = vpow.pop %v3966
    %v3968 = vmul.f32 %v3912, 1.442695
    %v3969 = vpow.pop %v3968
    %v3970 = vmul.f32 %v3913, 1.442695
    %v3971 = vpow.pop %v3970
    %v3972 = vmul.f32 %v3914, 1.442695
    %v3973 = vpow.pop %v3972
    %v3974 = vmul.f32 %v3915, 1.442695
    %v3975 = vpow.pop %v3974
    %v3976 = vmul.f32 %v3916, 1.442695
    %v3977 = vpow.pop %v3976
    %v3978 = vmul.f32 %v3917, 1.442695
    %v3979 = vpow.pop %v3978
    %v3980 = vmul.f32 %v3918, 1.442695
    %v3981 = vpow.pop %v3980
    %v3982 = vmul.f32 %v3919, 1.442695
    %v3983 = vpow.pop %v3982
    %v3984 = vld [vmem:[#allocation3] sm:$0xff]
    %v3985 = vld [vmem:[#allocation3 + $0x8] sm:$0xff]
    %v3986 = vld [vmem:[#allocation3 + $0x10] sm:$0xff]
    %v3987 = vld [vmem:[#allocation3 + $0x18] sm:$0xff]
    %v3988 = vld [vmem:[#allocation3 + $0x20] sm:$0xff]
    %v3989 = vld [vmem:[#allocation3 + $0x28] sm:$0xff]
    %v3990 = vld [vmem:[#allocation3 + $0x30] sm:$0xff]
    %v3991 = vld [vmem:[#allocation3 + $0x38] sm:$0xff]
    %v3992 = vld [vmem:[#allocation3 + $0x40] sm:$0xff]
    %v3993 = vld [vmem:[#allocation3 + $0x48] sm:$0xff]
    %v3994 = vld [vmem:[#allocation3 + $0x50] sm:$0xff]
    %v3995 = vld [vmem:[#allocation3 + $0x58] sm:$0xff]
    %v3996 = vld [vmem:[#allocation3 + $0x60] sm:$0xff]
    %v3997 = vld [vmem:[#allocation3 + $0x68] sm:$0xff]
    %v3998 = vld [vmem:[#allocation3 + $0x70] sm:$0xff]
    %v3999 = vld [vmem:[#allocation3 + $0x78] sm:$0xff]
    %v4000 = vld [vmem:[#allocation3 + $0x80] sm:$0xff]
    %v4001 = vld [vmem:[#allocation3 + $0x88] sm:$0xff]
    %v4002 = vld [vmem:[#allocation3 + $0x90] sm:$0xff]
    %v4003 = vld [vmem:[#allocation3 + $0x98] sm:$0xff]
    %v4004 = vld [vmem:[#allocation3 + $0xa0] sm:$0xff]
    %v4005 = vld [vmem:[#allocation3 + $0xa8] sm:$0xff]
    %v4006 = vld [vmem:[#allocation3 + $0xb0] sm:$0xff]
    %v4007 = vld [vmem:[#allocation3 + $0xb8] sm:$0xff]
    %v4008 = vld [vmem:[#allocation3 + $0xc0] sm:$0xff]
    %v4009 = vld [vmem:[#allocation3 + $0xc8] sm:$0xff]
    %v4010 = vld [vmem:[#allocation3 + $0xd0] sm:$0xff]
    %v4011 = vld [vmem:[#allocation3 + $0xd8] sm:$0xff]
    %v4012 = vld [vmem:[#allocation3 + $0xe0] sm:$0xff]
    %v4013 = vld [vmem:[#allocation3 + $0xe8] sm:$0xff]
    %v4014 = vld [vmem:[#allocation3 + $0xf0] sm:$0xff]
    %v4015 = vld [vmem:[#allocation3 + $0xf8] sm:$0xff]
    %v4016 = vmul.f32 %v3921, %v3984
    %v4017 = vmul.f32 %v3923, %v3985
    %v4018 = vmul.f32 %v3925, %v3986
    %v4019 = vmul.f32 %v3927, %v3987
    %v4020 = vmul.f32 %v3929, %v3988
    %v4021 = vmul.f32 %v3931, %v3989
    %v4022 = vmul.f32 %v3933, %v3990
    %v4023 = vmul.f32 %v3935, %v3991
    %v4024 = vmul.f32 %v3937, %v3992
    %v4025 = vmul.f32 %v3939, %v3993
    %v4026 = vmul.f32 %v3941, %v3994
    %v4027 = vmul.f32 %v3943, %v3995
    %v4028 = vmul.f32 %v3945, %v3996
    %v4029 = vmul.f32 %v3947, %v3997
    %v4030 = vmul.f32 %v3949, %v3998
    %v4031 = vmul.f32 %v3951, %v3999
    %v4032 = vmul.f32 %v3953, %v4000
    %v4033 = vmul.f32 %v3955, %v4001
    %v4034 = vmul.f32 %v3957, %v4002
    %v4035 = vmul.f32 %v3959, %v4003
    %v4036 = vmul.f32 %v3961, %v4004
    %v4037 = vmul.f32 %v3963, %v4005
    %v4038 = vmul.f32 %v3965, %v4006
    %v4039 = vmul.f32 %v3967, %v4007
    %v4040 = vmul.f32 %v3969, %v4008
    %v4041 = vmul.f32 %v3971, %v4009
    %v4042 = vmul.f32 %v3973, %v4010
    %v4043 = vmul.f32 %v3975, %v4011
    %v4044 = vmul.f32 %v3977, %v4012
    %v4045 = vmul.f32 %v3979, %v4013
    %v4046 = vmul.f32 %v3981, %v4014
    %v4047 = vmul.f32 %v3983, %v4015
    %v4048 = vadd.f32 %v4016, %v4017
    %v4049 = vadd.f32 %v4048, %v4018
    %v4050 = vadd.f32 %v4049, %v4019
    %v4051 = vadd.f32 %v4050, %v4020
    %v4052 = vadd.f32 %v4051, %v4021
    %v4053 = vadd.f32 %v4052, %v4022
    %v4054 = vadd.f32 %v4053, %v4023
    %v4055 = vadd.f32 %v4054, %v4024
    %v4056 = vadd.f32 %v4055, %v4025
    %v4057 = vadd.f32 %v4056, %v4026
    %v4058 = vadd.f32 %v4057, %v4027
    %v4059 = vadd.f32 %v4058, %v4028
    %v4060 = vadd.f32 %v4059, %v4029
    %v4061 = vadd.f32 %v4060, %v4030
    %v4062 = vadd.f32 %v4061, %v4031
    %v4063 = vadd.f32 %v4062, %v4032
    %v4064 = vadd.f32 %v4063, %v4033
    %v4065 = vadd.f32 %v4064, %v4034
    %v4066 = vadd.f32 %v4065, %v4035
    %v4067 = vadd.f32 %v4066, %v4036
    %v4068 = vadd.f32 %v4067, %v4037
    %v4069 = vadd.f32 %v4068, %v4038
    %v4070 = vadd.f32 %v4069, %v4039
    %v4071 = vadd.f32 %v4070, %v4040
    %v4072 = vadd.f32 %v4071, %v4041
    %v4073 = vadd.f32 %v4072, %v4042
    %v4074 = vadd.f32 %v4073, %v4043
    %v4075 = vadd.f32 %v4074, %v4044
    %v4076 = vadd.f32 %v4075, %v4045
    %v4077 = vadd.f32 %v4076, %v4046
    %v4078 = vadd.f32 %v4077, %v4047
    %v4079 = vrot.slane %v4078, 4
    %v4080 = vadd.f32 %v4078, %v4079
    %v4081 = vrot.slane %v4080, 2
    %v4082 = vadd.f32 %v4080, %v4081
    %v4083 = vrot.slane %v4082, 1
    %v4084 = vadd.f32 %v4082, %v4083
    %v4085 = vmul.f32 %v4084, 7.9788456
    %v4086 = vrsqrt.pop %v4085
    %v4087 = vmul.f32 %v4085, %v4086
    %vm4088 = vcmp.eq.f32.partialorder %v4085, inf
    %v4089 = vsel %vm4088, %v4085, %v4087
    %vm4090 = vcmp.eq.f32.partialorder %v4085, 0.0
    %v4091 = vand.u32 %v4085, 2147483648
    %v4092 = vsel %vm4090, %v4091, %v4089
    %4093 = vst [vmem:[#allocation8 + $0xc] sm:$0x1] %v4092
    %v4094 = vld [vmem:[#allocation6] sm:$0xff]
    %v4095 = vld [vmem:[#allocation6 + $0x8] sm:$0xff]
    %v4096 = vld [vmem:[#allocation6 + $0x10] sm:$0xff]
    %v4097 = vld [vmem:[#allocation6 + $0x18] sm:$0xff]
    %v4098 = vld [vmem:[#allocation6 + $0x20] sm:$0xff]
    %v4099 = vld [vmem:[#allocation6 + $0x28] sm:$0xff]
    %v4100 = vld [vmem:[#allocation6 + $0x30] sm:$0xff]
    %v4101 = vld [vmem:[#allocation6 + $0x38] sm:$0xff]
    %v4102 = vld [vmem:[#allocation6 + $0x40] sm:$0xff]
    %v4103 = vld [vmem:[#allocation6 + $0x48] sm:$0xff]
    %v4104 = vld [vmem:[#allocation6 + $0x50] sm:$0xff]
    %v4105 = vld [vmem:[#allocation6 + $0x58] sm:$0xff]
    %v4106 = vld [vmem:[#allocation6 + $0x60] sm:$0xff]
    %v4107 = vld [vmem:[#allocation6 + $0x68] sm:$0xff]
    %v4108 = vld [vmem:[#allocation6 + $0x70] sm:$0xff]
    %v4109 = vld [vmem:[#allocation6 + $0x78] sm:$0xff]
    %v4110 = vld [vmem:[#allocation6 + $0x80] sm:$0xff]
    %v4111 = vld [vmem:[#allocation6 + $0x88] sm:$0xff]
    %v4112 = vld [vmem:[#allocation6 + $0x90] sm:$0xff]
    %v4113 = vld [vmem:[#allocation6 + $0x98] sm:$0xff]
    %v4114 = vld [vmem:[#allocation6 + $0xa0] sm:$0xff]
    %v4115 = vld [vmem:[#allocation6 + $0xa8] sm:$0xff]
    %v4116 = vld [vmem:[#allocation6 + $0xb0] sm:$0xff]
    %v4117 = vld [vmem:[#allocation6 + $0xb8] sm:$0xff]
    %v4118 = vld [vmem:[#allocation6 + $0xc0] sm:$0xff]
    %v4119 = vld [vmem:[#allocation6 + $0xc8] sm:$0xff]
    %v4120 = vld [vmem:[#allocation6 + $0xd0] sm:$0xff]
    %v4121 = vld [vmem:[#allocation6 + $0xd8] sm:$0xff]
    %v4122 = vld [vmem:[#allocation6 + $0xe0] sm:$0xff]
    %v4123 = vld [vmem:[#allocation6 + $0xe8] sm:$0xff]
    %v4124 = vld [vmem:[#allocation6 + $0xf0] sm:$0xff]
    %v4125 = vld [vmem:[#allocation6 + $0xf8] sm:$0xff]
    %v4126 = vsub.f32 %v4094, 1.8512012
    %v4127 = vsub.f32 %v4095, 1.8512012
    %v4128 = vsub.f32 %v4096, 1.8512012
    %v4129 = vsub.f32 %v4097, 1.8512012
    %v4130 = vsub.f32 %v4098, 1.8512012
    %v4131 = vsub.f32 %v4099, 1.8512012
    %v4132 = vsub.f32 %v4100, 1.8512012
    %v4133 = vsub.f32 %v4101, 1.8512012
    %v4134 = vsub.f32 %v4102, 1.8512012
    %v4135 = vsub.f32 %v4103, 1.8512012
    %v4136 = vsub.f32 %v4104, 1.8512012
    %v4137 = vsub.f32 %v4105, 1.8512012
    %v4138 = vsub.f32 %v4106, 1.8512012
    %v4139 = vsub.f32 %v4107, 1.8512012
    %v4140 = vsub.f32 %v4108, 1.8512012
    %v4141 = vsub.f32 %v4109, 1.8512012
    %v4142 = vsub.f32 %v4110, 1.8512012
    %v4143 = vsub.f32 %v4111, 1.8512012
    %v4144 = vsub.f32 %v4112, 1.8512012
    %v4145 = vsub.f32 %v4113, 1.8512012
    %v4146 = vsub.f32 %v4114, 1.8512012
    %v4147 = vsub.f32 %v4115, 1.8512012
    %v4148 = vsub.f32 %v4116, 1.8512012
    %v4149 = vsub.f32 %v4117, 1.8512012
    %v4150 = vsub.f32 %v4118, 1.8512012
    %v4151 = vsub.f32 %v4119, 1.8512012
    %v4152 = vsub.f32 %v4120, 1.8512012
    %v4153 = vsub.f32 %v4121, 1.8512012
    %v4154 = vsub.f32 %v4122, 1.8512012
    %v4155 = vsub.f32 %v4123, 1.8512012
    %v4156 = vsub.f32 %v4124, 1.8512012
    %v4157 = vsub.f32 %v4125, 1.8512012
    %v4158 = vmul.f32 %v4126, %v4126
    %v4159 = vmul.f32 %v4127, %v4127
    %v4160 = vmul.f32 %v4128, %v4128
    %v4161 = vmul.f32 %v4129, %v4129
    %v4162 = vmul.f32 %v4130, %v4130
    %v4163 = vmul.f32 %v4131, %v4131
    %v4164 = vmul.f32 %v4132, %v4132
    %v4165 = vmul.f32 %v4133, %v4133
    %v4166 = vmul.f32 %v4134, %v4134
    %v4167 = vmul.f32 %v4135, %v4135
    %v4168 = vmul.f32 %v4136, %v4136
    %v4169 = vmul.f32 %v4137, %v4137
    %v4170 = vmul.f32 %v4138, %v4138
    %v4171 = vmul.f32 %v4139, %v4139
    %v4172 = vmul.f32 %v4140, %v4140
    %v4173 = vmul.f32 %v4141, %v4141
    %v4174 = vmul.f32 %v4142, %v4142
    %v4175 = vmul.f32 %v4143, %v4143
    %v4176 = vmul.f32 %v4144, %v4144
    %v4177 = vmul.f32 %v4145, %v4145
    %v4178 = vmul.f32 %v4146, %v4146
    %v4179 = vmul.f32 %v4147, %v4147
    %v4180 = vmul.f32 %v4148, %v4148
    %v4181 = vmul.f32 %v4149, %v4149
    %v4182 = vmul.f32 %v4150, %v4150
    %v4183 = vmul.f32 %v4151, %v4151
    %v4184 = vmul.f32 %v4152, %v4152
    %v4185 = vmul.f32 %v4153, %v4153
    %v4186 = vmul.f32 %v4154, %v4154
    %v4187 = vmul.f32 %v4155, %v4155
    %v4188 = vmul.f32 %v4156, %v4156
    %v4189 = vmul.f32 %v4157, %v4157
    %v4190 = vsub.f32 0.0, %v4158
    %v4191 = vsub.f32 0.0, %v4159
    %v4192 = vsub.f32 0.0, %v4160
    %v4193 = vsub.f32 0.0, %v4161
    %v4194 = vsub.f32 0.0, %v4162
    %v4195 = vsub.f32 0.0, %v4163
    %v4196 = vsub.f32 0.0, %v4164
    %v4197 = vsub.f32 0.0, %v4165
    %v4198 = vsub.f32 0.0, %v4166
    %v4199 = vsub.f32 0.0, %v4167
    %v4200 = vsub.f32 0.0, %v4168
    %v4201 = vsub.f32 0.0, %v4169
    %v4202 = vsub.f32 0.0, %v4170
    %v4203 = vsub.f32 0.0, %v4171
    %v4204 = vsub.f32 0.0, %v4172
    %v4205 = vsub.f32 0.0, %v4173
    %v4206 = vsub.f32 0.0, %v4174
    %v4207 = vsub.f32 0.0, %v4175
    %v4208 = vsub.f32 0.0, %v4176
    %v4209 = vsub.f32 0.0, %v4177
    %v4210 = vsub.f32 0.0, %v4178
    %v4211 = vsub.f32 0.0, %v4179
    %v4212 = vsub.f32 0.0, %v4180
    %v4213 = vsub.f32 0.0, %v4181
    %v4214 = vsub.f32 0.0, %v4182
    %v4215 = vsub.f32 0.0, %v4183
    %v4216 = vsub.f32 0.0, %v4184
    %v4217 = vsub.f32 0.0, %v4185
    %v4218 = vsub.f32 0.0, %v4186
    %v4219 = vsub.f32 0.0, %v4187
    %v4220 = vsub.f32 0.0, %v4188
    %v4221 = vsub.f32 0.0, %v4189
    %v4222 = vmul.f32 %v4190, 1.442695
    %v4223 = vpow.pop %v4222
    %v4224 = vmul.f32 %v4191, 1.442695
    %v4225 = vpow.pop %v4224
    %v4226 = vmul.f32 %v4192, 1.442695
    %v4227 = vpow.pop %v4226
    %v4228 = vmul.f32 %v4193, 1.442695
    %v4229 = vpow.pop %v4228
    %v4230 = vmul.f32 %v4194, 1.442695
    %v4231 = vpow.pop %v4230
    %v4232 = vmul.f32 %v4195, 1.442695
    %v4233 = vpow.pop %v4232
    %v4234 = vmul.f32 %v4196, 1.442695
    %v4235 = vpow.pop %v4234
    %v4236 = vmul.f32 %v4197, 1.442695
    %v4237 = vpow.pop %v4236
    %v4238 = vmul.f32 %v4198, 1.442695
    %v4239 = vpow.pop %v4238
    %v4240 = vmul.f32 %v4199, 1.442695
    %v4241 = vpow.pop %v4240
    %v4242 = vmul.f32 %v4200, 1.442695
    %v4243 = vpow.pop %v4242
    %v4244 = vmul.f32 %v4201, 1.442695
    %v4245 = vpow.pop %v4244
    %v4246 = vmul.f32 %v4202, 1.442695
    %v4247 = vpow.pop %v4246
    %v4248 = vmul.f32 %v4203, 1.442695
    %v4249 = vpow.pop %v4248
    %v4250 = vmul.f32 %v4204, 1.442695
    %v4251 = vpow.pop %v4250
    %v4252 = vmul.f32 %v4205, 1.442695
    %v4253 = vpow.pop %v4252
    %v4254 = vmul.f32 %v4206, 1.442695
    %v4255 = vpow.pop %v4254
    %v4256 = vmul.f32 %v4207, 1.442695
    %v4257 = vpow.pop %v4256
    %v4258 = vmul.f32 %v4208, 1.442695
    %v4259 = vpow.pop %v4258
    %v4260 = vmul.f32 %v4209, 1.442695
    %v4261 = vpow.pop %v4260
    %v4262 = vmul.f32 %v4210, 1.442695
    %v4263 = vpow.pop %v4262
    %v4264 = vmul.f32 %v4211, 1.442695
    %v4265 = vpow.pop %v4264
    %v4266 = vmul.f32 %v4212, 1.442695
    %v4267 = vpow.pop %v4266
    %v4268 = vmul.f32 %v4213, 1.442695
    %v4269 = vpow.pop %v4268
    %v4270 = vmul.f32 %v4214, 1.442695
    %v4271 = vpow.pop %v4270
    %v4272 = vmul.f32 %v4215, 1.442695
    %v4273 = vpow.pop %v4272
    %v4274 = vmul.f32 %v4216, 1.442695
    %v4275 = vpow.pop %v4274
    %v4276 = vmul.f32 %v4217, 1.442695
    %v4277 = vpow.pop %v4276
    %v4278 = vmul.f32 %v4218, 1.442695
    %v4279 = vpow.pop %v4278
    %v4280 = vmul.f32 %v4219, 1.442695
    %v4281 = vpow.pop %v4280
    %v4282 = vmul.f32 %v4220, 1.442695
    %v4283 = vpow.pop %v4282
    %v4284 = vmul.f32 %v4221, 1.442695
    %v4285 = vpow.pop %v4284
    %v4286 = vld [vmem:[#allocation3] sm:$0xff]
    %v4287 = vld [vmem:[#allocation3 + $0x8] sm:$0xff]
    %v4288 = vld [vmem:[#allocation3 + $0x10] sm:$0xff]
    %v4289 = vld [vmem:[#allocation3 + $0x18] sm:$0xff]
    %v4290 = vld [vmem:[#allocation3 + $0x20] sm:$0xff]
    %v4291 = vld [vmem:[#allocation3 + $0x28] sm:$0xff]
    %v4292 = vld [vmem:[#allocation3 + $0x30] sm:$0xff]
    %v4293 = vld [vmem:[#allocation3 + $0x38] sm:$0xff]
    %v4294 = vld [vmem:[#allocation3 + $0x40] sm:$0xff]
    %v4295 = vld [vmem:[#allocation3 + $0x48] sm:$0xff]
    %v4296 = vld [vmem:[#allocation3 + $0x50] sm:$0xff]
    %v4297 = vld [vmem:[#allocation3 + $0x58] sm:$0xff]
    %v4298 = vld [vmem:[#allocation3 + $0x60] sm:$0xff]
    %v4299 = vld [vmem:[#allocation3 + $0x68] sm:$0xff]
    %v4300 = vld [vmem:[#allocation3 + $0x70] sm:$0xff]
    %v4301 = vld [vmem:[#allocation3 + $0x78] sm:$0xff]
    %v4302 = vld [vmem:[#allocation3 + $0x80] sm:$0xff]
    %v4303 = vld [vmem:[#allocation3 + $0x88] sm:$0xff]
    %v4304 = vld [vmem:[#allocation3 + $0x90] sm:$0xff]
    %v4305 = vld [vmem:[#allocation3 + $0x98] sm:$0xff]
    %v4306 = vld [vmem:[#allocation3 + $0xa0] sm:$0xff]
    %v4307 = vld [vmem:[#allocation3 + $0xa8] sm:$0xff]
    %v4308 = vld [vmem:[#allocation3 + $0xb0] sm:$0xff]
    %v4309 = vld [vmem:[#allocation3 + $0xb8] sm:$0xff]
    %v4310 = vld [vmem:[#allocation3 + $0xc0] sm:$0xff]
    %v4311 = vld [vmem:[#allocation3 + $0xc8] sm:$0xff]
    %v4312 = vld [vmem:[#allocation3 + $0xd0] sm:$0xff]
    %v4313 = vld [vmem:[#allocation3 + $0xd8] sm:$0xff]
    %v4314 = vld [vmem:[#allocation3 + $0xe0] sm:$0xff]
    %v4315 = vld [vmem:[#allocation3 + $0xe8] sm:$0xff]
    %v4316 = vld [vmem:[#allocation3 + $0xf0] sm:$0xff]
    %v4317 = vld [vmem:[#allocation3 + $0xf8] sm:$0xff]
    %v4318 = vmul.f32 %v4223, %v4286
    %v4319 = vmul.f32 %v4225, %v4287
    %v4320 = vmul.f32 %v4227, %v4288
    %v4321 = vmul.f32 %v4229, %v4289
    %v4322 = vmul.f32 %v4231, %v4290
    %v4323 = vmul.f32 %v4233, %v4291
    %v4324 = vmul.f32 %v4235, %v4292
    %v4325 = vmul.f32 %v4237, %v4293
    %v4326 = vmul.f32 %v4239, %v4294
    %v4327 = vmul.f32 %v4241, %v4295
    %v4328 = vmul.f32 %v4243, %v4296
    %v4329 = vmul.f32 %v4245, %v4297
    %v4330 = vmul.f32 %v4247, %v4298
    %v4331 = vmul.f32 %v4249, %v4299
    %v4332 = vmul.f32 %v4251, %v4300
    %v4333 = vmul.f32 %v4253, %v4301
    %v4334 = vmul.f32 %v4255, %v4302
    %v4335 = vmul.f32 %v4257, %v4303
    %v4336 = vmul.f32 %v4259, %v4304
    %v4337 = vmul.f32 %v4261, %v4305
    %v4338 = vmul.f32 %v4263, %v4306
    %v4339 = vmul.f32 %v4265, %v4307
    %v4340 = vmul.f32 %v4267, %v4308
    %v4341 = vmul.f32 %v4269, %v4309
    %v4342 = vmul.f32 %v4271, %v4310
    %v4343 = vmul.f32 %v4273, %v4311
    %v4344 = vmul.f32 %v4275, %v4312
    %v4345 = vmul.f32 %v4277, %v4313
    %v4346 = vmul.f32 %v4279, %v4314
    %v4347 = vmul.f32 %v4281, %v4315
    %v4348 = vmul.f32 %v4283, %v4316
    %v4349 = vmul.f32 %v4285, %v4317
    %v4350 = vadd.f32 %v4318, %v4319
    %v4351 = vadd.f32 %v4350, %v4320
    %v4352 = vadd.f32 %v4351, %v4321
    %v4353 = vadd.f32 %v4352, %v4322
    %v4354 = vadd.f32 %v4353, %v4323
    %v4355 = vadd.f32 %v4354, %v4324
    %v4356 = vadd.f32 %v4355, %v4325
    %v4357 = vadd.f32 %v4356, %v4326
    %v4358 = vadd.f32 %v4357, %v4327
    %v4359 = vadd.f32 %v4358, %v4328
    %v4360 = vadd.f32 %v4359, %v4329
    %v4361 = vadd.f32 %v4360, %v4330
    %v4362 = vadd.f32 %v4361, %v4331
    %v4363 = vadd.f32 %v4362, %v4332
    %v4364 = vadd.f32 %v4363, %v4333
    %v4365 = vadd.f32 %v4364, %v4334
    %v4366 = vadd.f32 %v4365, %v4335
    %v4367 = vadd.f32 %v4366, %v4336
    %v4368 = vadd.f32 %v4367, %v4337
    %v4369 = vadd.f32 %v4368, %v4338
    %v4370 = vadd.f32 %v4369, %v4339
    %v4371 = vadd.f32 %v4370, %v4340
    %v4372 = vadd.f32 %v4371, %v4341
    %v4373 = vadd.f32 %v4372, %v4342
    %v4374 = vadd.f32 %v4373, %v4343
    %v4375 = vadd.f32 %v4374, %v4344
    %v4376 = vadd.f32 %v4375, %v4345
    %v4377 = vadd.f32 %v4376, %v4346
    %v4378 = vadd.f32 %v4377, %v4347
    %v4379 = vadd.f32 %v4378, %v4348
    %v4380 = vadd.f32 %v4379, %v4349
    %v4381 = vrot.slane %v4380, 4
    %v4382 = vadd.f32 %v4380, %v4381
    %v4383 = vrot.slane %v4382, 2
    %v4384 = vadd.f32 %v4382, %v4383
    %v4385 = vrot.slane %v4384, 1
    %v4386 = vadd.f32 %v4384, %v4385
    %v4387 = vmul.f32 %v4386, 7.9788456
    %v4388 = vrsqrt.pop %v4387
    %v4389 = vmul.f32 %v4387, %v4388
    %vm4390 = vcmp.eq.f32.partialorder %v4387, inf
    %v4391 = vsel %vm4390, %v4387, %v4389
    %vm4392 = vcmp.eq.f32.partialorder %v4387, 0.0
    %v4393 = vand.u32 %v4387, 2147483648
    %v4394 = vsel %vm4392, %v4393, %v4391
    %4395 = vst [vmem:[#allocation8 + $0xd] sm:$0x1] %v4394
    %v4396 = vld [vmem:[#allocation6] sm:$0xff]
    %v4397 = vld [vmem:[#allocation6 + $0x8] sm:$0xff]
    %v4398 = vld [vmem:[#allocation6 + $0x10] sm:$0xff]
    %v4399 = vld [vmem:[#allocation6 + $0x18] sm:$0xff]
    %v4400 = vld [vmem:[#allocation6 + $0x20] sm:$0xff]
    %v4401 = vld [vmem:[#allocation6 + $0x28] sm:$0xff]
    %v4402 = vld [vmem:[#allocation6 + $0x30] sm:$0xff]
    %v4403 = vld [vmem:[#allocation6 + $0x38] sm:$0xff]
    %v4404 = vld [vmem:[#allocation6 + $0x40] sm:$0xff]
    %v4405 = vld [vmem:[#allocation6 + $0x48] sm:$0xff]
    %v4406 = vld [vmem:[#allocation6 + $0x50] sm:$0xff]
    %v4407 = vld [vmem:[#allocation6 + $0x58] sm:$0xff]
    %v4408 = vld [vmem:[#allocation6 + $0x60] sm:$0xff]
    %v4409 = vld [vmem:[#allocation6 + $0x68] sm:$0xff]
    %v4410 = vld [vmem:[#allocation6 + $0x70] sm:$0xff]
    %v4411 = vld [vmem:[#allocation6 + $0x78] sm:$0xff]
    %v4412 = vld [vmem:[#allocation6 + $0x80] sm:$0xff]
    %v4413 = vld [vmem:[#allocation6 + $0x88] sm:$0xff]
    %v4414 = vld [vmem:[#allocation6 + $0x90] sm:$0xff]
    %v4415 = vld [vmem:[#allocation6 + $0x98] sm:$0xff]
    %v4416 = vld [vmem:[#allocation6 + $0xa0] sm:$0xff]
    %v4417 = vld [vmem:[#allocation6 + $0xa8] sm:$0xff]
    %v4418 = vld [vmem:[#allocation6 + $0xb0] sm:$0xff]
    %v4419 = vld [vmem:[#allocation6 + $0xb8] sm:$0xff]
    %v4420 = vld [vmem:[#allocation6 + $0xc0] sm:$0xff]
    %v4421 = vld [vmem:[#allocation6 + $0xc8] sm:$0xff]
    %v4422 = vld [vmem:[#allocation6 + $0xd0] sm:$0xff]
    %v4423 = vld [vmem:[#allocation6 + $0xd8] sm:$0xff]
    %v4424 = vld [vmem:[#allocation6 + $0xe0] sm:$0xff]
    %v4425 = vld [vmem:[#allocation6 + $0xe8] sm:$0xff]
    %v4426 = vld [vmem:[#allocation6 + $0xf0] sm:$0xff]
    %v4427 = vld [vmem:[#allocation6 + $0xf8] sm:$0xff]
    %v4428 = vsub.f32 %v4396, 3.7024024
    %v4429 = vsub.f32 %v4397, 3.7024024
    %v4430 = vsub.f32 %v4398, 3.7024024
    %v4431 = vsub.f32 %v4399, 3.7024024
    %v4432 = vsub.f32 %v4400, 3.7024024
    %v4433 = vsub.f32 %v4401, 3.7024024
    %v4434 = vsub.f32 %v4402, 3.7024024
    %v4435 = vsub.f32 %v4403, 3.7024024
    %v4436 = vsub.f32 %v4404, 3.7024024
    %v4437 = vsub.f32 %v4405, 3.7024024
    %v4438 = vsub.f32 %v4406, 3.7024024
    %v4439 = vsub.f32 %v4407, 3.7024024
    %v4440 = vsub.f32 %v4408, 3.7024024
    %v4441 = vsub.f32 %v4409, 3.7024024
    %v4442 = vsub.f32 %v4410, 3.7024024
    %v4443 = vsub.f32 %v4411, 3.7024024
    %v4444 = vsub.f32 %v4412, 3.7024024
    %v4445 = vsub.f32 %v4413, 3.7024024
    %v4446 = vsub.f32 %v4414, 3.7024024
    %v4447 = vsub.f32 %v4415, 3.7024024
    %v4448 = vsub.f32 %v4416, 3.7024024
    %v4449 = vsub.f32 %v4417, 3.7024024
    %v4450 = vsub.f32 %v4418, 3.7024024
    %v4451 = vsub.f32 %v4419, 3.7024024
    %v4452 = vsub.f32 %v4420, 3.7024024
    %v4453 = vsub.f32 %v4421, 3.7024024
    %v4454 = vsub.f32 %v4422, 3.7024024
    %v4455 = vsub.f32 %v4423, 3.7024024
    %v4456 = vsub.f32 %v4424, 3.7024024
    %v4457 = vsub.f32 %v4425, 3.7024024
    %v4458 = vsub.f32 %v4426, 3.7024024
    %v4459 = vsub.f32 %v4427, 3.7024024
    %v4460 = vmul.f32 %v4428, %v4428
    %v4461 = vmul.f32 %v4429, %v4429
    %v4462 = vmul.f32 %v4430, %v4430
    %v4463 = vmul.f32 %v4431, %v4431
    %v4464 = vmul.f32 %v4432, %v4432
    %v4465 = vmul.f32 %v4433, %v4433
    %v4466 = vmul.f32 %v4434, %v4434
    %v4467 = vmul.f32 %v4435, %v4435
    %v4468 = vmul.f32 %v4436, %v4436
    %v4469 = vmul.f32 %v4437, %v4437
    %v4470 = vmul.f32 %v4438, %v4438
    %v4471 = vmul.f32 %v4439, %v4439
    %v4472 = vmul.f32 %v4440, %v4440
    %v4473 = vmul.f32 %v4441, %v4441
    %v4474 = vmul.f32 %v4442, %v4442
    %v4475 = vmul.f32 %v4443, %v4443
    %v4476 = vmul.f32 %v4444, %v4444
    %v4477 = vmul.f32 %v4445, %v4445
    %v4478 = vmul.f32 %v4446, %v4446
    %v4479 = vmul.f32 %v4447, %v4447
    %v4480 = vmul.f32 %v4448, %v4448
    %v4481 = vmul.f32 %v4449, %v4449
    %v4482 = vmul.f32 %v4450, %v4450
    %v4483 = vmul.f32 %v4451, %v4451
    %v4484 = vmul.f32 %v4452, %v4452
    %v4485 = vmul.f32 %v4453, %v4453
    %v4486 = vmul.f32 %v4454, %v4454
    %v4487 = vmul.f32 %v4455, %v4455
    %v4488 = vmul.f32 %v4456, %v4456
    %v4489 = vmul.f32 %v4457, %v4457
    %v4490 = vmul.f32 %v4458, %v4458
    %v4491 = vmul.f32 %v4459, %v4459
    %v4492 = vsub.f32 0.0, %v4460
    %v4493 = vsub.f32 0.0, %v4461
    %v4494 = vsub.f32 0.0, %v4462
    %v4495 = vsub.f32 0.0, %v4463
    %v4496 = vsub.f32 0.0, %v4464
    %v4497 = vsub.f32 0.0, %v4465
    %v4498 = vsub.f32 0.0, %v4466
    %v4499 = vsub.f32 0.0, %v4467
    %v4500 = vsub.f32 0.0, %v4468
    %v4501 = vsub.f32 0.0, %v4469
    %v4502 = vsub.f32 0.0, %v4470
    %v4503 = vsub.f32 0.0, %v4471
    %v4504 = vsub.f32 0.0, %v4472
    %v4505 = vsub.f32 0.0, %v4473
    %v4506 = vsub.f32 0.0, %v4474
    %v4507 = vsub.f32 0.0, %v4475
    %v4508 = vsub.f32 0.0, %v4476
    %v4509 = vsub.f32 0.0, %v4477
    %v4510 = vsub.f32 0.0, %v4478
    %v4511 = vsub.f32 0.0, %v4479
    %v4512 = vsub.f32 0.0, %v4480
    %v4513 = vsub.f32 0.0, %v4481
    %v4514 = vsub.f32 0.0, %v4482
    %v4515 = vsub.f32 0.0, %v4483
    %v4516 = vsub.f32 0.0, %v4484
    %v4517 = vsub.f32 0.0, %v4485
    %v4518 = vsub.f32 0.0, %v4486
    %v4519 = vsub.f32 0.0, %v4487
    %v4520 = vsub.f32 0.0, %v4488
    %v4521 = vsub.f32 0.0, %v4489
    %v4522 = vsub.f32 0.0, %v4490
    %v4523 = vsub.f32 0.0, %v4491
    %v4524 = vmul.f32 %v4492, 1.442695
    %v4525 = vpow.pop %v4524
    %v4526 = vmul.f32 %v4493, 1.442695
    %v4527 = vpow.pop %v4526
    %v4528 = vmul.f32 %v4494, 1.442695
    %v4529 = vpow.pop %v4528
    %v4530 = vmul.f32 %v4495, 1.442695
    %v4531 = vpow.pop %v4530
    %v4532 = vmul.f32 %v4496, 1.442695
    %v4533 = vpow.pop %v4532
    %v4534 = vmul.f32 %v4497, 1.442695
    %v4535 = vpow.pop %v4534
    %v4536 = vmul.f32 %v4498, 1.442695
    %v4537 = vpow.pop %v4536
    %v4538 = vmul.f32 %v4499, 1.442695
    %v4539 = vpow.pop %v4538
    %v4540 = vmul.f32 %v4500, 1.442695
    %v4541 = vpow.pop %v4540
    %v4542 = vmul.f32 %v4501, 1.442695
    %v4543 = vpow.pop %v4542
    %v4544 = vmul.f32 %v4502, 1.442695
    %v4545 = vpow.pop %v4544
    %v4546 = vmul.f32 %v4503, 1.442695
    %v4547 = vpow.pop %v4546
    %v4548 = vmul.f32 %v4504, 1.442695
    %v4549 = vpow.pop %v4548
    %v4550 = vmul.f32 %v4505, 1.442695
    %v4551 = vpow.pop %v4550
    %v4552 = vmul.f32 %v4506, 1.442695
    %v4553 = vpow.pop %v4552
    %v4554 = vmul.f32 %v4507, 1.442695
    %v4555 = vpow.pop %v4554
    %v4556 = vmul.f32 %v4508, 1.442695
    %v4557 = vpow.pop %v4556
    %v4558 = vmul.f32 %v4509, 1.442695
    %v4559 = vpow.pop %v4558
    %v4560 = vmul.f32 %v4510, 1.442695
    %v4561 = vpow.pop %v4560
    %v4562 = vmul.f32 %v4511, 1.442695
    %v4563 = vpow.pop %v4562
    %v4564 = vmul.f32 %v4512, 1.442695
    %v4565 = vpow.pop %v4564
    %v4566 = vmul.f32 %v4513, 1.442695
    %v4567 = vpow.pop %v4566
    %v4568 = vmul.f32 %v4514, 1.442695
    %v4569 = vpow.pop %v4568
    %v4570 = vmul.f32 %v4515, 1.442695
    %v4571 = vpow.pop %v4570
    %v4572 = vmul.f32 %v4516, 1.442695
    %v4573 = vpow.pop %v4572
    %v4574 = vmul.f32 %v4517, 1.442695
    %v4575 = vpow.pop %v4574
    %v4576 = vmul.f32 %v4518, 1.442695
    %v4577 = vpow.pop %v4576
    %v4578 = vmul.f32 %v4519, 1.442695
    %v4579 = vpow.pop %v4578
    %v4580 = vmul.f32 %v4520, 1.442695
    %v4581 = vpow.pop %v4580
    %v4582 = vmul.f32 %v4521, 1.442695
    %v4583 = vpow.pop %v4582
    %v4584 = vmul.f32 %v4522, 1.442695
    %v4585 = vpow.pop %v4584
    %v4586 = vmul.f32 %v4523, 1.442695
    %v4587 = vpow.pop %v4586
    %v4588 = vld [vmem:[#allocation3] sm:$0xff]
    %v4589 = vld [vmem:[#allocation3 + $0x8] sm:$0xff]
    %v4590 = vld [vmem:[#allocation3 + $0x10] sm:$0xff]
    %v4591 = vld [vmem:[#allocation3 + $0x18] sm:$0xff]
    %v4592 = vld [vmem:[#allocation3 + $0x20] sm:$0xff]
    %v4593 = vld [vmem:[#allocation3 + $0x28] sm:$0xff]
    %v4594 = vld [vmem:[#allocation3 + $0x30] sm:$0xff]
    %v4595 = vld [vmem:[#allocation3 + $0x38] sm:$0xff]
    %v4596 = vld [vmem:[#allocation3 + $0x40] sm:$0xff]
    %v4597 = vld [vmem:[#allocation3 + $0x48] sm:$0xff]
    %v4598 = vld [vmem:[#allocation3 + $0x50] sm:$0xff]
    %v4599 = vld [vmem:[#allocation3 + $0x58] sm:$0xff]
    %v4600 = vld [vmem:[#allocation3 + $0x60] sm:$0xff]
    %v4601 = vld [vmem:[#allocation3 + $0x68] sm:$0xff]
    %v4602 = vld [vmem:[#allocation3 + $0x70] sm:$0xff]
    %v4603 = vld [vmem:[#allocation3 + $0x78] sm:$0xff]
    %v4604 = vld [vmem:[#allocation3 + $0x80] sm:$0xff]
    %v4605 = vld [vmem:[#allocation3 + $0x88] sm:$0xff]
    %v4606 = vld [vmem:[#allocation3 + $0x90] sm:$0xff]
    %v4607 = vld [vmem:[#allocation3 + $0x98] sm:$0xff]
    %v4608 = vld [vmem:[#allocation3 + $0xa0] sm:$0xff]
    %v4609 = vld [vmem:[#allocation3 + $0xa8] sm:$0xff]
    %v4610 = vld [vmem:[#allocation3 + $0xb0] sm:$0xff]
    %v4611 = vld [vmem:[#allocation3 + $0xb8] sm:$0xff]
    %v4612 = vld [vmem:[#allocation3 + $0xc0] sm:$0xff]
    %v4613 = vld [vmem:[#allocation3 + $0xc8] sm:$0xff]
    %v4614 = vld [vmem:[#allocation3 + $0xd0] sm:$0xff]
    %v4615 = vld [vmem:[#allocation3 + $0xd8] sm:$0xff]
    %v4616 = vld [vmem:[#allocation3 + $0xe0] sm:$0xff]
    %v4617 = vld [vmem:[#allocation3 + $0xe8] sm:$0xff]
    %v4618 = vld [vmem:[#allocation3 + $0xf0] sm:$0xff]
    %v4619 = vld [vmem:[#allocation3 + $0xf8] sm:$0xff]
    %v4620 = vmul.f32 %v4525, %v4588
    %v4621 = vmul.f32 %v4527, %v4589
    %v4622 = vmul.f32 %v4529, %v4590
    %v4623 = vmul.f32 %v4531, %v4591
    %v4624 = vmul.f32 %v4533, %v4592
    %v4625 = vmul.f32 %v4535, %v4593
    %v4626 = vmul.f32 %v4537, %v4594
    %v4627 = vmul.f32 %v4539, %v4595
    %v4628 = vmul.f32 %v4541, %v4596
    %v4629 = vmul.f32 %v4543, %v4597
    %v4630 = vmul.f32 %v4545, %v4598
    %v4631 = vmul.f32 %v4547, %v4599
    %v4632 = vmul.f32 %v4549, %v4600
    %v4633 = vmul.f32 %v4551, %v4601
    %v4634 = vmul.f32 %v4553, %v4602
    %v4635 = vmul.f32 %v4555, %v4603
    %v4636 = vmul.f32 %v4557, %v4604
    %v4637 = vmul.f32 %v4559, %v4605
    %v4638 = vmul.f32 %v4561, %v4606
    %v4639 = vmul.f32 %v4563, %v4607
    %v4640 = vmul.f32 %v4565, %v4608
    %v4641 = vmul.f32 %v4567, %v4609
    %v4642 = vmul.f32 %v4569, %v4610
    %v4643 = vmul.f32 %v4571, %v4611
    %v4644 = vmul.f32 %v4573, %v4612
    %v4645 = vmul.f32 %v4575, %v4613
    %v4646 = vmul.f32 %v4577, %v4614
    %v4647 = vmul.f32 %v4579, %v4615
    %v4648 = vmul.f32 %v4581, %v4616
    %v4649 = vmul.f32 %v4583, %v4617
    %v4650 = vmul.f32 %v4585, %v4618
    %v4651 = vmul.f32 %v4587, %v4619
    %v4652 = vadd.f32 %v4620, %v4621
    %v4653 = vadd.f32 %v4652, %v4622
    %v4654 = vadd.f32 %v4653, %v4623
    %v4655 = vadd.f32 %v4654, %v4624
    %v4656 = vadd.f32 %v4655, %v4625
    %v4657 = vadd.f32 %v4656, %v4626
    %v4658 = vadd.f32 %v4657, %v4627
    %v4659 = vadd.f32 %v4658, %v4628
    %v4660 = vadd.f32 %v4659, %v4629
    %v4661 = vadd.f32 %v4660, %v4630
    %v4662 = vadd.f32 %v4661, %v4631
    %v4663 = vadd.f32 %v4662, %v4632
    %v4664 = vadd.f32 %v4663, %v4633
    %v4665 = vadd.f32 %v4664, %v4634
    %v4666 = vadd.f32 %v4665, %v4635
    %v4667 = vadd.f32 %v4666, %v4636
    %v4668 = vadd.f32 %v4667, %v4637
    %v4669 = vadd.f32 %v4668, %v4638
    %v4670 = vadd.f32 %v4669, %v4639
    %v4671 = vadd.f32 %v4670, %v4640
    %v4672 = vadd.f32 %v4671, %v4641
    %v4673 = vadd.f32 %v4672, %v4642
    %v4674 = vadd.f32 %v4673, %v4643
    %v4675 = vadd.f32 %v4674, %v4644
    %v4676 = vadd.f32 %v4675, %v4645
    %v4677 = vadd.f32 %v4676, %v4646
    %v4678 = vadd.f32 %v4677, %v4647
    %v4679 = vadd.f32 %v4678, %v4648
    %v4680 = vadd.f32 %v4679, %v4649
    %v4681 = vadd.f32 %v4680, %v4650
    %v4682 = vadd.f32 %v4681, %v4651
    %v4683 = vrot.slane %v4682, 4
    %v4684 = vadd.f32 %v4682, %v4683
    %v4685 = vrot.slane %v4684, 2
    %v4686 = vadd.f32 %v4684, %v4685
    %v4687 = vrot.slane %v4686, 1
    %v4688 = vadd.f32 %v4686, %v4687
    %v4689 = vmul.f32 %v4688, 7.9788456
    %v4690 = vrsqrt.pop %v4689
    %v4691 = vmul.f32 %v4689, %v4690
    %vm4692 = vcmp.eq.f32.partialorder %v4689, inf
    %v4693 = vsel %vm4692, %v4689, %v4691
    %vm4694 = vcmp.eq.f32.partialorder %v4689, 0.0
    %v4695 = vand.u32 %v4689, 2147483648
    %v4696 = vsel %vm4694, %v4695, %v4693
    %4697 = vst [vmem:[#allocation8 + $0xe] sm:$0x1] %v4696
    %v4698 = vld [vmem:[#allocation6] sm:$0xff]
    %v4699 = vld [vmem:[#allocation6 + $0x8] sm:$0xff]
    %v4700 = vld [vmem:[#allocation6 + $0x10] sm:$0xff]
    %v4701 = vld [vmem:[#allocation6 + $0x18] sm:$0xff]
    %v4702 = vld [vmem:[#allocation6 + $0x20] sm:$0xff]
    %v4703 = vld [vmem:[#allocation6 + $0x28] sm:$0xff]
    %v4704 = vld [vmem:[#allocation6 + $0x30] sm:$0xff]
    %v4705 = vld [vmem:[#allocation6 + $0x38] sm:$0xff]
    %v4706 = vld [vmem:[#allocation6 + $0x40] sm:$0xff]
    %v4707 = vld [vmem:[#allocation6 + $0x48] sm:$0xff]
    %v4708 = vld [vmem:[#allocation6 + $0x50] sm:$0xff]
    %v4709 = vld [vmem:[#allocation6 + $0x58] sm:$0xff]
    %v4710 = vld [vmem:[#allocation6 + $0x60] sm:$0xff]
    %v4711 = vld [vmem:[#allocation6 + $0x68] sm:$0xff]
    %v4712 = vld [vmem:[#allocation6 + $0x70] sm:$0xff]
    %v4713 = vld [vmem:[#allocation6 + $0x78] sm:$0xff]
    %v4714 = vld [vmem:[#allocation6 + $0x80] sm:$0xff]
    %v4715 = vld [vmem:[#allocation6 + $0x88] sm:$0xff]
    %v4716 = vld [vmem:[#allocation6 + $0x90] sm:$0xff]
    %v4717 = vld [vmem:[#allocation6 + $0x98] sm:$0xff]
    %v4718 = vld [vmem:[#allocation6 + $0xa0] sm:$0xff]
    %v4719 = vld [vmem:[#allocation6 + $0xa8] sm:$0xff]
    %v4720 = vld [vmem:[#allocation6 + $0xb0] sm:$0xff]
    %v4721 = vld [vmem:[#allocation6 + $0xb8] sm:$0xff]
    %v4722 = vld [vmem:[#allocation6 + $0xc0] sm:$0xff]
    %v4723 = vld [vmem:[#allocation6 + $0xc8] sm:$0xff]
    %v4724 = vld [vmem:[#allocation6 + $0xd0] sm:$0xff]
    %v4725 = vld [vmem:[#allocation6 + $0xd8] sm:$0xff]
    %v4726 = vld [vmem:[#allocation6 + $0xe0] sm:$0xff]
    %v4727 = vld [vmem:[#allocation6 + $0xe8] sm:$0xff]
    %v4728 = vld [vmem:[#allocation6 + $0xf0] sm:$0xff]
    %v4729 = vld [vmem:[#allocation6 + $0xf8] sm:$0xff]
    %v4730 = vsub.f32 %v4698, 5.5536036
    %v4731 = vsub.f32 %v4699, 5.5536036
    %v4732 = vsub.f32 %v4700, 5.5536036
    %v4733 = vsub.f32 %v4701, 5.5536036
    %v4734 = vsub.f32 %v4702, 5.5536036
    %v4735 = vsub.f32 %v4703, 5.5536036
    %v4736 = vsub.f32 %v4704, 5.5536036
    %v4737 = vsub.f32 %v4705, 5.5536036
    %v4738 = vsub.f32 %v4706, 5.5536036
    %v4739 = vsub.f32 %v4707, 5.5536036
    %v4740 = vsub.f32 %v4708, 5.5536036
    %v4741 = vsub.f32 %v4709, 5.5536036
    %v4742 = vsub.f32 %v4710, 5.5536036
    %v4743 = vsub.f32 %v4711, 5.5536036
    %v4744 = vsub.f32 %v4712, 5.5536036
    %v4745 = vsub.f32 %v4713, 5.5536036
    %v4746 = vsub.f32 %v4714, 5.5536036
    %v4747 = vsub.f32 %v4715, 5.5536036
    %v4748 = vsub.f32 %v4716, 5.5536036
    %v4749 = vsub.f32 %v4717, 5.5536036
    %v4750 = vsub.f32 %v4718, 5.5536036
    %v4751 = vsub.f32 %v4719, 5.5536036
    %v4752 = vsub.f32 %v4720, 5.5536036
    %v4753 = vsub.f32 %v4721, 5.5536036
    %v4754 = vsub.f32 %v4722, 5.5536036
    %v4755 = vsub.f32 %v4723, 5.5536036
    %v4756 = vsub.f32 %v4724, 5.5536036
    %v4757 = vsub.f32 %v4725, 5.5536036
    %v4758 = vsub.f32 %v4726, 5.5536036
    %v4759 = vsub.f32 %v4727, 5.5536036
    %v4760 = vsub.f32 %v4728, 5.5536036
    %v4761 = vsub.f32 %v4729, 5.5536036
    %v4762 = vmul.f32 %v4730, %v4730
    %v4763 = vmul.f32 %v4731, %v4731
    %v4764 = vmul.f32 %v4732, %v4732
    %v4765 = vmul.f32 %v4733, %v4733
    %v4766 = vmul.f32 %v4734, %v4734
    %v4767 = vmul.f32 %v4735, %v4735
    %v4768 = vmul.f32 %v4736, %v4736
    %v4769 = vmul.f32 %v4737, %v4737
    %v4770 = vmul.f32 %v4738, %v4738
    %v4771 = vmul.f32 %v4739, %v4739
    %v4772 = vmul.f32 %v4740, %v4740
    %v4773 = vmul.f32 %v4741, %v4741
    %v4774 = vmul.f32 %v4742, %v4742
    %v4775 = vmul.f32 %v4743, %v4743
    %v4776 = vmul.f32 %v4744, %v4744
    %v4777 = vmul.f32 %v4745, %v4745
    %v4778 = vmul.f32 %v4746, %v4746
    %v4779 = vmul.f32 %v4747, %v4747
    %v4780 = vmul.f32 %v4748, %v4748
    %v4781 = vmul.f32 %v4749, %v4749
    %v4782 = vmul.f32 %v4750, %v4750
    %v4783 = vmul.f32 %v4751, %v4751
    %v4784 = vmul.f32 %v4752, %v4752
    %v4785 = vmul.f32 %v4753, %v4753
    %v4786 = vmul.f32 %v4754, %v4754
    %v4787 = vmul.f32 %v4755, %v4755
    %v4788 = vmul.f32 %v4756, %v4756
    %v4789 = vmul.f32 %v4757, %v4757
    %v4790 = vmul.f32 %v4758, %v4758
    %v4791 = vmul.f32 %v4759, %v4759
    %v4792 = vmul.f32 %v4760, %v4760
    %v4793 = vmul.f32 %v4761, %v4761
    %v4794 = vsub.f32 0.0, %v4762
    %v4795 = vsub.f32 0.0, %v4763
    %v4796 = vsub.f32 0.0, %v4764
    %v4797 = vsub.f32 0.0, %v4765
    %v4798 = vsub.f32 0.0, %v4766
    %v4799 = vsub.f32 0.0, %v4767
    %v4800 = vsub.f32 0.0, %v4768
    %v4801 = vsub.f32 0.0, %v4769
    %v4802 = vsub.f32 0.0, %v4770
    %v4803 = vsub.f32 0.0, %v4771
    %v4804 = vsub.f32 0.0, %v4772
    %v4805 = vsub.f32 0.0, %v4773
    %v4806 = vsub.f32 0.0, %v4774
    %v4807 = vsub.f32 0.0, %v4775
    %v4808 = vsub.f32 0.0, %v4776
    %v4809 = vsub.f32 0.0, %v4777
    %v4810 = vsub.f32 0.0, %v4778
    %v4811 = vsub.f32 0.0, %v4779
    %v4812 = vsub.f32 0.0, %v4780
    %v4813 = vsub.f32 0.0, %v4781
    %v4814 = vsub.f32 0.0, %v4782
    %v4815 = vsub.f32 0.0, %v4783
    %v4816 = vsub.f32 0.0, %v4784
    %v4817 = vsub.f32 0.0, %v4785
    %v4818 = vsub.f32 0.0, %v4786
    %v4819 = vsub.f32 0.0, %v4787
    %v4820 = vsub.f32 0.0, %v4788
    %v4821 = vsub.f32 0.0, %v4789
    %v4822 = vsub.f32 0.0, %v4790
    %v4823 = vsub.f32 0.0, %v4791
    %v4824 = vsub.f32 0.0, %v4792
    %v4825 = vsub.f32 0.0, %v4793
    %v4826 = vmul.f32 %v4794, 1.442695
    %v4827 = vpow.pop %v4826
    %v4828 = vmul.f32 %v4795, 1.442695
    %v4829 = vpow.pop %v4828
    %v4830 = vmul.f32 %v4796, 1.442695
    %v4831 = vpow.pop %v4830
    %v4832 = vmul.f32 %v4797, 1.442695
    %v4833 = vpow.pop %v4832
    %v4834 = vmul.f32 %v4798, 1.442695
    %v4835 = vpow.pop %v4834
    %v4836 = vmul.f32 %v4799, 1.442695
    %v4837 = vpow.pop %v4836
    %v4838 = vmul.f32 %v4800, 1.442695
    %v4839 = vpow.pop %v4838
    %v4840 = vmul.f32 %v4801, 1.442695
    %v4841 = vpow.pop %v4840
    %v4842 = vmul.f32 %v4802, 1.442695
    %v4843 = vpow.pop %v4842
    %v4844 = vmul.f32 %v4803, 1.442695
    %v4845 = vpow.pop %v4844
    %v4846 = vmul.f32 %v4804, 1.442695
    %v4847 = vpow.pop %v4846
    %v4848 = vmul.f32 %v4805, 1.442695
    %v4849 = vpow.pop %v4848
    %v4850 = vmul.f32 %v4806, 1.442695
    %v4851 = vpow.pop %v4850
    %v4852 = vmul.f32 %v4807, 1.442695
    %v4853 = vpow.pop %v4852
    %v4854 = vmul.f32 %v4808, 1.442695
    %v4855 = vpow.pop %v4854
    %v4856 = vmul.f32 %v4809, 1.442695
    %v4857 = vpow.pop %v4856
    %v4858 = vmul.f32 %v4810, 1.442695
    %v4859 = vpow.pop %v4858
    %v4860 = vmul.f32 %v4811, 1.442695
    %v4861 = vpow.pop %v4860
    %v4862 = vmul.f32 %v4812, 1.442695
    %v4863 = vpow.pop %v4862
    %v4864 = vmul.f32 %v4813, 1.442695
    %v4865 = vpow.pop %v4864
    %v4866 = vmul.f32 %v4814, 1.442695
    %v4867 = vpow.pop %v4866
    %v4868 = vmul.f32 %v4815, 1.442695
    %v4869 = vpow.pop %v4868
    %v4870 = vmul.f32 %v4816, 1.442695
    %v4871 = vpow.pop %v4870
    %v4872 = vmul.f32 %v4817, 1.442695
    %v4873 = vpow.pop %v4872
    %v4874 = vmul.f32 %v4818, 1.442695
    %v4875 = vpow.pop %v4874
    %v4876 = vmul.f32 %v4819, 1.442695
    %v4877 = vpow.pop %v4876
    %v4878 = vmul.f32 %v4820, 1.442695
    %v4879 = vpow.pop %v4878
    %v4880 = vmul.f32 %v4821, 1.442695
    %v4881 = vpow.pop %v4880
    %v4882 = vmul.f32 %v4822, 1.442695
    %v4883 = vpow.pop %v4882
    %v4884 = vmul.f32 %v4823, 1.442695
    %v4885 = vpow.pop %v4884
    %v4886 = vmul.f32 %v4824, 1.442695
    %v4887 = vpow.pop %v4886
    %v4888 = vmul.f32 %v4825, 1.442695
    %v4889 = vpow.pop %v4888
    %v4890 = vld [vmem:[#allocation3] sm:$0xff]
    %v4891 = vld [vmem:[#allocation3 + $0x8] sm:$0xff]
    %v4892 = vld [vmem:[#allocation3 + $0x10] sm:$0xff]
    %v4893 = vld [vmem:[#allocation3 + $0x18] sm:$0xff]
    %v4894 = vld [vmem:[#allocation3 + $0x20] sm:$0xff]
    %v4895 = vld [vmem:[#allocation3 + $0x28] sm:$0xff]
    %v4896 = vld [vmem:[#allocation3 + $0x30] sm:$0xff]
    %v4897 = vld [vmem:[#allocation3 + $0x38] sm:$0xff]
    %v4898 = vld [vmem:[#allocation3 + $0x40] sm:$0xff]
    %v4899 = vld [vmem:[#allocation3 + $0x48] sm:$0xff]
    %v4900 = vld [vmem:[#allocation3 + $0x50] sm:$0xff]
    %v4901 = vld [vmem:[#allocation3 + $0x58] sm:$0xff]
    %v4902 = vld [vmem:[#allocation3 + $0x60] sm:$0xff]
    %v4903 = vld [vmem:[#allocation3 + $0x68] sm:$0xff]
    %v4904 = vld [vmem:[#allocation3 + $0x70] sm:$0xff]
    %v4905 = vld [vmem:[#allocation3 + $0x78] sm:$0xff]
    %v4906 = vld [vmem:[#allocation3 + $0x80] sm:$0xff]
    %v4907 = vld [vmem:[#allocation3 + $0x88] sm:$0xff]
    %v4908 = vld [vmem:[#allocation3 + $0x90] sm:$0xff]
    %v4909 = vld [vmem:[#allocation3 + $0x98] sm:$0xff]
    %v4910 = vld [vmem:[#allocation3 + $0xa0] sm:$0xff]
    %v4911 = vld [vmem:[#allocation3 + $0xa8] sm:$0xff]
    %v4912 = vld [vmem:[#allocation3 + $0xb0] sm:$0xff]
    %v4913 = vld [vmem:[#allocation3 + $0xb8] sm:$0xff]
    %v4914 = vld [vmem:[#allocation3 + $0xc0] sm:$0xff]
    %v4915 = vld [vmem:[#allocation3 + $0xc8] sm:$0xff]
    %v4916 = vld [vmem:[#allocation3 + $0xd0] sm:$0xff]
    %v4917 = vld [vmem:[#allocation3 + $0xd8] sm:$0xff]
    %v4918 = vld [vmem:[#allocation3 + $0xe0] sm:$0xff]
    %v4919 = vld [vmem:[#allocation3 + $0xe8] sm:$0xff]
    %v4920 = vld [vmem:[#allocation3 + $0xf0] sm:$0xff]
    %v4921 = vld [vmem:[#allocation3 + $0xf8] sm:$0xff]
    %v4922 = vmul.f32 %v4827, %v4890
    %v4923 = vmul.f32 %v4829, %v4891
    %v4924 = vmul.f32 %v4831, %v4892
    %v4925 = vmul.f32 %v4833, %v4893
    %v4926 = vmul.f32 %v4835, %v4894
    %v4927 = vmul.f32 %v4837, %v4895
    %v4928 = vmul.f32 %v4839, %v4896
    %v4929 = vmul.f32 %v4841, %v4897
    %v4930 = vmul.f32 %v4843, %v4898
    %v4931 = vmul.f32 %v4845, %v4899
    %v4932 = vmul.f32 %v4847, %v4900
    %v4933 = vmul.f32 %v4849, %v4901
    %v4934 = vmul.f32 %v4851, %v4902
    %v4935 = vmul.f32 %v4853, %v4903
    %v4936 = vmul.f32 %v4855, %v4904
    %v4937 = vmul.f32 %v4857, %v4905
    %v4938 = vmul.f32 %v4859, %v4906
    %v4939 = vmul.f32 %v4861, %v4907
    %v4940 = vmul.f32 %v4863, %v4908
    %v4941 = vmul.f32 %v4865, %v4909
    %v4942 = vmul.f32 %v4867, %v4910
    %v4943 = vmul.f32 %v4869, %v4911
    %v4944 = vmul.f32 %v4871, %v4912
    %v4945 = vmul.f32 %v4873, %v4913
    %v4946 = vmul.f32 %v4875, %v4914
    %v4947 = vmul.f32 %v4877, %v4915
    %v4948 = vmul.f32 %v4879, %v4916
    %v4949 = vmul.f32 %v4881, %v4917
    %v4950 = vmul.f32 %v4883, %v4918
    %v4951 = vmul.f32 %v4885, %v4919
    %v4952 = vmul.f32 %v4887, %v4920
    %v4953 = vmul.f32 %v4889, %v4921
    %v4954 = vadd.f32 %v4922, %v4923
    %v4955 = vadd.f32 %v4954, %v4924
    %v4956 = vadd.f32 %v4955, %v4925
    %v4957 = vadd.f32 %v4956, %v4926
    %v4958 = vadd.f32 %v4957, %v4927
    %v4959 = vadd.f32 %v4958, %v4928
    %v4960 = vadd.f32 %v4959, %v4929
    %v4961 = vadd.f32 %v4960, %v4930
    %v4962 = vadd.f32 %v4961, %v4931
    %v4963 = vadd.f32 %v4962, %v4932
    %v4964 = vadd.f32 %v4963, %v4933
    %v4965 = vadd.f32 %v4964, %v4934
    %v4966 = vadd.f32 %v4965, %v4935
    %v4967 = vadd.f32 %v4966, %v4936
    %v4968 = vadd.f32 %v4967, %v4937
    %v4969 = vadd.f32 %v4968, %v4938
    %v4970 = vadd.f32 %v4969, %v4939
    %v4971 = vadd.f32 %v4970, %v4940
    %v4972 = vadd.f32 %v4971, %v4941
    %v4973 = vadd.f32 %v4972, %v4942
    %v4974 = vadd.f32 %v4973, %v4943
    %v4975 = vadd.f32 %v4974, %v4944
    %v4976 = vadd.f32 %v4975, %v4945
    %v4977 = vadd.f32 %v4976, %v4946
    %v4978 = vadd.f32 %v4977, %v4947
    %v4979 = vadd.f32 %v4978, %v4948
    %v4980 = vadd.f32 %v4979, %v4949
    %v4981 = vadd.f32 %v4980, %v4950
    %v4982 = vadd.f32 %v4981, %v4951
    %v4983 = vadd.f32 %v4982, %v4952
    %v4984 = vadd.f32 %v4983, %v4953
    %v4985 = vrot.slane %v4984, 4
    %v4986 = vadd.f32 %v4984, %v4985
    %v4987 = vrot.slane %v4986, 2
    %v4988 = vadd.f32 %v4986, %v4987
    %v4989 = vrot.slane %v4988, 1
    %v4990 = vadd.f32 %v4988, %v4989
    %v4991 = vmul.f32 %v4990, 7.9788456
    %v4992 = vrsqrt.pop %v4991
    %v4993 = vmul.f32 %v4991, %v4992
    %vm4994 = vcmp.eq.f32.partialorder %v4991, inf
    %v4995 = vsel %vm4994, %v4991, %v4993
    %vm4996 = vcmp.eq.f32.partialorder %v4991, 0.0
    %v4997 = vand.u32 %v4991, 2147483648
    %v4998 = vsel %vm4996, %v4997, %v4995
    %4999 = vst [vmem:[#allocation8 + $0xf] sm:$0x1] %v4998
    %v5000 = vld [vmem:[#allocation6] sm:$0xff]
    %v5001 = vld [vmem:[#allocation6 + $0x8] sm:$0xff]
    %v5002 = vld [vmem:[#allocation6 + $0x10] sm:$0xff]
    %v5003 = vld [vmem:[#allocation6 + $0x18] sm:$0xff]
    %v5004 = vld [vmem:[#allocation6 + $0x20] sm:$0xff]
    %v5005 = vld [vmem:[#allocation6 + $0x28] sm:$0xff]
    %v5006 = vld [vmem:[#allocation6 + $0x30] sm:$0xff]
    %v5007 = vld [vmem:[#allocation6 + $0x38] sm:$0xff]
    %v5008 = vld [vmem:[#allocation6 + $0x40] sm:$0xff]
    %v5009 = vld [vmem:[#allocation6 + $0x48] sm:$0xff]
    %v5010 = vld [vmem:[#allocation6 + $0x50] sm:$0xff]
    %v5011 = vld [vmem:[#allocation6 + $0x58] sm:$0xff]
    %v5012 = vld [vmem:[#allocation6 + $0x60] sm:$0xff]
    %v5013 = vld [vmem:[#allocation6 + $0x68] sm:$0xff]
    %v5014 = vld [vmem:[#allocation6 + $0x70] sm:$0xff]
    %v5015 = vld [vmem:[#allocation6 + $0x78] sm:$0xff]
    %v5016 = vld [vmem:[#allocation6 + $0x80] sm:$0xff]
    %v5017 = vld [vmem:[#allocation6 + $0x88] sm:$0xff]
    %v5018 = vld [vmem:[#allocation6 + $0x90] sm:$0xff]
    %v5019 = vld [vmem:[#allocation6 + $0x98] sm:$0xff]
    %v5020 = vld [vmem:[#allocation6 + $0xa0] sm:$0xff]
    %v5021 = vld [vmem:[#allocation6 + $0xa8] sm:$0xff]
    %v5022 = vld [vmem:[#allocation6 + $0xb0] sm:$0xff]
    %v5023 = vld [vmem:[#allocation6 + $0xb8] sm:$0xff]
    %v5024 = vld [vmem:[#allocation6 + $0xc0] sm:$0xff]
    %v5025 = vld [vmem:[#allocation6 + $0xc8] sm:$0xff]
    %v5026 = vld [vmem:[#allocation6 + $0xd0] sm:$0xff]
    %v5027 = vld [vmem:[#allocation6 + $0xd8] sm:$0xff]
    %v5028 = vld [vmem:[#allocation6 + $0xe0] sm:$0xff]
    %v5029 = vld [vmem:[#allocation6 + $0xe8] sm:$0xff]
    %v5030 = vld [vmem:[#allocation6 + $0xf0] sm:$0xff]
    %v5031 = vld [vmem:[#allocation6 + $0xf8] sm:$0xff]
    %v5032 = vsub.f32 %v5000, 7.4048047
    %v5033 = vsub.f32 %v5001, 7.4048047
    %v5034 = vsub.f32 %v5002, 7.4048047
    %v5035 = vsub.f32 %v5003, 7.4048047
    %v5036 = vsub.f32 %v5004, 7.4048047
    %v5037 = vsub.f32 %v5005, 7.4048047
    %v5038 = vsub.f32 %v5006, 7.4048047
    %v5039 = vsub.f32 %v5007, 7.4048047
    %v5040 = vsub.f32 %v5008, 7.4048047
    %v5041 = vsub.f32 %v5009, 7.4048047
    %v5042 = vsub.f32 %v5010, 7.4048047
    %v5043 = vsub.f32 %v5011, 7.4048047
    %v5044 = vsub.f32 %v5012, 7.4048047
    %v5045 = vsub.f32 %v5013, 7.4048047
    %v5046 = vsub.f32 %v5014, 7.4048047
    %v5047 = vsub.f32 %v5015, 7.4048047
    %v5048 = vsub.f32 %v5016, 7.4048047
    %v5049 = vsub.f32 %v5017, 7.4048047
    %v5050 = vsub.f32 %v5018, 7.4048047
    %v5051 = vsub.f32 %v5019, 7.4048047
    %v5052 = vsub.f32 %v5020, 7.4048047
    %v5053 = vsub.f32 %v5021, 7.4048047
    %v5054 = vsub.f32 %v5022, 7.4048047
    %v5055 = vsub.f32 %v5023, 7.4048047
    %v5056 = vsub.f32 %v5024, 7.4048047
    %v5057 = vsub.f32 %v5025, 7.4048047
    %v5058 = vsub.f32 %v5026, 7.4048047
    %v5059 = vsub.f32 %v5027, 7.4048047
    %v5060 = vsub.f32 %v5028, 7.4048047
    %v5061 = vsub.f32 %v5029, 7.4048047
    %v5062 = vsub.f32 %v5030, 7.4048047
    %v5063 = vsub.f32 %v5031, 7.4048047
    %v5064 = vmul.f32 %v5032, %v5032
    %v5065 = vmul.f32 %v5033, %v5033
    %v5066 = vmul.f32 %v5034, %v5034
    %v5067 = vmul.f32 %v5035, %v5035
    %v5068 = vmul.f32 %v5036, %v5036
    %v5069 = vmul.f32 %v5037, %v5037
    %v5070 = vmul.f32 %v5038, %v5038
    %v5071 = vmul.f32 %v5039, %v5039
    %v5072 = vmul.f32 %v5040, %v5040
    %v5073 = vmul.f32 %v5041, %v5041
    %v5074 = vmul.f32 %v5042, %v5042
    %v5075 = vmul.f32 %v5043, %v5043
    %v5076 = vmul.f32 %v5044, %v5044
    %v5077 = vmul.f32 %v5045, %v5045
    %v5078 = vmul.f32 %v5046, %v5046
    %v5079 = vmul.f32 %v5047, %v5047
    %v5080 = vmul.f32 %v5048, %v5048
    %v5081 = vmul.f32 %v5049, %v5049
    %v5082 = vmul.f32 %v5050, %v5050
    %v5083 = vmul.f32 %v5051, %v5051
    %v5084 = vmul.f32 %v5052, %v5052
    %v5085 = vmul.f32 %v5053, %v5053
    %v5086 = vmul.f32 %v5054, %v5054
    %v5087 = vmul.f32 %v5055, %v5055
    %v5088 = vmul.f32 %v5056, %v5056
    %v5089 = vmul.f32 %v5057, %v5057
    %v5090 = vmul.f32 %v5058, %v5058
    %v5091 = vmul.f32 %v5059, %v5059
    %v5092 = vmul.f32 %v5060, %v5060
    %v5093 = vmul.f32 %v5061, %v5061
    %v5094 = vmul.f32 %v5062, %v5062
    %v5095 = vmul.f32 %v5063, %v5063
    %v5096 = vsub.f32 0.0, %v5064
    %v5097 = vsub.f32 0.0, %v5065
    %v5098 = vsub.f32 0.0, %v5066
    %v5099 = vsub.f32 0.0, %v5067
    %v5100 = vsub.f32 0.0, %v5068
    %v5101 = vsub.f32 0.0, %v5069
    %v5102 = vsub.f32 0.0, %v5070
    %v5103 = vsub.f32 0.0, %v5071
    %v5104 = vsub.f32 0.0, %v5072
    %v5105 = vsub.f32 0.0, %v5073
    %v5106 = vsub.f32 0.0, %v5074
    %v5107 = vsub.f32 0.0, %v5075
    %v5108 = vsub.f32 0.0, %v5076
    %v5109 = vsub.f32 0.0, %v5077
    %v5110 = vsub.f32 0.0, %v5078
    %v5111 = vsub.f32 0.0, %v5079
    %v5112 = vsub.f32 0.0, %v5080
    %v5113 = vsub.f32 0.0, %v5081
    %v5114 = vsub.f32 0.0, %v5082
    %v5115 = vsub.f32 0.0, %v5083
    %v5116 = vsub.f32 0.0, %v5084
    %v5117 = vsub.f32 0.0, %v5085
    %v5118 = vsub.f32 0.0, %v5086
    %v5119 = vsub.f32 0.0, %v5087
    %v5120 = vsub.f32 0.0, %v5088
    %v5121 = vsub.f32 0.0, %v5089
    %v5122 = vsub.f32 0.0, %v5090
    %v5123 = vsub.f32 0.0, %v5091
    %v5124 = vsub.f32 0.0, %v5092
    %v5125 = vsub.f32 0.0, %v5093
    %v5126 = vsub.f32 0.0, %v5094
    %v5127 = vsub.f32 0.0, %v5095
    %v5128 = vmul.f32 %v5096, 1.442695
    %v5129 = vpow.pop %v5128
    %v5130 = vmul.f32 %v5097, 1.442695
    %v5131 = vpow.pop %v5130
    %v5132 = vmul.f32 %v5098, 1.442695
    %v5133 = vpow.pop %v5132
    %v5134 = vmul.f32 %v5099, 1.442695
    %v5135 = vpow.pop %v5134
    %v5136 = vmul.f32 %v5100, 1.442695
    %v5137 = vpow.pop %v5136
    %v5138 = vmul.f32 %v5101, 1.442695
    %v5139 = vpow.pop %v5138
    %v5140 = vmul.f32 %v5102, 1.442695
    %v5141 = vpow.pop %v5140
    %v5142 = vmul.f32 %v5103, 1.442695
    %v5143 = vpow.pop %v5142
    %v5144 = vmul.f32 %v5104, 1.442695
    %v5145 = vpow.pop %v5144
    %v5146 = vmul.f32 %v5105, 1.442695
    %v5147 = vpow.pop %v5146
    %v5148 = vmul.f32 %v5106, 1.442695
    %v5149 = vpow.pop %v5148
    %v5150 = vmul.f32 %v5107, 1.442695
    %v5151 = vpow.pop %v5150
    %v5152 = vmul.f32 %v5108, 1.442695
    %v5153 = vpow.pop %v5152
    %v5154 = vmul.f32 %v5109, 1.442695
    %v5155 = vpow.pop %v5154
    %v5156 = vmul.f32 %v5110, 1.442695
    %v5157 = vpow.pop %v5156
    %v5158 = vmul.f32 %v5111, 1.442695
    %v5159 = vpow.pop %v5158
    %v5160 = vmul.f32 %v5112, 1.442695
    %v5161 = vpow.pop %v5160
    %v5162 = vmul.f32 %v5113, 1.442695
    %v5163 = vpow.pop %v5162
    %v5164 = vmul.f32 %v5114, 1.442695
    %v5165 = vpow.pop %v5164
    %v5166 = vmul.f32 %v5115, 1.442695
    %v5167 = vpow.pop %v5166
    %v5168 = vmul.f32 %v5116, 1.442695
    %v5169 = vpow.pop %v5168
    %v5170 = vmul.f32 %v5117, 1.442695
    %v5171 = vpow.pop %v5170
    %v5172 = vmul.f32 %v5118, 1.442695
    %v5173 = vpow.pop %v5172
    %v5174 = vmul.f32 %v5119, 1.442695
    %v5175 = vpow.pop %v5174
    %v5176 = vmul.f32 %v5120, 1.442695
    %v5177 = vpow.pop %v5176
    %v5178 = vmul.f32 %v5121, 1.442695
    %v5179 = vpow.pop %v5178
    %v5180 = vmul.f32 %v5122, 1.442695
    %v5181 = vpow.pop %v5180
    %v5182 = vmul.f32 %v5123, 1.442695
    %v5183 = vpow.pop %v5182
    %v5184 = vmul.f32 %v5124, 1.442695
    %v5185 = vpow.pop %v5184
    %v5186 = vmul.f32 %v5125, 1.442695
    %v5187 = vpow.pop %v5186
    %v5188 = vmul.f32 %v5126, 1.442695
    %v5189 = vpow.pop %v5188
    %v5190 = vmul.f32 %v5127, 1.442695
    %v5191 = vpow.pop %v5190
    %v5192 = vld [vmem:[#allocation3] sm:$0xff]
    %v5193 = vld [vmem:[#allocation3 + $0x8] sm:$0xff]
    %v5194 = vld [vmem:[#allocation3 + $0x10] sm:$0xff]
    %v5195 = vld [vmem:[#allocation3 + $0x18] sm:$0xff]
    %v5196 = vld [vmem:[#allocation3 + $0x20] sm:$0xff]
    %v5197 = vld [vmem:[#allocation3 + $0x28] sm:$0xff]
    %v5198 = vld [vmem:[#allocation3 + $0x30] sm:$0xff]
    %v5199 = vld [vmem:[#allocation3 + $0x38] sm:$0xff]
    %v5200 = vld [vmem:[#allocation3 + $0x40] sm:$0xff]
    %v5201 = vld [vmem:[#allocation3 + $0x48] sm:$0xff]
    %v5202 = vld [vmem:[#allocation3 + $0x50] sm:$0xff]
    %v5203 = vld [vmem:[#allocation3 + $0x58] sm:$0xff]
    %v5204 = vld [vmem:[#allocation3 + $0x60] sm:$0xff]
    %v5205 = vld [vmem:[#allocation3 + $0x68] sm:$0xff]
    %v5206 = vld [vmem:[#allocation3 + $0x70] sm:$0xff]
    %v5207 = vld [vmem:[#allocation3 + $0x78] sm:$0xff]
    %v5208 = vld [vmem:[#allocation3 + $0x80] sm:$0xff]
    %v5209 = vld [vmem:[#allocation3 + $0x88] sm:$0xff]
    %v5210 = vld [vmem:[#allocation3 + $0x90] sm:$0xff]
    %v5211 = vld [vmem:[#allocation3 + $0x98] sm:$0xff]
    %v5212 = vld [vmem:[#allocation3 + $0xa0] sm:$0xff]
    %v5213 = vld [vmem:[#allocation3 + $0xa8] sm:$0xff]
    %v5214 = vld [vmem:[#allocation3 + $0xb0] sm:$0xff]
    %v5215 = vld [vmem:[#allocation3 + $0xb8] sm:$0xff]
    %v5216 = vld [vmem:[#allocation3 + $0xc0] sm:$0xff]
    %v5217 = vld [vmem:[#allocation3 + $0xc8] sm:$0xff]
    %v5218 = vld [vmem:[#allocation3 + $0xd0] sm:$0xff]
    %v5219 = vld [vmem:[#allocation3 + $0xd8] sm:$0xff]
    %v5220 = vld [vmem:[#allocation3 + $0xe0] sm:$0xff]
    %v5221 = vld [vmem:[#allocation3 + $0xe8] sm:$0xff]
    %v5222 = vld [vmem:[#allocation3 + $0xf0] sm:$0xff]
    %v5223 = vld [vmem:[#allocation3 + $0xf8] sm:$0xff]
    %v5224 = vmul.f32 %v5129, %v5192
    %v5225 = vmul.f32 %v5131, %v5193
    %v5226 = vmul.f32 %v5133, %v5194
    %v5227 = vmul.f32 %v5135, %v5195
    %v5228 = vmul.f32 %v5137, %v5196
    %v5229 = vmul.f32 %v5139, %v5197
    %v5230 = vmul.f32 %v5141, %v5198
    %v5231 = vmul.f32 %v5143, %v5199
    %v5232 = vmul.f32 %v5145, %v5200
    %v5233 = vmul.f32 %v5147, %v5201
    %v5234 = vmul.f32 %v5149, %v5202
    %v5235 = vmul.f32 %v5151, %v5203
    %v5236 = vmul.f32 %v5153, %v5204
    %v5237 = vmul.f32 %v5155, %v5205
    %v5238 = vmul.f32 %v5157, %v5206
    %v5239 = vmul.f32 %v5159, %v5207
    %v5240 = vmul.f32 %v5161, %v5208
    %v5241 = vmul.f32 %v5163, %v5209
    %v5242 = vmul.f32 %v5165, %v5210
    %v5243 = vmul.f32 %v5167, %v5211
    %v5244 = vmul.f32 %v5169, %v5212
    %v5245 = vmul.f32 %v5171, %v5213
    %v5246 = vmul.f32 %v5173, %v5214
    %v5247 = vmul.f32 %v5175, %v5215
    %v5248 = vmul.f32 %v5177, %v5216
    %v5249 = vmul.f32 %v5179, %v5217
    %v5250 = vmul.f32 %v5181, %v5218
    %v5251 = vmul.f32 %v5183, %v5219
    %v5252 = vmul.f32 %v5185, %v5220
    %v5253 = vmul.f32 %v5187, %v5221
    %v5254 = vmul.f32 %v5189, %v5222
    %v5255 = vmul.f32 %v5191, %v5223
    %v5256 = vadd.f32 %v5224, %v5225
    %v5257 = vadd.f32 %v5256, %v5226
    %v5258 = vadd.f32 %v5257, %v5227
    %v5259 = vadd.f32 %v5258, %v5228
    %v5260 = vadd.f32 %v5259, %v5229
    %v5261 = vadd.f32 %v5260, %v5230
    %v5262 = vadd.f32 %v5261, %v5231
    %v5263 = vadd.f32 %v5262, %v5232
    %v5264 = vadd.f32 %v5263, %v5233
    %v5265 = vadd.f32 %v5264, %v5234
    %v5266 = vadd.f32 %v5265, %v5235
    %v5267 = vadd.f32 %v5266, %v5236
    %v5268 = vadd.f32 %v5267, %v5237
    %v5269 = vadd.f32 %v5268, %v5238
    %v5270 = vadd.f32 %v5269, %v5239
    %v5271 = vadd.f32 %v5270, %v5240
    %v5272 = vadd.f32 %v5271, %v5241
    %v5273 = vadd.f32 %v5272, %v5242
    %v5274 = vadd.f32 %v5273, %v5243
    %v5275 = vadd.f32 %v5274, %v5244
    %v5276 = vadd.f32 %v5275, %v5245
    %v5277 = vadd.f32 %v5276, %v5246
    %v5278 = vadd.f32 %v5277, %v5247
    %v5279 = vadd.f32 %v5278, %v5248
    %v5280 = vadd.f32 %v5279, %v5249
    %v5281 = vadd.f32 %v5280, %v5250
    %v5282 = vadd.f32 %v5281, %v5251
    %v5283 = vadd.f32 %v5282, %v5252
    %v5284 = vadd.f32 %v5283, %v5253
    %v5285 = vadd.f32 %v5284, %v5254
    %v5286 = vadd.f32 %v5285, %v5255
    %v5287 = vrot.slane %v5286, 4
    %v5288 = vadd.f32 %v5286, %v5287
    %v5289 = vrot.slane %v5288, 2
    %v5290 = vadd.f32 %v5288, %v5289
    %v5291 = vrot.slane %v5290, 1
    %v5292 = vadd.f32 %v5290, %v5291
    %v5293 = vmul.f32 %v5292, 7.9788456
    %v5294 = vrsqrt.pop %v5293
    %v5295 = vmul.f32 %v5293, %v5294
    %vm5296 = vcmp.eq.f32.partialorder %v5293, inf
    %v5297 = vsel %vm5296, %v5293, %v5295
    %vm5298 = vcmp.eq.f32.partialorder %v5293, 0.0
    %v5299 = vand.u32 %v5293, 2147483648
    %v5300 = vsel %vm5298, %v5299, %v5297
    %5301 = vst [vmem:[#allocation8 + $0x10] sm:$0x1] %v5300
    %v5302 = vld [vmem:[#allocation6] sm:$0xff]
    %v5303 = vld [vmem:[#allocation6 + $0x8] sm:$0xff]
    %v5304 = vld [vmem:[#allocation6 + $0x10] sm:$0xff]
    %v5305 = vld [vmem:[#allocation6 + $0x18] sm:$0xff]
    %v5306 = vld [vmem:[#allocation6 + $0x20] sm:$0xff]
    %v5307 = vld [vmem:[#allocation6 + $0x28] sm:$0xff]
    %v5308 = vld [vmem:[#allocation6 + $0x30] sm:$0xff]
    %v5309 = vld [vmem:[#allocation6 + $0x38] sm:$0xff]
    %v5310 = vld [vmem:[#allocation6 + $0x40] sm:$0xff]
    %v5311 = vld [vmem:[#allocation6 + $0x48] sm:$0xff]
    %v5312 = vld [vmem:[#allocation6 + $0x50] sm:$0xff]
    %v5313 = vld [vmem:[#allocation6 + $0x58] sm:$0xff]
    %v5314 = vld [vmem:[#allocation6 + $0x60] sm:$0xff]
    %v5315 = vld [vmem:[#allocation6 + $0x68] sm:$0xff]
    %v5316 = vld [vmem:[#allocation6 + $0x70] sm:$0xff]
    %v5317 = vld [vmem:[#allocation6 + $0x78] sm:$0xff]
    %v5318 = vld [vmem:[#allocation6 + $0x80] sm:$0xff]
    %v5319 = vld [vmem:[#allocation6 + $0x88] sm:$0xff]
    %v5320 = vld [vmem:[#allocation6 + $0x90] sm:$0xff]
    %v5321 = vld [vmem:[#allocation6 + $0x98] sm:$0xff]
    %v5322 = vld [vmem:[#allocation6 + $0xa0] sm:$0xff]
    %v5323 = vld [vmem:[#allocation6 + $0xa8] sm:$0xff]
    %v5324 = vld [vmem:[#allocation6 + $0xb0] sm:$0xff]
    %v5325 = vld [vmem:[#allocation6 + $0xb8] sm:$0xff]
    %v5326 = vld [vmem:[#allocation6 + $0xc0] sm:$0xff]
    %v5327 = vld [vmem:[#allocation6 + $0xc8] sm:$0xff]
    %v5328 = vld [vmem:[#allocation6 + $0xd0] sm:$0xff]
    %v5329 = vld [vmem:[#allocation6 + $0xd8] sm:$0xff]
    %v5330 = vld [vmem:[#allocation6 + $0xe0] sm:$0xff]
    %v5331 = vld [vmem:[#allocation6 + $0xe8] sm:$0xff]
    %v5332 = vld [vmem:[#allocation6 + $0xf0] sm:$0xff]
    %v5333 = vld [vmem:[#allocation6 + $0xf8] sm:$0xff]
    %v5334 = vsub.f32 %v5302, 9.256006
    %v5335 = vsub.f32 %v5303, 9.256006
    %v5336 = vsub.f32 %v5304, 9.256006
    %v5337 = vsub.f32 %v5305, 9.256006
    %v5338 = vsub.f32 %v5306, 9.256006
    %v5339 = vsub.f32 %v5307, 9.256006
    %v5340 = vsub.f32 %v5308, 9.256006
    %v5341 = vsub.f32 %v5309, 9.256006
    %v5342 = vsub.f32 %v5310, 9.256006
    %v5343 = vsub.f32 %v5311, 9.256006
    %v5344 = vsub.f32 %v5312, 9.256006
    %v5345 = vsub.f32 %v5313, 9.256006
    %v5346 = vsub.f32 %v5314, 9.256006
    %v5347 = vsub.f32 %v5315, 9.256006
    %v5348 = vsub.f32 %v5316, 9.256006
    %v5349 = vsub.f32 %v5317, 9.256006
    %v5350 = vsub.f32 %v5318, 9.256006
    %v5351 = vsub.f32 %v5319, 9.256006
    %v5352 = vsub.f32 %v5320, 9.256006
    %v5353 = vsub.f32 %v5321, 9.256006
    %v5354 = vsub.f32 %v5322, 9.256006
    %v5355 = vsub.f32 %v5323, 9.256006
    %v5356 = vsub.f32 %v5324, 9.256006
    %v5357 = vsub.f32 %v5325, 9.256006
    %v5358 = vsub.f32 %v5326, 9.256006
    %v5359 = vsub.f32 %v5327, 9.256006
    %v5360 = vsub.f32 %v5328, 9.256006
    %v5361 = vsub.f32 %v5329, 9.256006
    %v5362 = vsub.f32 %v5330, 9.256006
    %v5363 = vsub.f32 %v5331, 9.256006
    %v5364 = vsub.f32 %v5332, 9.256006
    %v5365 = vsub.f32 %v5333, 9.256006
    %v5366 = vmul.f32 %v5334, %v5334
    %v5367 = vmul.f32 %v5335, %v5335
    %v5368 = vmul.f32 %v5336, %v5336
    %v5369 = vmul.f32 %v5337, %v5337
    %v5370 = vmul.f32 %v5338, %v5338
    %v5371 = vmul.f32 %v5339, %v5339
    %v5372 = vmul.f32 %v5340, %v5340
    %v5373 = vmul.f32 %v5341, %v5341
    %v5374 = vmul.f32 %v5342, %v5342
    %v5375 = vmul.f32 %v5343, %v5343
    %v5376 = vmul.f32 %v5344, %v5344
    %v5377 = vmul.f32 %v5345, %v5345
    %v5378 = vmul.f32 %v5346, %v5346
    %v5379 = vmul.f32 %v5347, %v5347
    %v5380 = vmul.f32 %v5348, %v5348
    %v5381 = vmul.f32 %v5349, %v5349
    %v5382 = vmul.f32 %v5350, %v5350
    %v5383 = vmul.f32 %v5351, %v5351
    %v5384 = vmul.f32 %v5352, %v5352
    %v5385 = vmul.f32 %v5353, %v5353
    %v5386 = vmul.f32 %v5354, %v5354
    %v5387 = vmul.f32 %v5355, %v5355
    %v5388 = vmul.f32 %v5356, %v5356
    %v5389 = vmul.f32 %v5357, %v5357
    %v5390 = vmul.f32 %v5358, %v5358
    %v5391 = vmul.f32 %v5359, %v5359
    %v5392 = vmul.f32 %v5360, %v5360
    %v5393 = vmul.f32 %v5361, %v5361
    %v5394 = vmul.f32 %v5362, %v5362
    %v5395 = vmul.f32 %v5363, %v5363
    %v5396 = vmul.f32 %v5364, %v5364
    %v5397 = vmul.f32 %v5365, %v5365
    %v5398 = vsub.f32 0.0, %v5366
    %v5399 = vsub.f32 0.0, %v5367
    %v5400 = vsub.f32 0.0, %v5368
    %v5401 = vsub.f32 0.0, %v5369
    %v5402 = vsub.f32 0.0, %v5370
    %v5403 = vsub.f32 0.0, %v5371
    %v5404 = vsub.f32 0.0, %v5372
    %v5405 = vsub.f32 0.0, %v5373
    %v5406 = vsub.f32 0.0, %v5374
    %v5407 = vsub.f32 0.0, %v5375
    %v5408 = vsub.f32 0.0, %v5376
    %v5409 = vsub.f32 0.0, %v5377
    %v5410 = vsub.f32 0.0, %v5378
    %v5411 = vsub.f32 0.0, %v5379
    %v5412 = vsub.f32 0.0, %v5380
    %v5413 = vsub.f32 0.0, %v5381
    %v5414 = vsub.f32 0.0, %v5382
    %v5415 = vsub.f32 0.0, %v5383
    %v5416 = vsub.f32 0.0, %v5384
    %v5417 = vsub.f32 0.0, %v5385
    %v5418 = vsub.f32 0.0, %v5386
    %v5419 = vsub.f32 0.0, %v5387
    %v5420 = vsub.f32 0.0, %v5388
    %v5421 = vsub.f32 0.0, %v5389
    %v5422 = vsub.f32 0.0, %v5390
    %v5423 = vsub.f32 0.0, %v5391
    %v5424 = vsub.f32 0.0, %v5392
    %v5425 = vsub.f32 0.0, %v5393
    %v5426 = vsub.f32 0.0, %v5394
    %v5427 = vsub.f32 0.0, %v5395
    %v5428 = vsub.f32 0.0, %v5396
    %v5429 = vsub.f32 0.0, %v5397
    %v5430 = vmul.f32 %v5398, 1.442695
    %v5431 = vpow.pop %v5430
    %v5432 = vmul.f32 %v5399, 1.442695
    %v5433 = vpow.pop %v5432
    %v5434 = vmul.f32 %v5400, 1.442695
    %v5435 = vpow.pop %v5434
    %v5436 = vmul.f32 %v5401, 1.442695
    %v5437 = vpow.pop %v5436
    %v5438 = vmul.f32 %v5402, 1.442695
    %v5439 = vpow.pop %v5438
    %v5440 = vmul.f32 %v5403, 1.442695
    %v5441 = vpow.pop %v5440
    %v5442 = vmul.f32 %v5404, 1.442695
    %v5443 = vpow.pop %v5442
    %v5444 = vmul.f32 %v5405, 1.442695
    %v5445 = vpow.pop %v5444
    %v5446 = vmul.f32 %v5406, 1.442695
    %v5447 = vpow.pop %v5446
    %v5448 = vmul.f32 %v5407, 1.442695
    %v5449 = vpow.pop %v5448
    %v5450 = vmul.f32 %v5408, 1.442695
    %v5451 = vpow.pop %v5450
    %v5452 = vmul.f32 %v5409, 1.442695
    %v5453 = vpow.pop %v5452
    %v5454 = vmul.f32 %v5410, 1.442695
    %v5455 = vpow.pop %v5454
    %v5456 = vmul.f32 %v5411, 1.442695
    %v5457 = vpow.pop %v5456
    %v5458 = vmul.f32 %v5412, 1.442695
    %v5459 = vpow.pop %v5458
    %v5460 = vmul.f32 %v5413, 1.442695
    %v5461 = vpow.pop %v5460
    %v5462 = vmul.f32 %v5414, 1.442695
    %v5463 = vpow.pop %v5462
    %v5464 = vmul.f32 %v5415, 1.442695
    %v5465 = vpow.pop %v5464
    %v5466 = vmul.f32 %v5416, 1.442695
    %v5467 = vpow.pop %v5466
    %v5468 = vmul.f32 %v5417, 1.442695
    %v5469 = vpow.pop %v5468
    %v5470 = vmul.f32 %v5418, 1.442695
    %v5471 = vpow.pop %v5470
    %v5472 = vmul.f32 %v5419, 1.442695
    %v5473 = vpow.pop %v5472
    %v5474 = vmul.f32 %v5420, 1.442695
    %v5475 = vpow.pop %v5474
    %v5476 = vmul.f32 %v5421, 1.442695
    %v5477 = vpow.pop %v5476
    %v5478 = vmul.f32 %v5422, 1.442695
    %v5479 = vpow.pop %v5478
    %v5480 = vmul.f32 %v5423, 1.442695
    %v5481 = vpow.pop %v5480
    %v5482 = vmul.f32 %v5424, 1.442695
    %v5483 = vpow.pop %v5482
    %v5484 = vmul.f32 %v5425, 1.442695
    %v5485 = vpow.pop %v5484
    %v5486 = vmul.f32 %v5426, 1.442695
    %v5487 = vpow.pop %v5486
    %v5488 = vmul.f32 %v5427, 1.442695
    %v5489 = vpow.pop %v5488
    %v5490 = vmul.f32 %v5428, 1.442695
    %v5491 = vpow.pop %v5490
    %v5492 = vmul.f32 %v5429, 1.442695
    %v5493 = vpow.pop %v5492
    %v5494 = vld [vmem:[#allocation3] sm:$0xff]
    %v5495 = vld [vmem:[#allocation3 + $0x8] sm:$0xff]
    %v5496 = vld [vmem:[#allocation3 + $0x10] sm:$0xff]
    %v5497 = vld [vmem:[#allocation3 + $0x18] sm:$0xff]
    %v5498 = vld [vmem:[#allocation3 + $0x20] sm:$0xff]
    %v5499 = vld [vmem:[#allocation3 + $0x28] sm:$0xff]
    %v5500 = vld [vmem:[#allocation3 + $0x30] sm:$0xff]
    %v5501 = vld [vmem:[#allocation3 + $0x38] sm:$0xff]
    %v5502 = vld [vmem:[#allocation3 + $0x40] sm:$0xff]
    %v5503 = vld [vmem:[#allocation3 + $0x48] sm:$0xff]
    %v5504 = vld [vmem:[#allocation3 + $0x50] sm:$0xff]
    %v5505 = vld [vmem:[#allocation3 + $0x58] sm:$0xff]
    %v5506 = vld [vmem:[#allocation3 + $0x60] sm:$0xff]
    %v5507 = vld [vmem:[#allocation3 + $0x68] sm:$0xff]
    %v5508 = vld [vmem:[#allocation3 + $0x70] sm:$0xff]
    %v5509 = vld [vmem:[#allocation3 + $0x78] sm:$0xff]
    %v5510 = vld [vmem:[#allocation3 + $0x80] sm:$0xff]
    %v5511 = vld [vmem:[#allocation3 + $0x88] sm:$0xff]
    %v5512 = vld [vmem:[#allocation3 + $0x90] sm:$0xff]
    %v5513 = vld [vmem:[#allocation3 + $0x98] sm:$0xff]
    %v5514 = vld [vmem:[#allocation3 + $0xa0] sm:$0xff]
    %v5515 = vld [vmem:[#allocation3 + $0xa8] sm:$0xff]
    %v5516 = vld [vmem:[#allocation3 + $0xb0] sm:$0xff]
    %v5517 = vld [vmem:[#allocation3 + $0xb8] sm:$0xff]
    %v5518 = vld [vmem:[#allocation3 + $0xc0] sm:$0xff]
    %v5519 = vld [vmem:[#allocation3 + $0xc8] sm:$0xff]
    %v5520 = vld [vmem:[#allocation3 + $0xd0] sm:$0xff]
    %v5521 = vld [vmem:[#allocation3 + $0xd8] sm:$0xff]
    %v5522 = vld [vmem:[#allocation3 + $0xe0] sm:$0xff]
    %v5523 = vld [vmem:[#allocation3 + $0xe8] sm:$0xff]
    %v5524 = vld [vmem:[#allocation3 + $0xf0] sm:$0xff]
    %v5525 = vld [vmem:[#allocation3 + $0xf8] sm:$0xff]
    %v5526 = vmul.f32 %v5431, %v5494
    %v5527 = vmul.f32 %v5433, %v5495
    %v5528 = vmul.f32 %v5435, %v5496
    %v5529 = vmul.f32 %v5437, %v5497
    %v5530 = vmul.f32 %v5439, %v5498
    %v5531 = vmul.f32 %v5441, %v5499
    %v5532 = vmul.f32 %v5443, %v5500
    %v5533 = vmul.f32 %v5445, %v5501
    %v5534 = vmul.f32 %v5447, %v5502
    %v5535 = vmul.f32 %v5449, %v5503
    %v5536 = vmul.f32 %v5451, %v5504
    %v5537 = vmul.f32 %v5453, %v5505
    %v5538 = vmul.f32 %v5455, %v5506
    %v5539 = vmul.f32 %v5457, %v5507
    %v5540 = vmul.f32 %v5459, %v5508
    %v5541 = vmul.f32 %v5461, %v5509
    %v5542 = vmul.f32 %v5463, %v5510
    %v5543 = vmul.f32 %v5465, %v5511
    %v5544 = vmul.f32 %v5467, %v5512
    %v5545 = vmul.f32 %v5469, %v5513
    %v5546 = vmul.f32 %v5471, %v5514
    %v5547 = vmul.f32 %v5473, %v5515
    %v5548 = vmul.f32 %v5475, %v5516
    %v5549 = vmul.f32 %v5477, %v5517
    %v5550 = vmul.f32 %v5479, %v5518
    %v5551 = vmul.f32 %v5481, %v5519
    %v5552 = vmul.f32 %v5483, %v5520
    %v5553 = vmul.f32 %v5485, %v5521
    %v5554 = vmul.f32 %v5487, %v5522
    %v5555 = vmul.f32 %v5489, %v5523
    %v5556 = vmul.f32 %v5491, %v5524
    %v5557 = vmul.f32 %v5493, %v5525
    %v5558 = vadd.f32 %v5526, %v5527
    %v5559 = vadd.f32 %v5558, %v5528
    %v5560 = vadd.f32 %v5559, %v5529
    %v5561 = vadd.f32 %v5560, %v5530
    %v5562 = vadd.f32 %v5561, %v5531
    %v5563 = vadd.f32 %v5562, %v5532
    %v5564 = vadd.f32 %v5563, %v5533
    %v5565 = vadd.f32 %v5564, %v5534
    %v5566 = vadd.f32 %v5565, %v5535
    %v5567 = vadd.f32 %v5566, %v5536
    %v5568 = vadd.f32 %v5567, %v5537
    %v5569 = vadd.f32 %v5568, %v5538
    %v5570 = vadd.f32 %v5569, %v5539
    %v5571 = vadd.f32 %v5570, %v5540
    %v5572 = vadd.f32 %v5571, %v5541
    %v5573 = vadd.f32 %v5572, %v5542
    %v5574 = vadd.f32 %v5573, %v5543
    %v5575 = vadd.f32 %v5574, %v5544
    %v5576 = vadd.f32 %v5575, %v5545
    %v5577 = vadd.f32 %v5576, %v5546
    %v5578 = vadd.f32 %v5577, %v5547
    %v5579 = vadd.f32 %v5578, %v5548
    %v5580 = vadd.f32 %v5579, %v5549
    %v5581 = vadd.f32 %v5580, %v5550
    %v5582 = vadd.f32 %v5581, %v5551
    %v5583 = vadd.f32 %v5582, %v5552
    %v5584 = vadd.f32 %v5583, %v5553
    %v5585 = vadd.f32 %v5584, %v5554
    %v5586 = vadd.f32 %v5585, %v5555
    %v5587 = vadd.f32 %v5586, %v5556
    %v5588 = vadd.f32 %v5587, %v5557
    %v5589 = vrot.slane %v5588, 4
    %v5590 = vadd.f32 %v5588, %v5589
    %v5591 = vrot.slane %v5590, 2
    %v5592 = vadd.f32 %v5590, %v5591
    %v5593 = vrot.slane %v5592, 1
    %v5594 = vadd.f32 %v5592, %v5593
    %v5595 = vmul.f32 %v5594, 7.9788456
    %v5596 = vrsqrt.pop %v5595
    %v5597 = vmul.f32 %v5595, %v5596
    %vm5598 = vcmp.eq.f32.partialorder %v5595, inf
    %v5599 = vsel %vm5598, %v5595, %v5597
    %vm5600 = vcmp.eq.f32.partialorder %v5595, 0.0
    %v5601 = vand.u32 %v5595, 2147483648
    %v5602 = vsel %vm5600, %v5601, %v5599
    %5603 = vst [vmem:[#allocation8 + $0x11] sm:$0x1] %v5602
    %v5604 = vld [vmem:[#allocation6] sm:$0xff]
    %v5605 = vld [vmem:[#allocation6 + $0x8] sm:$0xff]
    %v5606 = vld [vmem:[#allocation6 + $0x10] sm:$0xff]
    %v5607 = vld [vmem:[#allocation6 + $0x18] sm:$0xff]
    %v5608 = vld [vmem:[#allocation6 + $0x20] sm:$0xff]
    %v5609 = vld [vmem:[#allocation6 + $0x28] sm:$0xff]
    %v5610 = vld [vmem:[#allocation6 + $0x30] sm:$0xff]
    %v5611 = vld [vmem:[#allocation6 + $0x38] sm:$0xff]
    %v5612 = vld [vmem:[#allocation6 + $0x40] sm:$0xff]
    %v5613 = vld [vmem:[#allocation6 + $0x48] sm:$0xff]
    %v5614 = vld [vmem:[#allocation6 + $0x50] sm:$0xff]
    %v5615 = vld [vmem:[#allocation6 + $0x58] sm:$0xff]
    %v5616 = vld [vmem:[#allocation6 + $0x60] sm:$0xff]
    %v5617 = vld [vmem:[#allocation6 + $0x68] sm:$0xff]
    %v5618 = vld [vmem:[#allocation6 + $0x70] sm:$0xff]
    %v5619 = vld [vmem:[#allocation6 + $0x78] sm:$0xff]
    %v5620 = vld [vmem:[#allocation6 + $0x80] sm:$0xff]
    %v5621 = vld [vmem:[#allocation6 + $0x88] sm:$0xff]
    %v5622 = vld [vmem:[#allocation6 + $0x90] sm:$0xff]
    %v5623 = vld [vmem:[#allocation6 + $0x98] sm:$0xff]
    %v5624 = vld [vmem:[#allocation6 + $0xa0] sm:$0xff]
    %v5625 = vld [vmem:[#allocation6 + $0xa8] sm:$0xff]
    %v5626 = vld [vmem:[#allocation6 + $0xb0] sm:$0xff]
    %v5627 = vld [vmem:[#allocation6 + $0xb8] sm:$0xff]
    %v5628 = vld [vmem:[#allocation6 + $0xc0] sm:$0xff]
    %v5629 = vld [vmem:[#allocation6 + $0xc8] sm:$0xff]
    %v5630 = vld [vmem:[#allocation6 + $0xd0] sm:$0xff]
    %v5631 = vld [vmem:[#allocation6 + $0xd8] sm:$0xff]
    %v5632 = vld [vmem:[#allocation6 + $0xe0] sm:$0xff]
    %v5633 = vld [vmem:[#allocation6 + $0xe8] sm:$0xff]
    %v5634 = vld [vmem:[#allocation6 + $0xf0] sm:$0xff]
    %v5635 = vld [vmem:[#allocation6 + $0xf8] sm:$0xff]
    %v5636 = vsub.f32 %v5604, 11.107207
    %v5637 = vsub.f32 %v5605, 11.107207
    %v5638 = vsub.f32 %v5606, 11.107207
    %v5639 = vsub.f32 %v5607, 11.107207
    %v5640 = vsub.f32 %v5608, 11.107207
    %v5641 = vsub.f32 %v5609, 11.107207
    %v5642 = vsub.f32 %v5610, 11.107207
    %v5643 = vsub.f32 %v5611, 11.107207
    %v5644 = vsub.f32 %v5612, 11.107207
    %v5645 = vsub.f32 %v5613, 11.107207
    %v5646 = vsub.f32 %v5614, 11.107207
    %v5647 = vsub.f32 %v5615, 11.107207
    %v5648 = vsub.f32 %v5616, 11.107207
    %v5649 = vsub.f32 %v5617, 11.107207
    %v5650 = vsub.f32 %v5618, 11.107207
    %v5651 = vsub.f32 %v5619, 11.107207
    %v5652 = vsub.f32 %v5620, 11.107207
    %v5653 = vsub.f32 %v5621, 11.107207
    %v5654 = vsub.f32 %v5622, 11.107207
    %v5655 = vsub.f32 %v5623, 11.107207
    %v5656 = vsub.f32 %v5624, 11.107207
    %v5657 = vsub.f32 %v5625, 11.107207
    %v5658 = vsub.f32 %v5626, 11.107207
    %v5659 = vsub.f32 %v5627, 11.107207
    %v5660 = vsub.f32 %v5628, 11.107207
    %v5661 = vsub.f32 %v5629, 11.107207
    %v5662 = vsub.f32 %v5630, 11.107207
    %v5663 = vsub.f32 %v5631, 11.107207
    %v5664 = vsub.f32 %v5632, 11.107207
    %v5665 = vsub.f32 %v5633, 11.107207
    %v5666 = vsub.f32 %v5634, 11.107207
    %v5667 = vsub.f32 %v5635, 11.107207
    %v5668 = vmul.f32 %v5636, %v5636
    %v5669 = vmul.f32 %v5637, %v5637
    %v5670 = vmul.f32 %v5638, %v5638
    %v5671 = vmul.f32 %v5639, %v5639
    %v5672 = vmul.f32 %v5640, %v5640
    %v5673 = vmul.f32 %v5641, %v5641
    %v5674 = vmul.f32 %v5642, %v5642
    %v5675 = vmul.f32 %v5643, %v5643
    %v5676 = vmul.f32 %v5644, %v5644
    %v5677 = vmul.f32 %v5645, %v5645
    %v5678 = vmul.f32 %v5646, %v5646
    %v5679 = vmul.f32 %v5647, %v5647
    %v5680 = vmul.f32 %v5648, %v5648
    %v5681 = vmul.f32 %v5649, %v5649
    %v5682 = vmul.f32 %v5650, %v5650
    %v5683 = vmul.f32 %v5651, %v5651
    %v5684 = vmul.f32 %v5652, %v5652
    %v5685 = vmul.f32 %v5653, %v5653
    %v5686 = vmul.f32 %v5654, %v5654
    %v5687 = vmul.f32 %v5655, %v5655
    %v5688 = vmul.f32 %v5656, %v5656
    %v5689 = vmul.f32 %v5657, %v5657
    %v5690 = vmul.f32 %v5658, %v5658
    %v5691 = vmul.f32 %v5659, %v5659
    %v5692 = vmul.f32 %v5660, %v5660
    %v5693 = vmul.f32 %v5661, %v5661
    %v5694 = vmul.f32 %v5662, %v5662
    %v5695 = vmul.f32 %v5663, %v5663
    %v5696 = vmul.f32 %v5664, %v5664
    %v5697 = vmul.f32 %v5665, %v5665
    %v5698 = vmul.f32 %v5666, %v5666
    %v5699 = vmul.f32 %v5667, %v5667
    %v5700 = vsub.f32 0.0, %v5668
    %v5701 = vsub.f32 0.0, %v5669
    %v5702 = vsub.f32 0.0, %v5670
    %v5703 = vsub.f32 0.0, %v5671
    %v5704 = vsub.f32 0.0, %v5672
    %v5705 = vsub.f32 0.0, %v5673
    %v5706 = vsub.f32 0.0, %v5674
    %v5707 = vsub.f32 0.0, %v5675
    %v5708 = vsub.f32 0.0, %v5676
    %v5709 = vsub.f32 0.0, %v5677
    %v5710 = vsub.f32 0.0, %v5678
    %v5711 = vsub.f32 0.0, %v5679
    %v5712 = vsub.f32 0.0, %v5680
    %v5713 = vsub.f32 0.0, %v5681
    %v5714 = vsub.f32 0.0, %v5682
    %v5715 = vsub.f32 0.0, %v5683
    %v5716 = vsub.f32 0.0, %v5684
    %v5717 = vsub.f32 0.0, %v5685
    %v5718 = vsub.f32 0.0, %v5686
    %v5719 = vsub.f32 0.0, %v5687
    %v5720 = vsub.f32 0.0, %v5688
    %v5721 = vsub.f32 0.0, %v5689
    %v5722 = vsub.f32 0.0, %v5690
    %v5723 = vsub.f32 0.0, %v5691
    %v5724 = vsub.f32 0.0, %v5692
    %v5725 = vsub.f32 0.0, %v5693
    %v5726 = vsub.f32 0.0, %v5694
    %v5727 = vsub.f32 0.0, %v5695
    %v5728 = vsub.f32 0.0, %v5696
    %v5729 = vsub.f32 0.0, %v5697
    %v5730 = vsub.f32 0.0, %v5698
    %v5731 = vsub.f32 0.0, %v5699
    %v5732 = vmul.f32 %v5700, 1.442695
    %v5733 = vpow.pop %v5732
    %v5734 = vmul.f32 %v5701, 1.442695
    %v5735 = vpow.pop %v5734
    %v5736 = vmul.f32 %v5702, 1.442695
    %v5737 = vpow.pop %v5736
    %v5738 = vmul.f32 %v5703, 1.442695
    %v5739 = vpow.pop %v5738
    %v5740 = vmul.f32 %v5704, 1.442695
    %v5741 = vpow.pop %v5740
    %v5742 = vmul.f32 %v5705, 1.442695
    %v5743 = vpow.pop %v5742
    %v5744 = vmul.f32 %v5706, 1.442695
    %v5745 = vpow.pop %v5744
    %v5746 = vmul.f32 %v5707, 1.442695
    %v5747 = vpow.pop %v5746
    %v5748 = vmul.f32 %v5708, 1.442695
    %v5749 = vpow.pop %v5748
    %v5750 = vmul.f32 %v5709, 1.442695
    %v5751 = vpow.pop %v5750
    %v5752 = vmul.f32 %v5710, 1.442695
    %v5753 = vpow.pop %v5752
    %v5754 = vmul.f32 %v5711, 1.442695
    %v5755 = vpow.pop %v5754
    %v5756 = vmul.f32 %v5712, 1.442695
    %v5757 = vpow.pop %v5756
    %v5758 = vmul.f32 %v5713, 1.442695
    %v5759 = vpow.pop %v5758
    %v5760 = vmul.f32 %v5714, 1.442695
    %v5761 = vpow.pop %v5760
    %v5762 = vmul.f32 %v5715, 1.442695
    %v5763 = vpow.pop %v5762
    %v5764 = vmul.f32 %v5716, 1.442695
    %v5765 = vpow.pop %v5764
    %v5766 = vmul.f32 %v5717, 1.442695
    %v5767 = vpow.pop %v5766
    %v5768 = vmul.f32 %v5718, 1.442695
    %v5769 = vpow.pop %v5768
    %v5770 = vmul.f32 %v5719, 1.442695
    %v5771 = vpow.pop %v5770
    %v5772 = vmul.f32 %v5720, 1.442695
    %v5773 = vpow.pop %v5772
    %v5774 = vmul.f32 %v5721, 1.442695
    %v5775 = vpow.pop %v5774
    %v5776 = vmul.f32 %v5722, 1.442695
    %v5777 = vpow.pop %v5776
    %v5778 = vmul.f32 %v5723, 1.442695
    %v5779 = vpow.pop %v5778
    %v5780 = vmul.f32 %v5724, 1.442695
    %v5781 = vpow.pop %v5780
    %v5782 = vmul.f32 %v5725, 1.442695
    %v5783 = vpow.pop %v5782
    %v5784 = vmul.f32 %v5726, 1.442695
    %v5785 = vpow.pop %v5784
    %v5786 = vmul.f32 %v5727, 1.442695
    %v5787 = vpow.pop %v5786
    %v5788 = vmul.f32 %v5728, 1.442695
    %v5789 = vpow.pop %v5788
    %v5790 = vmul.f32 %v5729, 1.442695
    %v5791 = vpow.pop %v5790
    %v5792 = vmul.f32 %v5730, 1.442695
    %v5793 = vpow.pop %v5792
    %v5794 = vmul.f32 %v5731, 1.442695
    %v5795 = vpow.pop %v5794
    %v5796 = vld [vmem:[#allocation3] sm:$0xff]
    %v5797 = vld [vmem:[#allocation3 + $0x8] sm:$0xff]
    %v5798 = vld [vmem:[#allocation3 + $0x10] sm:$0xff]
    %v5799 = vld [vmem:[#allocation3 + $0x18] sm:$0xff]
    %v5800 = vld [vmem:[#allocation3 + $0x20] sm:$0xff]
    %v5801 = vld [vmem:[#allocation3 + $0x28] sm:$0xff]
    %v5802 = vld [vmem:[#allocation3 + $0x30] sm:$0xff]
    %v5803 = vld [vmem:[#allocation3 + $0x38] sm:$0xff]
    %v5804 = vld [vmem:[#allocation3 + $0x40] sm:$0xff]
    %v5805 = vld [vmem:[#allocation3 + $0x48] sm:$0xff]
    %v5806 = vld [vmem:[#allocation3 + $0x50] sm:$0xff]
    %v5807 = vld [vmem:[#allocation3 + $0x58] sm:$0xff]
    %v5808 = vld [vmem:[#allocation3 + $0x60] sm:$0xff]
    %v5809 = vld [vmem:[#allocation3 + $0x68] sm:$0xff]
    %v5810 = vld [vmem:[#allocation3 + $0x70] sm:$0xff]
    %v5811 = vld [vmem:[#allocation3 + $0x78] sm:$0xff]
    %v5812 = vld [vmem:[#allocation3 + $0x80] sm:$0xff]
    %v5813 = vld [vmem:[#allocation3 + $0x88] sm:$0xff]
    %v5814 = vld [vmem:[#allocation3 + $0x90] sm:$0xff]
    %v5815 = vld [vmem:[#allocation3 + $0x98] sm:$0xff]
    %v5816 = vld [vmem:[#allocation3 + $0xa0] sm:$0xff]
    %v5817 = vld [vmem:[#allocation3 + $0xa8] sm:$0xff]
    %v5818 = vld [vmem:[#allocation3 + $0xb0] sm:$0xff]
    %v5819 = vld [vmem:[#allocation3 + $0xb8] sm:$0xff]
    %v5820 = vld [vmem:[#allocation3 + $0xc0] sm:$0xff]
    %v5821 = vld [vmem:[#allocation3 + $0xc8] sm:$0xff]
    %v5822 = vld [vmem:[#allocation3 + $0xd0] sm:$0xff]
    %v5823 = vld [vmem:[#allocation3 + $0xd8] sm:$0xff]
    %v5824 = vld [vmem:[#allocation3 + $0xe0] sm:$0xff]
    %v5825 = vld [vmem:[#allocation3 + $0xe8] sm:$0xff]
    %v5826 = vld [vmem:[#allocation3 + $0xf0] sm:$0xff]
    %v5827 = vld [vmem:[#allocation3 + $0xf8] sm:$0xff]
    %v5828 = vmul.f32 %v5733, %v5796
    %v5829 = vmul.f32 %v5735, %v5797
    %v5830 = vmul.f32 %v5737, %v5798
    %v5831 = vmul.f32 %v5739, %v5799
    %v5832 = vmul.f32 %v5741, %v5800
    %v5833 = vmul.f32 %v5743, %v5801
    %v5834 = vmul.f32 %v5745, %v5802
    %v5835 = vmul.f32 %v5747, %v5803
    %v5836 = vmul.f32 %v5749, %v5804
    %v5837 = vmul.f32 %v5751, %v5805
    %v5838 = vmul.f32 %v5753, %v5806
    %v5839 = vmul.f32 %v5755, %v5807
    %v5840 = vmul.f32 %v5757, %v5808
    %v5841 = vmul.f32 %v5759, %v5809
    %v5842 = vmul.f32 %v5761, %v5810
    %v5843 = vmul.f32 %v5763, %v5811
    %v5844 = vmul.f32 %v5765, %v5812
    %v5845 = vmul.f32 %v5767, %v5813
    %v5846 = vmul.f32 %v5769, %v5814
    %v5847 = vmul.f32 %v5771, %v5815
    %v5848 = vmul.f32 %v5773, %v5816
    %v5849 = vmul.f32 %v5775, %v5817
    %v5850 = vmul.f32 %v5777, %v5818
    %v5851 = vmul.f32 %v5779, %v5819
    %v5852 = vmul.f32 %v5781, %v5820
    %v5853 = vmul.f32 %v5783, %v5821
    %v5854 = vmul.f32 %v5785, %v5822
    %v5855 = vmul.f32 %v5787, %v5823
    %v5856 = vmul.f32 %v5789, %v5824
    %v5857 = vmul.f32 %v5791, %v5825
    %v5858 = vmul.f32 %v5793, %v5826
    %v5859 = vmul.f32 %v5795, %v5827
    %v5860 = vadd.f32 %v5828, %v5829
    %v5861 = vadd.f32 %v5860, %v5830
    %v5862 = vadd.f32 %v5861, %v5831
    %v5863 = vadd.f32 %v5862, %v5832
    %v5864 = vadd.f32 %v5863, %v5833
    %v5865 = vadd.f32 %v5864, %v5834
    %v5866 = vadd.f32 %v5865, %v5835
    %v5867 = vadd.f32 %v5866, %v5836
    %v5868 = vadd.f32 %v5867, %v5837
    %v5869 = vadd.f32 %v5868, %v5838
    %v5870 = vadd.f32 %v5869, %v5839
    %v5871 = vadd.f32 %v5870, %v5840
    %v5872 = vadd.f32 %v5871, %v5841
    %v5873 = vadd.f32 %v5872, %v5842
    %v5874 = vadd.f32 %v5873, %v5843
    %v5875 = vadd.f32 %v5874, %v5844
    %v5876 = vadd.f32 %v5875, %v5845
    %v5877 = vadd.f32 %v5876, %v5846
    %v5878 = vadd.f32 %v5877, %v5847
    %v5879 = vadd.f32 %v5878, %v5848
    %v5880 = vadd.f32 %v5879, %v5849
    %v5881 = vadd.f32 %v5880, %v5850
    %v5882 = vadd.f32 %v5881, %v5851
    %v5883 = vadd.f32 %v5882, %v5852
    %v5884 = vadd.f32 %v5883, %v5853
    %v5885 = vadd.f32 %v5884, %v5854
    %v5886 = vadd.f32 %v5885, %v5855
    %v5887 = vadd.f32 %v5886, %v5856
    %v5888 = vadd.f32 %v5887, %v5857
    %v5889 = vadd.f32 %v5888, %v5858
    %v5890 = vadd.f32 %v5889, %v5859
    %v5891 = vrot.slane %v5890, 4
    %v5892 = vadd.f32 %v5890, %v5891
    %v5893 = vrot.slane %v5892, 2
    %v5894 = vadd.f32 %v5892, %v5893
    %v5895 = vrot.slane %v5894, 1
    %v5896 = vadd.f32 %v5894, %v5895
    %v5897 = vmul.f32 %v5896, 7.9788456
    %v5898 = vrsqrt.pop %v5897
    %v5899 = vmul.f32 %v5897, %v5898
    %vm5900 = vcmp.eq.f32.partialorder %v5897, inf
    %v5901 = vsel %vm5900, %v5897, %v5899
    %vm5902 = vcmp.eq.f32.partialorder %v5897, 0.0
    %v5903 = vand.u32 %v5897, 2147483648
    %v5904 = vsel %vm5902, %v5903, %v5901
    %5905 = vst [vmem:[#allocation8 + $0x12] sm:$0x1] %v5904
    %v5906 = vld [vmem:[#allocation2] sm:$0xff]
    %v5907 = vld [vmem:[#allocation2 + $0x8] sm:$0xff]
    %v5908 = vld [vmem:[#allocation2 + $0x10] sm:$0xff]
    %v5909 = vld [vmem:[#allocation2 + $0x18] sm:$0xff]
    %v5910 = vld [vmem:[#allocation2 + $0x20] sm:$0xff]
    %v5911 = vld [vmem:[#allocation2 + $0x28] sm:$0xff]
    %v5912 = vld [vmem:[#allocation2 + $0x30] sm:$0xff]
    %v5913 = vld [vmem:[#allocation2 + $0x38] sm:$0xff]
    %v5914 = vld [vmem:[#allocation2 + $0x40] sm:$0xff]
    %v5915 = vld [vmem:[#allocation2 + $0x48] sm:$0xff]
    %v5916 = vld [vmem:[#allocation2 + $0x50] sm:$0xff]
    %v5917 = vld [vmem:[#allocation2 + $0x58] sm:$0xff]
    %v5918 = vld [vmem:[#allocation2 + $0x60] sm:$0xff]
    %v5919 = vld [vmem:[#allocation2 + $0x68] sm:$0xff]
    %v5920 = vld [vmem:[#allocation2 + $0x70] sm:$0xff]
    %v5921 = vld [vmem:[#allocation2 + $0x78] sm:$0xff]
    %v5922 = vld [vmem:[#allocation2 + $0x80] sm:$0xff]
    %v5923 = vld [vmem:[#allocation2 + $0x88] sm:$0xff]
    %v5924 = vld [vmem:[#allocation2 + $0x90] sm:$0xff]
    %v5925 = vld [vmem:[#allocation2 + $0x98] sm:$0xff]
    %v5926 = vld [vmem:[#allocation2 + $0xa0] sm:$0xff]
    %v5927 = vld [vmem:[#allocation2 + $0xa8] sm:$0xff]
    %v5928 = vld [vmem:[#allocation2 + $0xb0] sm:$0xff]
    %v5929 = vld [vmem:[#allocation2 + $0xb8] sm:$0xff]
    %v5930 = vld [vmem:[#allocation2 + $0xc0] sm:$0xff]
    %v5931 = vld [vmem:[#allocation2 + $0xc8] sm:$0xff]
    %v5932 = vld [vmem:[#allocation2 + $0xd0] sm:$0xff]
    %v5933 = vld [vmem:[#allocation2 + $0xd8] sm:$0xff]
    %v5934 = vld [vmem:[#allocation2 + $0xe0] sm:$0xff]
    %v5935 = vld [vmem:[#allocation2 + $0xe8] sm:$0xff]
    %v5936 = vld [vmem:[#allocation2 + $0xf0] sm:$0xff]
    %v5937 = vld [vmem:[#allocation2 + $0xf8] sm:$0xff]
    %v5938 = vsub.f32 %v5906, -9.256006
    %v5939 = vsub.f32 %v5907, -9.256006
    %v5940 = vsub.f32 %v5908, -9.256006
    %v5941 = vsub.f32 %v5909, -9.256006
    %v5942 = vsub.f32 %v5910, -9.256006
    %v5943 = vsub.f32 %v5911, -9.256006
    %v5944 = vsub.f32 %v5912, -9.256006
    %v5945 = vsub.f32 %v5913, -9.256006
    %v5946 = vsub.f32 %v5914, -9.256006
    %v5947 = vsub.f32 %v5915, -9.256006
    %v5948 = vsub.f32 %v5916, -9.256006
    %v5949 = vsub.f32 %v5917, -9.256006
    %v5950 = vsub.f32 %v5918, -9.256006
    %v5951 = vsub.f32 %v5919, -9.256006
    %v5952 = vsub.f32 %v5920, -9.256006
    %v5953 = vsub.f32 %v5921, -9.256006
    %v5954 = vsub.f32 %v5922, -9.256006
    %v5955 = vsub.f32 %v5923, -9.256006
    %v5956 = vsub.f32 %v5924, -9.256006
    %v5957 = vsub.f32 %v5925, -9.256006
    %v5958 = vsub.f32 %v5926, -9.256006
    %v5959 = vsub.f32 %v5927, -9.256006
    %v5960 = vsub.f32 %v5928, -9.256006
    %v5961 = vsub.f32 %v5929, -9.256006
    %v5962 = vsub.f32 %v5930, -9.256006
    %v5963 = vsub.f32 %v5931, -9.256006
    %v5964 = vsub.f32 %v5932, -9.256006
    %v5965 = vsub.f32 %v5933, -9.256006
    %v5966 = vsub.f32 %v5934, -9.256006
    %v5967 = vsub.f32 %v5935, -9.256006
    %v5968 = vsub.f32 %v5936, -9.256006
    %v5969 = vsub.f32 %v5937, -9.256006
    %v5970 = vmul.f32 %v5938, %v5938
    %v5971 = vmul.f32 %v5939, %v5939
    %v5972 = vmul.f32 %v5940, %v5940
    %v5973 = vmul.f32 %v5941, %v5941
    %v5974 = vmul.f32 %v5942, %v5942
    %v5975 = vmul.f32 %v5943, %v5943
    %v5976 = vmul.f32 %v5944, %v5944
    %v5977 = vmul.f32 %v5945, %v5945
    %v5978 = vmul.f32 %v5946, %v5946
    %v5979 = vmul.f32 %v5947, %v5947
    %v5980 = vmul.f32 %v5948, %v5948
    %v5981 = vmul.f32 %v5949, %v5949
    %v5982 = vmul.f32 %v5950, %v5950
    %v5983 = vmul.f32 %v5951, %v5951
    %v5984 = vmul.f32 %v5952, %v5952
    %v5985 = vmul.f32 %v5953, %v5953
    %v5986 = vmul.f32 %v5954, %v5954
    %v5987 = vmul.f32 %v5955, %v5955
    %v5988 = vmul.f32 %v5956, %v5956
    %v5989 = vmul.f32 %v5957, %v5957
    %v5990 = vmul.f32 %v5958, %v5958
    %v5991 = vmul.f32 %v5959, %v5959
    %v5992 = vmul.f32 %v5960, %v5960
    %v5993 = vmul.f32 %v5961, %v5961
    %v5994 = vmul.f32 %v5962, %v5962
    %v5995 = vmul.f32 %v5963, %v5963
    %v5996 = vmul.f32 %v5964, %v5964
    %v5997 = vmul.f32 %v5965, %v5965
    %v5998 = vmul.f32 %v5966, %v5966
    %v5999 = vmul.f32 %v5967, %v5967
    %v6000 = vmul.f32 %v5968, %v5968
    %v6001 = vmul.f32 %v5969, %v5969
    %v6002 = vsub.f32 0.0, %v5970
    %v6003 = vsub.f32 0.0, %v5971
    %v6004 = vsub.f32 0.0, %v5972
    %v6005 = vsub.f32 0.0, %v5973
    %v6006 = vsub.f32 0.0, %v5974
    %v6007 = vsub.f32 0.0, %v5975
    %v6008 = vsub.f32 0.0, %v5976
    %v6009 = vsub.f32 0.0, %v5977
    %v6010 = vsub.f32 0.0, %v5978
    %v6011 = vsub.f32 0.0, %v5979
    %v6012 = vsub.f32 0.0, %v5980
    %v6013 = vsub.f32 0.0, %v5981
    %v6014 = vsub.f32 0.0, %v5982
    %v6015 = vsub.f32 0.0, %v5983
    %v6016 = vsub.f32 0.0, %v5984
    %v6017 = vsub.f32 0.0, %v5985
    %v6018 = vsub.f32 0.0, %v5986
    %v6019 = vsub.f32 0.0, %v5987
    %v6020 = vsub.f32 0.0, %v5988
    %v6021 = vsub.f32 0.0, %v5989
    %v6022 = vsub.f32 0.0, %v5990
    %v6023 = vsub.f32 0.0, %v5991
    %v6024 = vsub.f32 0.0, %v5992
    %v6025 = vsub.f32 0.0, %v5993
    %v6026 = vsub.f32 0.0, %v5994
    %v6027 = vsub.f32 0.0, %v5995
    %v6028 = vsub.f32 0.0, %v5996
    %v6029 = vsub.f32 0.0, %v5997
    %v6030 = vsub.f32 0.0, %v5998
    %v6031 = vsub.f32 0.0, %v5999
    %v6032 = vsub.f32 0.0, %v6000
    %v6033 = vsub.f32 0.0, %v6001
    %v6034 = vmul.f32 %v6002, 1.442695
    %v6035 = vpow.pop %v6034
    %v6036 = vmul.f32 %v6003, 1.442695
    %v6037 = vpow.pop %v6036
    %v6038 = vmul.f32 %v6004, 1.442695
    %v6039 = vpow.pop %v6038
    %v6040 = vmul.f32 %v6005, 1.442695
    %v6041 = vpow.pop %v6040
    %v6042 = vmul.f32 %v6006, 1.442695
    %v6043 = vpow.pop %v6042
    %v6044 = vmul.f32 %v6007, 1.442695
    %v6045 = vpow.pop %v6044
    %v6046 = vmul.f32 %v6008, 1.442695
    %v6047 = vpow.pop %v6046
    %v6048 = vmul.f32 %v6009, 1.442695
    %v6049 = vpow.pop %v6048
    %v6050 = vmul.f32 %v6010, 1.442695
    %v6051 = vpow.pop %v6050
    %v6052 = vmul.f32 %v6011, 1.442695
    %v6053 = vpow.pop %v6052
    %v6054 = vmul.f32 %v6012, 1.442695
    %v6055 = vpow.pop %v6054
    %v6056 = vmul.f32 %v6013, 1.442695
    %v6057 = vpow.pop %v6056
    %v6058 = vmul.f32 %v6014, 1.442695
    %v6059 = vpow.pop %v6058
    %v6060 = vmul.f32 %v6015, 1.442695
    %v6061 = vpow.pop %v6060
    %v6062 = vmul.f32 %v6016, 1.442695
    %v6063 = vpow.pop %v6062
    %v6064 = vmul.f32 %v6017, 1.442695
    %v6065 = vpow.pop %v6064
    %v6066 = vmul.f32 %v6018, 1.442695
    %v6067 = vpow.pop %v6066
    %v6068 = vmul.f32 %v6019, 1.442695
    %v6069 = vpow.pop %v6068
    %v6070 = vmul.f32 %v6020, 1.442695
    %v6071 = vpow.pop %v6070
    %v6072 = vmul.f32 %v6021, 1.442695
    %v6073 = vpow.pop %v6072
    %v6074 = vmul.f32 %v6022, 1.442695
    %v6075 = vpow.pop %v6074
    %v6076 = vmul.f32 %v6023, 1.442695
    %v6077 = vpow.pop %v6076
    %v6078 = vmul.f32 %v6024, 1.442695
    %v6079 = vpow.pop %v6078
    %v6080 = vmul.f32 %v6025, 1.442695
    %v6081 = vpow.pop %v6080
    %v6082 = vmul.f32 %v6026, 1.442695
    %v6083 = vpow.pop %v6082
    %v6084 = vmul.f32 %v6027, 1.442695
    %v6085 = vpow.pop %v6084
    %v6086 = vmul.f32 %v6028, 1.442695
    %v6087 = vpow.pop %v6086
    %v6088 = vmul.f32 %v6029, 1.442695
    %v6089 = vpow.pop %v6088
    %v6090 = vmul.f32 %v6030, 1.442695
    %v6091 = vpow.pop %v6090
    %v6092 = vmul.f32 %v6031, 1.442695
    %v6093 = vpow.pop %v6092
    %v6094 = vmul.f32 %v6032, 1.442695
    %v6095 = vpow.pop %v6094
    %v6096 = vmul.f32 %v6033, 1.442695
    %v6097 = vpow.pop %v6096
    %v6098 = vld [vmem:[#allocation3] sm:$0xff]
    %v6099 = vld [vmem:[#allocation3 + $0x8] sm:$0xff]
    %v6100 = vld [vmem:[#allocation3 + $0x10] sm:$0xff]
    %v6101 = vld [vmem:[#allocation3 + $0x18] sm:$0xff]
    %v6102 = vld [vmem:[#allocation3 + $0x20] sm:$0xff]
    %v6103 = vld [vmem:[#allocation3 + $0x28] sm:$0xff]
    %v6104 = vld [vmem:[#allocation3 + $0x30] sm:$0xff]
    %v6105 = vld [vmem:[#allocation3 + $0x38] sm:$0xff]
    %v6106 = vld [vmem:[#allocation3 + $0x40] sm:$0xff]
    %v6107 = vld [vmem:[#allocation3 + $0x48] sm:$0xff]
    %v6108 = vld [vmem:[#allocation3 + $0x50] sm:$0xff]
    %v6109 = vld [vmem:[#allocation3 + $0x58] sm:$0xff]
    %v6110 = vld [vmem:[#allocation3 + $0x60] sm:$0xff]
    %v6111 = vld [vmem:[#allocation3 + $0x68] sm:$0xff]
    %v6112 = vld [vmem:[#allocation3 + $0x70] sm:$0xff]
    %v6113 = vld [vmem:[#allocation3 + $0x78] sm:$0xff]
    %v6114 = vld [vmem:[#allocation3 + $0x80] sm:$0xff]
    %v6115 = vld [vmem:[#allocation3 + $0x88] sm:$0xff]
    %v6116 = vld [vmem:[#allocation3 + $0x90] sm:$0xff]
    %v6117 = vld [vmem:[#allocation3 + $0x98] sm:$0xff]
    %v6118 = vld [vmem:[#allocation3 + $0xa0] sm:$0xff]
    %v6119 = vld [vmem:[#allocation3 + $0xa8] sm:$0xff]
    %v6120 = vld [vmem:[#allocation3 + $0xb0] sm:$0xff]
    %v6121 = vld [vmem:[#allocation3 + $0xb8] sm:$0xff]
    %v6122 = vld [vmem:[#allocation3 + $0xc0] sm:$0xff]
    %v6123 = vld [vmem:[#allocation3 + $0xc8] sm:$0xff]
    %v6124 = vld [vmem:[#allocation3 + $0xd0] sm:$0xff]
    %v6125 = vld [vmem:[#allocation3 + $0xd8] sm:$0xff]
    %v6126 = vld [vmem:[#allocation3 + $0xe0] sm:$0xff]
    %v6127 = vld [vmem:[#allocation3 + $0xe8] sm:$0xff]
    %v6128 = vld [vmem:[#allocation3 + $0xf0] sm:$0xff]
    %v6129 = vld [vmem:[#allocation3 + $0xf8] sm:$0xff]
    %v6130 = vmul.f32 %v6035, %v6098
    %v6131 = vmul.f32 %v6037, %v6099
    %v6132 = vmul.f32 %v6039, %v6100
    %v6133 = vmul.f32 %v6041, %v6101
    %v6134 = vmul.f32 %v6043, %v6102
    %v6135 = vmul.f32 %v6045, %v6103
    %v6136 = vmul.f32 %v6047, %v6104
    %v6137 = vmul.f32 %v6049, %v6105
    %v6138 = vmul.f32 %v6051, %v6106
    %v6139 = vmul.f32 %v6053, %v6107
    %v6140 = vmul.f32 %v6055, %v6108
    %v6141 = vmul.f32 %v6057, %v6109
    %v6142 = vmul.f32 %v6059, %v6110
    %v6143 = vmul.f32 %v6061, %v6111
    %v6144 = vmul.f32 %v6063, %v6112
    %v6145 = vmul.f32 %v6065, %v6113
    %v6146 = vmul.f32 %v6067, %v6114
    %v6147 = vmul.f32 %v6069, %v6115
    %v6148 = vmul.f32 %v6071, %v6116
    %v6149 = vmul.f32 %v6073, %v6117
    %v6150 = vmul.f32 %v6075, %v6118
    %v6151 = vmul.f32 %v6077, %v6119
    %v6152 = vmul.f32 %v6079, %v6120
    %v6153 = vmul.f32 %v6081, %v6121
    %v6154 = vmul.f32 %v6083, %v6122
    %v6155 = vmul.f32 %v6085, %v6123
    %v6156 = vmul.f32 %v6087, %v6124
    %v6157 = vmul.f32 %v6089, %v6125
    %v6158 = vmul.f32 %v6091, %v6126
    %v6159 = vmul.f32 %v6093, %v6127
    %v6160 = vmul.f32 %v6095, %v6128
    %v6161 = vmul.f32 %v6097, %v6129
    %v6162 = vadd.f32 %v6130, %v6131
    %v6163 = vadd.f32 %v6162, %v6132
    %v6164 = vadd.f32 %v6163, %v6133
    %v6165 = vadd.f32 %v6164, %v6134
    %v6166 = vadd.f32 %v6165, %v6135
    %v6167 = vadd.f32 %v6166, %v6136
    %v6168 = vadd.f32 %v6167, %v6137
    %v6169 = vadd.f32 %v6168, %v6138
    %v6170 = vadd.f32 %v6169, %v6139
    %v6171 = vadd.f32 %v6170, %v6140
    %v6172 = vadd.f32 %v6171, %v6141
    %v6173 = vadd.f32 %v6172, %v6142
    %v6174 = vadd.f32 %v6173, %v6143
    %v6175 = vadd.f32 %v6174, %v6144
    %v6176 = vadd.f32 %v6175, %v6145
    %v6177 = vadd.f32 %v6176, %v6146
    %v6178 = vadd.f32 %v6177, %v6147
    %v6179 = vadd.f32 %v6178, %v6148
    %v6180 = vadd.f32 %v6179, %v6149
    %v6181 = vadd.f32 %v6180, %v6150
    %v6182 = vadd.f32 %v6181, %v6151
    %v6183 = vadd.f32 %v6182, %v6152
    %v6184 = vadd.f32 %v6183, %v6153
    %v6185 = vadd.f32 %v6184, %v6154
    %v6186 = vadd.f32 %v6185, %v6155
    %v6187 = vadd.f32 %v6186, %v6156
    %v6188 = vadd.f32 %v6187, %v6157
    %v6189 = vadd.f32 %v6188, %v6158
    %v6190 = vadd.f32 %v6189, %v6159
    %v6191 = vadd.f32 %v6190, %v6160
    %v6192 = vadd.f32 %v6191, %v6161
    %v6193 = vrot.slane %v6192, 4
    %v6194 = vadd.f32 %v6192, %v6193
    %v6195 = vrot.slane %v6194, 2
    %v6196 = vadd.f32 %v6194, %v6195
    %v6197 = vrot.slane %v6196, 1
    %v6198 = vadd.f32 %v6196, %v6197
    %v6199 = vmul.f32 %v6198, 7.9788456
    %v6200 = vrsqrt.pop %v6199
    %v6201 = vmul.f32 %v6199, %v6200
    %vm6202 = vcmp.eq.f32.partialorder %v6199, inf
    %v6203 = vsel %vm6202, %v6199, %v6201
    %vm6204 = vcmp.eq.f32.partialorder %v6199, 0.0
    %v6205 = vand.u32 %v6199, 2147483648
    %v6206 = vsel %vm6204, %v6205, %v6203
    %6207 = vst [vmem:[#allocation8 + $0x13] sm:$0x1] %v6206
    %v6208 = vld [vmem:[#allocation2] sm:$0xff]
    %v6209 = vld [vmem:[#allocation2 + $0x8] sm:$0xff]
    %v6210 = vld [vmem:[#allocation2 + $0x10] sm:$0xff]
    %v6211 = vld [vmem:[#allocation2 + $0x18] sm:$0xff]
    %v6212 = vld [vmem:[#allocation2 + $0x20] sm:$0xff]
    %v6213 = vld [vmem:[#allocation2 + $0x28] sm:$0xff]
    %v6214 = vld [vmem:[#allocation2 + $0x30] sm:$0xff]
    %v6215 = vld [vmem:[#allocation2 + $0x38] sm:$0xff]
    %v6216 = vld [vmem:[#allocation2 + $0x40] sm:$0xff]
    %v6217 = vld [vmem:[#allocation2 + $0x48] sm:$0xff]
    %v6218 = vld [vmem:[#allocation2 + $0x50] sm:$0xff]
    %v6219 = vld [vmem:[#allocation2 + $0x58] sm:$0xff]
    %v6220 = vld [vmem:[#allocation2 + $0x60] sm:$0xff]
    %v6221 = vld [vmem:[#allocation2 + $0x68] sm:$0xff]
    %v6222 = vld [vmem:[#allocation2 + $0x70] sm:$0xff]
    %v6223 = vld [vmem:[#allocation2 + $0x78] sm:$0xff]
    %v6224 = vld [vmem:[#allocation2 + $0x80] sm:$0xff]
    %v6225 = vld [vmem:[#allocation2 + $0x88] sm:$0xff]
    %v6226 = vld [vmem:[#allocation2 + $0x90] sm:$0xff]
    %v6227 = vld [vmem:[#allocation2 + $0x98] sm:$0xff]
    %v6228 = vld [vmem:[#allocation2 + $0xa0] sm:$0xff]
    %v6229 = vld [vmem:[#allocation2 + $0xa8] sm:$0xff]
    %v6230 = vld [vmem:[#allocation2 + $0xb0] sm:$0xff]
    %v6231 = vld [vmem:[#allocation2 + $0xb8] sm:$0xff]
    %v6232 = vld [vmem:[#allocation2 + $0xc0] sm:$0xff]
    %v6233 = vld [vmem:[#allocation2 + $0xc8] sm:$0xff]
    %v6234 = vld [vmem:[#allocation2 + $0xd0] sm:$0xff]
    %v6235 = vld [vmem:[#allocation2 + $0xd8] sm:$0xff]
    %v6236 = vld [vmem:[#allocation2 + $0xe0] sm:$0xff]
    %v6237 = vld [vmem:[#allocation2 + $0xe8] sm:$0xff]
    %v6238 = vld [vmem:[#allocation2 + $0xf0] sm:$0xff]
    %v6239 = vld [vmem:[#allocation2 + $0xf8] sm:$0xff]
    %v6240 = vsub.f32 %v6208, -7.4048047
    %v6241 = vsub.f32 %v6209, -7.4048047
    %v6242 = vsub.f32 %v6210, -7.4048047
    %v6243 = vsub.f32 %v6211, -7.4048047
    %v6244 = vsub.f32 %v6212, -7.4048047
    %v6245 = vsub.f32 %v6213, -7.4048047
    %v6246 = vsub.f32 %v6214, -7.4048047
    %v6247 = vsub.f32 %v6215, -7.4048047
    %v6248 = vsub.f32 %v6216, -7.4048047
    %v6249 = vsub.f32 %v6217, -7.4048047
    %v6250 = vsub.f32 %v6218, -7.4048047
    %v6251 = vsub.f32 %v6219, -7.4048047
    %v6252 = vsub.f32 %v6220, -7.4048047
    %v6253 = vsub.f32 %v6221, -7.4048047
    %v6254 = vsub.f32 %v6222, -7.4048047
    %v6255 = vsub.f32 %v6223, -7.4048047
    %v6256 = vsub.f32 %v6224, -7.4048047
    %v6257 = vsub.f32 %v6225, -7.4048047
    %v6258 = vsub.f32 %v6226, -7.4048047
    %v6259 = vsub.f32 %v6227, -7.4048047
    %v6260 = vsub.f32 %v6228, -7.4048047
    %v6261 = vsub.f32 %v6229, -7.4048047
    %v6262 = vsub.f32 %v6230, -7.4048047
    %v6263 = vsub.f32 %v6231, -7.4048047
    %v6264 = vsub.f32 %v6232, -7.4048047
    %v6265 = vsub.f32 %v6233, -7.4048047
    %v6266 = vsub.f32 %v6234, -7.4048047
    %v6267 = vsub.f32 %v6235, -7.4048047
    %v6268 = vsub.f32 %v6236, -7.4048047
    %v6269 = vsub.f32 %v6237, -7.4048047
    %v6270 = vsub.f32 %v6238, -7.4048047
    %v6271 = vsub.f32 %v6239, -7.4048047
    %v6272 = vmul.f32 %v6240, %v6240
    %v6273 = vmul.f32 %v6241, %v6241
    %v6274 = vmul.f32 %v6242, %v6242
    %v6275 = vmul.f32 %v6243, %v6243
    %v6276 = vmul.f32 %v6244, %v6244
    %v6277 = vmul.f32 %v6245, %v6245
    %v6278 = vmul.f32 %v6246, %v6246
    %v6279 = vmul.f32 %v6247, %v6247
    %v6280 = vmul.f32 %v6248, %v6248
    %v6281 = vmul.f32 %v6249, %v6249
    %v6282 = vmul.f32 %v6250, %v6250
    %v6283 = vmul.f32 %v6251, %v6251
    %v6284 = vmul.f32 %v6252, %v6252
    %v6285 = vmul.f32 %v6253, %v6253
    %v6286 = vmul.f32 %v6254, %v6254
    %v6287 = vmul.f32 %v6255, %v6255
    %v6288 = vmul.f32 %v6256, %v6256
    %v6289 = vmul.f32 %v6257, %v6257
    %v6290 = vmul.f32 %v6258, %v6258
    %v6291 = vmul.f32 %v6259, %v6259
    %v6292 = vmul.f32 %v6260, %v6260
    %v6293 = vmul.f32 %v6261, %v6261
    %v6294 = vmul.f32 %v6262, %v6262
    %v6295 = vmul.f32 %v6263, %v6263
    %v6296 = vmul.f32 %v6264, %v6264
    %v6297 = vmul.f32 %v6265, %v6265
    %v6298 = vmul.f32 %v6266, %v6266
    %v6299 = vmul.f32 %v6267, %v6267
    %v6300 = vmul.f32 %v6268, %v6268
    %v6301 = vmul.f32 %v6269, %v6269
    %v6302 = vmul.f32 %v6270, %v6270
    %v6303 = vmul.f32 %v6271, %v6271
    %v6304 = vsub.f32 0.0, %v6272
    %v6305 = vsub.f32 0.0, %v6273
    %v6306 = vsub.f32 0.0, %v6274
    %v6307 = vsub.f32 0.0, %v6275
    %v6308 = vsub.f32 0.0, %v6276
    %v6309 = vsub.f32 0.0, %v6277
    %v6310 = vsub.f32 0.0, %v6278
    %v6311 = vsub.f32 0.0, %v6279
    %v6312 = vsub.f32 0.0, %v6280
    %v6313 = vsub.f32 0.0, %v6281
    %v6314 = vsub.f32 0.0, %v6282
    %v6315 = vsub.f32 0.0, %v6283
    %v6316 = vsub.f32 0.0, %v6284
    %v6317 = vsub.f32 0.0, %v6285
    %v6318 = vsub.f32 0.0, %v6286
    %v6319 = vsub.f32 0.0, %v6287
    %v6320 = vsub.f32 0.0, %v6288
    %v6321 = vsub.f32 0.0, %v6289
    %v6322 = vsub.f32 0.0, %v6290
    %v6323 = vsub.f32 0.0, %v6291
    %v6324 = vsub.f32 0.0, %v6292
    %v6325 = vsub.f32 0.0, %v6293
    %v6326 = vsub.f32 0.0, %v6294
    %v6327 = vsub.f32 0.0, %v6295
    %v6328 = vsub.f32 0.0, %v6296
    %v6329 = vsub.f32 0.0, %v6297
    %v6330 = vsub.f32 0.0, %v6298
    %v6331 = vsub.f32 0.0, %v6299
    %v6332 = vsub.f32 0.0, %v6300
    %v6333 = vsub.f32 0.0, %v6301
    %v6334 = vsub.f32 0.0, %v6302
    %v6335 = vsub.f32 0.0, %v6303
    %v6336 = vmul.f32 %v6304, 1.442695
    %v6337 = vpow.pop %v6336
    %v6338 = vmul.f32 %v6305, 1.442695
    %v6339 = vpow.pop %v6338
    %v6340 = vmul.f32 %v6306, 1.442695
    %v6341 = vpow.pop %v6340
    %v6342 = vmul.f32 %v6307, 1.442695
    %v6343 = vpow.pop %v6342
    %v6344 = vmul.f32 %v6308, 1.442695
    %v6345 = vpow.pop %v6344
    %v6346 = vmul.f32 %v6309, 1.442695
    %v6347 = vpow.pop %v6346
    %v6348 = vmul.f32 %v6310, 1.442695
    %v6349 = vpow.pop %v6348
    %v6350 = vmul.f32 %v6311, 1.442695
    %v6351 = vpow.pop %v6350
    %v6352 = vmul.f32 %v6312, 1.442695
    %v6353 = vpow.pop %v6352
    %v6354 = vmul.f32 %v6313, 1.442695
    %v6355 = vpow.pop %v6354
    %v6356 = vmul.f32 %v6314, 1.442695
    %v6357 = vpow.pop %v6356
    %v6358 = vmul.f32 %v6315, 1.442695
    %v6359 = vpow.pop %v6358
    %v6360 = vmul.f32 %v6316, 1.442695
    %v6361 = vpow.pop %v6360
    %v6362 = vmul.f32 %v6317, 1.442695
    %v6363 = vpow.pop %v6362
    %v6364 = vmul.f32 %v6318, 1.442695
    %v6365 = vpow.pop %v6364
    %v6366 = vmul.f32 %v6319, 1.442695
    %v6367 = vpow.pop %v6366
    %v6368 = vmul.f32 %v6320, 1.442695
    %v6369 = vpow.pop %v6368
    %v6370 = vmul.f32 %v6321, 1.442695
    %v6371 = vpow.pop %v6370
    %v6372 = vmul.f32 %v6322, 1.442695
    %v6373 = vpow.pop %v6372
    %v6374 = vmul.f32 %v6323, 1.442695
    %v6375 = vpow.pop %v6374
    %v6376 = vmul.f32 %v6324, 1.442695
    %v6377 = vpow.pop %v6376
    %v6378 = vmul.f32 %v6325, 1.442695
    %v6379 = vpow.pop %v6378
    %v6380 = vmul.f32 %v6326, 1.442695
    %v6381 = vpow.pop %v6380
    %v6382 = vmul.f32 %v6327, 1.442695
    %v6383 = vpow.pop %v6382
    %v6384 = vmul.f32 %v6328, 1.442695
    %v6385 = vpow.pop %v6384
    %v6386 = vmul.f32 %v6329, 1.442695
    %v6387 = vpow.pop %v6386
    %v6388 = vmul.f32 %v6330, 1.442695
    %v6389 = vpow.pop %v6388
    %v6390 = vmul.f32 %v6331, 1.442695
    %v6391 = vpow.pop %v6390
    %v6392 = vmul.f32 %v6332, 1.442695
    %v6393 = vpow.pop %v6392
    %v6394 = vmul.f32 %v6333, 1.442695
    %v6395 = vpow.pop %v6394
    %v6396 = vmul.f32 %v6334, 1.442695
    %v6397 = vpow.pop %v6396
    %v6398 = vmul.f32 %v6335, 1.442695
    %v6399 = vpow.pop %v6398
    %v6400 = vld [vmem:[#allocation3] sm:$0xff]
    %v6401 = vld [vmem:[#allocation3 + $0x8] sm:$0xff]
    %v6402 = vld [vmem:[#allocation3 + $0x10] sm:$0xff]
    %v6403 = vld [vmem:[#allocation3 + $0x18] sm:$0xff]
    %v6404 = vld [vmem:[#allocation3 + $0x20] sm:$0xff]
    %v6405 = vld [vmem:[#allocation3 + $0x28] sm:$0xff]
    %v6406 = vld [vmem:[#allocation3 + $0x30] sm:$0xff]
    %v6407 = vld [vmem:[#allocation3 + $0x38] sm:$0xff]
    %v6408 = vld [vmem:[#allocation3 + $0x40] sm:$0xff]
    %v6409 = vld [vmem:[#allocation3 + $0x48] sm:$0xff]
    %v6410 = vld [vmem:[#allocation3 + $0x50] sm:$0xff]
    %v6411 = vld [vmem:[#allocation3 + $0x58] sm:$0xff]
    %v6412 = vld [vmem:[#allocation3 + $0x60] sm:$0xff]
    %v6413 = vld [vmem:[#allocation3 + $0x68] sm:$0xff]
    %v6414 = vld [vmem:[#allocation3 + $0x70] sm:$0xff]
    %v6415 = vld [vmem:[#allocation3 + $0x78] sm:$0xff]
    %v6416 = vld [vmem:[#allocation3 + $0x80] sm:$0xff]
    %v6417 = vld [vmem:[#allocation3 + $0x88] sm:$0xff]
    %v6418 = vld [vmem:[#allocation3 + $0x90] sm:$0xff]
    %v6419 = vld [vmem:[#allocation3 + $0x98] sm:$0xff]
    %v6420 = vld [vmem:[#allocation3 + $0xa0] sm:$0xff]
    %v6421 = vld [vmem:[#allocation3 + $0xa8] sm:$0xff]
    %v6422 = vld [vmem:[#allocation3 + $0xb0] sm:$0xff]
    %v6423 = vld [vmem:[#allocation3 + $0xb8] sm:$0xff]
    %v6424 = vld [vmem:[#allocation3 + $0xc0] sm:$0xff]
    %v6425 = vld [vmem:[#allocation3 + $0xc8] sm:$0xff]
    %v6426 = vld [vmem:[#allocation3 + $0xd0] sm:$0xff]
    %v6427 = vld [vmem:[#allocation3 + $0xd8] sm:$0xff]
    %v6428 = vld [vmem:[#allocation3 + $0xe0] sm:$0xff]
    %v6429 = vld [vmem:[#allocation3 + $0xe8] sm:$0xff]
    %v6430 = vld [vmem:[#allocation3 + $0xf0] sm:$0xff]
    %v6431 = vld [vmem:[#allocation3 + $0xf8] sm:$0xff]
    %v6432 = vmul.f32 %v6337, %v6400
    %v6433 = vmul.f32 %v6339, %v6401
    %v6434 = vmul.f32 %v6341, %v6402
    %v6435 = vmul.f32 %v6343, %v6403
    %v6436 = vmul.f32 %v6345, %v6404
    %v6437 = vmul.f32 %v6347, %v6405
    %v6438 = vmul.f32 %v6349, %v6406
    %v6439 = vmul.f32 %v6351, %v6407
    %v6440 = vmul.f32 %v6353, %v6408
    %v6441 = vmul.f32 %v6355, %v6409
    %v6442 = vmul.f32 %v6357, %v6410
    %v6443 = vmul.f32 %v6359, %v6411
    %v6444 = vmul.f32 %v6361, %v6412
    %v6445 = vmul.f32 %v6363, %v6413
    %v6446 = vmul.f32 %v6365, %v6414
    %v6447 = vmul.f32 %v6367, %v6415
    %v6448 = vmul.f32 %v6369, %v6416
    %v6449 = vmul.f32 %v6371, %v6417
    %v6450 = vmul.f32 %v6373, %v6418
    %v6451 = vmul.f32 %v6375, %v6419
    %v6452 = vmul.f32 %v6377, %v6420
    %v6453 = vmul.f32 %v6379, %v6421
    %v6454 = vmul.f32 %v6381, %v6422
    %v6455 = vmul.f32 %v6383, %v6423
    %v6456 = vmul.f32 %v6385, %v6424
    %v6457 = vmul.f32 %v6387, %v6425
    %v6458 = vmul.f32 %v6389, %v6426
    %v6459 = vmul.f32 %v6391, %v6427
    %v6460 = vmul.f32 %v6393, %v6428
    %v6461 = vmul.f32 %v6395, %v6429
    %v6462 = vmul.f32 %v6397, %v6430
    %v6463 = vmul.f32 %v6399, %v6431
    %v6464 = vadd.f32 %v6432, %v6433
    %v6465 = vadd.f32 %v6464, %v6434
    %v6466 = vadd.f32 %v6465, %v6435
    %v6467 = vadd.f32 %v6466, %v6436
    %v6468 = vadd.f32 %v6467, %v6437
    %v6469 = vadd.f32 %v6468, %v6438
    %v6470 = vadd.f32 %v6469, %v6439
    %v6471 = vadd.f32 %v6470, %v6440
    %v6472 = vadd.f32 %v6471, %v6441
    %v6473 = vadd.f32 %v6472, %v6442
    %v6474 = vadd.f32 %v6473, %v6443
    %v6475 = vadd.f32 %v6474, %v6444
    %v6476 = vadd.f32 %v6475, %v6445
    %v6477 = vadd.f32 %v6476, %v6446
    %v6478 = vadd.f32 %v6477, %v6447
    %v6479 = vadd.f32 %v6478, %v6448
    %v6480 = vadd.f32 %v6479, %v6449
    %v6481 = vadd.f32 %v6480, %v6450
    %v6482 = vadd.f32 %v6481, %v6451
    %v6483 = vadd.f32 %v6482, %v6452
    %v6484 = vadd.f32 %v6483, %v6453
    %v6485 = vadd.f32 %v6484, %v6454
    %v6486 = vadd.f32 %v6485, %v6455
    %v6487 = vadd.f32 %v6486, %v6456
    %v6488 = vadd.f32 %v6487, %v6457
    %v6489 = vadd.f32 %v6488, %v6458
    %v6490 = vadd.f32 %v6489, %v6459
    %v6491 = vadd.f32 %v6490, %v6460
    %v6492 = vadd.f32 %v6491, %v6461
    %v6493 = vadd.f32 %v6492, %v6462
    %v6494 = vadd.f32 %v6493, %v6463
    %v6495 = vrot.slane %v6494, 4
    %v6496 = vadd.f32 %v6494, %v6495
    %v6497 = vrot.slane %v6496, 2
    %v6498 = vadd.f32 %v6496, %v6497
    %v6499 = vrot.slane %v6498, 1
    %v6500 = vadd.f32 %v6498, %v6499
    %v6501 = vmul.f32 %v6500, 7.9788456
    %v6502 = vrsqrt.pop %v6501
    %v6503 = vmul.f32 %v6501, %v6502
    %vm6504 = vcmp.eq.f32.partialorder %v6501, inf
    %v6505 = vsel %vm6504, %v6501, %v6503
    %vm6506 = vcmp.eq.f32.partialorder %v6501, 0.0
    %v6507 = vand.u32 %v6501, 2147483648
    %v6508 = vsel %vm6506, %v6507, %v6505
    %6509 = vst [vmem:[#allocation8 + $0x14] sm:$0x1] %v6508
    %v6510 = vld [vmem:[#allocation2] sm:$0xff]
    %v6511 = vld [vmem:[#allocation2 + $0x8] sm:$0xff]
    %v6512 = vld [vmem:[#allocation2 + $0x10] sm:$0xff]
    %v6513 = vld [vmem:[#allocation2 + $0x18] sm:$0xff]
    %v6514 = vld [vmem:[#allocation2 + $0x20] sm:$0xff]
    %v6515 = vld [vmem:[#allocation2 + $0x28] sm:$0xff]
    %v6516 = vld [vmem:[#allocation2 + $0x30] sm:$0xff]
    %v6517 = vld [vmem:[#allocation2 + $0x38] sm:$0xff]
    %v6518 = vld [vmem:[#allocation2 + $0x40] sm:$0xff]
    %v6519 = vld [vmem:[#allocation2 + $0x48] sm:$0xff]
    %v6520 = vld [vmem:[#allocation2 + $0x50] sm:$0xff]
    %v6521 = vld [vmem:[#allocation2 + $0x58] sm:$0xff]
    %v6522 = vld [vmem:[#allocation2 + $0x60] sm:$0xff]
    %v6523 = vld [vmem:[#allocation2 + $0x68] sm:$0xff]
    %v6524 = vld [vmem:[#allocation2 + $0x70] sm:$0xff]
    %v6525 = vld [vmem:[#allocation2 + $0x78] sm:$0xff]
    %v6526 = vld [vmem:[#allocation2 + $0x80] sm:$0xff]
    %v6527 = vld [vmem:[#allocation2 + $0x88] sm:$0xff]
    %v6528 = vld [vmem:[#allocation2 + $0x90] sm:$0xff]
    %v6529 = vld [vmem:[#allocation2 + $0x98] sm:$0xff]
    %v6530 = vld [vmem:[#allocation2 + $0xa0] sm:$0xff]
    %v6531 = vld [vmem:[#allocation2 + $0xa8] sm:$0xff]
    %v6532 = vld [vmem:[#allocation2 + $0xb0] sm:$0xff]
    %v6533 = vld [vmem:[#allocation2 + $0xb8] sm:$0xff]
    %v6534 = vld [vmem:[#allocation2 + $0xc0] sm:$0xff]
    %v6535 = vld [vmem:[#allocation2 + $0xc8] sm:$0xff]
    %v6536 = vld [vmem:[#allocation2 + $0xd0] sm:$0xff]
    %v6537 = vld [vmem:[#allocation2 + $0xd8] sm:$0xff]
    %v6538 = vld [vmem:[#allocation2 + $0xe0] sm:$0xff]
    %v6539 = vld [vmem:[#allocation2 + $0xe8] sm:$0xff]
    %v6540 = vld [vmem:[#allocation2 + $0xf0] sm:$0xff]
    %v6541 = vld [vmem:[#allocation2 + $0xf8] sm:$0xff]
    %v6542 = vsub.f32 %v6510, -5.5536036
    %v6543 = vsub.f32 %v6511, -5.5536036
    %v6544 = vsub.f32 %v6512, -5.5536036
    %v6545 = vsub.f32 %v6513, -5.5536036
    %v6546 = vsub.f32 %v6514, -5.5536036
    %v6547 = vsub.f32 %v6515, -5.5536036
    %v6548 = vsub.f32 %v6516, -5.5536036
    %v6549 = vsub.f32 %v6517, -5.5536036
    %v6550 = vsub.f32 %v6518, -5.5536036
    %v6551 = vsub.f32 %v6519, -5.5536036
    %v6552 = vsub.f32 %v6520, -5.5536036
    %v6553 = vsub.f32 %v6521, -5.5536036
    %v6554 = vsub.f32 %v6522, -5.5536036
    %v6555 = vsub.f32 %v6523, -5.5536036
    %v6556 = vsub.f32 %v6524, -5.5536036
    %v6557 = vsub.f32 %v6525, -5.5536036
    %v6558 = vsub.f32 %v6526, -5.5536036
    %v6559 = vsub.f32 %v6527, -5.5536036
    %v6560 = vsub.f32 %v6528, -5.5536036
    %v6561 = vsub.f32 %v6529, -5.5536036
    %v6562 = vsub.f32 %v6530, -5.5536036
    %v6563 = vsub.f32 %v6531, -5.5536036
    %v6564 = vsub.f32 %v6532, -5.5536036
    %v6565 = vsub.f32 %v6533, -5.5536036
    %v6566 = vsub.f32 %v6534, -5.5536036
    %v6567 = vsub.f32 %v6535, -5.5536036
    %v6568 = vsub.f32 %v6536, -5.5536036
    %v6569 = vsub.f32 %v6537, -5.5536036
    %v6570 = vsub.f32 %v6538, -5.5536036
    %v6571 = vsub.f32 %v6539, -5.5536036
    %v6572 = vsub.f32 %v6540, -5.5536036
    %v6573 = vsub.f32 %v6541, -5.5536036
    %v6574 = vmul.f32 %v6542, %v6542
    %v6575 = vmul.f32 %v6543, %v6543
    %v6576 = vmul.f32 %v6544, %v6544
    %v6577 = vmul.f32 %v6545, %v6545
    %v6578 = vmul.f32 %v6546, %v6546
    %v6579 = vmul.f32 %v6547, %v6547
    %v6580 = vmul.f32 %v6548, %v6548
    %v6581 = vmul.f32 %v6549, %v6549
    %v6582 = vmul.f32 %v6550, %v6550
    %v6583 = vmul.f32 %v6551, %v6551
    %v6584 = vmul.f32 %v6552, %v6552
    %v6585 = vmul.f32 %v6553, %v6553
    %v6586 = vmul.f32 %v6554, %v6554
    %v6587 = vmul.f32 %v6555, %v6555
    %v6588 = vmul.f32 %v6556, %v6556
    %v6589 = vmul.f32 %v6557, %v6557
    %v6590 = vmul.f32 %v6558, %v6558
    %v6591 = vmul.f32 %v6559, %v6559
    %v6592 = vmul.f32 %v6560, %v6560
    %v6593 = vmul.f32 %v6561, %v6561
    %v6594 = vmul.f32 %v6562, %v6562
    %v6595 = vmul.f32 %v6563, %v6563
    %v6596 = vmul.f32 %v6564, %v6564
    %v6597 = vmul.f32 %v6565, %v6565
    %v6598 = vmul.f32 %v6566, %v6566
    %v6599 = vmul.f32 %v6567, %v6567
    %v6600 = vmul.f32 %v6568, %v6568
    %v6601 = vmul.f32 %v6569, %v6569
    %v6602 = vmul.f32 %v6570, %v6570
    %v6603 = vmul.f32 %v6571, %v6571
    %v6604 = vmul.f32 %v6572, %v6572
    %v6605 = vmul.f32 %v6573, %v6573
    %v6606 = vsub.f32 0.0, %v6574
    %v6607 = vsub.f32 0.0, %v6575
    %v6608 = vsub.f32 0.0, %v6576
    %v6609 = vsub.f32 0.0, %v6577
    %v6610 = vsub.f32 0.0, %v6578
    %v6611 = vsub.f32 0.0, %v6579
    %v6612 = vsub.f32 0.0, %v6580
    %v6613 = vsub.f32 0.0, %v6581
    %v6614 = vsub.f32 0.0, %v6582
    %v6615 = vsub.f32 0.0, %v6583
    %v6616 = vsub.f32 0.0, %v6584
    %v6617 = vsub.f32 0.0, %v6585
    %v6618 = vsub.f32 0.0, %v6586
    %v6619 = vsub.f32 0.0, %v6587
    %v6620 = vsub.f32 0.0, %v6588
    %v6621 = vsub.f32 0.0, %v6589
    %v6622 = vsub.f32 0.0, %v6590
    %v6623 = vsub.f32 0.0, %v6591
    %v6624 = vsub.f32 0.0, %v6592
    %v6625 = vsub.f32 0.0, %v6593
    %v6626 = vsub.f32 0.0, %v6594
    %v6627 = vsub.f32 0.0, %v6595
    %v6628 = vsub.f32 0.0, %v6596
    %v6629 = vsub.f32 0.0, %v6597
    %v6630 = vsub.f32 0.0, %v6598
    %v6631 = vsub.f32 0.0, %v6599
    %v6632 = vsub.f32 0.0, %v6600
    %v6633 = vsub.f32 0.0, %v6601
    %v6634 = vsub.f32 0.0, %v6602
    %v6635 = vsub.f32 0.0, %v6603
    %v6636 = vsub.f32 0.0, %v6604
    %v6637 = vsub.f32 0.0, %v6605
    %v6638 = vmul.f32 %v6606, 1.442695
    %v6639 = vpow.pop %v6638
    %v6640 = vmul.f32 %v6607, 1.442695
    %v6641 = vpow.pop %v6640
    %v6642 = vmul.f32 %v6608, 1.442695
    %v6643 = vpow.pop %v6642
    %v6644 = vmul.f32 %v6609, 1.442695
    %v6645 = vpow.pop %v6644
    %v6646 = vmul.f32 %v6610, 1.442695
    %v6647 = vpow.pop %v6646
    %v6648 = vmul.f32 %v6611, 1.442695
    %v6649 = vpow.pop %v6648
    %v6650 = vmul.f32 %v6612, 1.442695
    %v6651 = vpow.pop %v6650
    %v6652 = vmul.f32 %v6613, 1.442695
    %v6653 = vpow.pop %v6652
    %v6654 = vmul.f32 %v6614, 1.442695
    %v6655 = vpow.pop %v6654
    %v6656 = vmul.f32 %v6615, 1.442695
    %v6657 = vpow.pop %v6656
    %v6658 = vmul.f32 %v6616, 1.442695
    %v6659 = vpow.pop %v6658
    %v6660 = vmul.f32 %v6617, 1.442695
    %v6661 = vpow.pop %v6660
    %v6662 = vmul.f32 %v6618, 1.442695
    %v6663 = vpow.pop %v6662
    %v6664 = vmul.f32 %v6619, 1.442695
    %v6665 = vpow.pop %v6664
    %v6666 = vmul.f32 %v6620, 1.442695
    %v6667 = vpow.pop %v6666
    %v6668 = vmul.f32 %v6621, 1.442695
    %v6669 = vpow.pop %v6668
    %v6670 = vmul.f32 %v6622, 1.442695
    %v6671 = vpow.pop %v6670
    %v6672 = vmul.f32 %v6623, 1.442695
    %v6673 = vpow.pop %v6672
    %v6674 = vmul.f32 %v6624, 1.442695
    %v6675 = vpow.pop %v6674
    %v6676 = vmul.f32 %v6625, 1.442695
    %v6677 = vpow.pop %v6676
    %v6678 = vmul.f32 %v6626, 1.442695
    %v6679 = vpow.pop %v6678
    %v6680 = vmul.f32 %v6627, 1.442695
    %v6681 = vpow.pop %v6680
    %v6682 = vmul.f32 %v6628, 1.442695
    %v6683 = vpow.pop %v6682
    %v6684 = vmul.f32 %v6629, 1.442695
    %v6685 = vpow.pop %v6684
    %v6686 = vmul.f32 %v6630, 1.442695
    %v6687 = vpow.pop %v6686
    %v6688 = vmul.f32 %v6631, 1.442695
    %v6689 = vpow.pop %v6688
    %v6690 = vmul.f32 %v6632, 1.442695
    %v6691 = vpow.pop %v6690
    %v6692 = vmul.f32 %v6633, 1.442695
    %v6693 = vpow.pop %v6692
    %v6694 = vmul.f32 %v6634, 1.442695
    %v6695 = vpow.pop %v6694
    %v6696 = vmul.f32 %v6635, 1.442695
    %v6697 = vpow.pop %v6696
    %v6698 = vmul.f32 %v6636, 1.442695
    %v6699 = vpow.pop %v6698
    %v6700 = vmul.f32 %v6637, 1.442695
    %v6701 = vpow.pop %v6700
    %v6702 = vld [vmem:[#allocation3] sm:$0xff]
    %v6703 = vld [vmem:[#allocation3 + $0x8] sm:$0xff]
    %v6704 = vld [vmem:[#allocation3 + $0x10] sm:$0xff]
    %v6705 = vld [vmem:[#allocation3 + $0x18] sm:$0xff]
    %v6706 = vld [vmem:[#allocation3 + $0x20] sm:$0xff]
    %v6707 = vld [vmem:[#allocation3 + $0x28] sm:$0xff]
    %v6708 = vld [vmem:[#allocation3 + $0x30] sm:$0xff]
    %v6709 = vld [vmem:[#allocation3 + $0x38] sm:$0xff]
    %v6710 = vld [vmem:[#allocation3 + $0x40] sm:$0xff]
    %v6711 = vld [vmem:[#allocation3 + $0x48] sm:$0xff]
    %v6712 = vld [vmem:[#allocation3 + $0x50] sm:$0xff]
    %v6713 = vld [vmem:[#allocation3 + $0x58] sm:$0xff]
    %v6714 = vld [vmem:[#allocation3 + $0x60] sm:$0xff]
    %v6715 = vld [vmem:[#allocation3 + $0x68] sm:$0xff]
    %v6716 = vld [vmem:[#allocation3 + $0x70] sm:$0xff]
    %v6717 = vld [vmem:[#allocation3 + $0x78] sm:$0xff]
    %v6718 = vld [vmem:[#allocation3 + $0x80] sm:$0xff]
    %v6719 = vld [vmem:[#allocation3 + $0x88] sm:$0xff]
    %v6720 = vld [vmem:[#allocation3 + $0x90] sm:$0xff]
    %v6721 = vld [vmem:[#allocation3 + $0x98] sm:$0xff]
    %v6722 = vld [vmem:[#allocation3 + $0xa0] sm:$0xff]
    %v6723 = vld [vmem:[#allocation3 + $0xa8] sm:$0xff]
    %v6724 = vld [vmem:[#allocation3 + $0xb0] sm:$0xff]
    %v6725 = vld [vmem:[#allocation3 + $0xb8] sm:$0xff]
    %v6726 = vld [vmem:[#allocation3 + $0xc0] sm:$0xff]
    %v6727 = vld [vmem:[#allocation3 + $0xc8] sm:$0xff]
    %v6728 = vld [vmem:[#allocation3 + $0xd0] sm:$0xff]
    %v6729 = vld [vmem:[#allocation3 + $0xd8] sm:$0xff]
    %v6730 = vld [vmem:[#allocation3 + $0xe0] sm:$0xff]
    %v6731 = vld [vmem:[#allocation3 + $0xe8] sm:$0xff]
    %v6732 = vld [vmem:[#allocation3 + $0xf0] sm:$0xff]
    %v6733 = vld [vmem:[#allocation3 + $0xf8] sm:$0xff]
    %v6734 = vmul.f32 %v6639, %v6702
    %v6735 = vmul.f32 %v6641, %v6703
    %v6736 = vmul.f32 %v6643, %v6704
    %v6737 = vmul.f32 %v6645, %v6705
    %v6738 = vmul.f32 %v6647, %v6706
    %v6739 = vmul.f32 %v6649, %v6707
    %v6740 = vmul.f32 %v6651, %v6708
    %v6741 = vmul.f32 %v6653, %v6709
    %v6742 = vmul.f32 %v6655, %v6710
    %v6743 = vmul.f32 %v6657, %v6711
    %v6744 = vmul.f32 %v6659, %v6712
    %v6745 = vmul.f32 %v6661, %v6713
    %v6746 = vmul.f32 %v6663, %v6714
    %v6747 = vmul.f32 %v6665, %v6715
    %v6748 = vmul.f32 %v6667, %v6716
    %v6749 = vmul.f32 %v6669, %v6717
    %v6750 = vmul.f32 %v6671, %v6718
    %v6751 = vmul.f32 %v6673, %v6719
    %v6752 = vmul.f32 %v6675, %v6720
    %v6753 = vmul.f32 %v6677, %v6721
    %v6754 = vmul.f32 %v6679, %v6722
    %v6755 = vmul.f32 %v6681, %v6723
    %v6756 = vmul.f32 %v6683, %v6724
    %v6757 = vmul.f32 %v6685, %v6725
    %v6758 = vmul.f32 %v6687, %v6726
    %v6759 = vmul.f32 %v6689, %v6727
    %v6760 = vmul.f32 %v6691, %v6728
    %v6761 = vmul.f32 %v6693, %v6729
    %v6762 = vmul.f32 %v6695, %v6730
    %v6763 = vmul.f32 %v6697, %v6731
    %v6764 = vmul.f32 %v6699, %v6732
    %v6765 = vmul.f32 %v6701, %v6733
    %v6766 = vadd.f32 %v6734, %v6735
    %v6767 = vadd.f32 %v6766, %v6736
    %v6768 = vadd.f32 %v6767, %v6737
    %v6769 = vadd.f32 %v6768, %v6738
    %v6770 = vadd.f32 %v6769, %v6739
    %v6771 = vadd.f32 %v6770, %v6740
    %v6772 = vadd.f32 %v6771, %v6741
    %v6773 = vadd.f32 %v6772, %v6742
    %v6774 = vadd.f32 %v6773, %v6743
    %v6775 = vadd.f32 %v6774, %v6744
    %v6776 = vadd.f32 %v6775, %v6745
    %v6777 = vadd.f32 %v6776, %v6746
    %v6778 = vadd.f32 %v6777, %v6747
    %v6779 = vadd.f32 %v6778, %v6748
    %v6780 = vadd.f32 %v6779, %v6749
    %v6781 = vadd.f32 %v6780, %v6750
    %v6782 = vadd.f32 %v6781, %v6751
    %v6783 = vadd.f32 %v6782, %v6752
    %v6784 = vadd.f32 %v6783, %v6753
    %v6785 = vadd.f32 %v6784, %v6754
    %v6786 = vadd.f32 %v6785, %v6755
    %v6787 = vadd.f32 %v6786, %v6756
    %v6788 = vadd.f32 %v6787, %v6757
    %v6789 = vadd.f32 %v6788, %v6758
    %v6790 = vadd.f32 %v6789, %v6759
    %v6791 = vadd.f32 %v6790, %v6760
    %v6792 = vadd.f32 %v6791, %v6761
    %v6793 = vadd.f32 %v6792, %v6762
    %v6794 = vadd.f32 %v6793, %v6763
    %v6795 = vadd.f32 %v6794, %v6764
    %v6796 = vadd.f32 %v6795, %v6765
    %v6797 = vrot.slane %v6796, 4
    %v6798 = vadd.f32 %v6796, %v6797
    %v6799 = vrot.slane %v6798, 2
    %v6800 = vadd.f32 %v6798, %v6799
    %v6801 = vrot.slane %v6800, 1
    %v6802 = vadd.f32 %v6800, %v6801
    %v6803 = vmul.f32 %v6802, 7.9788456
    %v6804 = vrsqrt.pop %v6803
    %v6805 = vmul.f32 %v6803, %v6804
    %vm6806 = vcmp.eq.f32.partialorder %v6803, inf
    %v6807 = vsel %vm6806, %v6803, %v6805
    %vm6808 = vcmp.eq.f32.partialorder %v6803, 0.0
    %v6809 = vand.u32 %v6803, 2147483648
    %v6810 = vsel %vm6808, %v6809, %v6807
    %6811 = vst [vmem:[#allocation8 + $0x15] sm:$0x1] %v6810
    %v6812 = vld [vmem:[#allocation2] sm:$0xff]
    %v6813 = vld [vmem:[#allocation2 + $0x8] sm:$0xff]
    %v6814 = vld [vmem:[#allocation2 + $0x10] sm:$0xff]
    %v6815 = vld [vmem:[#allocation2 + $0x18] sm:$0xff]
    %v6816 = vld [vmem:[#allocation2 + $0x20] sm:$0xff]
    %v6817 = vld [vmem:[#allocation2 + $0x28] sm:$0xff]
    %v6818 = vld [vmem:[#allocation2 + $0x30] sm:$0xff]
    %v6819 = vld [vmem:[#allocation2 + $0x38] sm:$0xff]
    %v6820 = vld [vmem:[#allocation2 + $0x40] sm:$0xff]
    %v6821 = vld [vmem:[#allocation2 + $0x48] sm:$0xff]
    %v6822 = vld [vmem:[#allocation2 + $0x50] sm:$0xff]
    %v6823 = vld [vmem:[#allocation2 + $0x58] sm:$0xff]
    %v6824 = vld [vmem:[#allocation2 + $0x60] sm:$0xff]
    %v6825 = vld [vmem:[#allocation2 + $0x68] sm:$0xff]
    %v6826 = vld [vmem:[#allocation2 + $0x70] sm:$0xff]
    %v6827 = vld [vmem:[#allocation2 + $0x78] sm:$0xff]
    %v6828 = vld [vmem:[#allocation2 + $0x80] sm:$0xff]
    %v6829 = vld [vmem:[#allocation2 + $0x88] sm:$0xff]
    %v6830 = vld [vmem:[#allocation2 + $0x90] sm:$0xff]
    %v6831 = vld [vmem:[#allocation2 + $0x98] sm:$0xff]
    %v6832 = vld [vmem:[#allocation2 + $0xa0] sm:$0xff]
    %v6833 = vld [vmem:[#allocation2 + $0xa8] sm:$0xff]
    %v6834 = vld [vmem:[#allocation2 + $0xb0] sm:$0xff]
    %v6835 = vld [vmem:[#allocation2 + $0xb8] sm:$0xff]
    %v6836 = vld [vmem:[#allocation2 + $0xc0] sm:$0xff]
    %v6837 = vld [vmem:[#allocation2 + $0xc8] sm:$0xff]
    %v6838 = vld [vmem:[#allocation2 + $0xd0] sm:$0xff]
    %v6839 = vld [vmem:[#allocation2 + $0xd8] sm:$0xff]
    %v6840 = vld [vmem:[#allocation2 + $0xe0] sm:$0xff]
    %v6841 = vld [vmem:[#allocation2 + $0xe8] sm:$0xff]
    %v6842 = vld [vmem:[#allocation2 + $0xf0] sm:$0xff]
    %v6843 = vld [vmem:[#allocation2 + $0xf8] sm:$0xff]
    %v6844 = vsub.f32 %v6812, -3.7024024
    %v6845 = vsub.f32 %v6813, -3.7024024
    %v6846 = vsub.f32 %v6814, -3.7024024
    %v6847 = vsub.f32 %v6815, -3.7024024
    %v6848 = vsub.f32 %v6816, -3.7024024
    %v6849 = vsub.f32 %v6817, -3.7024024
    %v6850 = vsub.f32 %v6818, -3.7024024
    %v6851 = vsub.f32 %v6819, -3.7024024
    %v6852 = vsub.f32 %v6820, -3.7024024
    %v6853 = vsub.f32 %v6821, -3.7024024
    %v6854 = vsub.f32 %v6822, -3.7024024
    %v6855 = vsub.f32 %v6823, -3.7024024
    %v6856 = vsub.f32 %v6824, -3.7024024
    %v6857 = vsub.f32 %v6825, -3.7024024
    %v6858 = vsub.f32 %v6826, -3.7024024
    %v6859 = vsub.f32 %v6827, -3.7024024
    %v6860 = vsub.f32 %v6828, -3.7024024
    %v6861 = vsub.f32 %v6829, -3.7024024
    %v6862 = vsub.f32 %v6830, -3.7024024
    %v6863 = vsub.f32 %v6831, -3.7024024
    %v6864 = vsub.f32 %v6832, -3.7024024
    %v6865 = vsub.f32 %v6833, -3.7024024
    %v6866 = vsub.f32 %v6834, -3.7024024
    %v6867 = vsub.f32 %v6835, -3.7024024
    %v6868 = vsub.f32 %v6836, -3.7024024
    %v6869 = vsub.f32 %v6837, -3.7024024
    %v6870 = vsub.f32 %v6838, -3.7024024
    %v6871 = vsub.f32 %v6839, -3.7024024
    %v6872 = vsub.f32 %v6840, -3.7024024
    %v6873 = vsub.f32 %v6841, -3.7024024
    %v6874 = vsub.f32 %v6842, -3.7024024
    %v6875 = vsub.f32 %v6843, -3.7024024
    %v6876 = vmul.f32 %v6844, %v6844
    %v6877 = vmul.f32 %v6845, %v6845
    %v6878 = vmul.f32 %v6846, %v6846
    %v6879 = vmul.f32 %v6847, %v6847
    %v6880 = vmul.f32 %v6848, %v6848
    %v6881 = vmul.f32 %v6849, %v6849
    %v6882 = vmul.f32 %v6850, %v6850
    %v6883 = vmul.f32 %v6851, %v6851
    %v6884 = vmul.f32 %v6852, %v6852
    %v6885 = vmul.f32 %v6853, %v6853
    %v6886 = vmul.f32 %v6854, %v6854
    %v6887 = vmul.f32 %v6855, %v6855
    %v6888 = vmul.f32 %v6856, %v6856
    %v6889 = vmul.f32 %v6857, %v6857
    %v6890 = vmul.f32 %v6858, %v6858
    %v6891 = vmul.f32 %v6859, %v6859
    %v6892 = vmul.f32 %v6860, %v6860
    %v6893 = vmul.f32 %v6861, %v6861
    %v6894 = vmul.f32 %v6862, %v6862
    %v6895 = vmul.f32 %v6863, %v6863
    %v6896 = vmul.f32 %v6864, %v6864
    %v6897 = vmul.f32 %v6865, %v6865
    %v6898 = vmul.f32 %v6866, %v6866
    %v6899 = vmul.f32 %v6867, %v6867
    %v6900 = vmul.f32 %v6868, %v6868
    %v6901 = vmul.f32 %v6869, %v6869
    %v6902 = vmul.f32 %v6870, %v6870
    %v6903 = vmul.f32 %v6871, %v6871
    %v6904 = vmul.f32 %v6872, %v6872
    %v6905 = vmul.f32 %v6873, %v6873
    %v6906 = vmul.f32 %v6874, %v6874
    %v6907 = vmul.f32 %v6875, %v6875
    %v6908 = vsub.f32 0.0, %v6876
    %v6909 = vsub.f32 0.0, %v6877
    %v6910 = vsub.f32 0.0, %v6878
    %v6911 = vsub.f32 0.0, %v6879
    %v6912 = vsub.f32 0.0, %v6880
    %v6913 = vsub.f32 0.0, %v6881
    %v6914 = vsub.f32 0.0, %v6882
    %v6915 = vsub.f32 0.0, %v6883
    %v6916 = vsub.f32 0.0, %v6884
    %v6917 = vsub.f32 0.0, %v6885
    %v6918 = vsub.f32 0.0, %v6886
    %v6919 = vsub.f32 0.0, %v6887
    %v6920 = vsub.f32 0.0, %v6888
    %v6921 = vsub.f32 0.0, %v6889
    %v6922 = vsub.f32 0.0, %v6890
    %v6923 = vsub.f32 0.0, %v6891
    %v6924 = vsub.f32 0.0, %v6892
    %v6925 = vsub.f32 0.0, %v6893
    %v6926 = vsub.f32 0.0, %v6894
    %v6927 = vsub.f32 0.0, %v6895
    %v6928 = vsub.f32 0.0, %v6896
    %v6929 = vsub.f32 0.0, %v6897
    %v6930 = vsub.f32 0.0, %v6898
    %v6931 = vsub.f32 0.0, %v6899
    %v6932 = vsub.f32 0.0, %v6900
    %v6933 = vsub.f32 0.0, %v6901
    %v6934 = vsub.f32 0.0, %v6902
    %v6935 = vsub.f32 0.0, %v6903
    %v6936 = vsub.f32 0.0, %v6904
    %v6937 = vsub.f32 0.0, %v6905
    %v6938 = vsub.f32 0.0, %v6906
    %v6939 = vsub.f32 0.0, %v6907
    %v6940 = vmul.f32 %v6908, 1.442695
    %v6941 = vpow.pop %v6940
    %v6942 = vmul.f32 %v6909, 1.442695
    %v6943 = vpow.pop %v6942
    %v6944 = vmul.f32 %v6910, 1.442695
    %v6945 = vpow.pop %v6944
    %v6946 = vmul.f32 %v6911, 1.442695
    %v6947 = vpow.pop %v6946
    %v6948 = vmul.f32 %v6912, 1.442695
    %v6949 = vpow.pop %v6948
    %v6950 = vmul.f32 %v6913, 1.442695
    %v6951 = vpow.pop %v6950
    %v6952 = vmul.f32 %v6914, 1.442695
    %v6953 = vpow.pop %v6952
    %v6954 = vmul.f32 %v6915, 1.442695
    %v6955 = vpow.pop %v6954
    %v6956 = vmul.f32 %v6916, 1.442695
    %v6957 = vpow.pop %v6956
    %v6958 = vmul.f32 %v6917, 1.442695
    %v6959 = vpow.pop %v6958
    %v6960 = vmul.f32 %v6918, 1.442695
    %v6961 = vpow.pop %v6960
    %v6962 = vmul.f32 %v6919, 1.442695
    %v6963 = vpow.pop %v6962
    %v6964 = vmul.f32 %v6920, 1.442695
    %v6965 = vpow.pop %v6964
    %v6966 = vmul.f32 %v6921, 1.442695
    %v6967 = vpow.pop %v6966
    %v6968 = vmul.f32 %v6922, 1.442695
    %v6969 = vpow.pop %v6968
    %v6970 = vmul.f32 %v6923, 1.442695
    %v6971 = vpow.pop %v6970
    %v6972 = vmul.f32 %v6924, 1.442695
    %v6973 = vpow.pop %v6972
    %v6974 = vmul.f32 %v6925, 1.442695
    %v6975 = vpow.pop %v6974
    %v6976 = vmul.f32 %v6926, 1.442695
    %v6977 = vpow.pop %v6976
    %v6978 = vmul.f32 %v6927, 1.442695
    %v6979 = vpow.pop %v6978
    %v6980 = vmul.f32 %v6928, 1.442695
    %v6981 = vpow.pop %v6980
    %v6982 = vmul.f32 %v6929, 1.442695
    %v6983 = vpow.pop %v6982
    %v6984 = vmul.f32 %v6930, 1.442695
    %v6985 = vpow.pop %v6984
    %v6986 = vmul.f32 %v6931, 1.442695
    %v6987 = vpow.pop %v6986
    %v6988 = vmul.f32 %v6932, 1.442695
    %v6989 = vpow.pop %v6988
    %v6990 = vmul.f32 %v6933, 1.442695
    %v6991 = vpow.pop %v6990
    %v6992 = vmul.f32 %v6934, 1.442695
    %v6993 = vpow.pop %v6992
    %v6994 = vmul.f32 %v6935, 1.442695
    %v6995 = vpow.pop %v6994
    %v6996 = vmul.f32 %v6936, 1.442695
    %v6997 = vpow.pop %v6996
    %v6998 = vmul.f32 %v6937, 1.442695
    %v6999 = vpow.pop %v6998
    %v7000 = vmul.f32 %v6938, 1.442695
    %v7001 = vpow.pop %v7000
    %v7002 = vmul.f32 %v6939, 1.442695
    %v7003 = vpow.pop %v7002
    %v7004 = vld [vmem:[#allocation3] sm:$0xff]
    %v7005 = vld [vmem:[#allocation3 + $0x8] sm:$0xff]
    %v7006 = vld [vmem:[#allocation3 + $0x10] sm:$0xff]
    %v7007 = vld [vmem:[#allocation3 + $0x18] sm:$0xff]
    %v7008 = vld [vmem:[#allocation3 + $0x20] sm:$0xff]
    %v7009 = vld [vmem:[#allocation3 + $0x28] sm:$0xff]
    %v7010 = vld [vmem:[#allocation3 + $0x30] sm:$0xff]
    %v7011 = vld [vmem:[#allocation3 + $0x38] sm:$0xff]
    %v7012 = vld [vmem:[#allocation3 + $0x40] sm:$0xff]
    %v7013 = vld [vmem:[#allocation3 + $0x48] sm:$0xff]
    %v7014 = vld [vmem:[#allocation3 + $0x50] sm:$0xff]
    %v7015 = vld [vmem:[#allocation3 + $0x58] sm:$0xff]
    %v7016 = vld [vmem:[#allocation3 + $0x60] sm:$0xff]
    %v7017 = vld [vmem:[#allocation3 + $0x68] sm:$0xff]
    %v7018 = vld [vmem:[#allocation3 + $0x70] sm:$0xff]
    %v7019 = vld [vmem:[#allocation3 + $0x78] sm:$0xff]
    %v7020 = vld [vmem:[#allocation3 + $0x80] sm:$0xff]
    %v7021 = vld [vmem:[#allocation3 + $0x88] sm:$0xff]
    %v7022 = vld [vmem:[#allocation3 + $0x90] sm:$0xff]
    %v7023 = vld [vmem:[#allocation3 + $0x98] sm:$0xff]
    %v7024 = vld [vmem:[#allocation3 + $0xa0] sm:$0xff]
    %v7025 = vld [vmem:[#allocation3 + $0xa8] sm:$0xff]
    %v7026 = vld [vmem:[#allocation3 + $0xb0] sm:$0xff]
    %v7027 = vld [vmem:[#allocation3 + $0xb8] sm:$0xff]
    %v7028 = vld [vmem:[#allocation3 + $0xc0] sm:$0xff]
    %v7029 = vld [vmem:[#allocation3 + $0xc8] sm:$0xff]
    %v7030 = vld [vmem:[#allocation3 + $0xd0] sm:$0xff]
    %v7031 = vld [vmem:[#allocation3 + $0xd8] sm:$0xff]
    %v7032 = vld [vmem:[#allocation3 + $0xe0] sm:$0xff]
    %v7033 = vld [vmem:[#allocation3 + $0xe8] sm:$0xff]
    %v7034 = vld [vmem:[#allocation3 + $0xf0] sm:$0xff]
    %v7035 = vld [vmem:[#allocation3 + $0xf8] sm:$0xff]
    %v7036 = vmul.f32 %v6941, %v7004
    %v7037 = vmul.f32 %v6943, %v7005
    %v7038 = vmul.f32 %v6945, %v7006
    %v7039 = vmul.f32 %v6947, %v7007
    %v7040 = vmul.f32 %v6949, %v7008
    %v7041 = vmul.f32 %v6951, %v7009
    %v7042 = vmul.f32 %v6953, %v7010
    %v7043 = vmul.f32 %v6955, %v7011
    %v7044 = vmul.f32 %v6957, %v7012
    %v7045 = vmul.f32 %v6959, %v7013
    %v7046 = vmul.f32 %v6961, %v7014
    %v7047 = vmul.f32 %v6963, %v7015
    %v7048 = vmul.f32 %v6965, %v7016
    %v7049 = vmul.f32 %v6967, %v7017
    %v7050 = vmul.f32 %v6969, %v7018
    %v7051 = vmul.f32 %v6971, %v7019
    %v7052 = vmul.f32 %v6973, %v7020
    %v7053 = vmul.f32 %v6975, %v7021
    %v7054 = vmul.f32 %v6977, %v7022
    %v7055 = vmul.f32 %v6979, %v7023
    %v7056 = vmul.f32 %v6981, %v7024
    %v7057 = vmul.f32 %v6983, %v7025
    %v7058 = vmul.f32 %v6985, %v7026
    %v7059 = vmul.f32 %v6987, %v7027
    %v7060 = vmul.f32 %v6989, %v7028
    %v7061 = vmul.f32 %v6991, %v7029
    %v7062 = vmul.f32 %v6993, %v7030
    %v7063 = vmul.f32 %v6995, %v7031
    %v7064 = vmul.f32 %v6997, %v7032
    %v7065 = vmul.f32 %v6999, %v7033
    %v7066 = vmul.f32 %v7001, %v7034
    %v7067 = vmul.f32 %v7003, %v7035
    %v7068 = vadd.f32 %v7036, %v7037
    %v7069 = vadd.f32 %v7068, %v7038
    %v7070 = vadd.f32 %v7069, %v7039
    %v7071 = vadd.f32 %v7070, %v7040
    %v7072 = vadd.f32 %v7071, %v7041
    %v7073 = vadd.f32 %v7072, %v7042
    %v7074 = vadd.f32 %v7073, %v7043
    %v7075 = vadd.f32 %v7074, %v7044
    %v7076 = vadd.f32 %v7075, %v7045
    %v7077 = vadd.f32 %v7076, %v7046
    %v7078 = vadd.f32 %v7077, %v7047
    %v7079 = vadd.f32 %v7078, %v7048
    %v7080 = vadd.f32 %v7079, %v7049
    %v7081 = vadd.f32 %v7080, %v7050
    %v7082 = vadd.f32 %v7081, %v7051
    %v7083 = vadd.f32 %v7082, %v7052
    %v7084 = vadd.f32 %v7083, %v7053
    %v7085 = vadd.f32 %v7084, %v7054
    %v7086 = vadd.f32 %v7085, %v7055
    %v7087 = vadd.f32 %v7086, %v7056
    %v7088 = vadd.f32 %v7087, %v7057
    %v7089 = vadd.f32 %v7088, %v7058
    %v7090 = vadd.f32 %v7089, %v7059
    %v7091 = vadd.f32 %v7090, %v7060
    %v7092 = vadd.f32 %v7091, %v7061
    %v7093 = vadd.f32 %v7092, %v7062
    %v7094 = vadd.f32 %v7093, %v7063
    %v7095 = vadd.f32 %v7094, %v7064
    %v7096 = vadd.f32 %v7095, %v7065
    %v7097 = vadd.f32 %v7096, %v7066
    %v7098 = vadd.f32 %v7097, %v7067
    %v7099 = vrot.slane %v7098, 4
    %v7100 = vadd.f32 %v7098, %v7099
    %v7101 = vrot.slane %v7100, 2
    %v7102 = vadd.f32 %v7100, %v7101
    %v7103 = vrot.slane %v7102, 1
    %v7104 = vadd.f32 %v7102, %v7103
    %v7105 = vmul.f32 %v7104, 7.9788456
    %v7106 = vrsqrt.pop %v7105
    %v7107 = vmul.f32 %v7105, %v7106
    %vm7108 = vcmp.eq.f32.partialorder %v7105, inf
    %v7109 = vsel %vm7108, %v7105, %v7107
    %vm7110 = vcmp.eq.f32.partialorder %v7105, 0.0
    %v7111 = vand.u32 %v7105, 2147483648
    %v7112 = vsel %vm7110, %v7111, %v7109
    %7113 = vst [vmem:[#allocation8 + $0x16] sm:$0x1] %v7112
    %v7114 = vld [vmem:[#allocation2] sm:$0xff]
    %v7115 = vld [vmem:[#allocation2 + $0x8] sm:$0xff]
    %v7116 = vld [vmem:[#allocation2 + $0x10] sm:$0xff]
    %v7117 = vld [vmem:[#allocation2 + $0x18] sm:$0xff]
    %v7118 = vld [vmem:[#allocation2 + $0x20] sm:$0xff]
    %v7119 = vld [vmem:[#allocation2 + $0x28] sm:$0xff]
    %v7120 = vld [vmem:[#allocation2 + $0x30] sm:$0xff]
    %v7121 = vld [vmem:[#allocation2 + $0x38] sm:$0xff]
    %v7122 = vld [vmem:[#allocation2 + $0x40] sm:$0xff]
    %v7123 = vld [vmem:[#allocation2 + $0x48] sm:$0xff]
    %v7124 = vld [vmem:[#allocation2 + $0x50] sm:$0xff]
    %v7125 = vld [vmem:[#allocation2 + $0x58] sm:$0xff]
    %v7126 = vld [vmem:[#allocation2 + $0x60] sm:$0xff]
    %v7127 = vld [vmem:[#allocation2 + $0x68] sm:$0xff]
    %v7128 = vld [vmem:[#allocation2 + $0x70] sm:$0xff]
    %v7129 = vld [vmem:[#allocation2 + $0x78] sm:$0xff]
    %v7130 = vld [vmem:[#allocation2 + $0x80] sm:$0xff]
    %v7131 = vld [vmem:[#allocation2 + $0x88] sm:$0xff]
    %v7132 = vld [vmem:[#allocation2 + $0x90] sm:$0xff]
    %v7133 = vld [vmem:[#allocation2 + $0x98] sm:$0xff]
    %v7134 = vld [vmem:[#allocation2 + $0xa0] sm:$0xff]
    %v7135 = vld [vmem:[#allocation2 + $0xa8] sm:$0xff]
    %v7136 = vld [vmem:[#allocation2 + $0xb0] sm:$0xff]
    %v7137 = vld [vmem:[#allocation2 + $0xb8] sm:$0xff]
    %v7138 = vld [vmem:[#allocation2 + $0xc0] sm:$0xff]
    %v7139 = vld [vmem:[#allocation2 + $0xc8] sm:$0xff]
    %v7140 = vld [vmem:[#allocation2 + $0xd0] sm:$0xff]
    %v7141 = vld [vmem:[#allocation2 + $0xd8] sm:$0xff]
    %v7142 = vld [vmem:[#allocation2 + $0xe0] sm:$0xff]
    %v7143 = vld [vmem:[#allocation2 + $0xe8] sm:$0xff]
    %v7144 = vld [vmem:[#allocation2 + $0xf0] sm:$0xff]
    %v7145 = vld [vmem:[#allocation2 + $0xf8] sm:$0xff]
    %v7146 = vsub.f32 %v7114, -1.8512012
    %v7147 = vsub.f32 %v7115, -1.8512012
    %v7148 = vsub.f32 %v7116, -1.8512012
    %v7149 = vsub.f32 %v7117, -1.8512012
    %v7150 = vsub.f32 %v7118, -1.8512012
    %v7151 = vsub.f32 %v7119, -1.8512012
    %v7152 = vsub.f32 %v7120, -1.8512012
    %v7153 = vsub.f32 %v7121, -1.8512012
    %v7154 = vsub.f32 %v7122, -1.8512012
    %v7155 = vsub.f32 %v7123, -1.8512012
    %v7156 = vsub.f32 %v7124, -1.8512012
    %v7157 = vsub.f32 %v7125, -1.8512012
    %v7158 = vsub.f32 %v7126, -1.8512012
    %v7159 = vsub.f32 %v7127, -1.8512012
    %v7160 = vsub.f32 %v7128, -1.8512012
    %v7161 = vsub.f32 %v7129, -1.8512012
    %v7162 = vsub.f32 %v7130, -1.8512012
    %v7163 = vsub.f32 %v7131, -1.8512012
    %v7164 = vsub.f32 %v7132, -1.8512012
    %v7165 = vsub.f32 %v7133, -1.8512012
    %v7166 = vsub.f32 %v7134, -1.8512012
    %v7167 = vsub.f32 %v7135, -1.8512012
    %v7168 = vsub.f32 %v7136, -1.8512012
    %v7169 = vsub.f32 %v7137, -1.8512012
    %v7170 = vsub.f32 %v7138, -1.8512012
    %v7171 = vsub.f32 %v7139, -1.8512012
    %v7172 = vsub.f32 %v7140, -1.8512012
    %v7173 = vsub.f32 %v7141, -1.8512012
    %v7174 = vsub.f32 %v7142, -1.8512012
    %v7175 = vsub.f32 %v7143, -1.8512012
    %v7176 = vsub.f32 %v7144, -1.8512012
    %v7177 = vsub.f32 %v7145, -1.8512012
    %v7178 = vmul.f32 %v7146, %v7146
    %v7179 = vmul.f32 %v7147, %v7147
    %v7180 = vmul.f32 %v7148, %v7148
    %v7181 = vmul.f32 %v7149, %v7149
    %v7182 = vmul.f32 %v7150, %v7150
    %v7183 = vmul.f32 %v7151, %v7151
    %v7184 = vmul.f32 %v7152, %v7152
    %v7185 = vmul.f32 %v7153, %v7153
    %v7186 = vmul.f32 %v7154, %v7154
    %v7187 = vmul.f32 %v7155, %v7155
    %v7188 = vmul.f32 %v7156, %v7156
    %v7189 = vmul.f32 %v7157, %v7157
    %v7190 = vmul.f32 %v7158, %v7158
    %v7191 = vmul.f32 %v7159, %v7159
    %v7192 = vmul.f32 %v7160, %v7160
    %v7193 = vmul.f32 %v7161, %v7161
    %v7194 = vmul.f32 %v7162, %v7162
    %v7195 = vmul.f32 %v7163, %v7163
    %v7196 = vmul.f32 %v7164, %v7164
    %v7197 = vmul.f32 %v7165, %v7165
    %v7198 = vmul.f32 %v7166, %v7166
    %v7199 = vmul.f32 %v7167, %v7167
    %v7200 = vmul.f32 %v7168, %v7168
    %v7201 = vmul.f32 %v7169, %v7169
    %v7202 = vmul.f32 %v7170, %v7170
    %v7203 = vmul.f32 %v7171, %v7171
    %v7204 = vmul.f32 %v7172, %v7172
    %v7205 = vmul.f32 %v7173, %v7173
    %v7206 = vmul.f32 %v7174, %v7174
    %v7207 = vmul.f32 %v7175, %v7175
    %v7208 = vmul.f32 %v7176, %v7176
    %v7209 = vmul.f32 %v7177, %v7177
    %v7210 = vsub.f32 0.0, %v7178
    %v7211 = vsub.f32 0.0, %v7179
    %v7212 = vsub.f32 0.0, %v7180
    %v7213 = vsub.f32 0.0, %v7181
    %v7214 = vsub.f32 0.0, %v7182
    %v7215 = vsub.f32 0.0, %v7183
    %v7216 = vsub.f32 0.0, %v7184
    %v7217 = vsub.f32 0.0, %v7185
    %v7218 = vsub.f32 0.0, %v7186
    %v7219 = vsub.f32 0.0, %v7187
    %v7220 = vsub.f32 0.0, %v7188
    %v7221 = vsub.f32 0.0, %v7189
    %v7222 = vsub.f32 0.0, %v7190
    %v7223 = vsub.f32 0.0, %v7191
    %v7224 = vsub.f32 0.0, %v7192
    %v7225 = vsub.f32 0.0, %v7193
    %v7226 = vsub.f32 0.0, %v7194
    %v7227 = vsub.f32 0.0, %v7195
    %v7228 = vsub.f32 0.0, %v7196
    %v7229 = vsub.f32 0.0, %v7197
    %v7230 = vsub.f32 0.0, %v7198
    %v7231 = vsub.f32 0.0, %v7199
    %v7232 = vsub.f32 0.0, %v7200
    %v7233 = vsub.f32 0.0, %v7201
    %v7234 = vsub.f32 0.0, %v7202
    %v7235 = vsub.f32 0.0, %v7203
    %v7236 = vsub.f32 0.0, %v7204
    %v7237 = vsub.f32 0.0, %v7205
    %v7238 = vsub.f32 0.0, %v7206
    %v7239 = vsub.f32 0.0, %v7207
    %v7240 = vsub.f32 0.0, %v7208
    %v7241 = vsub.f32 0.0, %v7209
    %v7242 = vmul.f32 %v7210, 1.442695
    %v7243 = vpow.pop %v7242
    %v7244 = vmul.f32 %v7211, 1.442695
    %v7245 = vpow.pop %v7244
    %v7246 = vmul.f32 %v7212, 1.442695
    %v7247 = vpow.pop %v7246
    %v7248 = vmul.f32 %v7213, 1.442695
    %v7249 = vpow.pop %v7248
    %v7250 = vmul.f32 %v7214, 1.442695
    %v7251 = vpow.pop %v7250
    %v7252 = vmul.f32 %v7215, 1.442695
    %v7253 = vpow.pop %v7252
    %v7254 = vmul.f32 %v7216, 1.442695
    %v7255 = vpow.pop %v7254
    %v7256 = vmul.f32 %v7217, 1.442695
    %v7257 = vpow.pop %v7256
    %v7258 = vmul.f32 %v7218, 1.442695
    %v7259 = vpow.pop %v7258
    %v7260 = vmul.f32 %v7219, 1.442695
    %v7261 = vpow.pop %v7260
    %v7262 = vmul.f32 %v7220, 1.442695
    %v7263 = vpow.pop %v7262
    %v7264 = vmul.f32 %v7221, 1.442695
    %v7265 = vpow.pop %v7264
    %v7266 = vmul.f32 %v7222, 1.442695
    %v7267 = vpow.pop %v7266
    %v7268 = vmul.f32 %v7223, 1.442695
    %v7269 = vpow.pop %v7268
    %v7270 = vmul.f32 %v7224, 1.442695
    %v7271 = vpow.pop %v7270
    %v7272 = vmul.f32 %v7225, 1.442695
    %v7273 = vpow.pop %v7272
    %v7274 = vmul.f32 %v7226, 1.442695
    %v7275 = vpow.pop %v7274
    %v7276 = vmul.f32 %v7227, 1.442695
    %v7277 = vpow.pop %v7276
    %v7278 = vmul.f32 %v7228, 1.442695
    %v7279 = vpow.pop %v7278
    %v7280 = vmul.f32 %v7229, 1.442695
    %v7281 = vpow.pop %v7280
    %v7282 = vmul.f32 %v7230, 1.442695
    %v7283 = vpow.pop %v7282
    %v7284 = vmul.f32 %v7231, 1.442695
    %v7285 = vpow.pop %v7284
    %v7286 = vmul.f32 %v7232, 1.442695
    %v7287 = vpow.pop %v7286
    %v7288 = vmul.f32 %v7233, 1.442695
    %v7289 = vpow.pop %v7288
    %v7290 = vmul.f32 %v7234, 1.442695
    %v7291 = vpow.pop %v7290
    %v7292 = vmul.f32 %v7235, 1.442695
    %v7293 = vpow.pop %v7292
    %v7294 = vmul.f32 %v7236, 1.442695
    %v7295 = vpow.pop %v7294
    %v7296 = vmul.f32 %v7237, 1.442695
    %v7297 = vpow.pop %v7296
    %v7298 = vmul.f32 %v7238, 1.442695
    %v7299 = vpow.pop %v7298
    %v7300 = vmul.f32 %v7239, 1.442695
    %v7301 = vpow.pop %v7300
    %v7302 = vmul.f32 %v7240, 1.442695
    %v7303 = vpow.pop %v7302
    %v7304 = vmul.f32 %v7241, 1.442695
    %v7305 = vpow.pop %v7304
    %v7306 = vld [vmem:[#allocation3] sm:$0xff]
    %v7307 = vld [vmem:[#allocation3 + $0x8] sm:$0xff]
    %v7308 = vld [vmem:[#allocation3 + $0x10] sm:$0xff]
    %v7309 = vld [vmem:[#allocation3 + $0x18] sm:$0xff]
    %v7310 = vld [vmem:[#allocation3 + $0x20] sm:$0xff]
    %v7311 = vld [vmem:[#allocation3 + $0x28] sm:$0xff]
    %v7312 = vld [vmem:[#allocation3 + $0x30] sm:$0xff]
    %v7313 = vld [vmem:[#allocation3 + $0x38] sm:$0xff]
    %v7314 = vld [vmem:[#allocation3 + $0x40] sm:$0xff]
    %v7315 = vld [vmem:[#allocation3 + $0x48] sm:$0xff]
    %v7316 = vld [vmem:[#allocation3 + $0x50] sm:$0xff]
    %v7317 = vld [vmem:[#allocation3 + $0x58] sm:$0xff]
    %v7318 = vld [vmem:[#allocation3 + $0x60] sm:$0xff]
    %v7319 = vld [vmem:[#allocation3 + $0x68] sm:$0xff]
    %v7320 = vld [vmem:[#allocation3 + $0x70] sm:$0xff]
    %v7321 = vld [vmem:[#allocation3 + $0x78] sm:$0xff]
    %v7322 = vld [vmem:[#allocation3 + $0x80] sm:$0xff]
    %v7323 = vld [vmem:[#allocation3 + $0x88] sm:$0xff]
    %v7324 = vld [vmem:[#allocation3 + $0x90] sm:$0xff]
    %v7325 = vld [vmem:[#allocation3 + $0x98] sm:$0xff]
    %v7326 = vld [vmem:[#allocation3 + $0xa0] sm:$0xff]
    %v7327 = vld [vmem:[#allocation3 + $0xa8] sm:$0xff]
    %v7328 = vld [vmem:[#allocation3 + $0xb0] sm:$0xff]
    %v7329 = vld [vmem:[#allocation3 + $0xb8] sm:$0xff]
    %v7330 = vld [vmem:[#allocation3 + $0xc0] sm:$0xff]
    %v7331 = vld [vmem:[#allocation3 + $0xc8] sm:$0xff]
    %v7332 = vld [vmem:[#allocation3 + $0xd0] sm:$0xff]
    %v7333 = vld [vmem:[#allocation3 + $0xd8] sm:$0xff]
    %v7334 = vld [vmem:[#allocation3 + $0xe0] sm:$0xff]
    %v7335 = vld [vmem:[#allocation3 + $0xe8] sm:$0xff]
    %v7336 = vld [vmem:[#allocation3 + $0xf0] sm:$0xff]
    %v7337 = vld [vmem:[#allocation3 + $0xf8] sm:$0xff]
    %v7338 = vmul.f32 %v7243, %v7306
    %v7339 = vmul.f32 %v7245, %v7307
    %v7340 = vmul.f32 %v7247, %v7308
    %v7341 = vmul.f32 %v7249, %v7309
    %v7342 = vmul.f32 %v7251, %v7310
    %v7343 = vmul.f32 %v7253, %v7311
    %v7344 = vmul.f32 %v7255, %v7312
    %v7345 = vmul.f32 %v7257, %v7313
    %v7346 = vmul.f32 %v7259, %v7314
    %v7347 = vmul.f32 %v7261, %v7315
    %v7348 = vmul.f32 %v7263, %v7316
    %v7349 = vmul.f32 %v7265, %v7317
    %v7350 = vmul.f32 %v7267, %v7318
    %v7351 = vmul.f32 %v7269, %v7319
    %v7352 = vmul.f32 %v7271, %v7320
    %v7353 = vmul.f32 %v7273, %v7321
    %v7354 = vmul.f32 %v7275, %v7322
    %v7355 = vmul.f32 %v7277, %v7323
    %v7356 = vmul.f32 %v7279, %v7324
    %v7357 = vmul.f32 %v7281, %v7325
    %v7358 = vmul.f32 %v7283, %v7326
    %v7359 = vmul.f32 %v7285, %v7327
    %v7360 = vmul.f32 %v7287, %v7328
    %v7361 = vmul.f32 %v7289, %v7329
    %v7362 = vmul.f32 %v7291, %v7330
    %v7363 = vmul.f32 %v7293, %v7331
    %v7364 = vmul.f32 %v7295, %v7332
    %v7365 = vmul.f32 %v7297, %v7333
    %v7366 = vmul.f32 %v7299, %v7334
    %v7367 = vmul.f32 %v7301, %v7335
    %v7368 = vmul.f32 %v7303, %v7336
    %v7369 = vmul.f32 %v7305, %v7337
    %v7370 = vadd.f32 %v7338, %v7339
    %v7371 = vadd.f32 %v7370, %v7340
    %v7372 = vadd.f32 %v7371, %v7341
    %v7373 = vadd.f32 %v7372, %v7342
    %v7374 = vadd.f32 %v7373, %v7343
    %v7375 = vadd.f32 %v7374, %v7344
    %v7376 = vadd.f32 %v7375, %v7345
    %v7377 = vadd.f32 %v7376, %v7346
    %v7378 = vadd.f32 %v7377, %v7347
    %v7379 = vadd.f32 %v7378, %v7348
    %v7380 = vadd.f32 %v7379, %v7349
    %v7381 = vadd.f32 %v7380, %v7350
    %v7382 = vadd.f32 %v7381, %v7351
    %v7383 = vadd.f32 %v7382, %v7352
    %v7384 = vadd.f32 %v7383, %v7353
    %v7385 = vadd.f32 %v7384, %v7354
    %v7386 = vadd.f32 %v7385, %v7355
    %v7387 = vadd.f32 %v7386, %v7356
    %v7388 = vadd.f32 %v7387, %v7357
    %v7389 = vadd.f32 %v7388, %v7358
    %v7390 = vadd.f32 %v7389, %v7359
    %v7391 = vadd.f32 %v7390, %v7360
    %v7392 = vadd.f32 %v7391, %v7361
    %v7393 = vadd.f32 %v7392, %v7362
    %v7394 = vadd.f32 %v7393, %v7363
    %v7395 = vadd.f32 %v7394, %v7364
    %v7396 = vadd.f32 %v7395, %v7365
    %v7397 = vadd.f32 %v7396, %v7366
    %v7398 = vadd.f32 %v7397, %v7367
    %v7399 = vadd.f32 %v7398, %v7368
    %v7400 = vadd.f32 %v7399, %v7369
    %v7401 = vrot.slane %v7400, 4
    %v7402 = vadd.f32 %v7400, %v7401
    %v7403 = vrot.slane %v7402, 2
    %v7404 = vadd.f32 %v7402, %v7403
    %v7405 = vrot.slane %v7404, 1
    %v7406 = vadd.f32 %v7404, %v7405
    %v7407 = vmul.f32 %v7406, 7.9788456
    %v7408 = vrsqrt.pop %v7407
    %v7409 = vmul.f32 %v7407, %v7408
    %vm7410 = vcmp.eq.f32.partialorder %v7407, inf
    %v7411 = vsel %vm7410, %v7407, %v7409
    %vm7412 = vcmp.eq.f32.partialorder %v7407, 0.0
    %v7413 = vand.u32 %v7407, 2147483648
    %v7414 = vsel %vm7412, %v7413, %v7411
    %7415 = vst [vmem:[#allocation8 + $0x17] sm:$0x1] %v7414
    // Predicated region
    $region18: #{tpu_custom_call.1} parent=1 // pred_check
      _
    $region19: #{tpu_custom_call.1} parent=1 // pred_check_branch
      %7417 = sbr.rel (0) target = $region21
    $region20: #{tpu_custom_call.1} parent=1 // pred_region
      %s7419 = ssub.s32 384, 384
      %7420 = vsyncadd [#allocation5], %s7419
      %s7421 = sshll.u32 [#allocation8], 4
      %s7422 = int_to_ptr.vmem [resolvable:$true] %s7421
      %7427 = dma.vmem_to_hbm [thread:$0]  %s7422, 384, %s2, [#allocation5], 128, 128, 8
    $region21: #{tpu_custom_call.1} parent=1 // pred_fallthru
      _
    // Predicated region
    $region22: #{tpu_custom_call.1} parent=1 // pred_check
      _
    $region23: #{tpu_custom_call.1} parent=1 // pred_check_branch
      %7429 = sbr.rel (0) target = $region25
    $region24: #{tpu_custom_call.1} parent=1 // pred_region
      %7430 = dma.done [#allocation5], 384
    $region25: #{tpu_custom_call.1} parent=1 // pred_fallthru
      _
    %7431 = vsyncpa [#allocation4], 1
    %7432 = vsyncpa [#allocation7], 1
    %7433 = vsyncpa [#allocation5], 1

</llo_original>
